<compile_context>
chip_gen: v6e
topology: v6e:2x2x1
jax: 0.10.0
libtpu: 0.0.40
codegen_flags: <defaults>
</compile_context>

<pallas_src>
import math
from functools import partial

import jax
import jax.numpy as jnp
from jax.experimental import pallas as pl
from jax.experimental.pallas import tpu as pltpu

SELU_ALPHA = 1.6732632423543772
SELU_SCALE = 1.0507009873554805
HALF_LOG_2PI = 0.5 * math.log(2.0 * math.pi)
LANE = 128
COMPUTE_DTYPE = jnp.bfloat16   # MXU operand dtype; accumulation stays f32


def _round_up(n, m):
    return ((n + m - 1) // m) * m


def _selu(x):
    # exp only on the non-positive side so the unselected branch never overflows
    return SELU_SCALE * jnp.where(
        x > 0.0, x, SELU_ALPHA * (jnp.exp(jnp.minimum(x, 0.0)) - 1.0))


# --------------------------------------------------------------------------
# Kernel: one batch tile runs the base encoder + all IAF flow steps.
# --------------------------------------------------------------------------
def _encoder_iaf_kernel(n_latent,
                        x_ref, eps_ref,
                        a0w1_ref, a0b1_ref, a0hw_ref, a0hb_ref,
                        fw1_ref, fb1_ref, fhw_ref, fhb_ref,
                        packed_ref, z_ref, eps_slab_ref):
    f32 = jnp.float32
    cdt = COMPUTE_DTYPE
    L = n_latent
    Lp = packed_ref.shape[-1]        # 128-lane latent slab width
    n_flow = fw1_ref.shape[0]        # t - 1
    TB = x_ref.shape[0]

    def dot(a, b):                   # bf16 MXU operands, f32 accumulation
        return jnp.dot(a.astype(cdt), b.astype(cdt),
                       preferred_element_type=f32)

    # ---- stage the narrow (TB, L) eps into a 128-lane slab (padded lanes 0) --
    eps_slab_ref[...] = jnp.zeros((TB, Lp), f32)
    eps_slab_ref[:, :L] = eps_ref[...].astype(f32)
    eps = eps_slab_ref[...]

    # ---- encoder_H[0]: to_hidden -> SELU -> (to_out folded into heads) ------
    x = x_ref[...].astype(f32)
    hid = _selu(dot(x, a0w1_ref[...]) + a0b1_ref[...])
    heads0 = dot(hid, a0hw_ref[...]) + a0hb_ref[...]          # (TB, 3*Lp)
    mu0 = heads0[:, 0 * Lp:1 * Lp]                            # values in [0:L)
    sclamp0 = jnp.maximum(heads0[:, 1 * Lp:2 * Lp], -50.0)    # clamp(min=-50)
    h_shift = heads0[:, 2 * Lp:3 * Lp]                        # h pre-shifted to [L:2L)
    sigma0 = jnp.exp(sclamp0)                                 # do_sigmoid=False

    z = mu0 + eps * sigma0           # padded lanes: 0 + 0*exp(0) = 0 exactly

    # log sigma0 == sclamp0 exactly; padded lanes contribute 0 (sclamp0=0, eps=0)
    qz = -(jnp.sum(sclamp0 + 0.5 * eps * eps, axis=-1, keepdims=True)
           + L * HALF_LOG_2PI)                                # (TB, 1)

    lane = jax.lax.broadcasted_iota(jnp.int32, (1, Lp), 1)
    lmask = (lane < L).astype(f32)   # flow log-sigma mask (padded lanes = log 0.5)

    # ---- IAF flow steps: z <- sigma_t*z + (1-sigma_t)*mu_t -------------------
    flow_in = z + h_shift
    for k in range(n_flow):          # static unroll (t is small)
        flow_in = z + h_shift        # == concat([z, h]) packed in lanes [0:2L)
        hidk = _selu(dot(flow_in, fw1_ref[k]) + fb1_ref[k])
        headk = dot(hidk, fhw_ref[k]) + fhb_ref[k]            # (TB, 2*Lp)
        mu_it = headk[:, 0 * Lp:1 * Lp]
        sclamp = jnp.maximum(headk[:, 1 * Lp:2 * Lp], -50.0)
        t_exp = jnp.exp(-sclamp)                              # finite: sclamp >= -50
        denom = 1.0 + t_exp
        sig_it = pl.reciprocal(denom, approx=True)            # sigmoid, no VPU divide
        log_sig = -jnp.log(denom)                             # exact log sigmoid
        z = sig_it * z + (1.0 - sig_it) * mu_it               # padded lanes stay 0
        qz = qz - jnp.sum(lmask * log_sig, axis=-1, keepdims=True)

    # ---- outputs: dense [ last_inp (2L lanes) | qz (lane 2L) ], narrow z ----
    packed_ref[...] = flow_in + jnp.where(lane == 2 * L, qz, 0.0)
    z_ref[...] = z[:, :L]


# --------------------------------------------------------------------------
# One-time parameter packing (NOT in the per-call path).
# --------------------------------------------------------------------------
def prepare_params(raw, n_latent):
    """Transpose to (in, out), fold to_out (W2,b2) into the head weights,
    zero-pad heads to 128-lane slabs (h pre-shifted by L lanes), pack the flow
    W1 into one 128-deep weight, cast MXU operands to bf16. Biases stay f32."""
    L = n_latent
    Lp = _round_up(L, LANE)
    assert 2 * L < LANE, "merged flow-input / packed-output layout needs 2*n_latent < 128"
    assert len(raw["flows"]) >= 1, "EncoderIAF requires t >= 2"
    cdt = COMPUTE_DTYPE
    f32 = jnp.float32

    e0 = raw["enc0"]
    H = e0["w1"].shape[0]

    a0w1 = jnp.asarray(e0["w1"].T, cdt)                      # (n_in, H)
    a0b1 = jnp.asarray(e0["b1"], f32).reshape(1, -1)

    # head slab (H, 3*Lp): mu @ [0:L), sigma @ [Lp:Lp+L), h @ [2Lp+L:2Lp+2L)
    # (h is pre-shifted by L so the kernel's h slab already sits in lanes [L:2L))
    whp = jnp.zeros((H, 3 * Lp), f32)
    whp = whp.at[:, 0:L].set(e0["w_mu"].T)
    whp = whp.at[:, Lp:Lp + L].set(e0["w_sig"].T)
    whp = whp.at[:, 2 * Lp + L:2 * Lp + 2 * L].set(e0["w_h"].T)
    bhp = jnp.zeros((3 * Lp,), f32)
    bhp = bhp.at[0:L].set(e0["b_mu"])
    bhp = bhp.at[Lp:Lp + L].set(e0["b_sig"])
    bhp = bhp.at[2 * Lp + L:2 * Lp + 2 * L].set(e0["b_h"])
    # exact fold of to_out into the heads (f32 product, then a single bf16 cast)
    a0hw = (jnp.asarray(e0["w2"], f32).T @ whp).astype(cdt)             # (H, 3*Lp)
    a0hb = (jnp.asarray(e0["b2"], f32) @ whp + bhp).reshape(1, -1)      # (1, 3*Lp)

    fw1, fb1, fhw, fhb = [], [], [], []
    for fl in raw["flows"]:
        w1 = jnp.asarray(fl["w1"], f32)                      # (H, 2L) torch (out, in)
        w1p = jnp.zeros((Lp, H), f32)
        w1p = w1p.at[0:L, :].set(w1[:, :L].T)                # z rows
        w1p = w1p.at[L:2 * L, :].set(w1[:, L:].T)            # h rows (lanes [L:2L))
        fw1.append(w1p)
        fb1.append(jnp.asarray(fl["b1"], f32).reshape(1, -1))

        whf = jnp.zeros((H, 2 * Lp), f32)
        whf = whf.at[:, 0:L].set(fl["w_mu"].T)
        whf = whf.at[:, Lp:Lp + L].set(fl["w_sig"].T)
        bhf = jnp.zeros((2 * Lp,), f32)
        bhf = bhf.at[0:L].set(fl["b_mu"])
        bhf = bhf.at[Lp:Lp + L].set(fl["b_sig"])
        fhw.append((jnp.asarray(fl["w2"], f32).T @ whf).astype(cdt))
        fhb.append((jnp.asarray(fl["b2"], f32) @ whf + bhf).reshape(1, -1))

    return dict(
        a0w1=a0w1, a0b1=a0b1, a0hw=a0hw, a0hb=a0hb,
        fw1=jnp.stack(fw1).astype(cdt),
        fb1=jnp.stack(fb1),
        fhw=jnp.stack(fhw),
        fhb=jnp.stack(fhb),
    )


# --------------------------------------------------------------------------
# Forward wrapper (EncoderIAF.forward, n_samples=1).
# --------------------------------------------------------------------------
def encoder_iaf_forward(x, eps, prep, *, n_latent, tile_batch=512):
    """Returns dict(latent, posterior_density, last_inp) like the torch module."""
    B, n_in = x.shape
    L = n_latent
    Lp = LANE
    assert eps.shape == (B, L)
    n_flow = prep["fw1"].shape[0]
    H = prep["a0w1"].shape[1]

    # Tile/grid choice: amortize per-step overhead with a big batch tile, but
    # keep an even grid of >= 2 steps so v7x's two TensorCores both get work.
    nb = max(1, pl.cdiv(B, tile_batch))
    if B > 8:
        nb = max(nb, 2)
        nb += nb % 2
    TB = _round_up(pl.cdiv(B, nb), 8)
    Bp = nb * TB

    xf = x.astype(jnp.float32)
    ef = eps.astype(jnp.float32)
    if Bp != B:                      # skip the HBM pad when the batch already tiles
        xf = jnp.pad(xf, ((0, Bp - B), (0, 0)))
        ef = jnp.pad(ef, ((0, Bp - B), (0, 0)))

    weights = (prep["a0w1"], prep["a0b1"], prep["a0hw"], prep["a0hb"],
               prep["fw1"], prep["fb1"], prep["fhw"], prep["fhb"])

    def const_spec(a):               # VMEM-resident, constant block index
        return pl.BlockSpec(a.shape, lambda i, _nd=a.ndim: (0,) * _nd)

    # cost model (folded math): 2 matmuls base + 2 per flow
    flops = 2 * Bp * (n_in * H + H * 3 * Lp) \
        + n_flow * 2 * Bp * (Lp * H + H * 2 * Lp)
    transcend = Bp * (H + Lp) + n_flow * Bp * (H + 3 * Lp)
    weight_bytes = sum(int(w.size) * w.dtype.itemsize for w in weights)
    bytes_accessed = (Bp * n_in * 4 + Bp * L * 4 + weight_bytes
                      + Bp * Lp * 4 + Bp * L * 4)
    cost = pl.CostEstimate(flops=int(flops), transcendentals=int(transcend),
                           bytes_accessed=int(bytes_accessed))

    # VMEM budget (v7x: 64 MiB physical / 32 MiB default scoped):
    # double-buffered x/eps/out blocks + double-buffered constant weights + scratch.
    block_bytes = TB * (n_in + L + Lp + L) * 4
    footprint = 2 * block_bytes + 2 * weight_bytes + TB * Lp * 4
    cp_kwargs = dict(dimension_semantics=("parallel",))
    if 2 * footprint > (32 << 20):
        cp_kwargs["vmem_limit_bytes"] = int(min(2 * footprint, 64 << 20))

    packed, zout = pl.pallas_call(
        partial(_encoder_iaf_kernel, L),
        out_shape=(jax.ShapeDtypeStruct((Bp, Lp), jnp.float32),
                   jax.ShapeDtypeStruct((Bp, L), jnp.float32)),
        grid=(nb,),
        in_specs=[pl.BlockSpec((TB, n_in), lambda i: (i, 0)),
                  pl.BlockSpec((TB, L), lambda i: (i, 0)),
                  *[const_spec(w) for w in weights]],
        out_specs=(pl.BlockSpec((TB, Lp), lambda i: (i, 0)),
                   pl.BlockSpec((TB, L), lambda i: (i, 0))),
        scratch_shapes=[pltpu.VMEM((TB, Lp), jnp.float32)],
        compiler_params=pltpu.CompilerParams(**cp_kwargs),
        cost_estimate=cost,
    )(xf, ef, *weights)

    last_inp = packed[:B, 0:2 * L]        # == concat([z_prev, h], -1), contiguous
    qz_x = packed[:B, 2 * L]
    z = zout[:B]
    return dict(latent=z, posterior_density=qz_x, last_inp=last_inp)


# --------------------------------------------------------------------------
# Deterministic torch-convention init (mirrors nn.Linear + encoder_H.init_weights)
# --------------------------------------------------------------------------
def init_raw_params(key, n_in, n_latent, n_hidden, t):
    def linear(k, fan_in, fan_out):
        kw, kb = jax.random.split(k)
        bnd = 1.0 / math.sqrt(fan_in)
        w = jax.random.uniform(kw, (fan_out, fan_in), jnp.float32, -bnd, bnd)
        b = jax.random.uniform(kb, (fan_out,), jnp.float32, -bnd, bnd)
        return w, b

    keys = iter(jax.random.split(key, 8 * t))

    def enc(n_inp, do_h, sigma_bias):
        w1, b1 = linear(next(keys), n_inp, n_hidden)
        w2, b2 = linear(next(keys), n_hidden, n_hidden)
        wm, bm = linear(next(keys), n_hidden, n_latent)
        ws = 1e-8 * jax.random.normal(next(keys), (n_latent, n_hidden), jnp.float32)
        bs = jnp.full((n_latent,), sigma_bias, jnp.float32)
        d = dict(w1=w1, b1=b1, w2=w2, b2=b2, w_mu=wm, b_mu=bm, w_sig=ws, b_sig=bs)
        if do_h:
            wh, bh = linear(next(keys), n_hidden, n_latent)
            d.update(w_h=wh, b_h=bh)
        return d

    enc0 = enc(n_in, do_h=True, sigma_bias=0.5)               # do_sigmoid=False
    flows = [enc(2 * n_latent, do_h=False, sigma_bias=1.5)    # do_sigmoid=True
             for _ in range(t - 1)]
    return dict(enc0=enc0, flows=flows)


# --------------------------------------------------------------------------
# Pure-JAX f32 reference implementing the exact torch-module math.
# --------------------------------------------------------------------------
def reference_forward(x, eps, raw, n_latent):
    def lin(a, w, b):                 # torch (out, in) layout
        return a @ w.T + b

    def fc(a, p):                     # FCLayersA, eval mode (dropout id, no BN)
        return lin(_selu(lin(a, p["w1"], p["b1"])), p["w2"], p["b2"])

    e0 = raw["enc0"]
    p0 = fc(x, e0)
    mu0 = lin(p0, e0["w_mu"], e0["b_mu"])
    s0 = jnp.maximum(lin(p0, e0["w_sig"], e0["b_sig"]), -50.0)
    sig0 = jnp.exp(s0)
    h = lin(p0, e0["w_h"], e0["b_h"])

    z = mu0 + eps * sig0
    qz = -jnp.sum(jnp.log(sig0) + 0.5 * eps ** 2 + HALF_LOG_2PI, axis=-1)
    inp = None
    for fl in raw["flows"]:
        inp = jnp.concatenate([z, h], axis=-1)
        pk = fc(inp, fl)
        mu_it = lin(pk, fl["w_mu"], fl["b_mu"])
        sig_it = jax.nn.sigmoid(jnp.maximum(lin(pk, fl["w_sig"], fl["b_sig"]), -50.0))
        z = sig_it * z + (1.0 - sig_it) * mu_it
        qz = qz - jnp.sum(jnp.log(sig_it), axis=-1)
    return dict(latent=z, posterior_density=qz, last_inp=inp)


if __name__ == "__main__":
    key = jax.random.PRNGKey(0)
    k_par, k_x, k_eps = jax.random.split(key, 3)

    # Shapes sized so the default tile_batch=512 yields an even 2-step grid
    # (per the perf review) while the whole problem stays tiny (< 1 MB weights).
    B, n_in, n_hidden, n_latent, t = 1024, 128, 128, 16, 3

    raw = init_raw_params(k_par, n_in, n_latent, n_hidden, t)
    prep = prepare_params(raw, n_latent)   # one-time packing, NOT per call

    x = jax.random.normal(k_x, (B, n_in), jnp.float32)
    eps = jax.random.normal(k_eps, (B, n_latent), jnp.float32)  # dist0.rsample

    out = encoder_iaf_forward(x, eps, prep, n_latent=n_latent, tile_batch=512)
    jax.block_until_ready(out)

    ref = reference_forward(x, eps, raw, n_latent)
    for name in ("latent", "posterior_density", "last_inp"):
        a, b = out[name], ref[name]
        assert a.shape == b.shape, (name, a.shape, b.shape)
        ok = bool(jnp.allclose(a, b, atol=1e-1, rtol=2e-2))
        assert ok, (name, float(jnp.max(jnp.abs(a - b))))

    print("KERNEL_OK")
</pallas_src>

<mosaic_0001>
module attributes {stable_mosaic.version = 11 : i64} {
  func.func @_encoder_iaf_kernel(%arg0: i32, %arg1: memref<512x128xf32, #tpu.memory_space<vmem>>, %arg2: memref<512x16xf32, #tpu.memory_space<vmem>>, %arg3: memref<128x128xbf16, #tpu.memory_space<vmem>>, %arg4: memref<1x128xf32, #tpu.memory_space<vmem>>, %arg5: memref<128x384xbf16, #tpu.memory_space<vmem>>, %arg6: memref<1x384xf32, #tpu.memory_space<vmem>>, %arg7: memref<2x128x128xbf16, #tpu.memory_space<vmem>>, %arg8: memref<2x1x128xf32, #tpu.memory_space<vmem>>, %arg9: memref<2x128x256xbf16, #tpu.memory_space<vmem>>, %arg10: memref<2x1x256xf32, #tpu.memory_space<vmem>>, %arg11: memref<512x128xf32, #tpu.memory_space<vmem>>, %arg12: memref<512x16xf32, #tpu.memory_space<vmem>>, %arg13: memref<512x128xf32, #tpu.memory_space<vmem>>) attributes {dimension_semantics = [#tpu.dimension_semantics<parallel>], iteration_bounds = array<i64: 2>, scalar_prefetch = 0 : i64, scratch_operands = 1 : i64, tpu.core_type = #tpu.core_type<tc>, window_params = [{transform_indices = @transform_0, window_bounds = array<i64: 512, 128>}, {transform_indices = @transform_1, window_bounds = array<i64: 512, 16>}, {pipeline_mode = #tpu.pipeline_mode<synchronous>, transform_indices = @transform_2, window_bounds = array<i64: 128, 128>}, {pipeline_mode = #tpu.pipeline_mode<synchronous>, transform_indices = @transform_3, window_bounds = array<i64: 1, 128>}, {pipeline_mode = #tpu.pipeline_mode<synchronous>, transform_indices = @transform_4, window_bounds = array<i64: 128, 384>}, {pipeline_mode = #tpu.pipeline_mode<synchronous>, transform_indices = @transform_5, window_bounds = array<i64: 1, 384>}, {pipeline_mode = #tpu.pipeline_mode<synchronous>, transform_indices = @transform_6, window_bounds = array<i64: 2, 128, 128>}, {pipeline_mode = #tpu.pipeline_mode<synchronous>, transform_indices = @transform_7, window_bounds = array<i64: 2, 1, 128>}, {pipeline_mode = #tpu.pipeline_mode<synchronous>, transform_indices = @transform_8, window_bounds = array<i64: 2, 128, 256>}, {pipeline_mode = #tpu.pipeline_mode<synchronous>, transform_indices = @transform_9, window_bounds = array<i64: 2, 1, 256>}, {transform_indices = @transform_10, window_bounds = array<i64: 512, 128>}, {transform_indices = @transform_11, window_bounds = array<i64: 512, 16>}]} {
    %cst = arith.constant 0.000000e+00 : f32
    %0 = vector.broadcast %cst : f32 to vector<512x128xf32>
    %c0 = arith.constant 0 : index
    %c0_0 = arith.constant 0 : index
    %1 = vector.load %arg13[%c0, %c0_0] : memref<512x128xf32, #tpu.memory_space<vmem>>, vector<512x128xf32>
    tpu.vector_store %arg13[%c0, %c0_0], %0 {strides = array<i32>} : memref<512x128xf32, #tpu.memory_space<vmem>>, vector<512x128xf32>,
    %c0_1 = arith.constant 0 : index
    %c0_2 = arith.constant 0 : index
    %2 = vector.load %arg2[%c0_1, %c0_2] : memref<512x16xf32, #tpu.memory_space<vmem>>, vector<512x16xf32>
    %c0_3 = arith.constant 0 : index
    %c0_4 = arith.constant 0 : index
    %3 = vector.load %arg13[%c0_3, %c0_4] : memref<512x128xf32, #tpu.memory_space<vmem>>, vector<512x16xf32>
    tpu.vector_store %arg13[%c0_3, %c0_4], %2 {strides = array<i32>} : memref<512x128xf32, #tpu.memory_space<vmem>>, vector<512x16xf32>,
    %c0_5 = arith.constant 0 : index
    %c0_6 = arith.constant 0 : index
    %4 = vector.load %arg13[%c0_5, %c0_6] : memref<512x128xf32, #tpu.memory_space<vmem>>, vector<512x128xf32>
    %c0_7 = arith.constant 0 : index
    %c0_8 = arith.constant 0 : index
    %5 = vector.load %arg1[%c0_7, %c0_8] : memref<512x128xf32, #tpu.memory_space<vmem>>, vector<512x128xf32>
    %c0_9 = arith.constant 0 : index
    %c0_10 = arith.constant 0 : index
    %6 = vector.load %arg3[%c0_9, %c0_10] : memref<128x128xbf16, #tpu.memory_space<vmem>>, vector<128x128xbf16>
    %7 = arith.truncf %5 : vector<512x128xf32> to vector<512x128xbf16>
    %cst_11 = arith.constant dense<0.000000e+00> : vector<512x128xf32>
    %8 = tpu.matmul %7, %6, %cst_11 {dimension_numbers = #tpu.dot_dimension_numbers<[1], [0], [0], [1], [0, 0, 1, 1], [], []>} : vector<512x128xbf16>, vector<128x128xbf16>, vector<512x128xf32> -> vector<512x128xf32>
    %c0_12 = arith.constant 0 : index
    %c0_13 = arith.constant 0 : index
    %9 = vector.load %arg4[%c0_12, %c0_13] : memref<1x128xf32, #tpu.memory_space<vmem>>, vector<1x128xf32>
    %10 = vector.broadcast %9 : vector<1x128xf32> to vector<512x128xf32>
    %11 = arith.addf %8, %10 : vector<512x128xf32>
    %cst_14 = arith.constant 0.000000e+00 : f32
    %12 = vector.broadcast %cst_14 : f32 to vector<512x128xf32>
    %13 = arith.cmpf ogt, %11, %12 : vector<512x128xf32>
    %cst_15 = arith.constant 0.000000e+00 : f32
    %14 = vector.broadcast %cst_15 : f32 to vector<512x128xf32>
    %15 = arith.minimumf %11, %14 : vector<512x128xf32>
    %16 = math.exp %15 : vector<512x128xf32>
    %cst_16 = arith.constant 1.000000e+00 : f32
    %17 = vector.broadcast %cst_16 : f32 to vector<512x128xf32>
    %18 = arith.subf %16, %17 : vector<512x128xf32>
    %cst_17 = arith.constant 1.67326319 : f32
    %19 = vector.broadcast %cst_17 : f32 to vector<512x128xf32>
    %20 = arith.mulf %19, %18 : vector<512x128xf32>
    %21 = arith.select %13, %11, %20 : vector<512x128xi1>, vector<512x128xf32>
    %cst_18 = arith.constant 1.05070102 : f32
    %22 = vector.broadcast %cst_18 : f32 to vector<512x128xf32>
    %23 = arith.mulf %22, %21 : vector<512x128xf32>
    %c0_19 = arith.constant 0 : index
    %c0_20 = arith.constant 0 : index
    %24 = vector.load %arg5[%c0_19, %c0_20] : memref<128x384xbf16, #tpu.memory_space<vmem>>, vector<128x384xbf16>
    %25 = arith.truncf %23 : vector<512x128xf32> to vector<512x128xbf16>
    %cst_21 = arith.constant dense<0.000000e+00> : vector<512x384xf32>
    %26 = tpu.matmul %25, %24, %cst_21 {dimension_numbers = #tpu.dot_dimension_numbers<[1], [0], [0], [1], [0, 0, 1, 1], [], []>} : vector<512x128xbf16>, vector<128x384xbf16>, vector<512x384xf32> -> vector<512x384xf32>
    %c0_22 = arith.constant 0 : index
    %c0_23 = arith.constant 0 : index
    %27 = vector.load %arg6[%c0_22, %c0_23] : memref<1x384xf32, #tpu.memory_space<vmem>>, vector<1x384xf32>
    %28 = vector.broadcast %27 : vector<1x384xf32> to vector<512x384xf32>
    %29 = arith.addf %26, %28 : vector<512x384xf32>
    %30 = vector.extract_strided_slice %29 {offsets = [0, 0], sizes = [512, 128], strides = [1, 1]} : vector<512x384xf32> to vector<512x128xf32>
    %31 = vector.extract_strided_slice %29 {offsets = [0, 128], sizes = [512, 128], strides = [1, 1]} : vector<512x384xf32> to vector<512x128xf32>
    %cst_24 = arith.constant -5.000000e+01 : f32
    %32 = vector.broadcast %cst_24 : f32 to vector<512x128xf32>
    %33 = arith.maximumf %31, %32 : vector<512x128xf32>
    %34 = vector.extract_strided_slice %29 {offsets = [0, 256], sizes = [512, 128], strides = [1, 1]} : vector<512x384xf32> to vector<512x128xf32>
    %35 = math.exp %33 : vector<512x128xf32>
    %36 = arith.mulf %4, %35 : vector<512x128xf32>
    %37 = arith.addf %30, %36 : vector<512x128xf32>
    %cst_25 = arith.constant 5.000000e-01 : f32
    %38 = vector.broadcast %cst_25 : f32 to vector<512x128xf32>
    %39 = arith.mulf %38, %4 : vector<512x128xf32>
    %40 = arith.mulf %39, %4 : vector<512x128xf32>
    %41 = arith.addf %33, %40 : vector<512x128xf32>
    %cst_26 = arith.constant dense<0.000000e+00> : vector<512xf32>
    %42 = vector.multi_reduction <add>, %41, %cst_26 [1] : vector<512x128xf32> to vector<512xf32>
    %43 = vector.shape_cast %42 : vector<512xf32> to vector<512x1xf32>
    %cst_27 = arith.constant 14.7030163 : f32
    %44 = vector.broadcast %cst_27 : f32 to vector<512x1xf32>
    %45 = arith.addf %43, %44 : vector<512x1xf32>
    %cst_28 = arith.constant 0.000000e+00 : f32
    %46 = vector.broadcast %cst_28 : f32 to vector<512x1xf32>
    %47 = arith.subf %46, %45 : vector<512x1xf32>
    %48 = tpu.iota {dimensions = array<i32: 1>} : vector<1x128xi32>
    %c16_i32 = arith.constant 16 : i32
    %49 = vector.broadcast %c16_i32 : i32 to vector<1x128xi32>
    %50 = arith.cmpi slt, %48, %49 : vector<1x128xi32>
    %51 = arith.extui %50 : vector<1x128xi1> to vector<1x128xi32>
    %52 = arith.sitofp %51 : vector<1x128xi32> to vector<1x128xf32>
    %53 = arith.addf %37, %34 : vector<512x128xf32>
    %c0_29 = arith.constant 0 : index
    %c0_30 = arith.constant 0 : index
    %c0_31 = arith.constant 0 : index
    %54 = vector.load %arg7[%c0_29, %c0_30, %c0_31] : memref<2x128x128xbf16, #tpu.memory_space<vmem>>, vector<1x128x128xbf16>
    %55 = vector.shape_cast %54 : vector<1x128x128xbf16> to vector<128x128xbf16>
    %56 = arith.truncf %53 : vector<512x128xf32> to vector<512x128xbf16>
    %cst_32 = arith.constant dense<0.000000e+00> : vector<512x128xf32>
    %57 = tpu.matmul %56, %55, %cst_32 {dimension_numbers = #tpu.dot_dimension_numbers<[1], [0], [0], [1], [0, 0, 1, 1], [], []>} : vector<512x128xbf16>, vector<128x128xbf16>, vector<512x128xf32> -> vector<512x128xf32>
    %c0_33 = arith.constant 0 : index
    %c0_34 = arith.constant 0 : index
    %c0_35 = arith.constant 0 : index
    %58 = vector.load %arg8[%c0_33, %c0_34, %c0_35] : memref<2x1x128xf32, #tpu.memory_space<vmem>>, vector<1x1x128xf32>
    %59 = vector.shape_cast %58 : vector<1x1x128xf32> to vector<1x128xf32>
    %60 = vector.broadcast %59 : vector<1x128xf32> to vector<512x128xf32>
    %61 = arith.addf %57, %60 : vector<512x128xf32>
    %cst_36 = arith.constant 0.000000e+00 : f32
    %62 = vector.broadcast %cst_36 : f32 to vector<512x128xf32>
    %63 = arith.cmpf ogt, %61, %62 : vector<512x128xf32>
    %cst_37 = arith.constant 0.000000e+00 : f32
    %64 = vector.broadcast %cst_37 : f32 to vector<512x128xf32>
    %65 = arith.minimumf %61, %64 : vector<512x128xf32>
    %66 = math.exp %65 : vector<512x128xf32>
    %cst_38 = arith.constant 1.000000e+00 : f32
    %67 = vector.broadcast %cst_38 : f32 to vector<512x128xf32>
    %68 = arith.subf %66, %67 : vector<512x128xf32>
    %cst_39 = arith.constant 1.67326319 : f32
    %69 = vector.broadcast %cst_39 : f32 to vector<512x128xf32>
    %70 = arith.mulf %69, %68 : vector<512x128xf32>
    %71 = arith.select %63, %61, %70 : vector<512x128xi1>, vector<512x128xf32>
    %cst_40 = arith.constant 1.05070102 : f32
    %72 = vector.broadcast %cst_40 : f32 to vector<512x128xf32>
    %73 = arith.mulf %72, %71 : vector<512x128xf32>
    %c0_41 = arith.constant 0 : index
    %c0_42 = arith.constant 0 : index
    %c0_43 = arith.constant 0 : index
    %74 = vector.load %arg9[%c0_41, %c0_42, %c0_43] : memref<2x128x256xbf16, #tpu.memory_space<vmem>>, vector<1x128x256xbf16>
    %75 = vector.shape_cast %74 : vector<1x128x256xbf16> to vector<128x256xbf16>
    %76 = arith.truncf %73 : vector<512x128xf32> to vector<512x128xbf16>
    %cst_44 = arith.constant dense<0.000000e+00> : vector<512x256xf32>
    %77 = tpu.matmul %76, %75, %cst_44 {dimension_numbers = #tpu.dot_dimension_numbers<[1], [0], [0], [1], [0, 0, 1, 1], [], []>} : vector<512x128xbf16>, vector<128x256xbf16>, vector<512x256xf32> -> vector<512x256xf32>
    %c0_45 = arith.constant 0 : index
    %c0_46 = arith.constant 0 : index
    %c0_47 = arith.constant 0 : index
    %78 = vector.load %arg10[%c0_45, %c0_46, %c0_47] : memref<2x1x256xf32, #tpu.memory_space<vmem>>, vector<1x1x256xf32>
    %79 = vector.shape_cast %78 : vector<1x1x256xf32> to vector<1x256xf32>
    %80 = vector.broadcast %79 : vector<1x256xf32> to vector<512x256xf32>
    %81 = arith.addf %77, %80 : vector<512x256xf32>
    %82 = vector.extract_strided_slice %81 {offsets = [0, 0], sizes = [512, 128], strides = [1, 1]} : vector<512x256xf32> to vector<512x128xf32>
    %83 = vector.extract_strided_slice %81 {offsets = [0, 128], sizes = [512, 128], strides = [1, 1]} : vector<512x256xf32> to vector<512x128xf32>
    %cst_48 = arith.constant -5.000000e+01 : f32
    %84 = vector.broadcast %cst_48 : f32 to vector<512x128xf32>
    %85 = arith.maximumf %83, %84 : vector<512x128xf32>
    %cst_49 = arith.constant 0.000000e+00 : f32
    %86 = vector.broadcast %cst_49 : f32 to vector<512x128xf32>
    %87 = arith.subf %86, %85 : vector<512x128xf32>
    %88 = math.exp %87 : vector<512x128xf32>
    %cst_50 = arith.constant 1.000000e+00 : f32
    %89 = vector.broadcast %cst_50 : f32 to vector<512x128xf32>
    %90 = arith.addf %89, %88 : vector<512x128xf32>
    %91 = tpu.reciprocal %90 {approx = true} : vector<512x128xf32> -> vector<512x128xf32>
    %92 = math.log %90 : vector<512x128xf32>
    %cst_51 = arith.constant 0.000000e+00 : f32
    %93 = vector.broadcast %cst_51 : f32 to vector<512x128xf32>
    %94 = arith.subf %93, %92 : vector<512x128xf32>
    %95 = arith.mulf %91, %37 : vector<512x128xf32>
    %cst_52 = arith.constant 1.000000e+00 : f32
    %96 = vector.broadcast %cst_52 : f32 to vector<512x128xf32>
    %97 = arith.subf %96, %91 : vector<512x128xf32>
    %98 = arith.mulf %97, %82 : vector<512x128xf32>
    %99 = arith.addf %95, %98 : vector<512x128xf32>
    %100 = vector.broadcast %52 : vector<1x128xf32> to vector<512x128xf32>
    %101 = arith.mulf %100, %94 : vector<512x128xf32>
    %cst_53 = arith.constant dense<0.000000e+00> : vector<512xf32>
    %102 = vector.multi_reduction <add>, %101, %cst_53 [1] : vector<512x128xf32> to vector<512xf32>
    %103 = vector.shape_cast %102 : vector<512xf32> to vector<512x1xf32>
    %104 = arith.subf %47, %103 : vector<512x1xf32>
    %105 = arith.addf %99, %34 : vector<512x128xf32>
    %c1 = arith.constant 1 : index
    %c0_54 = arith.constant 0 : index
    %c0_55 = arith.constant 0 : index
    %106 = vector.load %arg7[%c1, %c0_54, %c0_55] : memref<2x128x128xbf16, #tpu.memory_space<vmem>>, vector<1x128x128xbf16>
    %107 = vector.shape_cast %106 : vector<1x128x128xbf16> to vector<128x128xbf16>
    %108 = arith.truncf %105 : vector<512x128xf32> to vector<512x128xbf16>
    %cst_56 = arith.constant dense<0.000000e+00> : vector<512x128xf32>
    %109 = tpu.matmul %108, %107, %cst_56 {dimension_numbers = #tpu.dot_dimension_numbers<[1], [0], [0], [1], [0, 0, 1, 1], [], []>} : vector<512x128xbf16>, vector<128x128xbf16>, vector<512x128xf32> -> vector<512x128xf32>
    %c1_57 = arith.constant 1 : index
    %c0_58 = arith.constant 0 : index
    %c0_59 = arith.constant 0 : index
    %110 = vector.load %arg8[%c1_57, %c0_58, %c0_59] : memref<2x1x128xf32, #tpu.memory_space<vmem>>, vector<1x1x128xf32>
    %111 = vector.shape_cast %110 : vector<1x1x128xf32> to vector<1x128xf32>
    %112 = vector.broadcast %111 : vector<1x128xf32> to vector<512x128xf32>
    %113 = arith.addf %109, %112 : vector<512x128xf32>
    %cst_60 = arith.constant 0.000000e+00 : f32
    %114 = vector.broadcast %cst_60 : f32 to vector<512x128xf32>
    %115 = arith.cmpf ogt, %113, %114 : vector<512x128xf32>
    %cst_61 = arith.constant 0.000000e+00 : f32
    %116 = vector.broadcast %cst_61 : f32 to vector<512x128xf32>
    %117 = arith.minimumf %113, %116 : vector<512x128xf32>
    %118 = math.exp %117 : vector<512x128xf32>
    %cst_62 = arith.constant 1.000000e+00 : f32
    %119 = vector.broadcast %cst_62 : f32 to vector<512x128xf32>
    %120 = arith.subf %118, %119 : vector<512x128xf32>
    %cst_63 = arith.constant 1.67326319 : f32
    %121 = vector.broadcast %cst_63 : f32 to vector<512x128xf32>
    %122 = arith.mulf %121, %120 : vector<512x128xf32>
    %123 = arith.select %115, %113, %122 : vector<512x128xi1>, vector<512x128xf32>
    %cst_64 = arith.constant 1.05070102 : f32
    %124 = vector.broadcast %cst_64 : f32 to vector<512x128xf32>
    %125 = arith.mulf %124, %123 : vector<512x128xf32>
    %c1_65 = arith.constant 1 : index
    %c0_66 = arith.constant 0 : index
    %c0_67 = arith.constant 0 : index
    %126 = vector.load %arg9[%c1_65, %c0_66, %c0_67] : memref<2x128x256xbf16, #tpu.memory_space<vmem>>, vector<1x128x256xbf16>
    %127 = vector.shape_cast %126 : vector<1x128x256xbf16> to vector<128x256xbf16>
    %128 = arith.truncf %125 : vector<512x128xf32> to vector<512x128xbf16>
    %cst_68 = arith.constant dense<0.000000e+00> : vector<512x256xf32>
    %129 = tpu.matmul %128, %127, %cst_68 {dimension_numbers = #tpu.dot_dimension_numbers<[1], [0], [0], [1], [0, 0, 1, 1], [], []>} : vector<512x128xbf16>, vector<128x256xbf16>, vector<512x256xf32> -> vector<512x256xf32>
    %c1_69 = arith.constant 1 : index
    %c0_70 = arith.constant 0 : index
    %c0_71 = arith.constant 0 : index
    %130 = vector.load %arg10[%c1_69, %c0_70, %c0_71] : memref<2x1x256xf32, #tpu.memory_space<vmem>>, vector<1x1x256xf32>
    %131 = vector.shape_cast %130 : vector<1x1x256xf32> to vector<1x256xf32>
    %132 = vector.broadcast %131 : vector<1x256xf32> to vector<512x256xf32>
    %133 = arith.addf %129, %132 : vector<512x256xf32>
    %134 = vector.extract_strided_slice %133 {offsets = [0, 0], sizes = [512, 128], strides = [1, 1]} : vector<512x256xf32> to vector<512x128xf32>
    %135 = vector.extract_strided_slice %133 {offsets = [0, 128], sizes = [512, 128], strides = [1, 1]} : vector<512x256xf32> to vector<512x128xf32>
    %cst_72 = arith.constant -5.000000e+01 : f32
    %136 = vector.broadcast %cst_72 : f32 to vector<512x128xf32>
    %137 = arith.maximumf %135, %136 : vector<512x128xf32>
    %cst_73 = arith.constant 0.000000e+00 : f32
    %138 = vector.broadcast %cst_73 : f32 to vector<512x128xf32>
    %139 = arith.subf %138, %137 : vector<512x128xf32>
    %140 = math.exp %139 : vector<512x128xf32>
    %cst_74 = arith.constant 1.000000e+00 : f32
    %141 = vector.broadcast %cst_74 : f32 to vector<512x128xf32>
    %142 = arith.addf %141, %140 : vector<512x128xf32>
    %143 = tpu.reciprocal %142 {approx = true} : vector<512x128xf32> -> vector<512x128xf32>
    %144 = math.log %142 : vector<512x128xf32>
    %cst_75 = arith.constant 0.000000e+00 : f32
    %145 = vector.broadcast %cst_75 : f32 to vector<512x128xf32>
    %146 = arith.subf %145, %144 : vector<512x128xf32>
    %147 = arith.mulf %143, %99 : vector<512x128xf32>
    %cst_76 = arith.constant 1.000000e+00 : f32
    %148 = vector.broadcast %cst_76 : f32 to vector<512x128xf32>
    %149 = arith.subf %148, %143 : vector<512x128xf32>
    %150 = arith.mulf %149, %134 : vector<512x128xf32>
    %151 = arith.addf %147, %150 : vector<512x128xf32>
    %152 = vector.broadcast %52 : vector<1x128xf32> to vector<512x128xf32>
    %153 = arith.mulf %152, %146 : vector<512x128xf32>
    %cst_77 = arith.constant dense<0.000000e+00> : vector<512xf32>
    %154 = vector.multi_reduction <add>, %153, %cst_77 [1] : vector<512x128xf32> to vector<512xf32>
    %155 = vector.shape_cast %154 : vector<512xf32> to vector<512x1xf32>
    %156 = arith.subf %104, %155 : vector<512x1xf32>
    %c32_i32 = arith.constant 32 : i32
    %157 = vector.broadcast %c32_i32 : i32 to vector<1x128xi32>
    %158 = arith.cmpi eq, %48, %157 : vector<1x128xi32>
    %cst_78 = arith.constant 0.000000e+00 : f32
    %159 = vector.shape_cast %158 : vector<1x128xi1> to vector<1x128xi1>
    %160 = vector.broadcast %159 : vector<1x128xi1> to vector<512x128xi1>
    %161 = vector.shape_cast %156 : vector<512x1xf32> to vector<512x1xf32>
    %162 = vector.broadcast %161 : vector<512x1xf32> to vector<512x128xf32>
    %163 = vector.broadcast %cst_78 : f32 to vector<512x128xf32>
    %164 = arith.select %160, %162, %163 : vector<512x128xi1>, vector<512x128xf32>
    %165 = arith.addf %105, %164 : vector<512x128xf32>
    %c0_79 = arith.constant 0 : index
    %c0_80 = arith.constant 0 : index
    %166 = vector.load %arg11[%c0_79, %c0_80] : memref<512x128xf32, #tpu.memory_space<vmem>>, vector<512x128xf32>
    tpu.vector_store %arg11[%c0_79, %c0_80], %165 {strides = array<i32>} : memref<512x128xf32, #tpu.memory_space<vmem>>, vector<512x128xf32>,
    %167 = vector.extract_strided_slice %151 {offsets = [0, 0], sizes = [512, 16], strides = [1, 1]} : vector<512x128xf32> to vector<512x16xf32>
    %c0_81 = arith.constant 0 : index
    %c0_82 = arith.constant 0 : index
    %168 = vector.load %arg12[%c0_81, %c0_82] : memref<512x16xf32, #tpu.memory_space<vmem>>, vector<512x16xf32>
    tpu.vector_store %arg12[%c0_81, %c0_82], %167 {strides = array<i32>} : memref<512x16xf32, #tpu.memory_space<vmem>>, vector<512x16xf32>,
    return
  }
  func.func @transform_0(%arg0: i32) -> (i32, i32) {
    %c0_i32 = arith.constant 0 : i32
    %c0_i32_0 = arith.constant 0 : i32
    return %arg0, %c0_i32 : i32, i32
  }
  func.func @transform_1(%arg0: i32) -> (i32, i32) {
    %c0_i32 = arith.constant 0 : i32
    %c0_i32_0 = arith.constant 0 : i32
    return %arg0, %c0_i32 : i32, i32
  }
  func.func @transform_2(%arg0: i32) -> (i32, i32) {
    %c0_i32 = arith.constant 0 : i32
    %c0_i32_0 = arith.constant 0 : i32
    %c0_i32_1 = arith.constant 0 : i32
    return %c0_i32, %c0_i32_0 : i32, i32
  }
  func.func @transform_3(%arg0: i32) -> (i32, i32) {
    %c0_i32 = arith.constant 0 : i32
    %c0_i32_0 = arith.constant 0 : i32
    %c0_i32_1 = arith.constant 0 : i32
    return %c0_i32, %c0_i32_0 : i32, i32
  }
  func.func @transform_4(%arg0: i32) -> (i32, i32) {
    %c0_i32 = arith.constant 0 : i32
    %c0_i32_0 = arith.constant 0 : i32
    %c0_i32_1 = arith.constant 0 : i32
    return %c0_i32, %c0_i32_0 : i32, i32
  }
  func.func @transform_5(%arg0: i32) -> (i32, i32) {
    %c0_i32 = arith.constant 0 : i32
    %c0_i32_0 = arith.constant 0 : i32
    %c0_i32_1 = arith.constant 0 : i32
    return %c0_i32, %c0_i32_0 : i32, i32
  }
  func.func @transform_6(%arg0: i32) -> (i32, i32, i32) {
    %c0_i32 = arith.constant 0 : i32
    %c0_i32_0 = arith.constant 0 : i32
    %c0_i32_1 = arith.constant 0 : i32
    %c0_i32_2 = arith.constant 0 : i32
    return %c0_i32, %c0_i32_0, %c0_i32_1 : i32, i32, i32
  }
  func.func @transform_7(%arg0: i32) -> (i32, i32, i32) {
    %c0_i32 = arith.constant 0 : i32
    %c0_i32_0 = arith.constant 0 : i32
    %c0_i32_1 = arith.constant 0 : i32
    %c0_i32_2 = arith.constant 0 : i32
    return %c0_i32, %c0_i32_0, %c0_i32_1 : i32, i32, i32
  }
  func.func @transform_8(%arg0: i32) -> (i32, i32, i32) {
    %c0_i32 = arith.constant 0 : i32
    %c0_i32_0 = arith.constant 0 : i32
    %c0_i32_1 = arith.constant 0 : i32
    %c0_i32_2 = arith.constant 0 : i32
    return %c0_i32, %c0_i32_0, %c0_i32_1 : i32, i32, i32
  }
  func.func @transform_9(%arg0: i32) -> (i32, i32, i32) {
    %c0_i32 = arith.constant 0 : i32
    %c0_i32_0 = arith.constant 0 : i32
    %c0_i32_1 = arith.constant 0 : i32
    %c0_i32_2 = arith.constant 0 : i32
    return %c0_i32, %c0_i32_0, %c0_i32_1 : i32, i32, i32
  }
  func.func @transform_10(%arg0: i32) -> (i32, i32) {
    %c0_i32 = arith.constant 0 : i32
    %c0_i32_0 = arith.constant 0 : i32
    return %arg0, %c0_i32 : i32, i32
  }
  func.func @transform_11(%arg0: i32) -> (i32, i32) {
    %c0_i32 = arith.constant 0 : i32
    %c0_i32_0 = arith.constant 0 : i32
    return %arg0, %c0_i32 : i32, i32
  }
}

</mosaic_0001>

<llo_original>
// kernel: tpu_custom_call.1
$region0: #{tpu_custom_call.1}
  #allocation0 [shape = 'u32[]', space=smem, size = 0x4, offset = 0x4, fixed_abs, tag = 'smem constant byte address 0x4 - core index']
  #allocation1 [shape = 'u32[144,128]{1,0:T(1,128)}', space=vmem, size = 0x12000, scoped, tag = 'internal scratch']
  #allocation2 [shape = 'f32[512,128]{1,0:T(8,128)}', space=vmem, size = 0x40000, scoped, tag = 'scratch operand']
  %s0 = inlined_call_operand.vmem [shape: f32[1024,128], index: 0, kind: input, shape index: {}]
  %s1 = inlined_call_operand.vmem [shape: f32[1024,16], index: 1, kind: input, shape index: {}]
  %s2 = inlined_call_operand.hbm [shape: bf16[128,128], index: 2, kind: input, shape index: {}]
  %s3 = inlined_call_operand.hbm [shape: f32[1,128], index: 3, kind: input, shape index: {}]
  %s4 = inlined_call_operand.hbm [shape: bf16[128,384], index: 4, kind: input, shape index: {}]
  %s5 = inlined_call_operand.hbm [shape: f32[1,384], index: 5, kind: input, shape index: {}]
  %s6 = inlined_call_operand.vmem [shape: bf16[2,128,128], index: 6, kind: input, shape index: {}]
  %s7 = inlined_call_operand.vmem [shape: f32[2,1,128], index: 7, kind: input, shape index: {}]
  %s8 = inlined_call_operand.hbm [shape: bf16[2,128,256], index: 8, kind: input, shape index: {}]
  %s9 = inlined_call_operand.vmem [shape: f32[2,1,256], index: 9, kind: input, shape index: {}]
  %s10 = inlined_call_operand.hbm [shape: f32[1024,128], index: 10, kind: output, shape index: {0}]
  %s11 = inlined_call_operand.vmem [shape: f32[1024,16], index: 11, kind: output, shape index: {1}]
  %12 = xla_tuple %s10, %s11
  %s13 = sld [smem:[#allocation0]]
  $region101: #{tpu_custom_call.1} parent=0
    _
  %s15 = ssub.s32 1, %s13
  %s16 = scalar_select 0, %s15, %s13
  $region1: #{tpu_custom_call.1} parent=0
    #allocation3 [shape = 'u8[32768]{0}', space=vmem, size = 0x8000, scoped, tag = 'input window, operand 2, single buffered']
    #allocation4 [shape = 's32[2]{0}', space=sflag, size = 0x8, scoped, tag = 'scoped memory for tpu_custom_call.1']
    #allocation5 [shape = 's32[2]{0}', space=sflag, size = 0x8, scoped, tag = 'scoped memory for tpu_custom_call.1']
    #allocation6 [shape = 'u8[512]{0}', space=vmem, size = 0x400, scoped, tag = 'input window, operand 3, single buffered']
    #allocation7 [shape = 's32[1]{0}', space=sflag, size = 0x4, scoped, tag = 'scoped memory for tpu_custom_call.1']
    #allocation8 [shape = 'u8[98304]{0}', space=vmem, size = 0x18000, scoped, tag = 'input window, operand 4, single buffered']
    #allocation9 [shape = 'u8[1536]{0}', space=vmem, size = 0x800, scoped, tag = 'input window, operand 5, single buffered']
    #allocation10 [shape = 's32[1]{0}', space=sflag, size = 0x4, scoped, tag = 'scoped memory for tpu_custom_call.1']
    #allocation11 [shape = 'u8[131072]{0}', space=vmem, size = 0x20000, scoped, tag = 'input window, operand 8, single buffered']
    #allocation12 [shape = 'u8[524288]{0}', space=vmem, size = 0x80000, scoped, tag = 'output window, operand 0']
    %17 = vsyncpa [#allocation4], 0
    %18 = vsyncpa [#allocation7], 0
    %19 = vsyncpa [#allocation10], 0
    %20 = vsyncpa [#allocation5], 0
    %s21 = scalar_lea.sflag [#allocation5], 1
    %22 = vsyncpa %s21, 0
    loop: start=0, step=1, limit=4
    $region2: #{tpu_custom_call.1} parent=1 // loop_pre_header
      _
    $region3: #{tpu_custom_call.1} parent=1 // loop_header
      %s24 = sphi 0, %s28
      %p25 = scmp.ge.s32.totalorder %s24, 4
      %s34 = sphi 0, %s36
      %s37 = sphi 0, %s34
      %s38 = sphi 0, %s37
      %s54 = sphi 0, %s38
      %s60 = sphi 0, %s62
      %s63 = sphi 0, %s60
      %s64 = sphi 0, %s63
      %s80 = sphi 0, %s64
      %s84 = sphi 0, %s84
      %s86 = sphi 0, %s84
      %s87 = sphi 0, %s86
      %s101 = sphi 0, %s87
      %s105 = sphi 0, %s105
      %s107 = sphi 0, %s105
      %s108 = sphi 0, %s107
      %s122 = sphi 0, %s108
      %s126 = sphi 0, %s126
      %s128 = sphi 0, %s126
      %s129 = sphi 0, %s128
      %s143 = sphi 0, %s129
      %s147 = sphi 0, %s147
      %s149 = sphi 0, %s147
      %s150 = sphi 0, %s149
      %s164 = sphi 0, %s150
      %s168 = sphi 0, %s168
      %s170 = sphi 0, %s168
      %s171 = sphi 0, %s170
      %s185 = sphi 0, %s171
      %s189 = sphi 0, %s189
      %s191 = sphi 0, %s189
      %s192 = sphi 0, %s191
      %s206 = sphi 0, %s192
      %s210 = sphi 0, %s210
      %s212 = sphi 0, %s210
      %s213 = sphi 0, %s212
      %s227 = sphi 0, %s213
      %s231 = sphi 0, %s231
      %s233 = sphi 0, %s231
      %s234 = sphi 0, %s233
      %s248 = sphi 0, %s234
      %s254 = sphi 0, %s256
      %s257 = sphi 0, %s254
      %s258 = sphi 0, %s257
      %s274 = sphi 0, %s258
      %s280 = sphi 0, %s282
      %s283 = sphi 0, %s280
      %s284 = sphi 0, %s283
      %s300 = sphi 0, %s284
    $region4: #{tpu_custom_call.1} parent=1 // loop_header_branch
      %27 = sbr.rel (%p25) target = $region8
    $region5: #{tpu_custom_call.1} parent=1 // loop_body
      %s29 = ssub.s32 %s24, 1
      %s30 = ssub.s32 %s24, 2
      %s31 = sadd.s32 %s24, 1
      %s32 = ssub.s32 %s24, %s31
      %p33 = scmp.eq.s32.totalorder %s32, 0
      %s35 = sadd.s32 %s34, 1
      %s36 = scalar_select %p33, %s34, %s35
      %p39 = pneg %p33
      %p40 = scmp.eq.s32.totalorder %s24, 1
      %p41 = por %p39, %p40
      %p42 = scmp.ne.s32.totalorder %s34, %s37
      %p43 = scmp.eq.s32.totalorder %s24, 0
      %p44 = por %p42, %p43
      %p45 = scmp.ne.s32.totalorder %s34, %s37
      %p46 = scmp.eq.s32.totalorder %s29, 1
      %p47 = por %p45, %p46
      %p48 = scmp.ne.s32.totalorder %s37, %s38
      %p49 = scmp.eq.s32.totalorder %s29, 0
      %p50 = por %p48, %p49
      %p51 = scmp.ne.s32.totalorder %s37, %s38
      %p52 = scmp.eq.s32.totalorder %s30, 1
      %p53 = por %p51, %p52
      %p55 = scmp.ne.s32.totalorder %s38, %s54
      %p56 = scmp.eq.s32.totalorder %s30, 0
      %p57 = por %p55, %p56
      %s58 = ssub.s32 %s24, %s31
      %p59 = scmp.eq.s32.totalorder %s58, 0
      %s61 = sadd.s32 %s60, 1
      %s62 = scalar_select %p59, %s60, %s61
      %p65 = pneg %p59
      %p66 = scmp.eq.s32.totalorder %s24, 1
      %p67 = por %p65, %p66
      %p68 = scmp.ne.s32.totalorder %s60, %s63
      %p69 = scmp.eq.s32.totalorder %s24, 0
      %p70 = por %p68, %p69
      %p71 = scmp.ne.s32.totalorder %s60, %s63
      %p72 = scmp.eq.s32.totalorder %s29, 1
      %p73 = por %p71, %p72
      %p74 = scmp.ne.s32.totalorder %s63, %s64
      %p75 = scmp.eq.s32.totalorder %s29, 0
      %p76 = por %p74, %p75
      %p77 = scmp.ne.s32.totalorder %s63, %s64
      %p78 = scmp.eq.s32.totalorder %s30, 1
      %p79 = por %p77, %p78
      %p81 = scmp.ne.s32.totalorder %s64, %s80
      %p82 = scmp.eq.s32.totalorder %s30, 0
      %p83 = por %p81, %p82
      %s85 = sadd.s32 %s84, 1
      %p88 = scmp.eq.s32.totalorder %s24, 1
      %p89 = scmp.ne.s32.totalorder %s84, %s86
      %p90 = scmp.eq.s32.totalorder %s24, 0
      %p91 = por %p89, %p90
      %p92 = scmp.ne.s32.totalorder %s84, %s86
      %p93 = scmp.eq.s32.totalorder %s29, 1
      %p94 = por %p92, %p93
      %p95 = scmp.ne.s32.totalorder %s86, %s87
      %p96 = scmp.eq.s32.totalorder %s29, 0
      %p97 = por %p95, %p96
      %p98 = scmp.ne.s32.totalorder %s86, %s87
      %p99 = scmp.eq.s32.totalorder %s30, 1
      %p100 = por %p98, %p99
      %p102 = scmp.ne.s32.totalorder %s87, %s101
      %p103 = scmp.eq.s32.totalorder %s30, 0
      %p104 = por %p102, %p103
      %s106 = sadd.s32 %s105, 1
      %p109 = scmp.eq.s32.totalorder %s24, 1
      %p110 = scmp.ne.s32.totalorder %s105, %s107
      %p111 = scmp.eq.s32.totalorder %s24, 0
      %p112 = por %p110, %p111
      %p113 = scmp.ne.s32.totalorder %s105, %s107
      %p114 = scmp.eq.s32.totalorder %s29, 1
      %p115 = por %p113, %p114
      %p116 = scmp.ne.s32.totalorder %s107, %s108
      %p117 = scmp.eq.s32.totalorder %s29, 0
      %p118 = por %p116, %p117
      %p119 = scmp.ne.s32.totalorder %s107, %s108
      %p120 = scmp.eq.s32.totalorder %s30, 1
      %p121 = por %p119, %p120
      %p123 = scmp.ne.s32.totalorder %s108, %s122
      %p124 = scmp.eq.s32.totalorder %s30, 0
      %p125 = por %p123, %p124
      %s127 = sadd.s32 %s126, 1
      %p130 = scmp.eq.s32.totalorder %s24, 1
      %p131 = scmp.ne.s32.totalorder %s126, %s128
      %p132 = scmp.eq.s32.totalorder %s24, 0
      %p133 = por %p131, %p132
      %p134 = scmp.ne.s32.totalorder %s126, %s128
      %p135 = scmp.eq.s32.totalorder %s29, 1
      %p136 = por %p134, %p135
      %p137 = scmp.ne.s32.totalorder %s128, %s129
      %p138 = scmp.eq.s32.totalorder %s29, 0
      %p139 = por %p137, %p138
      %p140 = scmp.ne.s32.totalorder %s128, %s129
      %p141 = scmp.eq.s32.totalorder %s30, 1
      %p142 = por %p140, %p141
      %p144 = scmp.ne.s32.totalorder %s129, %s143
      %p145 = scmp.eq.s32.totalorder %s30, 0
      %p146 = por %p144, %p145
      %s148 = sadd.s32 %s147, 1
      %p151 = scmp.eq.s32.totalorder %s24, 1
      %p152 = scmp.ne.s32.totalorder %s147, %s149
      %p153 = scmp.eq.s32.totalorder %s24, 0
      %p154 = por %p152, %p153
      %p155 = scmp.ne.s32.totalorder %s147, %s149
      %p156 = scmp.eq.s32.totalorder %s29, 1
      %p157 = por %p155, %p156
      %p158 = scmp.ne.s32.totalorder %s149, %s150
      %p159 = scmp.eq.s32.totalorder %s29, 0
      %p160 = por %p158, %p159
      %p161 = scmp.ne.s32.totalorder %s149, %s150
      %p162 = scmp.eq.s32.totalorder %s30, 1
      %p163 = por %p161, %p162
      %p165 = scmp.ne.s32.totalorder %s150, %s164
      %p166 = scmp.eq.s32.totalorder %s30, 0
      %p167 = por %p165, %p166
      %s169 = sadd.s32 %s168, 1
      %p172 = scmp.eq.s32.totalorder %s24, 1
      %p173 = scmp.ne.s32.totalorder %s168, %s170
      %p174 = scmp.eq.s32.totalorder %s24, 0
      %p175 = por %p173, %p174
      %p176 = scmp.ne.s32.totalorder %s168, %s170
      %p177 = scmp.eq.s32.totalorder %s29, 1
      %p178 = por %p176, %p177
      %p179 = scmp.ne.s32.totalorder %s170, %s171
      %p180 = scmp.eq.s32.totalorder %s29, 0
      %p181 = por %p179, %p180
      %p182 = scmp.ne.s32.totalorder %s170, %s171
      %p183 = scmp.eq.s32.totalorder %s30, 1
      %p184 = por %p182, %p183
      %p186 = scmp.ne.s32.totalorder %s171, %s185
      %p187 = scmp.eq.s32.totalorder %s30, 0
      %p188 = por %p186, %p187
      %s190 = sadd.s32 %s189, 1
      %p193 = scmp.eq.s32.totalorder %s24, 1
      %p194 = scmp.ne.s32.totalorder %s189, %s191
      %p195 = scmp.eq.s32.totalorder %s24, 0
      %p196 = por %p194, %p195
      %p197 = scmp.ne.s32.totalorder %s189, %s191
      %p198 = scmp.eq.s32.totalorder %s29, 1
      %p199 = por %p197, %p198
      %p200 = scmp.ne.s32.totalorder %s191, %s192
      %p201 = scmp.eq.s32.totalorder %s29, 0
      %p202 = por %p200, %p201
      %p203 = scmp.ne.s32.totalorder %s191, %s192
      %p204 = scmp.eq.s32.totalorder %s30, 1
      %p205 = por %p203, %p204
      %p207 = scmp.ne.s32.totalorder %s192, %s206
      %p208 = scmp.eq.s32.totalorder %s30, 0
      %p209 = por %p207, %p208
      %s211 = sadd.s32 %s210, 1
      %p214 = scmp.eq.s32.totalorder %s24, 1
      %p215 = scmp.ne.s32.totalorder %s210, %s212
      %p216 = scmp.eq.s32.totalorder %s24, 0
      %p217 = por %p215, %p216
      %p218 = scmp.ne.s32.totalorder %s210, %s212
      %p219 = scmp.eq.s32.totalorder %s29, 1
      %p220 = por %p218, %p219
      %p221 = scmp.ne.s32.totalorder %s212, %s213
      %p222 = scmp.eq.s32.totalorder %s29, 0
      %p223 = por %p221, %p222
      %p224 = scmp.ne.s32.totalorder %s212, %s213
      %p225 = scmp.eq.s32.totalorder %s30, 1
      %p226 = por %p224, %p225
      %p228 = scmp.ne.s32.totalorder %s213, %s227
      %p229 = scmp.eq.s32.totalorder %s30, 0
      %p230 = por %p228, %p229
      %s232 = sadd.s32 %s231, 1
      %p235 = scmp.eq.s32.totalorder %s24, 1
      %p236 = scmp.ne.s32.totalorder %s231, %s233
      %p237 = scmp.eq.s32.totalorder %s24, 0
      %p238 = por %p236, %p237
      %p239 = scmp.ne.s32.totalorder %s231, %s233
      %p240 = scmp.eq.s32.totalorder %s29, 1
      %p241 = por %p239, %p240
      %p242 = scmp.ne.s32.totalorder %s233, %s234
      %p243 = scmp.eq.s32.totalorder %s29, 0
      %p244 = por %p242, %p243
      %p245 = scmp.ne.s32.totalorder %s233, %s234
      %p246 = scmp.eq.s32.totalorder %s30, 1
      %p247 = por %p245, %p246
      %p249 = scmp.ne.s32.totalorder %s234, %s248
      %p250 = scmp.eq.s32.totalorder %s30, 0
      %p251 = por %p249, %p250
      %s252 = ssub.s32 %s24, %s31
      %p253 = scmp.eq.s32.totalorder %s252, 0
      %s255 = sadd.s32 %s254, 1
      %s256 = scalar_select %p253, %s254, %s255
      %p259 = pneg %p253
      %p260 = scmp.eq.s32.totalorder %s24, 1
      %p261 = por %p259, %p260
      %p262 = scmp.ne.s32.totalorder %s254, %s257
      %p263 = scmp.eq.s32.totalorder %s24, 0
      %p264 = por %p262, %p263
      %p265 = scmp.ne.s32.totalorder %s254, %s257
      %p266 = scmp.eq.s32.totalorder %s29, 1
      %p267 = por %p265, %p266
      %p268 = scmp.ne.s32.totalorder %s257, %s258
      %p269 = scmp.eq.s32.totalorder %s29, 0
      %p270 = por %p268, %p269
      %p271 = scmp.ne.s32.totalorder %s257, %s258
      %p272 = scmp.eq.s32.totalorder %s30, 1
      %p273 = por %p271, %p272
      %p275 = scmp.ne.s32.totalorder %s258, %s274
      %p276 = scmp.eq.s32.totalorder %s30, 0
      %p277 = por %p275, %p276
      %s278 = ssub.s32 %s24, %s31
      %p279 = scmp.eq.s32.totalorder %s278, 0
      %s281 = sadd.s32 %s280, 1
      %s282 = scalar_select %p279, %s280, %s281
      %p285 = pneg %p279
      %p286 = scmp.eq.s32.totalorder %s24, 1
      %p287 = por %p285, %p286
      %p288 = scmp.ne.s32.totalorder %s280, %s283
      %p289 = scmp.eq.s32.totalorder %s24, 0
      %p290 = por %p288, %p289
      %p291 = scmp.ne.s32.totalorder %s280, %s283
      %p292 = scmp.eq.s32.totalorder %s29, 1
      %p293 = por %p291, %p292
      %p294 = scmp.ne.s32.totalorder %s283, %s284
      %p295 = scmp.eq.s32.totalorder %s29, 0
      %p296 = por %p294, %p295
      %p297 = scmp.ne.s32.totalorder %s283, %s284
      %p298 = scmp.eq.s32.totalorder %s30, 1
      %p299 = por %p297, %p298
      %p301 = scmp.ne.s32.totalorder %s284, %s300
      %p302 = scmp.eq.s32.totalorder %s30, 0
      %p303 = por %p301, %p302
      %p304 = scmp.le.s32.totalorder 1, %s24
      %p305 = scmp.lt.s32.totalorder %s24, 3
      %p306 = pnand %p304, %p305
      %p307 = pneg %p306
      // Predicated region
      $region9: #{tpu_custom_call.1} parent=5 // pred_check
        _
      $region10: #{tpu_custom_call.1} parent=5 // pred_check_branch
        %309 = sbr.rel (%p306) target = $region12
      $region11: #{tpu_custom_call.1} parent=5 // pred_region
        %s310 = ssub.s32 %s24, 1
        // Predicated region
        $region13: #{tpu_custom_call.1} parent=11 // pred_check
          %p311 = pneg %p97
        $region14: #{tpu_custom_call.1} parent=11 // pred_check_branch
          %313 = sbr.rel (%p311) target = $region16
        $region15: #{tpu_custom_call.1} parent=11 // pred_region
          %s315 = ssub.s32 1024, 1024
          %316 = vsyncadd [#allocation4], %s315
          %s317 = sshll.u32 [#allocation3], 4
          %s318 = int_to_ptr.vmem [resolvable:$true] %s317
          %323 = dma.hbm_to_vmem [thread:$0]  %s2, 1024, %s318, [#allocation4], 64, 64, 4
        $region16: #{tpu_custom_call.1} parent=11 // pred_fallthru
          _
        // Predicated region
        $region17: #{tpu_custom_call.1} parent=11 // pred_check
          %p324 = pneg %p118
        $region18: #{tpu_custom_call.1} parent=11 // pred_check_branch
          %326 = sbr.rel (%p324) target = $region20
        $region19: #{tpu_custom_call.1} parent=11 // pred_region
          %s328 = ssub.s32 16, 16
          %329 = vsyncadd [#allocation7], %s328
          %s331 = sshll.u32 [#allocation6], 4
          %s332 = int_to_ptr.vmem [resolvable:$true] %s331
          %334 = dma.hbm_to_vmem [thread:$0]  %s3, 16, %s332, [#allocation7]
        $region20: #{tpu_custom_call.1} parent=11 // pred_fallthru
          _
        // Predicated region
        $region21: #{tpu_custom_call.1} parent=11 // pred_check
          %p335 = pneg %p139
        $region22: #{tpu_custom_call.1} parent=11 // pred_check_branch
          %337 = sbr.rel (%p335) target = $region24
        $region23: #{tpu_custom_call.1} parent=11 // pred_region
          %s339 = ssub.s32 3072, 3072
          %340 = vsyncadd [#allocation7], %s339
          %s341 = sshll.u32 [#allocation8], 4
          %s342 = int_to_ptr.vmem [resolvable:$true] %s341
          %347 = dma.hbm_to_vmem [thread:$0]  %s4, 3072, %s342, [#allocation7], 192, 192, 12
        $region24: #{tpu_custom_call.1} parent=11 // pred_fallthru
          _
        // Predicated region
        $region25: #{tpu_custom_call.1} parent=11 // pred_check
          %p348 = pneg %p160
        $region26: #{tpu_custom_call.1} parent=11 // pred_check_branch
          %350 = sbr.rel (%p348) target = $region28
        $region27: #{tpu_custom_call.1} parent=11 // pred_region
          %s352 = ssub.s32 48, 48
          %353 = vsyncadd [#allocation10], %s352
          %s355 = sshll.u32 [#allocation9], 4
          %s356 = int_to_ptr.vmem [resolvable:$true] %s355
          %358 = dma.hbm_to_vmem [thread:$0]  %s5, 48, %s356, [#allocation10]
        $region28: #{tpu_custom_call.1} parent=11 // pred_fallthru
          _
        // Predicated region
        $region29: #{tpu_custom_call.1} parent=11 // pred_check
          %p359 = pneg %p181
        $region30: #{tpu_custom_call.1} parent=11 // pred_check_branch
          %361 = sbr.rel (%p359) target = $region32
        $region31: #{tpu_custom_call.1} parent=11 // pred_region
          _
        $region32: #{tpu_custom_call.1} parent=11 // pred_fallthru
          _
        // Predicated region
        $region33: #{tpu_custom_call.1} parent=11 // pred_check
          %p362 = pneg %p202
        $region34: #{tpu_custom_call.1} parent=11 // pred_check_branch
          %364 = sbr.rel (%p362) target = $region36
        $region35: #{tpu_custom_call.1} parent=11 // pred_region
          _
        $region36: #{tpu_custom_call.1} parent=11 // pred_fallthru
          _
        // Predicated region
        $region37: #{tpu_custom_call.1} parent=11 // pred_check
          %p365 = pneg %p223
        $region38: #{tpu_custom_call.1} parent=11 // pred_check_branch
          %367 = sbr.rel (%p365) target = $region40
        $region39: #{tpu_custom_call.1} parent=11 // pred_region
          %s369 = ssub.s32 4096, 4096
          %370 = vsyncadd [#allocation10], %s369
          %s371 = sshll.u32 [#allocation11], 4
          %s372 = int_to_ptr.vmem [resolvable:$true] %s371
          %377 = dma.hbm_to_vmem [thread:$0]  %s8, 4096, %s372, [#allocation10], 128, 128, 8
        $region40: #{tpu_custom_call.1} parent=11 // pred_fallthru
          _
        // Predicated region
        $region41: #{tpu_custom_call.1} parent=11 // pred_check
          %p378 = pneg %p244
        $region42: #{tpu_custom_call.1} parent=11 // pred_check_branch
          %380 = sbr.rel (%p378) target = $region44
        $region43: #{tpu_custom_call.1} parent=11 // pred_region
          _
        $region44: #{tpu_custom_call.1} parent=11 // pred_fallthru
          _
      $region12: #{tpu_custom_call.1} parent=5 // pred_fallthru
        _
      %p381 = scmp.lt.s32.totalorder %s24, 2
      // Predicated region
      $region45: #{tpu_custom_call.1} parent=5 // pred_check
        %p382 = pneg %p381
      $region46: #{tpu_custom_call.1} parent=5 // pred_check_branch
        %384 = sbr.rel (%p382) target = $region48
      $region47: #{tpu_custom_call.1} parent=5 // pred_region
        // Predicated region
        $region49: #{tpu_custom_call.1} parent=47 // pred_check
          %p385 = pneg %p44
        $region50: #{tpu_custom_call.1} parent=47 // pred_check_branch
          %387 = sbr.rel (%p385) target = $region52
        $region51: #{tpu_custom_call.1} parent=47 // pred_region
          %s388 = smul.u32 64, %s24
          %p389 = scmp.lt.s32.totalorder %s388, 127
          %s390 = scalar_select %p389, %s388, 127
          %s391 = smul.addr %s390, 8
          %s392 = scalar_lea.vmem %s0, %s391
          %s393 = smul.u32 64, %s24
        $region52: #{tpu_custom_call.1} parent=47 // pred_fallthru
          _
        // Predicated region
        $region53: #{tpu_custom_call.1} parent=47 // pred_check
          %p394 = pneg %p70
        $region54: #{tpu_custom_call.1} parent=47 // pred_check_branch
          %396 = sbr.rel (%p394) target = $region56
        $region55: #{tpu_custom_call.1} parent=47 // pred_region
          %s397 = smul.u32 64, %s24
          %p398 = scmp.lt.s32.totalorder %s397, 127
          %s399 = scalar_select %p398, %s397, 127
          %s400 = smul.addr %s399, 8
          %s401 = scalar_lea.vmem %s1, %s400
          %s402 = smul.u32 64, %s24
        $region56: #{tpu_custom_call.1} parent=47 // pred_fallthru
          _
      $region48: #{tpu_custom_call.1} parent=5 // pred_fallthru
        _
      %p403 = scmp.le.s32.totalorder 1, %s24
      %p404 = scmp.lt.s32.totalorder %s24, 3
      %p405 = pnand %p403, %p404
      %p406 = pneg %p405
      // Predicated region
      $region57: #{tpu_custom_call.1} parent=5 // pred_check
        _
      $region58: #{tpu_custom_call.1} parent=5 // pred_check_branch
        %408 = sbr.rel (%p405) target = $region60
      $region59: #{tpu_custom_call.1} parent=5 // pred_region
        %s409 = ssub.s32 %s24, 1
        // Predicated region
        $region61: #{tpu_custom_call.1} parent=59 // pred_check
          %p410 = pneg %p97
        $region62: #{tpu_custom_call.1} parent=59 // pred_check_branch
          %412 = sbr.rel (%p410) target = $region64
        $region63: #{tpu_custom_call.1} parent=59 // pred_region
          %413 = dma.done [#allocation4], 1024
        $region64: #{tpu_custom_call.1} parent=59 // pred_fallthru
          _
        // Predicated region
        $region65: #{tpu_custom_call.1} parent=59 // pred_check
          %p414 = pneg %p118
        $region66: #{tpu_custom_call.1} parent=59 // pred_check_branch
          %416 = sbr.rel (%p414) target = $region68
        $region67: #{tpu_custom_call.1} parent=59 // pred_region
          %417 = dma.done [#allocation7], 16
        $region68: #{tpu_custom_call.1} parent=59 // pred_fallthru
          _
        // Predicated region
        $region69: #{tpu_custom_call.1} parent=59 // pred_check
          %p418 = pneg %p139
        $region70: #{tpu_custom_call.1} parent=59 // pred_check_branch
          %420 = sbr.rel (%p418) target = $region72
        $region71: #{tpu_custom_call.1} parent=59 // pred_region
          %421 = dma.done [#allocation7], 3072
        $region72: #{tpu_custom_call.1} parent=59 // pred_fallthru
          _
        // Predicated region
        $region73: #{tpu_custom_call.1} parent=59 // pred_check
          %p422 = pneg %p160
        $region74: #{tpu_custom_call.1} parent=59 // pred_check_branch
          %424 = sbr.rel (%p422) target = $region76
        $region75: #{tpu_custom_call.1} parent=59 // pred_region
          %425 = dma.done [#allocation10], 48
        $region76: #{tpu_custom_call.1} parent=59 // pred_fallthru
          _
        // Predicated region
        $region77: #{tpu_custom_call.1} parent=59 // pred_check
          %p426 = pneg %p223
        $region78: #{tpu_custom_call.1} parent=59 // pred_check_branch
          %428 = sbr.rel (%p426) target = $region80
        $region79: #{tpu_custom_call.1} parent=59 // pred_region
          %429 = dma.done [#allocation10], 4096
        $region80: #{tpu_custom_call.1} parent=59 // pred_fallthru
          _
        %s430 = smul.u32 64, %s29
        %p431 = scmp.lt.s32.totalorder %s430, 127
        %s432 = scalar_select %p431, %s430, 127
        %s433 = smul.addr %s432, 8
        %s434 = scalar_lea.vmem %s0, %s433
        %p435 = pneg %p50
        %p436 = pneg %p47
        %s437 = smul.u32 64, %s29
        %p438 = scmp.lt.s32.totalorder %s437, 127
        %s439 = scalar_select %p438, %s437, 127
        %s440 = smul.addr %s439, 8
        %s441 = scalar_lea.vmem %s1, %s440
        %p442 = pneg %p76
        %p443 = pneg %p73
        %p444 = pneg %p97
        %p445 = pneg %p94
        %p446 = pneg %p118
        %p447 = pneg %p115
        %p448 = pneg %p139
        %p449 = pneg %p136
        %p450 = pneg %p160
        %p451 = pneg %p157
        %p452 = pneg %p181
        %p453 = pneg %p178
        %p454 = pneg %p202
        %p455 = pneg %p199
        %p456 = pneg %p223
        %p457 = pneg %p220
        %p458 = pneg %p244
        %p459 = pneg %p241
        %p460 = pneg %p270
        %p461 = pneg %p267
        %s462 = sand.u32 %s257, 1
        %s463 = scalar_lea.sflag [#allocation5], %s462
        %s464 = sand.u32 %s257, 1
        %s465 = smul.addr %s464, 512
        %s466 = scalar_lea.vmem [#allocation12], %s465
        %p467 = pneg %p296
        %p468 = pneg %p293
        %s469 = smul.u32 64, %s29
        %p470 = scmp.lt.s32.totalorder %s469, 127
        %s471 = scalar_select %p470, %s469, 127
        %s472 = smul.addr %s471, 8
        %s473 = scalar_lea.vmem %s11, %s472
        %s474 = smul.u32 64, %s29
        %p475 = scmp.lt.s32.totalorder %s474, 127
        %s476 = scalar_select %p475, %s474, 127
        %s477 = smul.addr %s476, 8
        %s478 = scalar_lea.vmem %s0, %s477
        %s479 = smul.u32 64, %s29
        %s480 = smul.u32 64, %s29
        %p481 = scmp.lt.s32.totalorder %s480, 127
        %s482 = scalar_select %p481, %s480, 127
        %s483 = smul.addr %s482, 8
        %s484 = scalar_lea.vmem %s1, %s483
        %s485 = smul.u32 64, %s29
        %s486 = smul.u32 64, %s29
        %s487 = smul.u32 64, %s29
        %p488 = scmp.lt.s32.totalorder %s487, 127
        %s489 = scalar_select %p488, %s487, 127
        %s490 = smul.addr %s489, 8
        %s491 = scalar_lea.vmem %s11, %s490
        %s492 = smul.u32 64, %s29
        %494 = vst [vmem:[#allocation2] sm:$0xff] 0.0
        %495 = vst [vmem:[#allocation2 + $0x8] sm:$0xff] 0.0
        %496 = vst [vmem:[#allocation2 + $0x10] sm:$0xff] 0.0
        %497 = vst [vmem:[#allocation2 + $0x18] sm:$0xff] 0.0
        %498 = vst [vmem:[#allocation2 + $0x20] sm:$0xff] 0.0
        %499 = vst [vmem:[#allocation2 + $0x28] sm:$0xff] 0.0
        %500 = vst [vmem:[#allocation2 + $0x30] sm:$0xff] 0.0
        %501 = vst [vmem:[#allocation2 + $0x38] sm:$0xff] 0.0
        %502 = vst [vmem:[#allocation2 + $0x40] sm:$0xff] 0.0
        %503 = vst [vmem:[#allocation2 + $0x48] sm:$0xff] 0.0
        %504 = vst [vmem:[#allocation2 + $0x50] sm:$0xff] 0.0
        %505 = vst [vmem:[#allocation2 + $0x58] sm:$0xff] 0.0
        %506 = vst [vmem:[#allocation2 + $0x60] sm:$0xff] 0.0
        %507 = vst [vmem:[#allocation2 + $0x68] sm:$0xff] 0.0
        %508 = vst [vmem:[#allocation2 + $0x70] sm:$0xff] 0.0
        %509 = vst [vmem:[#allocation2 + $0x78] sm:$0xff] 0.0
        %510 = vst [vmem:[#allocation2 + $0x80] sm:$0xff] 0.0
        %511 = vst [vmem:[#allocation2 + $0x88] sm:$0xff] 0.0
        %512 = vst [vmem:[#allocation2 + $0x90] sm:$0xff] 0.0
        %513 = vst [vmem:[#allocation2 + $0x98] sm:$0xff] 0.0
        %514 = vst [vmem:[#allocation2 + $0xa0] sm:$0xff] 0.0
        %515 = vst [vmem:[#allocation2 + $0xa8] sm:$0xff] 0.0
        %516 = vst [vmem:[#allocation2 + $0xb0] sm:$0xff] 0.0
        %517 = vst [vmem:[#allocation2 + $0xb8] sm:$0xff] 0.0
        %518 = vst [vmem:[#allocation2 + $0xc0] sm:$0xff] 0.0
        %519 = vst [vmem:[#allocation2 + $0xc8] sm:$0xff] 0.0
        %520 = vst [vmem:[#allocation2 + $0xd0] sm:$0xff] 0.0
        %521 = vst [vmem:[#allocation2 + $0xd8] sm:$0xff] 0.0
        %522 = vst [vmem:[#allocation2 + $0xe0] sm:$0xff] 0.0
        %523 = vst [vmem:[#allocation2 + $0xe8] sm:$0xff] 0.0
        %524 = vst [vmem:[#allocation2 + $0xf0] sm:$0xff] 0.0
        %525 = vst [vmem:[#allocation2 + $0xf8] sm:$0xff] 0.0
        %526 = vst [vmem:[#allocation2 + $0x100] sm:$0xff] 0.0
        %527 = vst [vmem:[#allocation2 + $0x108] sm:$0xff] 0.0
        %528 = vst [vmem:[#allocation2 + $0x110] sm:$0xff] 0.0
        %529 = vst [vmem:[#allocation2 + $0x118] sm:$0xff] 0.0
        %530 = vst [vmem:[#allocation2 + $0x120] sm:$0xff] 0.0
        %531 = vst [vmem:[#allocation2 + $0x128] sm:$0xff] 0.0
        %532 = vst [vmem:[#allocation2 + $0x130] sm:$0xff] 0.0
        %533 = vst [vmem:[#allocation2 + $0x138] sm:$0xff] 0.0
        %534 = vst [vmem:[#allocation2 + $0x140] sm:$0xff] 0.0
        %535 = vst [vmem:[#allocation2 + $0x148] sm:$0xff] 0.0
        %536 = vst [vmem:[#allocation2 + $0x150] sm:$0xff] 0.0
        %537 = vst [vmem:[#allocation2 + $0x158] sm:$0xff] 0.0
        %538 = vst [vmem:[#allocation2 + $0x160] sm:$0xff] 0.0
        %539 = vst [vmem:[#allocation2 + $0x168] sm:$0xff] 0.0
        %540 = vst [vmem:[#allocation2 + $0x170] sm:$0xff] 0.0
        %541 = vst [vmem:[#allocation2 + $0x178] sm:$0xff] 0.0
        %542 = vst [vmem:[#allocation2 + $0x180] sm:$0xff] 0.0
        %543 = vst [vmem:[#allocation2 + $0x188] sm:$0xff] 0.0
        %544 = vst [vmem:[#allocation2 + $0x190] sm:$0xff] 0.0
        %545 = vst [vmem:[#allocation2 + $0x198] sm:$0xff] 0.0
        %546 = vst [vmem:[#allocation2 + $0x1a0] sm:$0xff] 0.0
        %547 = vst [vmem:[#allocation2 + $0x1a8] sm:$0xff] 0.0
        %548 = vst [vmem:[#allocation2 + $0x1b0] sm:$0xff] 0.0
        %549 = vst [vmem:[#allocation2 + $0x1b8] sm:$0xff] 0.0
        %550 = vst [vmem:[#allocation2 + $0x1c0] sm:$0xff] 0.0
        %551 = vst [vmem:[#allocation2 + $0x1c8] sm:$0xff] 0.0
        %552 = vst [vmem:[#allocation2 + $0x1d0] sm:$0xff] 0.0
        %553 = vst [vmem:[#allocation2 + $0x1d8] sm:$0xff] 0.0
        %554 = vst [vmem:[#allocation2 + $0x1e0] sm:$0xff] 0.0
        %555 = vst [vmem:[#allocation2 + $0x1e8] sm:$0xff] 0.0
        %556 = vst [vmem:[#allocation2 + $0x1f0] sm:$0xff] 0.0
        %557 = vst [vmem:[#allocation2 + $0x1f8] sm:$0xff] 0.0
        %v558 = vld [vmem:[%s484] sm:$0xff]
        %v559 = vld [vmem:[%s484 + $0x8] sm:$0xff]
        %v560 = vld [vmem:[%s484 + $0x10] sm:$0xff]
        %v561 = vld [vmem:[%s484 + $0x18] sm:$0xff]
        %v562 = vld [vmem:[%s484 + $0x20] sm:$0xff]
        %v563 = vld [vmem:[%s484 + $0x28] sm:$0xff]
        %v564 = vld [vmem:[%s484 + $0x30] sm:$0xff]
        %v565 = vld [vmem:[%s484 + $0x38] sm:$0xff]
        %v566 = vld [vmem:[%s484 + $0x40] sm:$0xff]
        %v567 = vld [vmem:[%s484 + $0x48] sm:$0xff]
        %v568 = vld [vmem:[%s484 + $0x50] sm:$0xff]
        %v569 = vld [vmem:[%s484 + $0x58] sm:$0xff]
        %v570 = vld [vmem:[%s484 + $0x60] sm:$0xff]
        %v571 = vld [vmem:[%s484 + $0x68] sm:$0xff]
        %v572 = vld [vmem:[%s484 + $0x70] sm:$0xff]
        %v573 = vld [vmem:[%s484 + $0x78] sm:$0xff]
        %v574 = vld [vmem:[%s484 + $0x80] sm:$0xff]
        %v575 = vld [vmem:[%s484 + $0x88] sm:$0xff]
        %v576 = vld [vmem:[%s484 + $0x90] sm:$0xff]
        %v577 = vld [vmem:[%s484 + $0x98] sm:$0xff]
        %v578 = vld [vmem:[%s484 + $0xa0] sm:$0xff]
        %v579 = vld [vmem:[%s484 + $0xa8] sm:$0xff]
        %v580 = vld [vmem:[%s484 + $0xb0] sm:$0xff]
        %v581 = vld [vmem:[%s484 + $0xb8] sm:$0xff]
        %v582 = vld [vmem:[%s484 + $0xc0] sm:$0xff]
        %v583 = vld [vmem:[%s484 + $0xc8] sm:$0xff]
        %v584 = vld [vmem:[%s484 + $0xd0] sm:$0xff]
        %v585 = vld [vmem:[%s484 + $0xd8] sm:$0xff]
        %v586 = vld [vmem:[%s484 + $0xe0] sm:$0xff]
        %v587 = vld [vmem:[%s484 + $0xe8] sm:$0xff]
        %v588 = vld [vmem:[%s484 + $0xf0] sm:$0xff]
        %v589 = vld [vmem:[%s484 + $0xf8] sm:$0xff]
        %v590 = vld [vmem:[%s484 + $0x100] sm:$0xff]
        %v591 = vld [vmem:[%s484 + $0x108] sm:$0xff]
        %v592 = vld [vmem:[%s484 + $0x110] sm:$0xff]
        %v593 = vld [vmem:[%s484 + $0x118] sm:$0xff]
        %v594 = vld [vmem:[%s484 + $0x120] sm:$0xff]
        %v595 = vld [vmem:[%s484 + $0x128] sm:$0xff]
        %v596 = vld [vmem:[%s484 + $0x130] sm:$0xff]
        %v597 = vld [vmem:[%s484 + $0x138] sm:$0xff]
        %v598 = vld [vmem:[%s484 + $0x140] sm:$0xff]
        %v599 = vld [vmem:[%s484 + $0x148] sm:$0xff]
        %v600 = vld [vmem:[%s484 + $0x150] sm:$0xff]
        %v601 = vld [vmem:[%s484 + $0x158] sm:$0xff]
        %v602 = vld [vmem:[%s484 + $0x160] sm:$0xff]
        %v603 = vld [vmem:[%s484 + $0x168] sm:$0xff]
        %v604 = vld [vmem:[%s484 + $0x170] sm:$0xff]
        %v605 = vld [vmem:[%s484 + $0x178] sm:$0xff]
        %v606 = vld [vmem:[%s484 + $0x180] sm:$0xff]
        %v607 = vld [vmem:[%s484 + $0x188] sm:$0xff]
        %v608 = vld [vmem:[%s484 + $0x190] sm:$0xff]
        %v609 = vld [vmem:[%s484 + $0x198] sm:$0xff]
        %v610 = vld [vmem:[%s484 + $0x1a0] sm:$0xff]
        %v611 = vld [vmem:[%s484 + $0x1a8] sm:$0xff]
        %v612 = vld [vmem:[%s484 + $0x1b0] sm:$0xff]
        %v613 = vld [vmem:[%s484 + $0x1b8] sm:$0xff]
        %v614 = vld [vmem:[%s484 + $0x1c0] sm:$0xff]
        %v615 = vld [vmem:[%s484 + $0x1c8] sm:$0xff]
        %v616 = vld [vmem:[%s484 + $0x1d0] sm:$0xff]
        %v617 = vld [vmem:[%s484 + $0x1d8] sm:$0xff]
        %v618 = vld [vmem:[%s484 + $0x1e0] sm:$0xff]
        %v619 = vld [vmem:[%s484 + $0x1e8] sm:$0xff]
        %v620 = vld [vmem:[%s484 + $0x1f0] sm:$0xff]
        %v621 = vld [vmem:[%s484 + $0x1f8] sm:$0xff]
        %vm622 = vcmask 130048
        %623 = vst.msk [vmem:[#allocation2] sm:$0xff] %vm622, %v558
        %624 = vst.msk [vmem:[#allocation2 + $0x8] sm:$0xff] %vm622, %v559
        %625 = vst.msk [vmem:[#allocation2 + $0x10] sm:$0xff] %vm622, %v560
        %626 = vst.msk [vmem:[#allocation2 + $0x18] sm:$0xff] %vm622, %v561
        %627 = vst.msk [vmem:[#allocation2 + $0x20] sm:$0xff] %vm622, %v562
        %628 = vst.msk [vmem:[#allocation2 + $0x28] sm:$0xff] %vm622, %v563
        %629 = vst.msk [vmem:[#allocation2 + $0x30] sm:$0xff] %vm622, %v564
        %630 = vst.msk [vmem:[#allocation2 + $0x38] sm:$0xff] %vm622, %v565
        %631 = vst.msk [vmem:[#allocation2 + $0x40] sm:$0xff] %vm622, %v566
        %632 = vst.msk [vmem:[#allocation2 + $0x48] sm:$0xff] %vm622, %v567
        %633 = vst.msk [vmem:[#allocation2 + $0x50] sm:$0xff] %vm622, %v568
        %634 = vst.msk [vmem:[#allocation2 + $0x58] sm:$0xff] %vm622, %v569
        %635 = vst.msk [vmem:[#allocation2 + $0x60] sm:$0xff] %vm622, %v570
        %636 = vst.msk [vmem:[#allocation2 + $0x68] sm:$0xff] %vm622, %v571
        %637 = vst.msk [vmem:[#allocation2 + $0x70] sm:$0xff] %vm622, %v572
        %638 = vst.msk [vmem:[#allocation2 + $0x78] sm:$0xff] %vm622, %v573
        %639 = vst.msk [vmem:[#allocation2 + $0x80] sm:$0xff] %vm622, %v574
        %640 = vst.msk [vmem:[#allocation2 + $0x88] sm:$0xff] %vm622, %v575
        %641 = vst.msk [vmem:[#allocation2 + $0x90] sm:$0xff] %vm622, %v576
        %642 = vst.msk [vmem:[#allocation2 + $0x98] sm:$0xff] %vm622, %v577
        %643 = vst.msk [vmem:[#allocation2 + $0xa0] sm:$0xff] %vm622, %v578
        %644 = vst.msk [vmem:[#allocation2 + $0xa8] sm:$0xff] %vm622, %v579
        %645 = vst.msk [vmem:[#allocation2 + $0xb0] sm:$0xff] %vm622, %v580
        %646 = vst.msk [vmem:[#allocation2 + $0xb8] sm:$0xff] %vm622, %v581
        %647 = vst.msk [vmem:[#allocation2 + $0xc0] sm:$0xff] %vm622, %v582
        %648 = vst.msk [vmem:[#allocation2 + $0xc8] sm:$0xff] %vm622, %v583
        %649 = vst.msk [vmem:[#allocation2 + $0xd0] sm:$0xff] %vm622, %v584
        %650 = vst.msk [vmem:[#allocation2 + $0xd8] sm:$0xff] %vm622, %v585
        %651 = vst.msk [vmem:[#allocation2 + $0xe0] sm:$0xff] %vm622, %v586
        %652 = vst.msk [vmem:[#allocation2 + $0xe8] sm:$0xff] %vm622, %v587
        %653 = vst.msk [vmem:[#allocation2 + $0xf0] sm:$0xff] %vm622, %v588
        %654 = vst.msk [vmem:[#allocation2 + $0xf8] sm:$0xff] %vm622, %v589
        %655 = vst.msk [vmem:[#allocation2 + $0x100] sm:$0xff] %vm622, %v590
        %656 = vst.msk [vmem:[#allocation2 + $0x108] sm:$0xff] %vm622, %v591
        %657 = vst.msk [vmem:[#allocation2 + $0x110] sm:$0xff] %vm622, %v592
        %658 = vst.msk [vmem:[#allocation2 + $0x118] sm:$0xff] %vm622, %v593
        %659 = vst.msk [vmem:[#allocation2 + $0x120] sm:$0xff] %vm622, %v594
        %660 = vst.msk [vmem:[#allocation2 + $0x128] sm:$0xff] %vm622, %v595
        %661 = vst.msk [vmem:[#allocation2 + $0x130] sm:$0xff] %vm622, %v596
        %662 = vst.msk [vmem:[#allocation2 + $0x138] sm:$0xff] %vm622, %v597
        %663 = vst.msk [vmem:[#allocation2 + $0x140] sm:$0xff] %vm622, %v598
        %664 = vst.msk [vmem:[#allocation2 + $0x148] sm:$0xff] %vm622, %v599
        %665 = vst.msk [vmem:[#allocation2 + $0x150] sm:$0xff] %vm622, %v600
        %666 = vst.msk [vmem:[#allocation2 + $0x158] sm:$0xff] %vm622, %v601
        %667 = vst.msk [vmem:[#allocation2 + $0x160] sm:$0xff] %vm622, %v602
        %668 = vst.msk [vmem:[#allocation2 + $0x168] sm:$0xff] %vm622, %v603
        %669 = vst.msk [vmem:[#allocation2 + $0x170] sm:$0xff] %vm622, %v604
        %670 = vst.msk [vmem:[#allocation2 + $0x178] sm:$0xff] %vm622, %v605
        %671 = vst.msk [vmem:[#allocation2 + $0x180] sm:$0xff] %vm622, %v606
        %672 = vst.msk [vmem:[#allocation2 + $0x188] sm:$0xff] %vm622, %v607
        %673 = vst.msk [vmem:[#allocation2 + $0x190] sm:$0xff] %vm622, %v608
        %674 = vst.msk [vmem:[#allocation2 + $0x198] sm:$0xff] %vm622, %v609
        %675 = vst.msk [vmem:[#allocation2 + $0x1a0] sm:$0xff] %vm622, %v610
        %676 = vst.msk [vmem:[#allocation2 + $0x1a8] sm:$0xff] %vm622, %v611
        %677 = vst.msk [vmem:[#allocation2 + $0x1b0] sm:$0xff] %vm622, %v612
        %678 = vst.msk [vmem:[#allocation2 + $0x1b8] sm:$0xff] %vm622, %v613
        %679 = vst.msk [vmem:[#allocation2 + $0x1c0] sm:$0xff] %vm622, %v614
        %680 = vst.msk [vmem:[#allocation2 + $0x1c8] sm:$0xff] %vm622, %v615
        %681 = vst.msk [vmem:[#allocation2 + $0x1d0] sm:$0xff] %vm622, %v616
        %682 = vst.msk [vmem:[#allocation2 + $0x1d8] sm:$0xff] %vm622, %v617
        %683 = vst.msk [vmem:[#allocation2 + $0x1e0] sm:$0xff] %vm622, %v618
        %684 = vst.msk [vmem:[#allocation2 + $0x1e8] sm:$0xff] %vm622, %v619
        %685 = vst.msk [vmem:[#allocation2 + $0x1f0] sm:$0xff] %vm622, %v620
        %686 = vst.msk [vmem:[#allocation2 + $0x1f8] sm:$0xff] %vm622, %v621
        %v687 = vld [vmem:[#allocation2] sm:$0xff]
        %v688 = vld [vmem:[#allocation2 + $0x8] sm:$0xff]
        %v689 = vld [vmem:[#allocation2 + $0x10] sm:$0xff]
        %v690 = vld [vmem:[#allocation2 + $0x18] sm:$0xff]
        %v691 = vld [vmem:[#allocation2 + $0x20] sm:$0xff]
        %v692 = vld [vmem:[#allocation2 + $0x28] sm:$0xff]
        %v693 = vld [vmem:[#allocation2 + $0x30] sm:$0xff]
        %v694 = vld [vmem:[#allocation2 + $0x38] sm:$0xff]
        %v695 = vld [vmem:[#allocation2 + $0x40] sm:$0xff]
        %v696 = vld [vmem:[#allocation2 + $0x48] sm:$0xff]
        %v697 = vld [vmem:[#allocation2 + $0x50] sm:$0xff]
        %v698 = vld [vmem:[#allocation2 + $0x58] sm:$0xff]
        %v699 = vld [vmem:[#allocation2 + $0x60] sm:$0xff]
        %v700 = vld [vmem:[#allocation2 + $0x68] sm:$0xff]
        %v701 = vld [vmem:[#allocation2 + $0x70] sm:$0xff]
        %v702 = vld [vmem:[#allocation2 + $0x78] sm:$0xff]
        %v703 = vld [vmem:[#allocation2 + $0x80] sm:$0xff]
        %v704 = vld [vmem:[#allocation2 + $0x88] sm:$0xff]
        %v705 = vld [vmem:[#allocation2 + $0x90] sm:$0xff]
        %v706 = vld [vmem:[#allocation2 + $0x98] sm:$0xff]
        %v707 = vld [vmem:[#allocation2 + $0xa0] sm:$0xff]
        %v708 = vld [vmem:[#allocation2 + $0xa8] sm:$0xff]
        %v709 = vld [vmem:[#allocation2 + $0xb0] sm:$0xff]
        %v710 = vld [vmem:[#allocation2 + $0xb8] sm:$0xff]
        %v711 = vld [vmem:[#allocation2 + $0xc0] sm:$0xff]
        %v712 = vld [vmem:[#allocation2 + $0xc8] sm:$0xff]
        %v713 = vld [vmem:[#allocation2 + $0xd0] sm:$0xff]
        %v714 = vld [vmem:[#allocation2 + $0xd8] sm:$0xff]
        %v715 = vld [vmem:[#allocation2 + $0xe0] sm:$0xff]
        %v716 = vld [vmem:[#allocation2 + $0xe8] sm:$0xff]
        %v717 = vld [vmem:[#allocation2 + $0xf0] sm:$0xff]
        %v718 = vld [vmem:[#allocation2 + $0xf8] sm:$0xff]
        %v719 = vld [vmem:[#allocation2 + $0x100] sm:$0xff]
        %v720 = vld [vmem:[#allocation2 + $0x108] sm:$0xff]
        %v721 = vld [vmem:[#allocation2 + $0x110] sm:$0xff]
        %v722 = vld [vmem:[#allocation2 + $0x118] sm:$0xff]
        %v723 = vld [vmem:[#allocation2 + $0x120] sm:$0xff]
        %v724 = vld [vmem:[#allocation2 + $0x128] sm:$0xff]
        %v725 = vld [vmem:[#allocation2 + $0x130] sm:$0xff]
        %v726 = vld [vmem:[#allocation2 + $0x138] sm:$0xff]
        %v727 = vld [vmem:[#allocation2 + $0x140] sm:$0xff]
        %v728 = vld [vmem:[#allocation2 + $0x148] sm:$0xff]
        %v729 = vld [vmem:[#allocation2 + $0x150] sm:$0xff]
        %v730 = vld [vmem:[#allocation2 + $0x158] sm:$0xff]
        %v731 = vld [vmem:[#allocation2 + $0x160] sm:$0xff]
        %v732 = vld [vmem:[#allocation2 + $0x168] sm:$0xff]
        %v733 = vld [vmem:[#allocation2 + $0x170] sm:$0xff]
        %v734 = vld [vmem:[#allocation2 + $0x178] sm:$0xff]
        %v735 = vld [vmem:[#allocation2 + $0x180] sm:$0xff]
        %v736 = vld [vmem:[#allocation2 + $0x188] sm:$0xff]
        %v737 = vld [vmem:[#allocation2 + $0x190] sm:$0xff]
        %v738 = vld [vmem:[#allocation2 + $0x198] sm:$0xff]
        %v739 = vld [vmem:[#allocation2 + $0x1a0] sm:$0xff]
        %v740 = vld [vmem:[#allocation2 + $0x1a8] sm:$0xff]
        %v741 = vld [vmem:[#allocation2 + $0x1b0] sm:$0xff]
        %v742 = vld [vmem:[#allocation2 + $0x1b8] sm:$0xff]
        %v743 = vld [vmem:[#allocation2 + $0x1c0] sm:$0xff]
        %v744 = vld [vmem:[#allocation2 + $0x1c8] sm:$0xff]
        %v745 = vld [vmem:[#allocation2 + $0x1d0] sm:$0xff]
        %v746 = vld [vmem:[#allocation2 + $0x1d8] sm:$0xff]
        %v747 = vld [vmem:[#allocation2 + $0x1e0] sm:$0xff]
        %v748 = vld [vmem:[#allocation2 + $0x1e8] sm:$0xff]
        %v749 = vld [vmem:[#allocation2 + $0x1f0] sm:$0xff]
        %v750 = vld [vmem:[#allocation2 + $0x1f8] sm:$0xff]
        %v751 = vld [vmem:[%s478] sm:$0xff]
        %v752 = vld [vmem:[%s478 + $0x8] sm:$0xff]
        %v753 = vld [vmem:[%s478 + $0x10] sm:$0xff]
        %v754 = vld [vmem:[%s478 + $0x18] sm:$0xff]
        %v755 = vld [vmem:[%s478 + $0x20] sm:$0xff]
        %v756 = vld [vmem:[%s478 + $0x28] sm:$0xff]
        %v757 = vld [vmem:[%s478 + $0x30] sm:$0xff]
        %v758 = vld [vmem:[%s478 + $0x38] sm:$0xff]
        %v759 = vld [vmem:[%s478 + $0x40] sm:$0xff]
        %v760 = vld [vmem:[%s478 + $0x48] sm:$0xff]
        %v761 = vld [vmem:[%s478 + $0x50] sm:$0xff]
        %v762 = vld [vmem:[%s478 + $0x58] sm:$0xff]
        %v763 = vld [vmem:[%s478 + $0x60] sm:$0xff]
        %v764 = vld [vmem:[%s478 + $0x68] sm:$0xff]
        %v765 = vld [vmem:[%s478 + $0x70] sm:$0xff]
        %v766 = vld [vmem:[%s478 + $0x78] sm:$0xff]
        %v767 = vld [vmem:[%s478 + $0x80] sm:$0xff]
        %v768 = vld [vmem:[%s478 + $0x88] sm:$0xff]
        %v769 = vld [vmem:[%s478 + $0x90] sm:$0xff]
        %v770 = vld [vmem:[%s478 + $0x98] sm:$0xff]
        %v771 = vld [vmem:[%s478 + $0xa0] sm:$0xff]
        %v772 = vld [vmem:[%s478 + $0xa8] sm:$0xff]
        %v773 = vld [vmem:[%s478 + $0xb0] sm:$0xff]
        %v774 = vld [vmem:[%s478 + $0xb8] sm:$0xff]
        %v775 = vld [vmem:[%s478 + $0xc0] sm:$0xff]
        %v776 = vld [vmem:[%s478 + $0xc8] sm:$0xff]
        %v777 = vld [vmem:[%s478 + $0xd0] sm:$0xff]
        %v778 = vld [vmem:[%s478 + $0xd8] sm:$0xff]
        %v779 = vld [vmem:[%s478 + $0xe0] sm:$0xff]
        %v780 = vld [vmem:[%s478 + $0xe8] sm:$0xff]
        %v781 = vld [vmem:[%s478 + $0xf0] sm:$0xff]
        %v782 = vld [vmem:[%s478 + $0xf8] sm:$0xff]
        %v783 = vld [vmem:[%s478 + $0x100] sm:$0xff]
        %v784 = vld [vmem:[%s478 + $0x108] sm:$0xff]
        %v785 = vld [vmem:[%s478 + $0x110] sm:$0xff]
        %v786 = vld [vmem:[%s478 + $0x118] sm:$0xff]
        %v787 = vld [vmem:[%s478 + $0x120] sm:$0xff]
        %v788 = vld [vmem:[%s478 + $0x128] sm:$0xff]
        %v789 = vld [vmem:[%s478 + $0x130] sm:$0xff]
        %v790 = vld [vmem:[%s478 + $0x138] sm:$0xff]
        %v791 = vld [vmem:[%s478 + $0x140] sm:$0xff]
        %v792 = vld [vmem:[%s478 + $0x148] sm:$0xff]
        %v793 = vld [vmem:[%s478 + $0x150] sm:$0xff]
        %v794 = vld [vmem:[%s478 + $0x158] sm:$0xff]
        %v795 = vld [vmem:[%s478 + $0x160] sm:$0xff]
        %v796 = vld [vmem:[%s478 + $0x168] sm:$0xff]
        %v797 = vld [vmem:[%s478 + $0x170] sm:$0xff]
        %v798 = vld [vmem:[%s478 + $0x178] sm:$0xff]
        %v799 = vld [vmem:[%s478 + $0x180] sm:$0xff]
        %v800 = vld [vmem:[%s478 + $0x188] sm:$0xff]
        %v801 = vld [vmem:[%s478 + $0x190] sm:$0xff]
        %v802 = vld [vmem:[%s478 + $0x198] sm:$0xff]
        %v803 = vld [vmem:[%s478 + $0x1a0] sm:$0xff]
        %v804 = vld [vmem:[%s478 + $0x1a8] sm:$0xff]
        %v805 = vld [vmem:[%s478 + $0x1b0] sm:$0xff]
        %v806 = vld [vmem:[%s478 + $0x1b8] sm:$0xff]
        %v807 = vld [vmem:[%s478 + $0x1c0] sm:$0xff]
        %v808 = vld [vmem:[%s478 + $0x1c8] sm:$0xff]
        %v809 = vld [vmem:[%s478 + $0x1d0] sm:$0xff]
        %v810 = vld [vmem:[%s478 + $0x1d8] sm:$0xff]
        %v811 = vld [vmem:[%s478 + $0x1e0] sm:$0xff]
        %v812 = vld [vmem:[%s478 + $0x1e8] sm:$0xff]
        %v813 = vld [vmem:[%s478 + $0x1f0] sm:$0xff]
        %v814 = vld [vmem:[%s478 + $0x1f8] sm:$0xff]
        %v815 = vld [vmem:[#allocation3] sm:$0xf]
        %v816 = vld [vmem:[#allocation3 + $0x4] sm:$0xf]
        %v817 = vld [vmem:[#allocation3 + $0x8] sm:$0xf]
        %v818 = vld [vmem:[#allocation3 + $0xc] sm:$0xf]
        %v819 = vld [vmem:[#allocation3 + $0x10] sm:$0xf]
        %v820 = vld [vmem:[#allocation3 + $0x14] sm:$0xf]
        %v821 = vld [vmem:[#allocation3 + $0x18] sm:$0xf]
        %v822 = vld [vmem:[#allocation3 + $0x1c] sm:$0xf]
        %v823 = vld [vmem:[#allocation3 + $0x20] sm:$0xf]
        %v824 = vld [vmem:[#allocation3 + $0x24] sm:$0xf]
        %v825 = vld [vmem:[#allocation3 + $0x28] sm:$0xf]
        %v826 = vld [vmem:[#allocation3 + $0x2c] sm:$0xf]
        %v827 = vld [vmem:[#allocation3 + $0x30] sm:$0xf]
        %v828 = vld [vmem:[#allocation3 + $0x34] sm:$0xf]
        %v829 = vld [vmem:[#allocation3 + $0x38] sm:$0xf]
        %v830 = vld [vmem:[#allocation3 + $0x3c] sm:$0xf]
        %v831 = vpack.c.bf16 %v752, %v751
        %v832 = vpack.c.bf16 %v754, %v753
        %v833 = vpack.c.bf16 %v756, %v755
        %v834 = vpack.c.bf16 %v758, %v757
        %v835 = vpack.c.bf16 %v760, %v759
        %v836 = vpack.c.bf16 %v762, %v761
        %v837 = vpack.c.bf16 %v764, %v763
        %v838 = vpack.c.bf16 %v766, %v765
        %v839 = vpack.c.bf16 %v768, %v767
        %v840 = vpack.c.bf16 %v770, %v769
        %v841 = vpack.c.bf16 %v772, %v771
        %v842 = vpack.c.bf16 %v774, %v773
        %v843 = vpack.c.bf16 %v776, %v775
        %v844 = vpack.c.bf16 %v778, %v777
        %v845 = vpack.c.bf16 %v780, %v779
        %v846 = vpack.c.bf16 %v782, %v781
        %v847 = vpack.c.bf16 %v784, %v783
        %v848 = vpack.c.bf16 %v786, %v785
        %v849 = vpack.c.bf16 %v788, %v787
        %v850 = vpack.c.bf16 %v790, %v789
        %v851 = vpack.c.bf16 %v792, %v791
        %v852 = vpack.c.bf16 %v794, %v793
        %v853 = vpack.c.bf16 %v796, %v795
        %v854 = vpack.c.bf16 %v798, %v797
        %v855 = vpack.c.bf16 %v800, %v799
        %v856 = vpack.c.bf16 %v802, %v801
        %v857 = vpack.c.bf16 %v804, %v803
        %v858 = vpack.c.bf16 %v806, %v805
        %v859 = vpack.c.bf16 %v808, %v807
        %v860 = vpack.c.bf16 %v810, %v809
        %v861 = vpack.c.bf16 %v812, %v811
        %v862 = vpack.c.bf16 %v814, %v813
        %v863 = vld [vmem:[#allocation6] sm:$0x1]
        %v865 = vlaneseq
        %v866 = vshrl.u32 %v865, 7
        %v867 = vsub.s32 0, %v866
        %v868 = vrot.slane %v863, %v867
        %v886 = vunpack.c.l.b16 %v815
        %v887 = vunpack.c.l.b16 %v816
        %v888 = vunpack.c.l.b16 %v817
        %v889 = vunpack.c.l.b16 %v818
        %v890 = vunpack.c.l.b16 %v819
        %v891 = vunpack.c.l.b16 %v820
        %v892 = vunpack.c.l.b16 %v821
        %v893 = vunpack.c.l.b16 %v822
        %v894 = vunpack.c.l.b16 %v823
        %v895 = vunpack.c.l.b16 %v824
        %v896 = vunpack.c.l.b16 %v825
        %v897 = vunpack.c.l.b16 %v826
        %v898 = vunpack.c.l.b16 %v827
        %v899 = vunpack.c.l.b16 %v828
        %v900 = vunpack.c.l.b16 %v829
        %v901 = vunpack.c.l.b16 %v830
        %v902 = vpack.c.b16 %v887, %v886
        %v903 = vpack.c.b16 %v889, %v888
        %v904 = vpack.c.b16 %v891, %v890
        %v905 = vpack.c.b16 %v893, %v892
        %v906 = vpack.c.b16 %v895, %v894
        %v907 = vpack.c.b16 %v897, %v896
        %v908 = vpack.c.b16 %v899, %v898
        %v909 = vpack.c.b16 %v901, %v900
        %918 = vmatprep.subr.bf16.mxu0 0
        %919 = vmatpush1.bf16.msra.mxu0 %v909
        %920 = vmatprep.subr.bf16.mxu0 0
        %921 = vmatpush1.bf16.msra.mxu0 %v908
        %922 = vmatprep.subr.bf16.mxu0 0
        %923 = vmatpush1.bf16.msra.mxu0 %v907
        %924 = vmatprep.subr.bf16.mxu0 0
        %925 = vmatpush1.bf16.msra.mxu0 %v906
        %926 = vmatprep.subr.bf16.mxu0 0
        %927 = vmatpush1.bf16.msra.mxu0 %v905
        %928 = vmatprep.subr.bf16.mxu0 0
        %929 = vmatpush1.bf16.msra.mxu0 %v904
        %930 = vmatprep.subr.bf16.mxu0 0
        %931 = vmatpush1.bf16.msra.mxu0 %v903
        %932 = vmatprep.subr.bf16.mxu0 0
        %933 = vmatpush1.bf16.msra.mxu0 %v902
        %934 = vmatprep.subr.bf16.mxu0 0
        %935 = vmatpush2.bf16.msra.mxu0 0
        %936 = vmatprep.subr.bf16.mxu0 0
        %937 = vmatpush2.bf16.msra.mxu0 0
        %938 = vmatprep.subr.bf16.mxu0 0
        %939 = vmatpush2.bf16.msra.mxu0 0
        %940 = vmatprep.subr.bf16.mxu0 0
        %941 = vmatpush2.bf16.msra.mxu0 0
        %942 = vmatprep.subr.bf16.mxu0 0
        %943 = vmatpush2.bf16.msra.mxu0 0
        %944 = vmatprep.subr.bf16.mxu0 0
        %945 = vmatpush2.bf16.msra.mxu0 0
        %946 = vmatprep.subr.bf16.mxu0 0
        %947 = vmatpush2.bf16.msra.mxu0 0
        %948 = vmatprep.subr.bf16.mxu0 0
        %949 = vmatpush2.bf16.msra.mxu0 0
        %950 = vmatprep.mubr.bf16.mxu0 0
        %951 = vmatmul.mubr.bf16.gmra.mxu0 %v831
        %v952 = vpop.f32.mrf.mxu0
        %v953 = vadd.f32 %v868, %v952
        %v954 = vpop.f32.mrf.mxu0
        %v955 = vpop.f32.mrf.mxu0
        %v956 = vadd.f32 %v868, %v955
        %v957 = vpop.f32.mrf.mxu0
        %958 = vmatprep.mubr.bf16.mxu0 0
        %959 = vmatmul.mubr.bf16.gmra.mxu0 %v832
        %v960 = vpop.f32.mrf.mxu0
        %v961 = vadd.f32 %v868, %v960
        %v962 = vpop.f32.mrf.mxu0
        %v963 = vpop.f32.mrf.mxu0
        %v964 = vadd.f32 %v868, %v963
        %v965 = vpop.f32.mrf.mxu0
        %966 = vmatprep.mubr.bf16.mxu0 0
        %967 = vmatmul.mubr.bf16.gmra.mxu0 %v833
        %v968 = vpop.f32.mrf.mxu0
        %v969 = vadd.f32 %v868, %v968
        %v970 = vpop.f32.mrf.mxu0
        %v971 = vpop.f32.mrf.mxu0
        %v972 = vadd.f32 %v868, %v971
        %v973 = vpop.f32.mrf.mxu0
        %974 = vmatprep.mubr.bf16.mxu0 0
        %975 = vmatmul.mubr.bf16.gmra.mxu0 %v834
        %v976 = vpop.f32.mrf.mxu0
        %v977 = vadd.f32 %v868, %v976
        %v978 = vpop.f32.mrf.mxu0
        %v979 = vpop.f32.mrf.mxu0
        %v980 = vadd.f32 %v868, %v979
        %v981 = vpop.f32.mrf.mxu0
        %982 = vmatprep.mubr.bf16.mxu0 0
        %983 = vmatmul.mubr.bf16.gmra.mxu0 %v835
        %v984 = vpop.f32.mrf.mxu0
        %v985 = vadd.f32 %v868, %v984
        %v986 = vpop.f32.mrf.mxu0
        %v987 = vpop.f32.mrf.mxu0
        %v988 = vadd.f32 %v868, %v987
        %v989 = vpop.f32.mrf.mxu0
        %990 = vmatprep.mubr.bf16.mxu0 0
        %991 = vmatmul.mubr.bf16.gmra.mxu0 %v836
        %v992 = vpop.f32.mrf.mxu0
        %v993 = vadd.f32 %v868, %v992
        %v994 = vpop.f32.mrf.mxu0
        %v995 = vpop.f32.mrf.mxu0
        %v996 = vadd.f32 %v868, %v995
        %v997 = vpop.f32.mrf.mxu0
        %998 = vmatprep.mubr.bf16.mxu0 0
        %999 = vmatmul.mubr.bf16.gmra.mxu0 %v837
        %v1000 = vpop.f32.mrf.mxu0
        %v1001 = vadd.f32 %v868, %v1000
        %v1002 = vpop.f32.mrf.mxu0
        %v1003 = vpop.f32.mrf.mxu0
        %v1004 = vadd.f32 %v868, %v1003
        %v1005 = vpop.f32.mrf.mxu0
        %1006 = vmatprep.mubr.bf16.mxu0 0
        %1007 = vmatmul.mubr.bf16.gmra.mxu0 %v838
        %v1008 = vpop.f32.mrf.mxu0
        %v1009 = vadd.f32 %v868, %v1008
        %v1010 = vpop.f32.mrf.mxu0
        %v1011 = vpop.f32.mrf.mxu0
        %v1012 = vadd.f32 %v868, %v1011
        %v1013 = vpop.f32.mrf.mxu0
        %1014 = vmatprep.mubr.bf16.mxu0 0
        %1015 = vmatmul.mubr.bf16.gmra.mxu0 %v839
        %v1016 = vpop.f32.mrf.mxu0
        %v1017 = vadd.f32 %v868, %v1016
        %v1018 = vpop.f32.mrf.mxu0
        %v1019 = vpop.f32.mrf.mxu0
        %v1020 = vadd.f32 %v868, %v1019
        %v1021 = vpop.f32.mrf.mxu0
        %1022 = vmatprep.mubr.bf16.mxu0 0
        %1023 = vmatmul.mubr.bf16.gmra.mxu0 %v840
        %v1024 = vpop.f32.mrf.mxu0
        %v1025 = vadd.f32 %v868, %v1024
        %v1026 = vpop.f32.mrf.mxu0
        %v1027 = vpop.f32.mrf.mxu0
        %v1028 = vadd.f32 %v868, %v1027
        %v1029 = vpop.f32.mrf.mxu0
        %1030 = vmatprep.mubr.bf16.mxu0 0
        %1031 = vmatmul.mubr.bf16.gmra.mxu0 %v841
        %v1032 = vpop.f32.mrf.mxu0
        %v1033 = vadd.f32 %v868, %v1032
        %v1034 = vpop.f32.mrf.mxu0
        %v1035 = vpop.f32.mrf.mxu0
        %v1036 = vadd.f32 %v868, %v1035
        %v1037 = vpop.f32.mrf.mxu0
        %1038 = vmatprep.mubr.bf16.mxu0 0
        %1039 = vmatmul.mubr.bf16.gmra.mxu0 %v842
        %v1040 = vpop.f32.mrf.mxu0
        %v1041 = vadd.f32 %v868, %v1040
        %v1042 = vpop.f32.mrf.mxu0
        %v1043 = vpop.f32.mrf.mxu0
        %v1044 = vadd.f32 %v868, %v1043
        %v1045 = vpop.f32.mrf.mxu0
        %1046 = vmatprep.mubr.bf16.mxu0 0
        %1047 = vmatmul.mubr.bf16.gmra.mxu0 %v843
        %v1048 = vpop.f32.mrf.mxu0
        %v1049 = vadd.f32 %v868, %v1048
        %v1050 = vpop.f32.mrf.mxu0
        %v1051 = vpop.f32.mrf.mxu0
        %v1052 = vadd.f32 %v868, %v1051
        %v1053 = vpop.f32.mrf.mxu0
        %1054 = vmatprep.mubr.bf16.mxu0 0
        %1055 = vmatmul.mubr.bf16.gmra.mxu0 %v844
        %v1056 = vpop.f32.mrf.mxu0
        %v1057 = vadd.f32 %v868, %v1056
        %v1058 = vpop.f32.mrf.mxu0
        %v1059 = vpop.f32.mrf.mxu0
        %v1060 = vadd.f32 %v868, %v1059
        %v1061 = vpop.f32.mrf.mxu0
        %1062 = vmatprep.mubr.bf16.mxu0 0
        %1063 = vmatmul.mubr.bf16.gmra.mxu0 %v845
        %v1064 = vpop.f32.mrf.mxu0
        %v1065 = vadd.f32 %v868, %v1064
        %v1066 = vpop.f32.mrf.mxu0
        %v1067 = vpop.f32.mrf.mxu0
        %v1068 = vadd.f32 %v868, %v1067
        %v1069 = vpop.f32.mrf.mxu0
        %1070 = vmatprep.mubr.bf16.mxu0 0
        %1071 = vmatmul.mubr.bf16.gmra.mxu0 %v846
        %v1072 = vpop.f32.mrf.mxu0
        %v1073 = vadd.f32 %v868, %v1072
        %v1074 = vpop.f32.mrf.mxu0
        %v1075 = vpop.f32.mrf.mxu0
        %v1076 = vadd.f32 %v868, %v1075
        %v1077 = vpop.f32.mrf.mxu0
        %1078 = vmatprep.mubr.bf16.mxu0 0
        %1079 = vmatmul.mubr.bf16.gmra.mxu0 %v847
        %v1080 = vpop.f32.mrf.mxu0
        %v1081 = vadd.f32 %v868, %v1080
        %v1082 = vpop.f32.mrf.mxu0
        %v1083 = vpop.f32.mrf.mxu0
        %v1084 = vadd.f32 %v868, %v1083
        %v1085 = vpop.f32.mrf.mxu0
        %1086 = vmatprep.mubr.bf16.mxu0 0
        %1087 = vmatmul.mubr.bf16.gmra.mxu0 %v848
        %v1088 = vpop.f32.mrf.mxu0
        %v1089 = vadd.f32 %v868, %v1088
        %v1090 = vpop.f32.mrf.mxu0
        %v1091 = vpop.f32.mrf.mxu0
        %v1092 = vadd.f32 %v868, %v1091
        %v1093 = vpop.f32.mrf.mxu0
        %1094 = vmatprep.mubr.bf16.mxu0 0
        %1095 = vmatmul.mubr.bf16.gmra.mxu0 %v849
        %v1096 = vpop.f32.mrf.mxu0
        %v1097 = vadd.f32 %v868, %v1096
        %v1098 = vpop.f32.mrf.mxu0
        %v1099 = vpop.f32.mrf.mxu0
        %v1100 = vadd.f32 %v868, %v1099
        %v1101 = vpop.f32.mrf.mxu0
        %1102 = vmatprep.mubr.bf16.mxu0 0
        %1103 = vmatmul.mubr.bf16.gmra.mxu0 %v850
        %v1104 = vpop.f32.mrf.mxu0
        %v1105 = vadd.f32 %v868, %v1104
        %v1106 = vpop.f32.mrf.mxu0
        %v1107 = vpop.f32.mrf.mxu0
        %v1108 = vadd.f32 %v868, %v1107
        %v1109 = vpop.f32.mrf.mxu0
        %1110 = vmatprep.mubr.bf16.mxu0 0
        %1111 = vmatmul.mubr.bf16.gmra.mxu0 %v851
        %v1112 = vpop.f32.mrf.mxu0
        %v1113 = vadd.f32 %v868, %v1112
        %v1114 = vpop.f32.mrf.mxu0
        %v1115 = vpop.f32.mrf.mxu0
        %v1116 = vadd.f32 %v868, %v1115
        %v1117 = vpop.f32.mrf.mxu0
        %1118 = vmatprep.mubr.bf16.mxu0 0
        %1119 = vmatmul.mubr.bf16.gmra.mxu0 %v852
        %v1120 = vpop.f32.mrf.mxu0
        %v1121 = vadd.f32 %v868, %v1120
        %v1122 = vpop.f32.mrf.mxu0
        %v1123 = vpop.f32.mrf.mxu0
        %v1124 = vadd.f32 %v868, %v1123
        %v1125 = vpop.f32.mrf.mxu0
        %1126 = vmatprep.mubr.bf16.mxu0 0
        %1127 = vmatmul.mubr.bf16.gmra.mxu0 %v853
        %v1128 = vpop.f32.mrf.mxu0
        %v1129 = vadd.f32 %v868, %v1128
        %v1130 = vpop.f32.mrf.mxu0
        %v1131 = vpop.f32.mrf.mxu0
        %v1132 = vadd.f32 %v868, %v1131
        %v1133 = vpop.f32.mrf.mxu0
        %1134 = vmatprep.mubr.bf16.mxu0 0
        %1135 = vmatmul.mubr.bf16.gmra.mxu0 %v854
        %v1136 = vpop.f32.mrf.mxu0
        %v1137 = vadd.f32 %v868, %v1136
        %v1138 = vpop.f32.mrf.mxu0
        %v1139 = vpop.f32.mrf.mxu0
        %v1140 = vadd.f32 %v868, %v1139
        %v1141 = vpop.f32.mrf.mxu0
        %1142 = vmatprep.mubr.bf16.mxu0 0
        %1143 = vmatmul.mubr.bf16.gmra.mxu0 %v855
        %v1144 = vpop.f32.mrf.mxu0
        %v1145 = vadd.f32 %v868, %v1144
        %v1146 = vpop.f32.mrf.mxu0
        %v1147 = vpop.f32.mrf.mxu0
        %v1148 = vadd.f32 %v868, %v1147
        %v1149 = vpop.f32.mrf.mxu0
        %1150 = vmatprep.mubr.bf16.mxu0 0
        %1151 = vmatmul.mubr.bf16.gmra.mxu0 %v856
        %v1152 = vpop.f32.mrf.mxu0
        %v1153 = vadd.f32 %v868, %v1152
        %v1154 = vpop.f32.mrf.mxu0
        %v1155 = vpop.f32.mrf.mxu0
        %v1156 = vadd.f32 %v868, %v1155
        %v1157 = vpop.f32.mrf.mxu0
        %1158 = vmatprep.mubr.bf16.mxu0 0
        %1159 = vmatmul.mubr.bf16.gmra.mxu0 %v857
        %v1160 = vpop.f32.mrf.mxu0
        %v1161 = vadd.f32 %v868, %v1160
        %v1162 = vpop.f32.mrf.mxu0
        %v1163 = vpop.f32.mrf.mxu0
        %v1164 = vadd.f32 %v868, %v1163
        %v1165 = vpop.f32.mrf.mxu0
        %1166 = vmatprep.mubr.bf16.mxu0 0
        %1167 = vmatmul.mubr.bf16.gmra.mxu0 %v858
        %v1168 = vpop.f32.mrf.mxu0
        %v1169 = vadd.f32 %v868, %v1168
        %v1170 = vpop.f32.mrf.mxu0
        %v1171 = vpop.f32.mrf.mxu0
        %v1172 = vadd.f32 %v868, %v1171
        %v1173 = vpop.f32.mrf.mxu0
        %1174 = vmatprep.mubr.bf16.mxu0 0
        %1175 = vmatmul.mubr.bf16.gmra.mxu0 %v859
        %v1176 = vpop.f32.mrf.mxu0
        %v1177 = vadd.f32 %v868, %v1176
        %v1178 = vpop.f32.mrf.mxu0
        %v1179 = vpop.f32.mrf.mxu0
        %v1180 = vadd.f32 %v868, %v1179
        %v1181 = vpop.f32.mrf.mxu0
        %1182 = vmatprep.mubr.bf16.mxu0 0
        %1183 = vmatmul.mubr.bf16.gmra.mxu0 %v860
        %v1184 = vpop.f32.mrf.mxu0
        %v1185 = vadd.f32 %v868, %v1184
        %v1186 = vpop.f32.mrf.mxu0
        %v1187 = vpop.f32.mrf.mxu0
        %v1188 = vadd.f32 %v868, %v1187
        %v1189 = vpop.f32.mrf.mxu0
        %1190 = vmatprep.mubr.bf16.mxu0 0
        %1191 = vmatmul.mubr.bf16.gmra.mxu0 %v861
        %v1192 = vpop.f32.mrf.mxu0
        %v1193 = vadd.f32 %v868, %v1192
        %v1194 = vpop.f32.mrf.mxu0
        %v1195 = vpop.f32.mrf.mxu0
        %v1196 = vadd.f32 %v868, %v1195
        %v1197 = vpop.f32.mrf.mxu0
        %1198 = vmatprep.mubr.bf16.mxu0 0
        %1199 = vmatmul.mubr.bf16.gmra.mxu0 %v862
        %v1200 = vpop.f32.mrf.mxu0
        %v1201 = vadd.f32 %v868, %v1200
        %v1202 = vpop.f32.mrf.mxu0
        %v1203 = vpop.f32.mrf.mxu0
        %v1204 = vadd.f32 %v868, %v1203
        %v1205 = vpop.f32.mrf.mxu0
        %1206 = vdwg.mxu0
        %vm1207 = vcmp.gt.f32.partialorder %v953, 0.0
        %vm1208 = vcmp.gt.f32.partialorder %v956, 0.0
        %vm1209 = vcmp.gt.f32.partialorder %v961, 0.0
        %vm1210 = vcmp.gt.f32.partialorder %v964, 0.0
        %vm1211 = vcmp.gt.f32.partialorder %v969, 0.0
        %vm1212 = vcmp.gt.f32.partialorder %v972, 0.0
        %vm1213 = vcmp.gt.f32.partialorder %v977, 0.0
        %vm1214 = vcmp.gt.f32.partialorder %v980, 0.0
        %vm1215 = vcmp.gt.f32.partialorder %v985, 0.0
        %vm1216 = vcmp.gt.f32.partialorder %v988, 0.0
        %vm1217 = vcmp.gt.f32.partialorder %v993, 0.0
        %vm1218 = vcmp.gt.f32.partialorder %v996, 0.0
        %vm1219 = vcmp.gt.f32.partialorder %v1001, 0.0
        %vm1220 = vcmp.gt.f32.partialorder %v1004, 0.0
        %vm1221 = vcmp.gt.f32.partialorder %v1009, 0.0
        %vm1222 = vcmp.gt.f32.partialorder %v1012, 0.0
        %vm1223 = vcmp.gt.f32.partialorder %v1017, 0.0
        %vm1224 = vcmp.gt.f32.partialorder %v1020, 0.0
        %vm1225 = vcmp.gt.f32.partialorder %v1025, 0.0
        %vm1226 = vcmp.gt.f32.partialorder %v1028, 0.0
        %vm1227 = vcmp.gt.f32.partialorder %v1033, 0.0
        %vm1228 = vcmp.gt.f32.partialorder %v1036, 0.0
        %vm1229 = vcmp.gt.f32.partialorder %v1041, 0.0
        %vm1230 = vcmp.gt.f32.partialorder %v1044, 0.0
        %vm1231 = vcmp.gt.f32.partialorder %v1049, 0.0
        %vm1232 = vcmp.gt.f32.partialorder %v1052, 0.0
        %vm1233 = vcmp.gt.f32.partialorder %v1057, 0.0
        %vm1234 = vcmp.gt.f32.partialorder %v1060, 0.0
        %vm1235 = vcmp.gt.f32.partialorder %v1065, 0.0
        %vm1236 = vcmp.gt.f32.partialorder %v1068, 0.0
        %vm1237 = vcmp.gt.f32.partialorder %v1073, 0.0
        %vm1238 = vcmp.gt.f32.partialorder %v1076, 0.0
        %vm1239 = vcmp.gt.f32.partialorder %v1081, 0.0
        %vm1240 = vcmp.gt.f32.partialorder %v1084, 0.0
        %vm1241 = vcmp.gt.f32.partialorder %v1089, 0.0
        %vm1242 = vcmp.gt.f32.partialorder %v1092, 0.0
        %vm1243 = vcmp.gt.f32.partialorder %v1097, 0.0
        %vm1244 = vcmp.gt.f32.partialorder %v1100, 0.0
        %vm1245 = vcmp.gt.f32.partialorder %v1105, 0.0
        %vm1246 = vcmp.gt.f32.partialorder %v1108, 0.0
        %vm1247 = vcmp.gt.f32.partialorder %v1113, 0.0
        %vm1248 = vcmp.gt.f32.partialorder %v1116, 0.0
        %vm1249 = vcmp.gt.f32.partialorder %v1121, 0.0
        %vm1250 = vcmp.gt.f32.partialorder %v1124, 0.0
        %vm1251 = vcmp.gt.f32.partialorder %v1129, 0.0
        %vm1252 = vcmp.gt.f32.partialorder %v1132, 0.0
        %vm1253 = vcmp.gt.f32.partialorder %v1137, 0.0
        %vm1254 = vcmp.gt.f32.partialorder %v1140, 0.0
        %vm1255 = vcmp.gt.f32.partialorder %v1145, 0.0
        %vm1256 = vcmp.gt.f32.partialorder %v1148, 0.0
        %vm1257 = vcmp.gt.f32.partialorder %v1153, 0.0
        %vm1258 = vcmp.gt.f32.partialorder %v1156, 0.0
        %vm1259 = vcmp.gt.f32.partialorder %v1161, 0.0
        %vm1260 = vcmp.gt.f32.partialorder %v1164, 0.0
        %vm1261 = vcmp.gt.f32.partialorder %v1169, 0.0
        %vm1262 = vcmp.gt.f32.partialorder %v1172, 0.0
        %vm1263 = vcmp.gt.f32.partialorder %v1177, 0.0
        %vm1264 = vcmp.gt.f32.partialorder %v1180, 0.0
        %vm1265 = vcmp.gt.f32.partialorder %v1185, 0.0
        %vm1266 = vcmp.gt.f32.partialorder %v1188, 0.0
        %vm1267 = vcmp.gt.f32.partialorder %v1193, 0.0
        %vm1268 = vcmp.gt.f32.partialorder %v1196, 0.0
        %vm1269 = vcmp.gt.f32.partialorder %v1201, 0.0
        %vm1270 = vcmp.gt.f32.partialorder %v1204, 0.0
        %v1271 = vmin.f32 %v953, 0.0
        %v1272 = vmin.f32 %v956, 0.0
        %v1273 = vmin.f32 %v961, 0.0
        %v1274 = vmin.f32 %v964, 0.0
        %v1275 = vmin.f32 %v969, 0.0
        %v1276 = vmin.f32 %v972, 0.0
        %v1277 = vmin.f32 %v977, 0.0
        %v1278 = vmin.f32 %v980, 0.0
        %v1279 = vmin.f32 %v985, 0.0
        %v1280 = vmin.f32 %v988, 0.0
        %v1281 = vmin.f32 %v993, 0.0
        %v1282 = vmin.f32 %v996, 0.0
        %v1283 = vmin.f32 %v1001, 0.0
        %v1284 = vmin.f32 %v1004, 0.0
        %v1285 = vmin.f32 %v1009, 0.0
        %v1286 = vmin.f32 %v1012, 0.0
        %v1287 = vmin.f32 %v1017, 0.0
        %v1288 = vmin.f32 %v1020, 0.0
        %v1289 = vmin.f32 %v1025, 0.0
        %v1290 = vmin.f32 %v1028, 0.0
        %v1291 = vmin.f32 %v1033, 0.0
        %v1292 = vmin.f32 %v1036, 0.0
        %v1293 = vmin.f32 %v1041, 0.0
        %v1294 = vmin.f32 %v1044, 0.0
        %v1295 = vmin.f32 %v1049, 0.0
        %v1296 = vmin.f32 %v1052, 0.0
        %v1297 = vmin.f32 %v1057, 0.0
        %v1298 = vmin.f32 %v1060, 0.0
        %v1299 = vmin.f32 %v1065, 0.0
        %v1300 = vmin.f32 %v1068, 0.0
        %v1301 = vmin.f32 %v1073, 0.0
        %v1302 = vmin.f32 %v1076, 0.0
        %v1303 = vmin.f32 %v1081, 0.0
        %v1304 = vmin.f32 %v1084, 0.0
        %v1305 = vmin.f32 %v1089, 0.0
        %v1306 = vmin.f32 %v1092, 0.0
        %v1307 = vmin.f32 %v1097, 0.0
        %v1308 = vmin.f32 %v1100, 0.0
        %v1309 = vmin.f32 %v1105, 0.0
        %v1310 = vmin.f32 %v1108, 0.0
        %v1311 = vmin.f32 %v1113, 0.0
        %v1312 = vmin.f32 %v1116, 0.0
        %v1313 = vmin.f32 %v1121, 0.0
        %v1314 = vmin.f32 %v1124, 0.0
        %v1315 = vmin.f32 %v1129, 0.0
        %v1316 = vmin.f32 %v1132, 0.0
        %v1317 = vmin.f32 %v1137, 0.0
        %v1318 = vmin.f32 %v1140, 0.0
        %v1319 = vmin.f32 %v1145, 0.0
        %v1320 = vmin.f32 %v1148, 0.0
        %v1321 = vmin.f32 %v1153, 0.0
        %v1322 = vmin.f32 %v1156, 0.0
        %v1323 = vmin.f32 %v1161, 0.0
        %v1324 = vmin.f32 %v1164, 0.0
        %v1325 = vmin.f32 %v1169, 0.0
        %v1326 = vmin.f32 %v1172, 0.0
        %v1327 = vmin.f32 %v1177, 0.0
        %v1328 = vmin.f32 %v1180, 0.0
        %v1329 = vmin.f32 %v1185, 0.0
        %v1330 = vmin.f32 %v1188, 0.0
        %v1331 = vmin.f32 %v1193, 0.0
        %v1332 = vmin.f32 %v1196, 0.0
        %v1333 = vmin.f32 %v1201, 0.0
        %v1334 = vmin.f32 %v1204, 0.0
        %v1335 = vmul.f32 %v1271, 1.442695
        %v1336 = vpow.pop %v1335
        %v1337 = vmul.f32 %v1272, 1.442695
        %v1338 = vpow.pop %v1337
        %v1339 = vmul.f32 %v1273, 1.442695
        %v1340 = vpow.pop %v1339
        %v1341 = vmul.f32 %v1274, 1.442695
        %v1342 = vpow.pop %v1341
        %v1343 = vmul.f32 %v1275, 1.442695
        %v1344 = vpow.pop %v1343
        %v1345 = vmul.f32 %v1276, 1.442695
        %v1346 = vpow.pop %v1345
        %v1347 = vmul.f32 %v1277, 1.442695
        %v1348 = vpow.pop %v1347
        %v1349 = vmul.f32 %v1278, 1.442695
        %v1350 = vpow.pop %v1349
        %v1351 = vmul.f32 %v1279, 1.442695
        %v1352 = vpow.pop %v1351
        %v1353 = vmul.f32 %v1280, 1.442695
        %v1354 = vpow.pop %v1353
        %v1355 = vmul.f32 %v1281, 1.442695
        %v1356 = vpow.pop %v1355
        %v1357 = vmul.f32 %v1282, 1.442695
        %v1358 = vpow.pop %v1357
        %v1359 = vmul.f32 %v1283, 1.442695
        %v1360 = vpow.pop %v1359
        %v1361 = vmul.f32 %v1284, 1.442695
        %v1362 = vpow.pop %v1361
        %v1363 = vmul.f32 %v1285, 1.442695
        %v1364 = vpow.pop %v1363
        %v1365 = vmul.f32 %v1286, 1.442695
        %v1366 = vpow.pop %v1365
        %v1367 = vmul.f32 %v1287, 1.442695
        %v1368 = vpow.pop %v1367
        %v1369 = vmul.f32 %v1288, 1.442695
        %v1370 = vpow.pop %v1369
        %v1371 = vmul.f32 %v1289, 1.442695
        %v1372 = vpow.pop %v1371
        %v1373 = vmul.f32 %v1290, 1.442695
        %v1374 = vpow.pop %v1373
        %v1375 = vmul.f32 %v1291, 1.442695
        %v1376 = vpow.pop %v1375
        %v1377 = vmul.f32 %v1292, 1.442695
        %v1378 = vpow.pop %v1377
        %v1379 = vmul.f32 %v1293, 1.442695
        %v1380 = vpow.pop %v1379
        %v1381 = vmul.f32 %v1294, 1.442695
        %v1382 = vpow.pop %v1381
        %v1383 = vmul.f32 %v1295, 1.442695
        %v1384 = vpow.pop %v1383
        %v1385 = vmul.f32 %v1296, 1.442695
        %v1386 = vpow.pop %v1385
        %v1387 = vmul.f32 %v1297, 1.442695
        %v1388 = vpow.pop %v1387
        %v1389 = vmul.f32 %v1298, 1.442695
        %v1390 = vpow.pop %v1389
        %v1391 = vmul.f32 %v1299, 1.442695
        %v1392 = vpow.pop %v1391
        %v1393 = vmul.f32 %v1300, 1.442695
        %v1394 = vpow.pop %v1393
        %v1395 = vmul.f32 %v1301, 1.442695
        %v1396 = vpow.pop %v1395
        %v1397 = vmul.f32 %v1302, 1.442695
        %v1398 = vpow.pop %v1397
        %v1399 = vmul.f32 %v1303, 1.442695
        %v1400 = vpow.pop %v1399
        %v1401 = vmul.f32 %v1304, 1.442695
        %v1402 = vpow.pop %v1401
        %v1403 = vmul.f32 %v1305, 1.442695
        %v1404 = vpow.pop %v1403
        %v1405 = vmul.f32 %v1306, 1.442695
        %v1406 = vpow.pop %v1405
        %v1407 = vmul.f32 %v1307, 1.442695
        %v1408 = vpow.pop %v1407
        %v1409 = vmul.f32 %v1308, 1.442695
        %v1410 = vpow.pop %v1409
        %v1411 = vmul.f32 %v1309, 1.442695
        %v1412 = vpow.pop %v1411
        %v1413 = vmul.f32 %v1310, 1.442695
        %v1414 = vpow.pop %v1413
        %v1415 = vmul.f32 %v1311, 1.442695
        %v1416 = vpow.pop %v1415
        %v1417 = vmul.f32 %v1312, 1.442695
        %v1418 = vpow.pop %v1417
        %v1419 = vmul.f32 %v1313, 1.442695
        %v1420 = vpow.pop %v1419
        %v1421 = vmul.f32 %v1314, 1.442695
        %v1422 = vpow.pop %v1421
        %v1423 = vmul.f32 %v1315, 1.442695
        %v1424 = vpow.pop %v1423
        %v1425 = vmul.f32 %v1316, 1.442695
        %v1426 = vpow.pop %v1425
        %v1427 = vmul.f32 %v1317, 1.442695
        %v1428 = vpow.pop %v1427
        %v1429 = vmul.f32 %v1318, 1.442695
        %v1430 = vpow.pop %v1429
        %v1431 = vmul.f32 %v1319, 1.442695
        %v1432 = vpow.pop %v1431
        %v1433 = vmul.f32 %v1320, 1.442695
        %v1434 = vpow.pop %v1433
        %v1435 = vmul.f32 %v1321, 1.442695
        %v1436 = vpow.pop %v1435
        %v1437 = vmul.f32 %v1322, 1.442695
        %v1438 = vpow.pop %v1437
        %v1439 = vmul.f32 %v1323, 1.442695
        %v1440 = vpow.pop %v1439
        %v1441 = vmul.f32 %v1324, 1.442695
        %v1442 = vpow.pop %v1441
        %v1443 = vmul.f32 %v1325, 1.442695
        %v1444 = vpow.pop %v1443
        %v1445 = vmul.f32 %v1326, 1.442695
        %v1446 = vpow.pop %v1445
        %v1447 = vmul.f32 %v1327, 1.442695
        %v1448 = vpow.pop %v1447
        %v1449 = vmul.f32 %v1328, 1.442695
        %v1450 = vpow.pop %v1449
        %v1451 = vmul.f32 %v1329, 1.442695
        %v1452 = vpow.pop %v1451
        %v1453 = vmul.f32 %v1330, 1.442695
        %v1454 = vpow.pop %v1453
        %v1455 = vmul.f32 %v1331, 1.442695
        %v1456 = vpow.pop %v1455
        %v1457 = vmul.f32 %v1332, 1.442695
        %v1458 = vpow.pop %v1457
        %v1459 = vmul.f32 %v1333, 1.442695
        %v1460 = vpow.pop %v1459
        %v1461 = vmul.f32 %v1334, 1.442695
        %v1462 = vpow.pop %v1461
        %v1463 = vsub.f32 %v1336, 1.0
        %v1464 = vsub.f32 %v1338, 1.0
        %v1465 = vsub.f32 %v1340, 1.0
        %v1466 = vsub.f32 %v1342, 1.0
        %v1467 = vsub.f32 %v1344, 1.0
        %v1468 = vsub.f32 %v1346, 1.0
        %v1469 = vsub.f32 %v1348, 1.0
        %v1470 = vsub.f32 %v1350, 1.0
        %v1471 = vsub.f32 %v1352, 1.0
        %v1472 = vsub.f32 %v1354, 1.0
        %v1473 = vsub.f32 %v1356, 1.0
        %v1474 = vsub.f32 %v1358, 1.0
        %v1475 = vsub.f32 %v1360, 1.0
        %v1476 = vsub.f32 %v1362, 1.0
        %v1477 = vsub.f32 %v1364, 1.0
        %v1478 = vsub.f32 %v1366, 1.0
        %v1479 = vsub.f32 %v1368, 1.0
        %v1480 = vsub.f32 %v1370, 1.0
        %v1481 = vsub.f32 %v1372, 1.0
        %v1482 = vsub.f32 %v1374, 1.0
        %v1483 = vsub.f32 %v1376, 1.0
        %v1484 = vsub.f32 %v1378, 1.0
        %v1485 = vsub.f32 %v1380, 1.0
        %v1486 = vsub.f32 %v1382, 1.0
        %v1487 = vsub.f32 %v1384, 1.0
        %v1488 = vsub.f32 %v1386, 1.0
        %v1489 = vsub.f32 %v1388, 1.0
        %v1490 = vsub.f32 %v1390, 1.0
        %v1491 = vsub.f32 %v1392, 1.0
        %v1492 = vsub.f32 %v1394, 1.0
        %v1493 = vsub.f32 %v1396, 1.0
        %v1494 = vsub.f32 %v1398, 1.0
        %v1495 = vsub.f32 %v1400, 1.0
        %v1496 = vsub.f32 %v1402, 1.0
        %v1497 = vsub.f32 %v1404, 1.0
        %v1498 = vsub.f32 %v1406, 1.0
        %v1499 = vsub.f32 %v1408, 1.0
        %v1500 = vsub.f32 %v1410, 1.0
        %v1501 = vsub.f32 %v1412, 1.0
        %v1502 = vsub.f32 %v1414, 1.0
        %v1503 = vsub.f32 %v1416, 1.0
        %v1504 = vsub.f32 %v1418, 1.0
        %v1505 = vsub.f32 %v1420, 1.0
        %v1506 = vsub.f32 %v1422, 1.0
        %v1507 = vsub.f32 %v1424, 1.0
        %v1508 = vsub.f32 %v1426, 1.0
        %v1509 = vsub.f32 %v1428, 1.0
        %v1510 = vsub.f32 %v1430, 1.0
        %v1511 = vsub.f32 %v1432, 1.0
        %v1512 = vsub.f32 %v1434, 1.0
        %v1513 = vsub.f32 %v1436, 1.0
        %v1514 = vsub.f32 %v1438, 1.0
        %v1515 = vsub.f32 %v1440, 1.0
        %v1516 = vsub.f32 %v1442, 1.0
        %v1517 = vsub.f32 %v1444, 1.0
        %v1518 = vsub.f32 %v1446, 1.0
        %v1519 = vsub.f32 %v1448, 1.0
        %v1520 = vsub.f32 %v1450, 1.0
        %v1521 = vsub.f32 %v1452, 1.0
        %v1522 = vsub.f32 %v1454, 1.0
        %v1523 = vsub.f32 %v1456, 1.0
        %v1524 = vsub.f32 %v1458, 1.0
        %v1525 = vsub.f32 %v1460, 1.0
        %v1526 = vsub.f32 %v1462, 1.0
        %v1527 = vmul.f32 %v1463, 1.6732632
        %v1528 = vmul.f32 %v1464, 1.6732632
        %v1529 = vmul.f32 %v1465, 1.6732632
        %v1530 = vmul.f32 %v1466, 1.6732632
        %v1531 = vmul.f32 %v1467, 1.6732632
        %v1532 = vmul.f32 %v1468, 1.6732632
        %v1533 = vmul.f32 %v1469, 1.6732632
        %v1534 = vmul.f32 %v1470, 1.6732632
        %v1535 = vmul.f32 %v1471, 1.6732632
        %v1536 = vmul.f32 %v1472, 1.6732632
        %v1537 = vmul.f32 %v1473, 1.6732632
        %v1538 = vmul.f32 %v1474, 1.6732632
        %v1539 = vmul.f32 %v1475, 1.6732632
        %v1540 = vmul.f32 %v1476, 1.6732632
        %v1541 = vmul.f32 %v1477, 1.6732632
        %v1542 = vmul.f32 %v1478, 1.6732632
        %v1543 = vmul.f32 %v1479, 1.6732632
        %v1544 = vmul.f32 %v1480, 1.6732632
        %v1545 = vmul.f32 %v1481, 1.6732632
        %v1546 = vmul.f32 %v1482, 1.6732632
        %v1547 = vmul.f32 %v1483, 1.6732632
        %v1548 = vmul.f32 %v1484, 1.6732632
        %v1549 = vmul.f32 %v1485, 1.6732632
        %v1550 = vmul.f32 %v1486, 1.6732632
        %v1551 = vmul.f32 %v1487, 1.6732632
        %v1552 = vmul.f32 %v1488, 1.6732632
        %v1553 = vmul.f32 %v1489, 1.6732632
        %v1554 = vmul.f32 %v1490, 1.6732632
        %v1555 = vmul.f32 %v1491, 1.6732632
        %v1556 = vmul.f32 %v1492, 1.6732632
        %v1557 = vmul.f32 %v1493, 1.6732632
        %v1558 = vmul.f32 %v1494, 1.6732632
        %v1559 = vmul.f32 %v1495, 1.6732632
        %v1560 = vmul.f32 %v1496, 1.6732632
        %v1561 = vmul.f32 %v1497, 1.6732632
        %v1562 = vmul.f32 %v1498, 1.6732632
        %v1563 = vmul.f32 %v1499, 1.6732632
        %v1564 = vmul.f32 %v1500, 1.6732632
        %v1565 = vmul.f32 %v1501, 1.6732632
        %v1566 = vmul.f32 %v1502, 1.6732632
        %v1567 = vmul.f32 %v1503, 1.6732632
        %v1568 = vmul.f32 %v1504, 1.6732632
        %v1569 = vmul.f32 %v1505, 1.6732632
        %v1570 = vmul.f32 %v1506, 1.6732632
        %v1571 = vmul.f32 %v1507, 1.6732632
        %v1572 = vmul.f32 %v1508, 1.6732632
        %v1573 = vmul.f32 %v1509, 1.6732632
        %v1574 = vmul.f32 %v1510, 1.6732632
        %v1575 = vmul.f32 %v1511, 1.6732632
        %v1576 = vmul.f32 %v1512, 1.6732632
        %v1577 = vmul.f32 %v1513, 1.6732632
        %v1578 = vmul.f32 %v1514, 1.6732632
        %v1579 = vmul.f32 %v1515, 1.6732632
        %v1580 = vmul.f32 %v1516, 1.6732632
        %v1581 = vmul.f32 %v1517, 1.6732632
        %v1582 = vmul.f32 %v1518, 1.6732632
        %v1583 = vmul.f32 %v1519, 1.6732632
        %v1584 = vmul.f32 %v1520, 1.6732632
        %v1585 = vmul.f32 %v1521, 1.6732632
        %v1586 = vmul.f32 %v1522, 1.6732632
        %v1587 = vmul.f32 %v1523, 1.6732632
        %v1588 = vmul.f32 %v1524, 1.6732632
        %v1589 = vmul.f32 %v1525, 1.6732632
        %v1590 = vmul.f32 %v1526, 1.6732632
        %v1591 = vsel %vm1207, %v953, %v1527
        %v1592 = vsel %vm1208, %v956, %v1528
        %v1593 = vsel %vm1209, %v961, %v1529
        %v1594 = vsel %vm1210, %v964, %v1530
        %v1595 = vsel %vm1211, %v969, %v1531
        %v1596 = vsel %vm1212, %v972, %v1532
        %v1597 = vsel %vm1213, %v977, %v1533
        %v1598 = vsel %vm1214, %v980, %v1534
        %v1599 = vsel %vm1215, %v985, %v1535
        %v1600 = vsel %vm1216, %v988, %v1536
        %v1601 = vsel %vm1217, %v993, %v1537
        %v1602 = vsel %vm1218, %v996, %v1538
        %v1603 = vsel %vm1219, %v1001, %v1539
        %v1604 = vsel %vm1220, %v1004, %v1540
        %v1605 = vsel %vm1221, %v1009, %v1541
        %v1606 = vsel %vm1222, %v1012, %v1542
        %v1607 = vsel %vm1223, %v1017, %v1543
        %v1608 = vsel %vm1224, %v1020, %v1544
        %v1609 = vsel %vm1225, %v1025, %v1545
        %v1610 = vsel %vm1226, %v1028, %v1546
        %v1611 = vsel %vm1227, %v1033, %v1547
        %v1612 = vsel %vm1228, %v1036, %v1548
        %v1613 = vsel %vm1229, %v1041, %v1549
        %v1614 = vsel %vm1230, %v1044, %v1550
        %v1615 = vsel %vm1231, %v1049, %v1551
        %v1616 = vsel %vm1232, %v1052, %v1552
        %v1617 = vsel %vm1233, %v1057, %v1553
        %v1618 = vsel %vm1234, %v1060, %v1554
        %v1619 = vsel %vm1235, %v1065, %v1555
        %v1620 = vsel %vm1236, %v1068, %v1556
        %v1621 = vsel %vm1237, %v1073, %v1557
        %v1622 = vsel %vm1238, %v1076, %v1558
        %v1623 = vsel %vm1239, %v1081, %v1559
        %v1624 = vsel %vm1240, %v1084, %v1560
        %v1625 = vsel %vm1241, %v1089, %v1561
        %v1626 = vsel %vm1242, %v1092, %v1562
        %v1627 = vsel %vm1243, %v1097, %v1563
        %v1628 = vsel %vm1244, %v1100, %v1564
        %v1629 = vsel %vm1245, %v1105, %v1565
        %v1630 = vsel %vm1246, %v1108, %v1566
        %v1631 = vsel %vm1247, %v1113, %v1567
        %v1632 = vsel %vm1248, %v1116, %v1568
        %v1633 = vsel %vm1249, %v1121, %v1569
        %v1634 = vsel %vm1250, %v1124, %v1570
        %v1635 = vsel %vm1251, %v1129, %v1571
        %v1636 = vsel %vm1252, %v1132, %v1572
        %v1637 = vsel %vm1253, %v1137, %v1573
        %v1638 = vsel %vm1254, %v1140, %v1574
        %v1639 = vsel %vm1255, %v1145, %v1575
        %v1640 = vsel %vm1256, %v1148, %v1576
        %v1641 = vsel %vm1257, %v1153, %v1577
        %v1642 = vsel %vm1258, %v1156, %v1578
        %v1643 = vsel %vm1259, %v1161, %v1579
        %v1644 = vsel %vm1260, %v1164, %v1580
        %v1645 = vsel %vm1261, %v1169, %v1581
        %v1646 = vsel %vm1262, %v1172, %v1582
        %v1647 = vsel %vm1263, %v1177, %v1583
        %v1648 = vsel %vm1264, %v1180, %v1584
        %v1649 = vsel %vm1265, %v1185, %v1585
        %v1650 = vsel %vm1266, %v1188, %v1586
        %v1651 = vsel %vm1267, %v1193, %v1587
        %v1652 = vsel %vm1268, %v1196, %v1588
        %v1653 = vsel %vm1269, %v1201, %v1589
        %v1654 = vsel %vm1270, %v1204, %v1590
        %v1655 = vmul.f32 %v1591, 1.050701
        %v1656 = vmul.f32 %v1592, 1.050701
        %v1657 = vmul.f32 %v1593, 1.050701
        %v1658 = vmul.f32 %v1594, 1.050701
        %v1659 = vmul.f32 %v1595, 1.050701
        %v1660 = vmul.f32 %v1596, 1.050701
        %v1661 = vmul.f32 %v1597, 1.050701
        %v1662 = vmul.f32 %v1598, 1.050701
        %v1663 = vmul.f32 %v1599, 1.050701
        %v1664 = vmul.f32 %v1600, 1.050701
        %v1665 = vmul.f32 %v1601, 1.050701
        %v1666 = vmul.f32 %v1602, 1.050701
        %v1667 = vmul.f32 %v1603, 1.050701
        %v1668 = vmul.f32 %v1604, 1.050701
        %v1669 = vmul.f32 %v1605, 1.050701
        %v1670 = vmul.f32 %v1606, 1.050701
        %v1671 = vmul.f32 %v1607, 1.050701
        %v1672 = vmul.f32 %v1608, 1.050701
        %v1673 = vmul.f32 %v1609, 1.050701
        %v1674 = vmul.f32 %v1610, 1.050701
        %v1675 = vmul.f32 %v1611, 1.050701
        %v1676 = vmul.f32 %v1612, 1.050701
        %v1677 = vmul.f32 %v1613, 1.050701
        %v1678 = vmul.f32 %v1614, 1.050701
        %v1679 = vmul.f32 %v1615, 1.050701
        %v1680 = vmul.f32 %v1616, 1.050701
        %v1681 = vmul.f32 %v1617, 1.050701
        %v1682 = vmul.f32 %v1618, 1.050701
        %v1683 = vmul.f32 %v1619, 1.050701
        %v1684 = vmul.f32 %v1620, 1.050701
        %v1685 = vmul.f32 %v1621, 1.050701
        %v1686 = vmul.f32 %v1622, 1.050701
        %v1687 = vmul.f32 %v1623, 1.050701
        %v1688 = vmul.f32 %v1624, 1.050701
        %v1689 = vmul.f32 %v1625, 1.050701
        %v1690 = vmul.f32 %v1626, 1.050701
        %v1691 = vmul.f32 %v1627, 1.050701
        %v1692 = vmul.f32 %v1628, 1.050701
        %v1693 = vmul.f32 %v1629, 1.050701
        %v1694 = vmul.f32 %v1630, 1.050701
        %v1695 = vmul.f32 %v1631, 1.050701
        %v1696 = vmul.f32 %v1632, 1.050701
        %v1697 = vmul.f32 %v1633, 1.050701
        %v1698 = vmul.f32 %v1634, 1.050701
        %v1699 = vmul.f32 %v1635, 1.050701
        %v1700 = vmul.f32 %v1636, 1.050701
        %v1701 = vmul.f32 %v1637, 1.050701
        %v1702 = vmul.f32 %v1638, 1.050701
        %v1703 = vmul.f32 %v1639, 1.050701
        %v1704 = vmul.f32 %v1640, 1.050701
        %v1705 = vmul.f32 %v1641, 1.050701
        %v1706 = vmul.f32 %v1642, 1.050701
        %v1707 = vmul.f32 %v1643, 1.050701
        %v1708 = vmul.f32 %v1644, 1.050701
        %v1709 = vmul.f32 %v1645, 1.050701
        %v1710 = vmul.f32 %v1646, 1.050701
        %v1711 = vmul.f32 %v1647, 1.050701
        %v1712 = vmul.f32 %v1648, 1.050701
        %v1713 = vmul.f32 %v1649, 1.050701
        %v1714 = vmul.f32 %v1650, 1.050701
        %v1715 = vmul.f32 %v1651, 1.050701
        %v1716 = vmul.f32 %v1652, 1.050701
        %v1717 = vmul.f32 %v1653, 1.050701
        %v1718 = vmul.f32 %v1654, 1.050701
        %v1719 = vld [vmem:[#allocation8] sm:$0xff]
        %v1720 = vld [vmem:[#allocation8 + $0x8] sm:$0xf]
        %v1721 = vld [vmem:[#allocation8 + $0xc] sm:$0xff]
        %v1722 = vld [vmem:[#allocation8 + $0x14] sm:$0xf]
        %v1723 = vld [vmem:[#allocation8 + $0x18] sm:$0xff]
        %v1724 = vld [vmem:[#allocation8 + $0x20] sm:$0xf]
        %v1725 = vld [vmem:[#allocation8 + $0x24] sm:$0xff]
        %v1726 = vld [vmem:[#allocation8 + $0x2c] sm:$0xf]
        %v1727 = vld [vmem:[#allocation8 + $0x30] sm:$0xff]
        %v1728 = vld [vmem:[#allocation8 + $0x38] sm:$0xf]
        %v1729 = vld [vmem:[#allocation8 + $0x3c] sm:$0xff]
        %v1730 = vld [vmem:[#allocation8 + $0x44] sm:$0xf]
        %v1731 = vld [vmem:[#allocation8 + $0x48] sm:$0xff]
        %v1732 = vld [vmem:[#allocation8 + $0x50] sm:$0xf]
        %v1733 = vld [vmem:[#allocation8 + $0x54] sm:$0xff]
        %v1734 = vld [vmem:[#allocation8 + $0x5c] sm:$0xf]
        %v1735 = vld [vmem:[#allocation8 + $0x60] sm:$0xff]
        %v1736 = vld [vmem:[#allocation8 + $0x68] sm:$0xf]
        %v1737 = vld [vmem:[#allocation8 + $0x6c] sm:$0xff]
        %v1738 = vld [vmem:[#allocation8 + $0x74] sm:$0xf]
        %v1739 = vld [vmem:[#allocation8 + $0x78] sm:$0xff]
        %v1740 = vld [vmem:[#allocation8 + $0x80] sm:$0xf]
        %v1741 = vld [vmem:[#allocation8 + $0x84] sm:$0xff]
        %v1742 = vld [vmem:[#allocation8 + $0x8c] sm:$0xf]
        %v1743 = vld [vmem:[#allocation8 + $0x90] sm:$0xff]
        %v1744 = vld [vmem:[#allocation8 + $0x98] sm:$0xf]
        %v1745 = vld [vmem:[#allocation8 + $0x9c] sm:$0xff]
        %v1746 = vld [vmem:[#allocation8 + $0xa4] sm:$0xf]
        %v1747 = vld [vmem:[#allocation8 + $0xa8] sm:$0xff]
        %v1748 = vld [vmem:[#allocation8 + $0xb0] sm:$0xf]
        %v1749 = vld [vmem:[#allocation8 + $0xb4] sm:$0xff]
        %v1750 = vld [vmem:[#allocation8 + $0xbc] sm:$0xf]
        %v1751 = vpack.c.bf16 %v1656, %v1655
        %v1752 = vpack.c.bf16 %v1658, %v1657
        %v1753 = vpack.c.bf16 %v1660, %v1659
        %v1754 = vpack.c.bf16 %v1662, %v1661
        %v1755 = vpack.c.bf16 %v1664, %v1663
        %v1756 = vpack.c.bf16 %v1666, %v1665
        %v1757 = vpack.c.bf16 %v1668, %v1667
        %v1758 = vpack.c.bf16 %v1670, %v1669
        %v1759 = vpack.c.bf16 %v1672, %v1671
        %v1760 = vpack.c.bf16 %v1674, %v1673
        %v1761 = vpack.c.bf16 %v1676, %v1675
        %v1762 = vpack.c.bf16 %v1678, %v1677
        %v1763 = vpack.c.bf16 %v1680, %v1679
        %v1764 = vpack.c.bf16 %v1682, %v1681
        %v1765 = vpack.c.bf16 %v1684, %v1683
        %v1766 = vpack.c.bf16 %v1686, %v1685
        %v1767 = vpack.c.bf16 %v1688, %v1687
        %v1768 = vpack.c.bf16 %v1690, %v1689
        %v1769 = vpack.c.bf16 %v1692, %v1691
        %v1770 = vpack.c.bf16 %v1694, %v1693
        %v1771 = vpack.c.bf16 %v1696, %v1695
        %v1772 = vpack.c.bf16 %v1698, %v1697
        %v1773 = vpack.c.bf16 %v1700, %v1699
        %v1774 = vpack.c.bf16 %v1702, %v1701
        %v1775 = vpack.c.bf16 %v1704, %v1703
        %v1776 = vpack.c.bf16 %v1706, %v1705
        %v1777 = vpack.c.bf16 %v1708, %v1707
        %v1778 = vpack.c.bf16 %v1710, %v1709
        %v1779 = vpack.c.bf16 %v1712, %v1711
        %v1780 = vpack.c.bf16 %v1714, %v1713
        %v1781 = vpack.c.bf16 %v1716, %v1715
        %v1782 = vpack.c.bf16 %v1718, %v1717
        %v1783 = vld [vmem:[#allocation9] sm:$0x7]
        %v1785 = vlaneseq
        %v1786 = vshrl.u32 %v1785, 7
        %v1787 = vsub.s32 0, %v1786
        %v1788 = vrot.slane %v1783, %v1787
        %v1789 = vlaneseq
        %v1790 = vshrl.u32 %v1789, 7
        %v1791 = vsub.s32 1, %v1790
        %v1792 = vrot.slane %v1783, %v1791
        %v1793 = vlaneseq
        %v1794 = vshrl.u32 %v1793, 7
        %v1795 = vsub.s32 2, %v1794
        %v1796 = vrot.slane %v1783, %v1795
        %v1832 = vunpack.c.l.b16 %v1719
        %v1833 = vunpack.c.h.b16 %v1719
        %v1834 = vunpack.c.l.b16 %v1720
        %v1835 = vunpack.c.l.b16 %v1721
        %v1836 = vunpack.c.h.b16 %v1721
        %v1837 = vunpack.c.l.b16 %v1722
        %v1838 = vunpack.c.l.b16 %v1723
        %v1839 = vunpack.c.h.b16 %v1723
        %v1840 = vunpack.c.l.b16 %v1724
        %v1841 = vunpack.c.l.b16 %v1725
        %v1842 = vunpack.c.h.b16 %v1725
        %v1843 = vunpack.c.l.b16 %v1726
        %v1844 = vunpack.c.l.b16 %v1727
        %v1845 = vunpack.c.h.b16 %v1727
        %v1846 = vunpack.c.l.b16 %v1728
        %v1847 = vunpack.c.l.b16 %v1729
        %v1848 = vunpack.c.h.b16 %v1729
        %v1849 = vunpack.c.l.b16 %v1730
        %v1850 = vunpack.c.l.b16 %v1731
        %v1851 = vunpack.c.h.b16 %v1731
        %v1852 = vunpack.c.l.b16 %v1732
        %v1853 = vunpack.c.l.b16 %v1733
        %v1854 = vunpack.c.h.b16 %v1733
        %v1855 = vunpack.c.l.b16 %v1734
        %v1856 = vunpack.c.l.b16 %v1735
        %v1857 = vunpack.c.h.b16 %v1735
        %v1858 = vunpack.c.l.b16 %v1736
        %v1859 = vunpack.c.l.b16 %v1737
        %v1860 = vunpack.c.h.b16 %v1737
        %v1861 = vunpack.c.l.b16 %v1738
        %v1862 = vunpack.c.l.b16 %v1739
        %v1863 = vunpack.c.h.b16 %v1739
        %v1864 = vunpack.c.l.b16 %v1740
        %v1865 = vunpack.c.l.b16 %v1741
        %v1866 = vunpack.c.h.b16 %v1741
        %v1867 = vunpack.c.l.b16 %v1742
        %v1868 = vunpack.c.l.b16 %v1743
        %v1869 = vunpack.c.h.b16 %v1743
        %v1870 = vunpack.c.l.b16 %v1744
        %v1871 = vunpack.c.l.b16 %v1745
        %v1872 = vunpack.c.h.b16 %v1745
        %v1873 = vunpack.c.l.b16 %v1746
        %v1874 = vunpack.c.l.b16 %v1747
        %v1875 = vunpack.c.h.b16 %v1747
        %v1876 = vunpack.c.l.b16 %v1748
        %v1877 = vunpack.c.l.b16 %v1749
        %v1878 = vunpack.c.h.b16 %v1749
        %v1879 = vunpack.c.l.b16 %v1750
        %v1880 = vpack.c.b16 %v1835, %v1832
        %v1881 = vpack.c.b16 %v1836, %v1833
        %v1882 = vpack.c.b16 %v1837, %v1834
        %v1883 = vpack.c.b16 %v1841, %v1838
        %v1884 = vpack.c.b16 %v1842, %v1839
        %v1885 = vpack.c.b16 %v1843, %v1840
        %v1886 = vpack.c.b16 %v1847, %v1844
        %v1887 = vpack.c.b16 %v1848, %v1845
        %v1888 = vpack.c.b16 %v1849, %v1846
        %v1889 = vpack.c.b16 %v1853, %v1850
        %v1890 = vpack.c.b16 %v1854, %v1851
        %v1891 = vpack.c.b16 %v1855, %v1852
        %v1892 = vpack.c.b16 %v1859, %v1856
        %v1893 = vpack.c.b16 %v1860, %v1857
        %v1894 = vpack.c.b16 %v1861, %v1858
        %v1895 = vpack.c.b16 %v1865, %v1862
        %v1896 = vpack.c.b16 %v1866, %v1863
        %v1897 = vpack.c.b16 %v1867, %v1864
        %v1898 = vpack.c.b16 %v1871, %v1868
        %v1899 = vpack.c.b16 %v1872, %v1869
        %v1900 = vpack.c.b16 %v1873, %v1870
        %v1901 = vpack.c.b16 %v1877, %v1874
        %v1902 = vpack.c.b16 %v1878, %v1875
        %v1903 = vpack.c.b16 %v1879, %v1876
        %1928 = vmatprep.subr.bf16.mxu0 %v1902
        %1929 = vmatpush1.bf16.msra.mxu0 %v1901
        %1930 = vmatprep.subr.bf16.mxu0 %v1899
        %1931 = vmatpush1.bf16.msra.mxu0 %v1898
        %1932 = vmatprep.subr.bf16.mxu0 %v1896
        %1933 = vmatpush1.bf16.msra.mxu0 %v1895
        %1934 = vmatprep.subr.bf16.mxu0 %v1893
        %1935 = vmatpush1.bf16.msra.mxu0 %v1892
        %1936 = vmatprep.subr.bf16.mxu0 %v1890
        %1937 = vmatpush1.bf16.msra.mxu0 %v1889
        %1938 = vmatprep.subr.bf16.mxu0 %v1887
        %1939 = vmatpush1.bf16.msra.mxu0 %v1886
        %1940 = vmatprep.subr.bf16.mxu0 %v1884
        %1941 = vmatpush1.bf16.msra.mxu0 %v1883
        %1942 = vmatprep.subr.bf16.mxu0 %v1881
        %1943 = vmatpush1.bf16.msra.mxu0 %v1880
        %1944 = vmatprep.subr.bf16.mxu0 0
        %1945 = vmatpush2.bf16.msra.mxu0 0
        %1946 = vmatprep.subr.bf16.mxu0 0
        %1947 = vmatpush2.bf16.msra.mxu0 0
        %1948 = vmatprep.subr.bf16.mxu0 0
        %1949 = vmatpush2.bf16.msra.mxu0 0
        %1950 = vmatprep.subr.bf16.mxu0 0
        %1951 = vmatpush2.bf16.msra.mxu0 0
        %1952 = vmatprep.subr.bf16.mxu0 0
        %1953 = vmatpush2.bf16.msra.mxu0 0
        %1954 = vmatprep.subr.bf16.mxu0 0
        %1955 = vmatpush2.bf16.msra.mxu0 0
        %1956 = vmatprep.subr.bf16.mxu0 0
        %1957 = vmatpush2.bf16.msra.mxu0 0
        %1958 = vmatprep.subr.bf16.mxu0 0
        %1959 = vmatpush2.bf16.msra.mxu0 0
        %1960 = vmatprep.mubr.bf16.mxu0 0
        %1961 = vmatmul.mubr.bf16.gmra.mxu0 %v1751
        %v1962 = vpop.f32.mrf.mxu0
        %v1963 = vadd.f32 %v1788, %v1962
        %v1964 = vpop.f32.mrf.mxu0
        %v1965 = vadd.f32 %v1792, %v1964
        %v1966 = vpop.f32.mrf.mxu0
        %v1967 = vadd.f32 %v1788, %v1966
        %v1968 = vpop.f32.mrf.mxu0
        %v1969 = vadd.f32 %v1792, %v1968
        %1970 = vmatprep.mubr.bf16.mxu0 0
        %1971 = vmatmul.mubr.bf16.gmra.mxu0 %v1752
        %v1972 = vpop.f32.mrf.mxu0
        %v1973 = vadd.f32 %v1788, %v1972
        %v1974 = vpop.f32.mrf.mxu0
        %v1975 = vadd.f32 %v1792, %v1974
        %v1976 = vpop.f32.mrf.mxu0
        %v1977 = vadd.f32 %v1788, %v1976
        %v1978 = vpop.f32.mrf.mxu0
        %v1979 = vadd.f32 %v1792, %v1978
        %1980 = vmatprep.mubr.bf16.mxu0 0
        %1981 = vmatmul.mubr.bf16.gmra.mxu0 %v1753
        %v1982 = vpop.f32.mrf.mxu0
        %v1983 = vadd.f32 %v1788, %v1982
        %v1984 = vpop.f32.mrf.mxu0
        %v1985 = vadd.f32 %v1792, %v1984
        %v1986 = vpop.f32.mrf.mxu0
        %v1987 = vadd.f32 %v1788, %v1986
        %v1988 = vpop.f32.mrf.mxu0
        %v1989 = vadd.f32 %v1792, %v1988
        %1990 = vmatprep.mubr.bf16.mxu0 0
        %1991 = vmatmul.mubr.bf16.gmra.mxu0 %v1754
        %v1992 = vpop.f32.mrf.mxu0
        %v1993 = vadd.f32 %v1788, %v1992
        %v1994 = vpop.f32.mrf.mxu0
        %v1995 = vadd.f32 %v1792, %v1994
        %v1996 = vpop.f32.mrf.mxu0
        %v1997 = vadd.f32 %v1788, %v1996
        %v1998 = vpop.f32.mrf.mxu0
        %v1999 = vadd.f32 %v1792, %v1998
        %2000 = vmatprep.mubr.bf16.mxu0 0
        %2001 = vmatmul.mubr.bf16.gmra.mxu0 %v1755
        %v2002 = vpop.f32.mrf.mxu0
        %v2003 = vadd.f32 %v1788, %v2002
        %v2004 = vpop.f32.mrf.mxu0
        %v2005 = vadd.f32 %v1792, %v2004
        %v2006 = vpop.f32.mrf.mxu0
        %v2007 = vadd.f32 %v1788, %v2006
        %v2008 = vpop.f32.mrf.mxu0
        %v2009 = vadd.f32 %v1792, %v2008
        %2010 = vmatprep.mubr.bf16.mxu0 0
        %2011 = vmatmul.mubr.bf16.gmra.mxu0 %v1756
        %v2012 = vpop.f32.mrf.mxu0
        %v2013 = vadd.f32 %v1788, %v2012
        %v2014 = vpop.f32.mrf.mxu0
        %v2015 = vadd.f32 %v1792, %v2014
        %v2016 = vpop.f32.mrf.mxu0
        %v2017 = vadd.f32 %v1788, %v2016
        %v2018 = vpop.f32.mrf.mxu0
        %v2019 = vadd.f32 %v1792, %v2018
        %2020 = vmatprep.mubr.bf16.mxu0 0
        %2021 = vmatmul.mubr.bf16.gmra.mxu0 %v1757
        %v2022 = vpop.f32.mrf.mxu0
        %v2023 = vadd.f32 %v1788, %v2022
        %v2024 = vpop.f32.mrf.mxu0
        %v2025 = vadd.f32 %v1792, %v2024
        %v2026 = vpop.f32.mrf.mxu0
        %v2027 = vadd.f32 %v1788, %v2026
        %v2028 = vpop.f32.mrf.mxu0
        %v2029 = vadd.f32 %v1792, %v2028
        %2030 = vmatprep.mubr.bf16.mxu0 0
        %2031 = vmatmul.mubr.bf16.gmra.mxu0 %v1758
        %v2032 = vpop.f32.mrf.mxu0
        %v2033 = vadd.f32 %v1788, %v2032
        %v2034 = vpop.f32.mrf.mxu0
        %v2035 = vadd.f32 %v1792, %v2034
        %v2036 = vpop.f32.mrf.mxu0
        %v2037 = vadd.f32 %v1788, %v2036
        %v2038 = vpop.f32.mrf.mxu0
        %v2039 = vadd.f32 %v1792, %v2038
        %2040 = vmatprep.mubr.bf16.mxu0 0
        %2041 = vmatmul.mubr.bf16.gmra.mxu0 %v1759
        %v2042 = vpop.f32.mrf.mxu0
        %v2043 = vadd.f32 %v1788, %v2042
        %v2044 = vpop.f32.mrf.mxu0
        %v2045 = vadd.f32 %v1792, %v2044
        %v2046 = vpop.f32.mrf.mxu0
        %v2047 = vadd.f32 %v1788, %v2046
        %v2048 = vpop.f32.mrf.mxu0
        %v2049 = vadd.f32 %v1792, %v2048
        %2050 = vmatprep.mubr.bf16.mxu0 0
        %2051 = vmatmul.mubr.bf16.gmra.mxu0 %v1760
        %v2052 = vpop.f32.mrf.mxu0
        %v2053 = vadd.f32 %v1788, %v2052
        %v2054 = vpop.f32.mrf.mxu0
        %v2055 = vadd.f32 %v1792, %v2054
        %v2056 = vpop.f32.mrf.mxu0
        %v2057 = vadd.f32 %v1788, %v2056
        %v2058 = vpop.f32.mrf.mxu0
        %v2059 = vadd.f32 %v1792, %v2058
        %2060 = vmatprep.mubr.bf16.mxu0 0
        %2061 = vmatmul.mubr.bf16.gmra.mxu0 %v1761
        %v2062 = vpop.f32.mrf.mxu0
        %v2063 = vadd.f32 %v1788, %v2062
        %v2064 = vpop.f32.mrf.mxu0
        %v2065 = vadd.f32 %v1792, %v2064
        %v2066 = vpop.f32.mrf.mxu0
        %v2067 = vadd.f32 %v1788, %v2066
        %v2068 = vpop.f32.mrf.mxu0
        %v2069 = vadd.f32 %v1792, %v2068
        %2070 = vmatprep.mubr.bf16.mxu0 0
        %2071 = vmatmul.mubr.bf16.gmra.mxu0 %v1762
        %v2072 = vpop.f32.mrf.mxu0
        %v2073 = vadd.f32 %v1788, %v2072
        %v2074 = vpop.f32.mrf.mxu0
        %v2075 = vadd.f32 %v1792, %v2074
        %v2076 = vpop.f32.mrf.mxu0
        %v2077 = vadd.f32 %v1788, %v2076
        %v2078 = vpop.f32.mrf.mxu0
        %v2079 = vadd.f32 %v1792, %v2078
        %2080 = vmatprep.mubr.bf16.mxu0 0
        %2081 = vmatmul.mubr.bf16.gmra.mxu0 %v1763
        %v2082 = vpop.f32.mrf.mxu0
        %v2083 = vadd.f32 %v1788, %v2082
        %v2084 = vpop.f32.mrf.mxu0
        %v2085 = vadd.f32 %v1792, %v2084
        %v2086 = vpop.f32.mrf.mxu0
        %v2087 = vadd.f32 %v1788, %v2086
        %v2088 = vpop.f32.mrf.mxu0
        %v2089 = vadd.f32 %v1792, %v2088
        %2090 = vmatprep.mubr.bf16.mxu0 0
        %2091 = vmatmul.mubr.bf16.gmra.mxu0 %v1764
        %v2092 = vpop.f32.mrf.mxu0
        %v2093 = vadd.f32 %v1788, %v2092
        %v2094 = vpop.f32.mrf.mxu0
        %v2095 = vadd.f32 %v1792, %v2094
        %v2096 = vpop.f32.mrf.mxu0
        %v2097 = vadd.f32 %v1788, %v2096
        %v2098 = vpop.f32.mrf.mxu0
        %v2099 = vadd.f32 %v1792, %v2098
        %2100 = vmatprep.mubr.bf16.mxu0 0
        %2101 = vmatmul.mubr.bf16.gmra.mxu0 %v1765
        %v2102 = vpop.f32.mrf.mxu0
        %v2103 = vadd.f32 %v1788, %v2102
        %v2104 = vpop.f32.mrf.mxu0
        %v2105 = vadd.f32 %v1792, %v2104
        %v2106 = vpop.f32.mrf.mxu0
        %v2107 = vadd.f32 %v1788, %v2106
        %v2108 = vpop.f32.mrf.mxu0
        %v2109 = vadd.f32 %v1792, %v2108
        %2110 = vmatprep.mubr.bf16.mxu0 0
        %2111 = vmatmul.mubr.bf16.gmra.mxu0 %v1766
        %v2112 = vpop.f32.mrf.mxu0
        %v2113 = vadd.f32 %v1788, %v2112
        %v2114 = vpop.f32.mrf.mxu0
        %v2115 = vadd.f32 %v1792, %v2114
        %v2116 = vpop.f32.mrf.mxu0
        %v2117 = vadd.f32 %v1788, %v2116
        %v2118 = vpop.f32.mrf.mxu0
        %v2119 = vadd.f32 %v1792, %v2118
        %2120 = vmatprep.mubr.bf16.mxu0 0
        %2121 = vmatmul.mubr.bf16.gmra.mxu0 %v1767
        %v2122 = vpop.f32.mrf.mxu0
        %v2123 = vadd.f32 %v1788, %v2122
        %v2124 = vpop.f32.mrf.mxu0
        %v2125 = vadd.f32 %v1792, %v2124
        %v2126 = vpop.f32.mrf.mxu0
        %v2127 = vadd.f32 %v1788, %v2126
        %v2128 = vpop.f32.mrf.mxu0
        %v2129 = vadd.f32 %v1792, %v2128
        %2130 = vmatprep.mubr.bf16.mxu0 0
        %2131 = vmatmul.mubr.bf16.gmra.mxu0 %v1768
        %v2132 = vpop.f32.mrf.mxu0
        %v2133 = vadd.f32 %v1788, %v2132
        %v2134 = vpop.f32.mrf.mxu0
        %v2135 = vadd.f32 %v1792, %v2134
        %v2136 = vpop.f32.mrf.mxu0
        %v2137 = vadd.f32 %v1788, %v2136
        %v2138 = vpop.f32.mrf.mxu0
        %v2139 = vadd.f32 %v1792, %v2138
        %2140 = vmatprep.mubr.bf16.mxu0 0
        %2141 = vmatmul.mubr.bf16.gmra.mxu0 %v1769
        %v2142 = vpop.f32.mrf.mxu0
        %v2143 = vadd.f32 %v1788, %v2142
        %v2144 = vpop.f32.mrf.mxu0
        %v2145 = vadd.f32 %v1792, %v2144
        %v2146 = vpop.f32.mrf.mxu0
        %v2147 = vadd.f32 %v1788, %v2146
        %v2148 = vpop.f32.mrf.mxu0
        %v2149 = vadd.f32 %v1792, %v2148
        %2150 = vmatprep.mubr.bf16.mxu0 0
        %2151 = vmatmul.mubr.bf16.gmra.mxu0 %v1770
        %v2152 = vpop.f32.mrf.mxu0
        %v2153 = vadd.f32 %v1788, %v2152
        %v2154 = vpop.f32.mrf.mxu0
        %v2155 = vadd.f32 %v1792, %v2154
        %v2156 = vpop.f32.mrf.mxu0
        %v2157 = vadd.f32 %v1788, %v2156
        %v2158 = vpop.f32.mrf.mxu0
        %v2159 = vadd.f32 %v1792, %v2158
        %2160 = vmatprep.mubr.bf16.mxu0 0
        %2161 = vmatmul.mubr.bf16.gmra.mxu0 %v1771
        %v2162 = vpop.f32.mrf.mxu0
        %v2163 = vadd.f32 %v1788, %v2162
        %v2164 = vpop.f32.mrf.mxu0
        %v2165 = vadd.f32 %v1792, %v2164
        %v2166 = vpop.f32.mrf.mxu0
        %v2167 = vadd.f32 %v1788, %v2166
        %v2168 = vpop.f32.mrf.mxu0
        %v2169 = vadd.f32 %v1792, %v2168
        %2170 = vmatprep.mubr.bf16.mxu0 0
        %2171 = vmatmul.mubr.bf16.gmra.mxu0 %v1772
        %v2172 = vpop.f32.mrf.mxu0
        %v2173 = vadd.f32 %v1788, %v2172
        %v2174 = vpop.f32.mrf.mxu0
        %v2175 = vadd.f32 %v1792, %v2174
        %v2176 = vpop.f32.mrf.mxu0
        %v2177 = vadd.f32 %v1788, %v2176
        %v2178 = vpop.f32.mrf.mxu0
        %v2179 = vadd.f32 %v1792, %v2178
        %2180 = vmatprep.mubr.bf16.mxu0 0
        %2181 = vmatmul.mubr.bf16.gmra.mxu0 %v1773
        %v2182 = vpop.f32.mrf.mxu0
        %v2183 = vadd.f32 %v1788, %v2182
        %v2184 = vpop.f32.mrf.mxu0
        %v2185 = vadd.f32 %v1792, %v2184
        %v2186 = vpop.f32.mrf.mxu0
        %v2187 = vadd.f32 %v1788, %v2186
        %v2188 = vpop.f32.mrf.mxu0
        %v2189 = vadd.f32 %v1792, %v2188
        %2190 = vmatprep.mubr.bf16.mxu0 0
        %2191 = vmatmul.mubr.bf16.gmra.mxu0 %v1774
        %v2192 = vpop.f32.mrf.mxu0
        %v2193 = vadd.f32 %v1788, %v2192
        %v2194 = vpop.f32.mrf.mxu0
        %v2195 = vadd.f32 %v1792, %v2194
        %v2196 = vpop.f32.mrf.mxu0
        %v2197 = vadd.f32 %v1788, %v2196
        %v2198 = vpop.f32.mrf.mxu0
        %v2199 = vadd.f32 %v1792, %v2198
        %2200 = vmatprep.mubr.bf16.mxu0 0
        %2201 = vmatmul.mubr.bf16.gmra.mxu0 %v1775
        %v2202 = vpop.f32.mrf.mxu0
        %v2203 = vadd.f32 %v1788, %v2202
        %v2204 = vpop.f32.mrf.mxu0
        %v2205 = vadd.f32 %v1792, %v2204
        %v2206 = vpop.f32.mrf.mxu0
        %v2207 = vadd.f32 %v1788, %v2206
        %v2208 = vpop.f32.mrf.mxu0
        %v2209 = vadd.f32 %v1792, %v2208
        %2210 = vmatprep.mubr.bf16.mxu0 0
        %2211 = vmatmul.mubr.bf16.gmra.mxu0 %v1776
        %v2212 = vpop.f32.mrf.mxu0
        %v2213 = vadd.f32 %v1788, %v2212
        %v2214 = vpop.f32.mrf.mxu0
        %v2215 = vadd.f32 %v1792, %v2214
        %v2216 = vpop.f32.mrf.mxu0
        %v2217 = vadd.f32 %v1788, %v2216
        %v2218 = vpop.f32.mrf.mxu0
        %v2219 = vadd.f32 %v1792, %v2218
        %2220 = vmatprep.mubr.bf16.mxu0 0
        %2221 = vmatmul.mubr.bf16.gmra.mxu0 %v1777
        %v2222 = vpop.f32.mrf.mxu0
        %v2223 = vadd.f32 %v1788, %v2222
        %v2224 = vpop.f32.mrf.mxu0
        %v2225 = vadd.f32 %v1792, %v2224
        %v2226 = vpop.f32.mrf.mxu0
        %v2227 = vadd.f32 %v1788, %v2226
        %v2228 = vpop.f32.mrf.mxu0
        %v2229 = vadd.f32 %v1792, %v2228
        %2230 = vmatprep.mubr.bf16.mxu0 0
        %2231 = vmatmul.mubr.bf16.gmra.mxu0 %v1778
        %v2232 = vpop.f32.mrf.mxu0
        %v2233 = vadd.f32 %v1788, %v2232
        %v2234 = vpop.f32.mrf.mxu0
        %v2235 = vadd.f32 %v1792, %v2234
        %v2236 = vpop.f32.mrf.mxu0
        %v2237 = vadd.f32 %v1788, %v2236
        %v2238 = vpop.f32.mrf.mxu0
        %v2239 = vadd.f32 %v1792, %v2238
        %2240 = vmatprep.mubr.bf16.mxu0 0
        %2241 = vmatmul.mubr.bf16.gmra.mxu0 %v1779
        %v2242 = vpop.f32.mrf.mxu0
        %v2243 = vadd.f32 %v1788, %v2242
        %v2244 = vpop.f32.mrf.mxu0
        %v2245 = vadd.f32 %v1792, %v2244
        %v2246 = vpop.f32.mrf.mxu0
        %v2247 = vadd.f32 %v1788, %v2246
        %v2248 = vpop.f32.mrf.mxu0
        %v2249 = vadd.f32 %v1792, %v2248
        %2250 = vmatprep.mubr.bf16.mxu0 0
        %2251 = vmatmul.mubr.bf16.gmra.mxu0 %v1780
        %v2252 = vpop.f32.mrf.mxu0
        %v2253 = vadd.f32 %v1788, %v2252
        %v2254 = vpop.f32.mrf.mxu0
        %v2255 = vadd.f32 %v1792, %v2254
        %v2256 = vpop.f32.mrf.mxu0
        %v2257 = vadd.f32 %v1788, %v2256
        %v2258 = vpop.f32.mrf.mxu0
        %v2259 = vadd.f32 %v1792, %v2258
        %2260 = vmatprep.mubr.bf16.mxu0 0
        %2261 = vmatmul.mubr.bf16.gmra.mxu0 %v1781
        %v2262 = vpop.f32.mrf.mxu0
        %v2263 = vadd.f32 %v1788, %v2262
        %v2264 = vpop.f32.mrf.mxu0
        %v2265 = vadd.f32 %v1792, %v2264
        %v2266 = vpop.f32.mrf.mxu0
        %v2267 = vadd.f32 %v1788, %v2266
        %v2268 = vpop.f32.mrf.mxu0
        %v2269 = vadd.f32 %v1792, %v2268
        %2270 = vmatprep.mubr.bf16.mxu0 0
        %2271 = vmatmul.mubr.bf16.gmra.mxu0 %v1782
        %v2272 = vpop.f32.mrf.mxu0
        %v2273 = vadd.f32 %v1788, %v2272
        %v2274 = vpop.f32.mrf.mxu0
        %v2275 = vadd.f32 %v1792, %v2274
        %v2276 = vpop.f32.mrf.mxu0
        %v2277 = vadd.f32 %v1788, %v2276
        %v2278 = vpop.f32.mrf.mxu0
        %v2279 = vadd.f32 %v1792, %v2278
        %2280 = vdwg.mxu0
        %2281 = vmatprep.subr.bf16.mxu0 0
        %2282 = vmatpush1.bf16.msra.mxu0 %v1903
        %2283 = vmatprep.subr.bf16.mxu0 0
        %2284 = vmatpush1.bf16.msra.mxu0 %v1900
        %2285 = vmatprep.subr.bf16.mxu0 0
        %2286 = vmatpush1.bf16.msra.mxu0 %v1897
        %2287 = vmatprep.subr.bf16.mxu0 0
        %2288 = vmatpush1.bf16.msra.mxu0 %v1894
        %2289 = vmatprep.subr.bf16.mxu0 0
        %2290 = vmatpush1.bf16.msra.mxu0 %v1891
        %2291 = vmatprep.subr.bf16.mxu0 0
        %2292 = vmatpush1.bf16.msra.mxu0 %v1888
        %2293 = vmatprep.subr.bf16.mxu0 0
        %2294 = vmatpush1.bf16.msra.mxu0 %v1885
        %2295 = vmatprep.subr.bf16.mxu0 0
        %2296 = vmatpush1.bf16.msra.mxu0 %v1882
        %2297 = vmatprep.subr.bf16.mxu0 0
        %2298 = vmatpush2.bf16.msra.mxu0 0
        %2299 = vmatprep.subr.bf16.mxu0 0
        %2300 = vmatpush2.bf16.msra.mxu0 0
        %2301 = vmatprep.subr.bf16.mxu0 0
        %2302 = vmatpush2.bf16.msra.mxu0 0
        %2303 = vmatprep.subr.bf16.mxu0 0
        %2304 = vmatpush2.bf16.msra.mxu0 0
        %2305 = vmatprep.subr.bf16.mxu0 0
        %2306 = vmatpush2.bf16.msra.mxu0 0
        %2307 = vmatprep.subr.bf16.mxu0 0
        %2308 = vmatpush2.bf16.msra.mxu0 0
        %2309 = vmatprep.subr.bf16.mxu0 0
        %2310 = vmatpush2.bf16.msra.mxu0 0
        %2311 = vmatprep.subr.bf16.mxu0 0
        %2312 = vmatpush2.bf16.msra.mxu0 0
        %2313 = vmatprep.mubr.bf16.mxu0 0
        %2314 = vmatmul.mubr.bf16.gmra.mxu0 %v1751
        %v2315 = vpop.f32.mrf.mxu0
        %v2316 = vadd.f32 %v1796, %v2315
        %v2317 = vpop.f32.mrf.mxu0
        %v2318 = vpop.f32.mrf.mxu0
        %v2319 = vadd.f32 %v1796, %v2318
        %v2320 = vpop.f32.mrf.mxu0
        %2321 = vmatprep.mubr.bf16.mxu0 0
        %2322 = vmatmul.mubr.bf16.gmra.mxu0 %v1752
        %v2323 = vpop.f32.mrf.mxu0
        %v2324 = vadd.f32 %v1796, %v2323
        %v2325 = vpop.f32.mrf.mxu0
        %v2326 = vpop.f32.mrf.mxu0
        %v2327 = vadd.f32 %v1796, %v2326
        %v2328 = vpop.f32.mrf.mxu0
        %2329 = vmatprep.mubr.bf16.mxu0 0
        %2330 = vmatmul.mubr.bf16.gmra.mxu0 %v1753
        %v2331 = vpop.f32.mrf.mxu0
        %v2332 = vadd.f32 %v1796, %v2331
        %v2333 = vpop.f32.mrf.mxu0
        %v2334 = vpop.f32.mrf.mxu0
        %v2335 = vadd.f32 %v1796, %v2334
        %v2336 = vpop.f32.mrf.mxu0
        %2337 = vmatprep.mubr.bf16.mxu0 0
        %2338 = vmatmul.mubr.bf16.gmra.mxu0 %v1754
        %v2339 = vpop.f32.mrf.mxu0
        %v2340 = vadd.f32 %v1796, %v2339
        %v2341 = vpop.f32.mrf.mxu0
        %v2342 = vpop.f32.mrf.mxu0
        %v2343 = vadd.f32 %v1796, %v2342
        %v2344 = vpop.f32.mrf.mxu0
        %2345 = vmatprep.mubr.bf16.mxu0 0
        %2346 = vmatmul.mubr.bf16.gmra.mxu0 %v1755
        %v2347 = vpop.f32.mrf.mxu0
        %v2348 = vadd.f32 %v1796, %v2347
        %v2349 = vpop.f32.mrf.mxu0
        %v2350 = vpop.f32.mrf.mxu0
        %v2351 = vadd.f32 %v1796, %v2350
        %v2352 = vpop.f32.mrf.mxu0
        %2353 = vmatprep.mubr.bf16.mxu0 0
        %2354 = vmatmul.mubr.bf16.gmra.mxu0 %v1756
        %v2355 = vpop.f32.mrf.mxu0
        %v2356 = vadd.f32 %v1796, %v2355
        %v2357 = vpop.f32.mrf.mxu0
        %v2358 = vpop.f32.mrf.mxu0
        %v2359 = vadd.f32 %v1796, %v2358
        %v2360 = vpop.f32.mrf.mxu0
        %2361 = vmatprep.mubr.bf16.mxu0 0
        %2362 = vmatmul.mubr.bf16.gmra.mxu0 %v1757
        %v2363 = vpop.f32.mrf.mxu0
        %v2364 = vadd.f32 %v1796, %v2363
        %v2365 = vpop.f32.mrf.mxu0
        %v2366 = vpop.f32.mrf.mxu0
        %v2367 = vadd.f32 %v1796, %v2366
        %v2368 = vpop.f32.mrf.mxu0
        %2369 = vmatprep.mubr.bf16.mxu0 0
        %2370 = vmatmul.mubr.bf16.gmra.mxu0 %v1758
        %v2371 = vpop.f32.mrf.mxu0
        %v2372 = vadd.f32 %v1796, %v2371
        %v2373 = vpop.f32.mrf.mxu0
        %v2374 = vpop.f32.mrf.mxu0
        %v2375 = vadd.f32 %v1796, %v2374
        %v2376 = vpop.f32.mrf.mxu0
        %2377 = vmatprep.mubr.bf16.mxu0 0
        %2378 = vmatmul.mubr.bf16.gmra.mxu0 %v1759
        %v2379 = vpop.f32.mrf.mxu0
        %v2380 = vadd.f32 %v1796, %v2379
        %v2381 = vpop.f32.mrf.mxu0
        %v2382 = vpop.f32.mrf.mxu0
        %v2383 = vadd.f32 %v1796, %v2382
        %v2384 = vpop.f32.mrf.mxu0
        %2385 = vmatprep.mubr.bf16.mxu0 0
        %2386 = vmatmul.mubr.bf16.gmra.mxu0 %v1760
        %v2387 = vpop.f32.mrf.mxu0
        %v2388 = vadd.f32 %v1796, %v2387
        %v2389 = vpop.f32.mrf.mxu0
        %v2390 = vpop.f32.mrf.mxu0
        %v2391 = vadd.f32 %v1796, %v2390
        %v2392 = vpop.f32.mrf.mxu0
        %2393 = vmatprep.mubr.bf16.mxu0 0
        %2394 = vmatmul.mubr.bf16.gmra.mxu0 %v1761
        %v2395 = vpop.f32.mrf.mxu0
        %v2396 = vadd.f32 %v1796, %v2395
        %v2397 = vpop.f32.mrf.mxu0
        %v2398 = vpop.f32.mrf.mxu0
        %v2399 = vadd.f32 %v1796, %v2398
        %v2400 = vpop.f32.mrf.mxu0
        %2401 = vmatprep.mubr.bf16.mxu0 0
        %2402 = vmatmul.mubr.bf16.gmra.mxu0 %v1762
        %v2403 = vpop.f32.mrf.mxu0
        %v2404 = vadd.f32 %v1796, %v2403
        %v2405 = vpop.f32.mrf.mxu0
        %v2406 = vpop.f32.mrf.mxu0
        %v2407 = vadd.f32 %v1796, %v2406
        %v2408 = vpop.f32.mrf.mxu0
        %2409 = vmatprep.mubr.bf16.mxu0 0
        %2410 = vmatmul.mubr.bf16.gmra.mxu0 %v1763
        %v2411 = vpop.f32.mrf.mxu0
        %v2412 = vadd.f32 %v1796, %v2411
        %v2413 = vpop.f32.mrf.mxu0
        %v2414 = vpop.f32.mrf.mxu0
        %v2415 = vadd.f32 %v1796, %v2414
        %v2416 = vpop.f32.mrf.mxu0
        %2417 = vmatprep.mubr.bf16.mxu0 0
        %2418 = vmatmul.mubr.bf16.gmra.mxu0 %v1764
        %v2419 = vpop.f32.mrf.mxu0
        %v2420 = vadd.f32 %v1796, %v2419
        %v2421 = vpop.f32.mrf.mxu0
        %v2422 = vpop.f32.mrf.mxu0
        %v2423 = vadd.f32 %v1796, %v2422
        %v2424 = vpop.f32.mrf.mxu0
        %2425 = vmatprep.mubr.bf16.mxu0 0
        %2426 = vmatmul.mubr.bf16.gmra.mxu0 %v1765
        %v2427 = vpop.f32.mrf.mxu0
        %v2428 = vadd.f32 %v1796, %v2427
        %v2429 = vpop.f32.mrf.mxu0
        %v2430 = vpop.f32.mrf.mxu0
        %v2431 = vadd.f32 %v1796, %v2430
        %v2432 = vpop.f32.mrf.mxu0
        %2433 = vmatprep.mubr.bf16.mxu0 0
        %2434 = vmatmul.mubr.bf16.gmra.mxu0 %v1766
        %v2435 = vpop.f32.mrf.mxu0
        %v2436 = vadd.f32 %v1796, %v2435
        %v2437 = vpop.f32.mrf.mxu0
        %v2438 = vpop.f32.mrf.mxu0
        %v2439 = vadd.f32 %v1796, %v2438
        %v2440 = vpop.f32.mrf.mxu0
        %2441 = vmatprep.mubr.bf16.mxu0 0
        %2442 = vmatmul.mubr.bf16.gmra.mxu0 %v1767
        %v2443 = vpop.f32.mrf.mxu0
        %v2444 = vadd.f32 %v1796, %v2443
        %v2445 = vpop.f32.mrf.mxu0
        %v2446 = vpop.f32.mrf.mxu0
        %v2447 = vadd.f32 %v1796, %v2446
        %v2448 = vpop.f32.mrf.mxu0
        %2449 = vmatprep.mubr.bf16.mxu0 0
        %2450 = vmatmul.mubr.bf16.gmra.mxu0 %v1768
        %v2451 = vpop.f32.mrf.mxu0
        %v2452 = vadd.f32 %v1796, %v2451
        %v2453 = vpop.f32.mrf.mxu0
        %v2454 = vpop.f32.mrf.mxu0
        %v2455 = vadd.f32 %v1796, %v2454
        %v2456 = vpop.f32.mrf.mxu0
        %2457 = vmatprep.mubr.bf16.mxu0 0
        %2458 = vmatmul.mubr.bf16.gmra.mxu0 %v1769
        %v2459 = vpop.f32.mrf.mxu0
        %v2460 = vadd.f32 %v1796, %v2459
        %v2461 = vpop.f32.mrf.mxu0
        %v2462 = vpop.f32.mrf.mxu0
        %v2463 = vadd.f32 %v1796, %v2462
        %v2464 = vpop.f32.mrf.mxu0
        %2465 = vmatprep.mubr.bf16.mxu0 0
        %2466 = vmatmul.mubr.bf16.gmra.mxu0 %v1770
        %v2467 = vpop.f32.mrf.mxu0
        %v2468 = vadd.f32 %v1796, %v2467
        %v2469 = vpop.f32.mrf.mxu0
        %v2470 = vpop.f32.mrf.mxu0
        %v2471 = vadd.f32 %v1796, %v2470
        %v2472 = vpop.f32.mrf.mxu0
        %2473 = vmatprep.mubr.bf16.mxu0 0
        %2474 = vmatmul.mubr.bf16.gmra.mxu0 %v1771
        %v2475 = vpop.f32.mrf.mxu0
        %v2476 = vadd.f32 %v1796, %v2475
        %v2477 = vpop.f32.mrf.mxu0
        %v2478 = vpop.f32.mrf.mxu0
        %v2479 = vadd.f32 %v1796, %v2478
        %v2480 = vpop.f32.mrf.mxu0
        %2481 = vmatprep.mubr.bf16.mxu0 0
        %2482 = vmatmul.mubr.bf16.gmra.mxu0 %v1772
        %v2483 = vpop.f32.mrf.mxu0
        %v2484 = vadd.f32 %v1796, %v2483
        %v2485 = vpop.f32.mrf.mxu0
        %v2486 = vpop.f32.mrf.mxu0
        %v2487 = vadd.f32 %v1796, %v2486
        %v2488 = vpop.f32.mrf.mxu0
        %2489 = vmatprep.mubr.bf16.mxu0 0
        %2490 = vmatmul.mubr.bf16.gmra.mxu0 %v1773
        %v2491 = vpop.f32.mrf.mxu0
        %v2492 = vadd.f32 %v1796, %v2491
        %v2493 = vpop.f32.mrf.mxu0
        %v2494 = vpop.f32.mrf.mxu0
        %v2495 = vadd.f32 %v1796, %v2494
        %v2496 = vpop.f32.mrf.mxu0
        %2497 = vmatprep.mubr.bf16.mxu0 0
        %2498 = vmatmul.mubr.bf16.gmra.mxu0 %v1774
        %v2499 = vpop.f32.mrf.mxu0
        %v2500 = vadd.f32 %v1796, %v2499
        %v2501 = vpop.f32.mrf.mxu0
        %v2502 = vpop.f32.mrf.mxu0
        %v2503 = vadd.f32 %v1796, %v2502
        %v2504 = vpop.f32.mrf.mxu0
        %2505 = vmatprep.mubr.bf16.mxu0 0
        %2506 = vmatmul.mubr.bf16.gmra.mxu0 %v1775
        %v2507 = vpop.f32.mrf.mxu0
        %v2508 = vadd.f32 %v1796, %v2507
        %v2509 = vpop.f32.mrf.mxu0
        %v2510 = vpop.f32.mrf.mxu0
        %v2511 = vadd.f32 %v1796, %v2510
        %v2512 = vpop.f32.mrf.mxu0
        %2513 = vmatprep.mubr.bf16.mxu0 0
        %2514 = vmatmul.mubr.bf16.gmra.mxu0 %v1776
        %v2515 = vpop.f32.mrf.mxu0
        %v2516 = vadd.f32 %v1796, %v2515
        %v2517 = vpop.f32.mrf.mxu0
        %v2518 = vpop.f32.mrf.mxu0
        %v2519 = vadd.f32 %v1796, %v2518
        %v2520 = vpop.f32.mrf.mxu0
        %2521 = vmatprep.mubr.bf16.mxu0 0
        %2522 = vmatmul.mubr.bf16.gmra.mxu0 %v1777
        %v2523 = vpop.f32.mrf.mxu0
        %v2524 = vadd.f32 %v1796, %v2523
        %v2525 = vpop.f32.mrf.mxu0
        %v2526 = vpop.f32.mrf.mxu0
        %v2527 = vadd.f32 %v1796, %v2526
        %v2528 = vpop.f32.mrf.mxu0
        %2529 = vmatprep.mubr.bf16.mxu0 0
        %2530 = vmatmul.mubr.bf16.gmra.mxu0 %v1778
        %v2531 = vpop.f32.mrf.mxu0
        %v2532 = vadd.f32 %v1796, %v2531
        %v2533 = vpop.f32.mrf.mxu0
        %v2534 = vpop.f32.mrf.mxu0
        %v2535 = vadd.f32 %v1796, %v2534
        %v2536 = vpop.f32.mrf.mxu0
        %2537 = vmatprep.mubr.bf16.mxu0 0
        %2538 = vmatmul.mubr.bf16.gmra.mxu0 %v1779
        %v2539 = vpop.f32.mrf.mxu0
        %v2540 = vadd.f32 %v1796, %v2539
        %v2541 = vpop.f32.mrf.mxu0
        %v2542 = vpop.f32.mrf.mxu0
        %v2543 = vadd.f32 %v1796, %v2542
        %v2544 = vpop.f32.mrf.mxu0
        %2545 = vmatprep.mubr.bf16.mxu0 0
        %2546 = vmatmul.mubr.bf16.gmra.mxu0 %v1780
        %v2547 = vpop.f32.mrf.mxu0
        %v2548 = vadd.f32 %v1796, %v2547
        %v2549 = vpop.f32.mrf.mxu0
        %v2550 = vpop.f32.mrf.mxu0
        %v2551 = vadd.f32 %v1796, %v2550
        %v2552 = vpop.f32.mrf.mxu0
        %2553 = vmatprep.mubr.bf16.mxu0 0
        %2554 = vmatmul.mubr.bf16.gmra.mxu0 %v1781
        %v2555 = vpop.f32.mrf.mxu0
        %v2556 = vadd.f32 %v1796, %v2555
        %v2557 = vpop.f32.mrf.mxu0
        %v2558 = vpop.f32.mrf.mxu0
        %v2559 = vadd.f32 %v1796, %v2558
        %v2560 = vpop.f32.mrf.mxu0
        %2561 = vmatprep.mubr.bf16.mxu0 0
        %2562 = vmatmul.mubr.bf16.gmra.mxu0 %v1782
        %v2563 = vpop.f32.mrf.mxu0
        %v2564 = vadd.f32 %v1796, %v2563
        %v2565 = vpop.f32.mrf.mxu0
        %v2566 = vpop.f32.mrf.mxu0
        %v2567 = vadd.f32 %v1796, %v2566
        %v2568 = vpop.f32.mrf.mxu0
        %2569 = vdwg.mxu0
        %v2570 = vmax.f32 %v1965, -50.0
        %v2571 = vmax.f32 %v1969, -50.0
        %v2572 = vmax.f32 %v1975, -50.0
        %v2573 = vmax.f32 %v1979, -50.0
        %v2574 = vmax.f32 %v1985, -50.0
        %v2575 = vmax.f32 %v1989, -50.0
        %v2576 = vmax.f32 %v1995, -50.0
        %v2577 = vmax.f32 %v1999, -50.0
        %v2578 = vmax.f32 %v2005, -50.0
        %v2579 = vmax.f32 %v2009, -50.0
        %v2580 = vmax.f32 %v2015, -50.0
        %v2581 = vmax.f32 %v2019, -50.0
        %v2582 = vmax.f32 %v2025, -50.0
        %v2583 = vmax.f32 %v2029, -50.0
        %v2584 = vmax.f32 %v2035, -50.0
        %v2585 = vmax.f32 %v2039, -50.0
        %v2586 = vmax.f32 %v2045, -50.0
        %v2587 = vmax.f32 %v2049, -50.0
        %v2588 = vmax.f32 %v2055, -50.0
        %v2589 = vmax.f32 %v2059, -50.0
        %v2590 = vmax.f32 %v2065, -50.0
        %v2591 = vmax.f32 %v2069, -50.0
        %v2592 = vmax.f32 %v2075, -50.0
        %v2593 = vmax.f32 %v2079, -50.0
        %v2594 = vmax.f32 %v2085, -50.0
        %v2595 = vmax.f32 %v2089, -50.0
        %v2596 = vmax.f32 %v2095, -50.0
        %v2597 = vmax.f32 %v2099, -50.0
        %v2598 = vmax.f32 %v2105, -50.0
        %v2599 = vmax.f32 %v2109, -50.0
        %v2600 = vmax.f32 %v2115, -50.0
        %v2601 = vmax.f32 %v2119, -50.0
        %v2602 = vmax.f32 %v2125, -50.0
        %v2603 = vmax.f32 %v2129, -50.0
        %v2604 = vmax.f32 %v2135, -50.0
        %v2605 = vmax.f32 %v2139, -50.0
        %v2606 = vmax.f32 %v2145, -50.0
        %v2607 = vmax.f32 %v2149, -50.0
        %v2608 = vmax.f32 %v2155, -50.0
        %v2609 = vmax.f32 %v2159, -50.0
        %v2610 = vmax.f32 %v2165, -50.0
        %v2611 = vmax.f32 %v2169, -50.0
        %v2612 = vmax.f32 %v2175, -50.0
        %v2613 = vmax.f32 %v2179, -50.0
        %v2614 = vmax.f32 %v2185, -50.0
        %v2615 = vmax.f32 %v2189, -50.0
        %v2616 = vmax.f32 %v2195, -50.0
        %v2617 = vmax.f32 %v2199, -50.0
        %v2618 = vmax.f32 %v2205, -50.0
        %v2619 = vmax.f32 %v2209, -50.0
        %v2620 = vmax.f32 %v2215, -50.0
        %v2621 = vmax.f32 %v2219, -50.0
        %v2622 = vmax.f32 %v2225, -50.0
        %v2623 = vmax.f32 %v2229, -50.0
        %v2624 = vmax.f32 %v2235, -50.0
        %v2625 = vmax.f32 %v2239, -50.0
        %v2626 = vmax.f32 %v2245, -50.0
        %v2627 = vmax.f32 %v2249, -50.0
        %v2628 = vmax.f32 %v2255, -50.0
        %v2629 = vmax.f32 %v2259, -50.0
        %v2630 = vmax.f32 %v2265, -50.0
        %v2631 = vmax.f32 %v2269, -50.0
        %v2632 = vmax.f32 %v2275, -50.0
        %v2633 = vmax.f32 %v2279, -50.0
        %v2634 = vmul.f32 %v2570, 1.442695
        %v2635 = vpow.pop %v2634
        %v2636 = vmul.f32 %v2571, 1.442695
        %v2637 = vpow.pop %v2636
        %v2638 = vmul.f32 %v2572, 1.442695
        %v2639 = vpow.pop %v2638
        %v2640 = vmul.f32 %v2573, 1.442695
        %v2641 = vpow.pop %v2640
        %v2642 = vmul.f32 %v2574, 1.442695
        %v2643 = vpow.pop %v2642
        %v2644 = vmul.f32 %v2575, 1.442695
        %v2645 = vpow.pop %v2644
        %v2646 = vmul.f32 %v2576, 1.442695
        %v2647 = vpow.pop %v2646
        %v2648 = vmul.f32 %v2577, 1.442695
        %v2649 = vpow.pop %v2648
        %v2650 = vmul.f32 %v2578, 1.442695
        %v2651 = vpow.pop %v2650
        %v2652 = vmul.f32 %v2579, 1.442695
        %v2653 = vpow.pop %v2652
        %v2654 = vmul.f32 %v2580, 1.442695
        %v2655 = vpow.pop %v2654
        %v2656 = vmul.f32 %v2581, 1.442695
        %v2657 = vpow.pop %v2656
        %v2658 = vmul.f32 %v2582, 1.442695
        %v2659 = vpow.pop %v2658
        %v2660 = vmul.f32 %v2583, 1.442695
        %v2661 = vpow.pop %v2660
        %v2662 = vmul.f32 %v2584, 1.442695
        %v2663 = vpow.pop %v2662
        %v2664 = vmul.f32 %v2585, 1.442695
        %v2665 = vpow.pop %v2664
        %v2666 = vmul.f32 %v2586, 1.442695
        %v2667 = vpow.pop %v2666
        %v2668 = vmul.f32 %v2587, 1.442695
        %v2669 = vpow.pop %v2668
        %v2670 = vmul.f32 %v2588, 1.442695
        %v2671 = vpow.pop %v2670
        %v2672 = vmul.f32 %v2589, 1.442695
        %v2673 = vpow.pop %v2672
        %v2674 = vmul.f32 %v2590, 1.442695
        %v2675 = vpow.pop %v2674
        %v2676 = vmul.f32 %v2591, 1.442695
        %v2677 = vpow.pop %v2676
        %v2678 = vmul.f32 %v2592, 1.442695
        %v2679 = vpow.pop %v2678
        %v2680 = vmul.f32 %v2593, 1.442695
        %v2681 = vpow.pop %v2680
        %v2682 = vmul.f32 %v2594, 1.442695
        %v2683 = vpow.pop %v2682
        %v2684 = vmul.f32 %v2595, 1.442695
        %v2685 = vpow.pop %v2684
        %v2686 = vmul.f32 %v2596, 1.442695
        %v2687 = vpow.pop %v2686
        %v2688 = vmul.f32 %v2597, 1.442695
        %v2689 = vpow.pop %v2688
        %v2690 = vmul.f32 %v2598, 1.442695
        %v2691 = vpow.pop %v2690
        %v2692 = vmul.f32 %v2599, 1.442695
        %v2693 = vpow.pop %v2692
        %v2694 = vmul.f32 %v2600, 1.442695
        %v2695 = vpow.pop %v2694
        %v2696 = vmul.f32 %v2601, 1.442695
        %v2697 = vpow.pop %v2696
        %v2698 = vmul.f32 %v2602, 1.442695
        %v2699 = vpow.pop %v2698
        %v2700 = vmul.f32 %v2603, 1.442695
        %v2701 = vpow.pop %v2700
        %v2702 = vmul.f32 %v2604, 1.442695
        %v2703 = vpow.pop %v2702
        %v2704 = vmul.f32 %v2605, 1.442695
        %v2705 = vpow.pop %v2704
        %v2706 = vmul.f32 %v2606, 1.442695
        %v2707 = vpow.pop %v2706
        %v2708 = vmul.f32 %v2607, 1.442695
        %v2709 = vpow.pop %v2708
        %v2710 = vmul.f32 %v2608, 1.442695
        %v2711 = vpow.pop %v2710
        %v2712 = vmul.f32 %v2609, 1.442695
        %v2713 = vpow.pop %v2712
        %v2714 = vmul.f32 %v2610, 1.442695
        %v2715 = vpow.pop %v2714
        %v2716 = vmul.f32 %v2611, 1.442695
        %v2717 = vpow.pop %v2716
        %v2718 = vmul.f32 %v2612, 1.442695
        %v2719 = vpow.pop %v2718
        %v2720 = vmul.f32 %v2613, 1.442695
        %v2721 = vpow.pop %v2720
        %v2722 = vmul.f32 %v2614, 1.442695
        %v2723 = vpow.pop %v2722
        %v2724 = vmul.f32 %v2615, 1.442695
        %v2725 = vpow.pop %v2724
        %v2726 = vmul.f32 %v2616, 1.442695
        %v2727 = vpow.pop %v2726
        %v2728 = vmul.f32 %v2617, 1.442695
        %v2729 = vpow.pop %v2728
        %v2730 = vmul.f32 %v2618, 1.442695
        %v2731 = vpow.pop %v2730
        %v2732 = vmul.f32 %v2619, 1.442695
        %v2733 = vpow.pop %v2732
        %v2734 = vmul.f32 %v2620, 1.442695
        %v2735 = vpow.pop %v2734
        %v2736 = vmul.f32 %v2621, 1.442695
        %v2737 = vpow.pop %v2736
        %v2738 = vmul.f32 %v2622, 1.442695
        %v2739 = vpow.pop %v2738
        %v2740 = vmul.f32 %v2623, 1.442695
        %v2741 = vpow.pop %v2740
        %v2742 = vmul.f32 %v2624, 1.442695
        %v2743 = vpow.pop %v2742
        %v2744 = vmul.f32 %v2625, 1.442695
        %v2745 = vpow.pop %v2744
        %v2746 = vmul.f32 %v2626, 1.442695
        %v2747 = vpow.pop %v2746
        %v2748 = vmul.f32 %v2627, 1.442695
        %v2749 = vpow.pop %v2748
        %v2750 = vmul.f32 %v2628, 1.442695
        %v2751 = vpow.pop %v2750
        %v2752 = vmul.f32 %v2629, 1.442695
        %v2753 = vpow.pop %v2752
        %v2754 = vmul.f32 %v2630, 1.442695
        %v2755 = vpow.pop %v2754
        %v2756 = vmul.f32 %v2631, 1.442695
        %v2757 = vpow.pop %v2756
        %v2758 = vmul.f32 %v2632, 1.442695
        %v2759 = vpow.pop %v2758
        %v2760 = vmul.f32 %v2633, 1.442695
        %v2761 = vpow.pop %v2760
        %v2762 = vmul.f32 %v687, %v2635
        %v2763 = vmul.f32 %v688, %v2637
        %v2764 = vmul.f32 %v689, %v2639
        %v2765 = vmul.f32 %v690, %v2641
        %v2766 = vmul.f32 %v691, %v2643
        %v2767 = vmul.f32 %v692, %v2645
        %v2768 = vmul.f32 %v693, %v2647
        %v2769 = vmul.f32 %v694, %v2649
        %v2770 = vmul.f32 %v695, %v2651
        %v2771 = vmul.f32 %v696, %v2653
        %v2772 = vmul.f32 %v697, %v2655
        %v2773 = vmul.f32 %v698, %v2657
        %v2774 = vmul.f32 %v699, %v2659
        %v2775 = vmul.f32 %v700, %v2661
        %v2776 = vmul.f32 %v701, %v2663
        %v2777 = vmul.f32 %v702, %v2665
        %v2778 = vmul.f32 %v703, %v2667
        %v2779 = vmul.f32 %v704, %v2669
        %v2780 = vmul.f32 %v705, %v2671
        %v2781 = vmul.f32 %v706, %v2673
        %v2782 = vmul.f32 %v707, %v2675
        %v2783 = vmul.f32 %v708, %v2677
        %v2784 = vmul.f32 %v709, %v2679
        %v2785 = vmul.f32 %v710, %v2681
        %v2786 = vmul.f32 %v711, %v2683
        %v2787 = vmul.f32 %v712, %v2685
        %v2788 = vmul.f32 %v713, %v2687
        %v2789 = vmul.f32 %v714, %v2689
        %v2790 = vmul.f32 %v715, %v2691
        %v2791 = vmul.f32 %v716, %v2693
        %v2792 = vmul.f32 %v717, %v2695
        %v2793 = vmul.f32 %v718, %v2697
        %v2794 = vmul.f32 %v719, %v2699
        %v2795 = vmul.f32 %v720, %v2701
        %v2796 = vmul.f32 %v721, %v2703
        %v2797 = vmul.f32 %v722, %v2705
        %v2798 = vmul.f32 %v723, %v2707
        %v2799 = vmul.f32 %v724, %v2709
        %v2800 = vmul.f32 %v725, %v2711
        %v2801 = vmul.f32 %v726, %v2713
        %v2802 = vmul.f32 %v727, %v2715
        %v2803 = vmul.f32 %v728, %v2717
        %v2804 = vmul.f32 %v729, %v2719
        %v2805 = vmul.f32 %v730, %v2721
        %v2806 = vmul.f32 %v731, %v2723
        %v2807 = vmul.f32 %v732, %v2725
        %v2808 = vmul.f32 %v733, %v2727
        %v2809 = vmul.f32 %v734, %v2729
        %v2810 = vmul.f32 %v735, %v2731
        %v2811 = vmul.f32 %v736, %v2733
        %v2812 = vmul.f32 %v737, %v2735
        %v2813 = vmul.f32 %v738, %v2737
        %v2814 = vmul.f32 %v739, %v2739
        %v2815 = vmul.f32 %v740, %v2741
        %v2816 = vmul.f32 %v741, %v2743
        %v2817 = vmul.f32 %v742, %v2745
        %v2818 = vmul.f32 %v743, %v2747
        %v2819 = vmul.f32 %v744, %v2749
        %v2820 = vmul.f32 %v745, %v2751
        %v2821 = vmul.f32 %v746, %v2753
        %v2822 = vmul.f32 %v747, %v2755
        %v2823 = vmul.f32 %v748, %v2757
        %v2824 = vmul.f32 %v749, %v2759
        %v2825 = vmul.f32 %v750, %v2761
        %v2826 = vadd.f32 %v1963, %v2762
        %v2827 = vadd.f32 %v1967, %v2763
        %v2828 = vadd.f32 %v1973, %v2764
        %v2829 = vadd.f32 %v1977, %v2765
        %v2830 = vadd.f32 %v1983, %v2766
        %v2831 = vadd.f32 %v1987, %v2767
        %v2832 = vadd.f32 %v1993, %v2768
        %v2833 = vadd.f32 %v1997, %v2769
        %v2834 = vadd.f32 %v2003, %v2770
        %v2835 = vadd.f32 %v2007, %v2771
        %v2836 = vadd.f32 %v2013, %v2772
        %v2837 = vadd.f32 %v2017, %v2773
        %v2838 = vadd.f32 %v2023, %v2774
        %v2839 = vadd.f32 %v2027, %v2775
        %v2840 = vadd.f32 %v2033, %v2776
        %v2841 = vadd.f32 %v2037, %v2777
        %v2842 = vadd.f32 %v2043, %v2778
        %v2843 = vadd.f32 %v2047, %v2779
        %v2844 = vadd.f32 %v2053, %v2780
        %v2845 = vadd.f32 %v2057, %v2781
        %v2846 = vadd.f32 %v2063, %v2782
        %v2847 = vadd.f32 %v2067, %v2783
        %v2848 = vadd.f32 %v2073, %v2784
        %v2849 = vadd.f32 %v2077, %v2785
        %v2850 = vadd.f32 %v2083, %v2786
        %v2851 = vadd.f32 %v2087, %v2787
        %v2852 = vadd.f32 %v2093, %v2788
        %v2853 = vadd.f32 %v2097, %v2789
        %v2854 = vadd.f32 %v2103, %v2790
        %v2855 = vadd.f32 %v2107, %v2791
        %v2856 = vadd.f32 %v2113, %v2792
        %v2857 = vadd.f32 %v2117, %v2793
        %v2858 = vadd.f32 %v2123, %v2794
        %v2859 = vadd.f32 %v2127, %v2795
        %v2860 = vadd.f32 %v2133, %v2796
        %v2861 = vadd.f32 %v2137, %v2797
        %v2862 = vadd.f32 %v2143, %v2798
        %v2863 = vadd.f32 %v2147, %v2799
        %v2864 = vadd.f32 %v2153, %v2800
        %v2865 = vadd.f32 %v2157, %v2801
        %v2866 = vadd.f32 %v2163, %v2802
        %v2867 = vadd.f32 %v2167, %v2803
        %v2868 = vadd.f32 %v2173, %v2804
        %v2869 = vadd.f32 %v2177, %v2805
        %v2870 = vadd.f32 %v2183, %v2806
        %v2871 = vadd.f32 %v2187, %v2807
        %v2872 = vadd.f32 %v2193, %v2808
        %v2873 = vadd.f32 %v2197, %v2809
        %v2874 = vadd.f32 %v2203, %v2810
        %v2875 = vadd.f32 %v2207, %v2811
        %v2876 = vadd.f32 %v2213, %v2812
        %v2877 = vadd.f32 %v2217, %v2813
        %v2878 = vadd.f32 %v2223, %v2814
        %v2879 = vadd.f32 %v2227, %v2815
        %v2880 = vadd.f32 %v2233, %v2816
        %v2881 = vadd.f32 %v2237, %v2817
        %v2882 = vadd.f32 %v2243, %v2818
        %v2883 = vadd.f32 %v2247, %v2819
        %v2884 = vadd.f32 %v2253, %v2820
        %v2885 = vadd.f32 %v2257, %v2821
        %v2886 = vadd.f32 %v2263, %v2822
        %v2887 = vadd.f32 %v2267, %v2823
        %v2888 = vadd.f32 %v2273, %v2824
        %v2889 = vadd.f32 %v2277, %v2825
        %v2890 = vmul.f32 %v687, 0.5
        %v2891 = vmul.f32 %v688, 0.5
        %v2892 = vmul.f32 %v689, 0.5
        %v2893 = vmul.f32 %v690, 0.5
        %v2894 = vmul.f32 %v691, 0.5
        %v2895 = vmul.f32 %v692, 0.5
        %v2896 = vmul.f32 %v693, 0.5
        %v2897 = vmul.f32 %v694, 0.5
        %v2898 = vmul.f32 %v695, 0.5
        %v2899 = vmul.f32 %v696, 0.5
        %v2900 = vmul.f32 %v697, 0.5
        %v2901 = vmul.f32 %v698, 0.5
        %v2902 = vmul.f32 %v699, 0.5
        %v2903 = vmul.f32 %v700, 0.5
        %v2904 = vmul.f32 %v701, 0.5
        %v2905 = vmul.f32 %v702, 0.5
        %v2906 = vmul.f32 %v703, 0.5
        %v2907 = vmul.f32 %v704, 0.5
        %v2908 = vmul.f32 %v705, 0.5
        %v2909 = vmul.f32 %v706, 0.5
        %v2910 = vmul.f32 %v707, 0.5
        %v2911 = vmul.f32 %v708, 0.5
        %v2912 = vmul.f32 %v709, 0.5
        %v2913 = vmul.f32 %v710, 0.5
        %v2914 = vmul.f32 %v711, 0.5
        %v2915 = vmul.f32 %v712, 0.5
        %v2916 = vmul.f32 %v713, 0.5
        %v2917 = vmul.f32 %v714, 0.5
        %v2918 = vmul.f32 %v715, 0.5
        %v2919 = vmul.f32 %v716, 0.5
        %v2920 = vmul.f32 %v717, 0.5
        %v2921 = vmul.f32 %v718, 0.5
        %v2922 = vmul.f32 %v719, 0.5
        %v2923 = vmul.f32 %v720, 0.5
        %v2924 = vmul.f32 %v721, 0.5
        %v2925 = vmul.f32 %v722, 0.5
        %v2926 = vmul.f32 %v723, 0.5
        %v2927 = vmul.f32 %v724, 0.5
        %v2928 = vmul.f32 %v725, 0.5
        %v2929 = vmul.f32 %v726, 0.5
        %v2930 = vmul.f32 %v727, 0.5
        %v2931 = vmul.f32 %v728, 0.5
        %v2932 = vmul.f32 %v729, 0.5
        %v2933 = vmul.f32 %v730, 0.5
        %v2934 = vmul.f32 %v731, 0.5
        %v2935 = vmul.f32 %v732, 0.5
        %v2936 = vmul.f32 %v733, 0.5
        %v2937 = vmul.f32 %v734, 0.5
        %v2938 = vmul.f32 %v735, 0.5
        %v2939 = vmul.f32 %v736, 0.5
        %v2940 = vmul.f32 %v737, 0.5
        %v2941 = vmul.f32 %v738, 0.5
        %v2942 = vmul.f32 %v739, 0.5
        %v2943 = vmul.f32 %v740, 0.5
        %v2944 = vmul.f32 %v741, 0.5
        %v2945 = vmul.f32 %v742, 0.5
        %v2946 = vmul.f32 %v743, 0.5
        %v2947 = vmul.f32 %v744, 0.5
        %v2948 = vmul.f32 %v745, 0.5
        %v2949 = vmul.f32 %v746, 0.5
        %v2950 = vmul.f32 %v747, 0.5
        %v2951 = vmul.f32 %v748, 0.5
        %v2952 = vmul.f32 %v749, 0.5
        %v2953 = vmul.f32 %v750, 0.5
        %v2954 = vmul.f32 %v2890, %v687
        %v2955 = vmul.f32 %v2891, %v688
        %v2956 = vmul.f32 %v2892, %v689
        %v2957 = vmul.f32 %v2893, %v690
        %v2958 = vmul.f32 %v2894, %v691
        %v2959 = vmul.f32 %v2895, %v692
        %v2960 = vmul.f32 %v2896, %v693
        %v2961 = vmul.f32 %v2897, %v694
        %v2962 = vmul.f32 %v2898, %v695
        %v2963 = vmul.f32 %v2899, %v696
        %v2964 = vmul.f32 %v2900, %v697
        %v2965 = vmul.f32 %v2901, %v698
        %v2966 = vmul.f32 %v2902, %v699
        %v2967 = vmul.f32 %v2903, %v700
        %v2968 = vmul.f32 %v2904, %v701
        %v2969 = vmul.f32 %v2905, %v702
        %v2970 = vmul.f32 %v2906, %v703
        %v2971 = vmul.f32 %v2907, %v704
        %v2972 = vmul.f32 %v2908, %v705
        %v2973 = vmul.f32 %v2909, %v706
        %v2974 = vmul.f32 %v2910, %v707
        %v2975 = vmul.f32 %v2911, %v708
        %v2976 = vmul.f32 %v2912, %v709
        %v2977 = vmul.f32 %v2913, %v710
        %v2978 = vmul.f32 %v2914, %v711
        %v2979 = vmul.f32 %v2915, %v712
        %v2980 = vmul.f32 %v2916, %v713
        %v2981 = vmul.f32 %v2917, %v714
        %v2982 = vmul.f32 %v2918, %v715
        %v2983 = vmul.f32 %v2919, %v716
        %v2984 = vmul.f32 %v2920, %v717
        %v2985 = vmul.f32 %v2921, %v718
        %v2986 = vmul.f32 %v2922, %v719
        %v2987 = vmul.f32 %v2923, %v720
        %v2988 = vmul.f32 %v2924, %v721
        %v2989 = vmul.f32 %v2925, %v722
        %v2990 = vmul.f32 %v2926, %v723
        %v2991 = vmul.f32 %v2927, %v724
        %v2992 = vmul.f32 %v2928, %v725
        %v2993 = vmul.f32 %v2929, %v726
        %v2994 = vmul.f32 %v2930, %v727
        %v2995 = vmul.f32 %v2931, %v728
        %v2996 = vmul.f32 %v2932, %v729
        %v2997 = vmul.f32 %v2933, %v730
        %v2998 = vmul.f32 %v2934, %v731
        %v2999 = vmul.f32 %v2935, %v732
        %v3000 = vmul.f32 %v2936, %v733
        %v3001 = vmul.f32 %v2937, %v734
        %v3002 = vmul.f32 %v2938, %v735
        %v3003 = vmul.f32 %v2939, %v736
        %v3004 = vmul.f32 %v2940, %v737
        %v3005 = vmul.f32 %v2941, %v738
        %v3006 = vmul.f32 %v2942, %v739
        %v3007 = vmul.f32 %v2943, %v740
        %v3008 = vmul.f32 %v2944, %v741
        %v3009 = vmul.f32 %v2945, %v742
        %v3010 = vmul.f32 %v2946, %v743
        %v3011 = vmul.f32 %v2947, %v744
        %v3012 = vmul.f32 %v2948, %v745
        %v3013 = vmul.f32 %v2949, %v746
        %v3014 = vmul.f32 %v2950, %v747
        %v3015 = vmul.f32 %v2951, %v748
        %v3016 = vmul.f32 %v2952, %v749
        %v3017 = vmul.f32 %v2953, %v750
        %v3018 = vadd.f32 %v2570, %v2954
        %v3019 = vadd.f32 %v2571, %v2955
        %v3020 = vadd.f32 %v2572, %v2956
        %v3021 = vadd.f32 %v2573, %v2957
        %v3022 = vadd.f32 %v2574, %v2958
        %v3023 = vadd.f32 %v2575, %v2959
        %v3024 = vadd.f32 %v2576, %v2960
        %v3025 = vadd.f32 %v2577, %v2961
        %v3026 = vadd.f32 %v2578, %v2962
        %v3027 = vadd.f32 %v2579, %v2963
        %v3028 = vadd.f32 %v2580, %v2964
        %v3029 = vadd.f32 %v2581, %v2965
        %v3030 = vadd.f32 %v2582, %v2966
        %v3031 = vadd.f32 %v2583, %v2967
        %v3032 = vadd.f32 %v2584, %v2968
        %v3033 = vadd.f32 %v2585, %v2969
        %v3034 = vadd.f32 %v2586, %v2970
        %v3035 = vadd.f32 %v2587, %v2971
        %v3036 = vadd.f32 %v2588, %v2972
        %v3037 = vadd.f32 %v2589, %v2973
        %v3038 = vadd.f32 %v2590, %v2974
        %v3039 = vadd.f32 %v2591, %v2975
        %v3040 = vadd.f32 %v2592, %v2976
        %v3041 = vadd.f32 %v2593, %v2977
        %v3042 = vadd.f32 %v2594, %v2978
        %v3043 = vadd.f32 %v2595, %v2979
        %v3044 = vadd.f32 %v2596, %v2980
        %v3045 = vadd.f32 %v2597, %v2981
        %v3046 = vadd.f32 %v2598, %v2982
        %v3047 = vadd.f32 %v2599, %v2983
        %v3048 = vadd.f32 %v2600, %v2984
        %v3049 = vadd.f32 %v2601, %v2985
        %v3050 = vadd.f32 %v2602, %v2986
        %v3051 = vadd.f32 %v2603, %v2987
        %v3052 = vadd.f32 %v2604, %v2988
        %v3053 = vadd.f32 %v2605, %v2989
        %v3054 = vadd.f32 %v2606, %v2990
        %v3055 = vadd.f32 %v2607, %v2991
        %v3056 = vadd.f32 %v2608, %v2992
        %v3057 = vadd.f32 %v2609, %v2993
        %v3058 = vadd.f32 %v2610, %v2994
        %v3059 = vadd.f32 %v2611, %v2995
        %v3060 = vadd.f32 %v2612, %v2996
        %v3061 = vadd.f32 %v2613, %v2997
        %v3062 = vadd.f32 %v2614, %v2998
        %v3063 = vadd.f32 %v2615, %v2999
        %v3064 = vadd.f32 %v2616, %v3000
        %v3065 = vadd.f32 %v2617, %v3001
        %v3066 = vadd.f32 %v2618, %v3002
        %v3067 = vadd.f32 %v2619, %v3003
        %v3068 = vadd.f32 %v2620, %v3004
        %v3069 = vadd.f32 %v2621, %v3005
        %v3070 = vadd.f32 %v2622, %v3006
        %v3071 = vadd.f32 %v2623, %v3007
        %v3072 = vadd.f32 %v2624, %v3008
        %v3073 = vadd.f32 %v2625, %v3009
        %v3074 = vadd.f32 %v2626, %v3010
        %v3075 = vadd.f32 %v2627, %v3011
        %v3076 = vadd.f32 %v2628, %v3012
        %v3077 = vadd.f32 %v2629, %v3013
        %v3078 = vadd.f32 %v2630, %v3014
        %v3079 = vadd.f32 %v2631, %v3015
        %v3080 = vadd.f32 %v2632, %v3016
        %v3081 = vadd.f32 %v2633, %v3017
        %3082 = vadd.xlane.f32.xlu0 %v3018
        %v3083 = vpop.xlane.xlu0 %3082
        %3084 = vadd.xlane.f32.xlu0 %v3019
        %v3085 = vpop.xlane.xlu0 %3084
        %3086 = vadd.xlane.f32.xlu0 %v3020
        %v3087 = vpop.xlane.xlu0 %3086
        %3088 = vadd.xlane.f32.xlu0 %v3021
        %v3089 = vpop.xlane.xlu0 %3088
        %3090 = vadd.xlane.f32.xlu0 %v3022
        %v3091 = vpop.xlane.xlu0 %3090
        %3092 = vadd.xlane.f32.xlu0 %v3023
        %v3093 = vpop.xlane.xlu0 %3092
        %3094 = vadd.xlane.f32.xlu0 %v3024
        %v3095 = vpop.xlane.xlu0 %3094
        %3096 = vadd.xlane.f32.xlu0 %v3025
        %v3097 = vpop.xlane.xlu0 %3096
        %3098 = vadd.xlane.f32.xlu0 %v3026
        %v3099 = vpop.xlane.xlu0 %3098
        %3100 = vadd.xlane.f32.xlu0 %v3027
        %v3101 = vpop.xlane.xlu0 %3100
        %3102 = vadd.xlane.f32.xlu0 %v3028
        %v3103 = vpop.xlane.xlu0 %3102
        %3104 = vadd.xlane.f32.xlu0 %v3029
        %v3105 = vpop.xlane.xlu0 %3104
        %3106 = vadd.xlane.f32.xlu0 %v3030
        %v3107 = vpop.xlane.xlu0 %3106
        %3108 = vadd.xlane.f32.xlu0 %v3031
        %v3109 = vpop.xlane.xlu0 %3108
        %3110 = vadd.xlane.f32.xlu0 %v3032
        %v3111 = vpop.xlane.xlu0 %3110
        %3112 = vadd.xlane.f32.xlu0 %v3033
        %v3113 = vpop.xlane.xlu0 %3112
        %3114 = vadd.xlane.f32.xlu0 %v3034
        %v3115 = vpop.xlane.xlu0 %3114
        %3116 = vadd.xlane.f32.xlu0 %v3035
        %v3117 = vpop.xlane.xlu0 %3116
        %3118 = vadd.xlane.f32.xlu0 %v3036
        %v3119 = vpop.xlane.xlu0 %3118
        %3120 = vadd.xlane.f32.xlu0 %v3037
        %v3121 = vpop.xlane.xlu0 %3120
        %3122 = vadd.xlane.f32.xlu0 %v3038
        %v3123 = vpop.xlane.xlu0 %3122
        %3124 = vadd.xlane.f32.xlu0 %v3039
        %v3125 = vpop.xlane.xlu0 %3124
        %3126 = vadd.xlane.f32.xlu0 %v3040
        %v3127 = vpop.xlane.xlu0 %3126
        %3128 = vadd.xlane.f32.xlu0 %v3041
        %v3129 = vpop.xlane.xlu0 %3128
        %3130 = vadd.xlane.f32.xlu0 %v3042
        %v3131 = vpop.xlane.xlu0 %3130
        %3132 = vadd.xlane.f32.xlu0 %v3043
        %v3133 = vpop.xlane.xlu0 %3132
        %3134 = vadd.xlane.f32.xlu0 %v3044
        %v3135 = vpop.xlane.xlu0 %3134
        %3136 = vadd.xlane.f32.xlu0 %v3045
        %v3137 = vpop.xlane.xlu0 %3136
        %3138 = vadd.xlane.f32.xlu0 %v3046
        %v3139 = vpop.xlane.xlu0 %3138
        %3140 = vadd.xlane.f32.xlu0 %v3047
        %v3141 = vpop.xlane.xlu0 %3140
        %3142 = vadd.xlane.f32.xlu0 %v3048
        %v3143 = vpop.xlane.xlu0 %3142
        %3144 = vadd.xlane.f32.xlu0 %v3049
        %v3145 = vpop.xlane.xlu0 %3144
        %3146 = vadd.xlane.f32.xlu0 %v3050
        %v3147 = vpop.xlane.xlu0 %3146
        %3148 = vadd.xlane.f32.xlu0 %v3051
        %v3149 = vpop.xlane.xlu0 %3148
        %3150 = vadd.xlane.f32.xlu0 %v3052
        %v3151 = vpop.xlane.xlu0 %3150
        %3152 = vadd.xlane.f32.xlu0 %v3053
        %v3153 = vpop.xlane.xlu0 %3152
        %3154 = vadd.xlane.f32.xlu0 %v3054
        %v3155 = vpop.xlane.xlu0 %3154
        %3156 = vadd.xlane.f32.xlu0 %v3055
        %v3157 = vpop.xlane.xlu0 %3156
        %3158 = vadd.xlane.f32.xlu0 %v3056
        %v3159 = vpop.xlane.xlu0 %3158
        %3160 = vadd.xlane.f32.xlu0 %v3057
        %v3161 = vpop.xlane.xlu0 %3160
        %3162 = vadd.xlane.f32.xlu0 %v3058
        %v3163 = vpop.xlane.xlu0 %3162
        %3164 = vadd.xlane.f32.xlu0 %v3059
        %v3165 = vpop.xlane.xlu0 %3164
        %3166 = vadd.xlane.f32.xlu0 %v3060
        %v3167 = vpop.xlane.xlu0 %3166
        %3168 = vadd.xlane.f32.xlu0 %v3061
        %v3169 = vpop.xlane.xlu0 %3168
        %3170 = vadd.xlane.f32.xlu0 %v3062
        %v3171 = vpop.xlane.xlu0 %3170
        %3172 = vadd.xlane.f32.xlu0 %v3063
        %v3173 = vpop.xlane.xlu0 %3172
        %3174 = vadd.xlane.f32.xlu0 %v3064
        %v3175 = vpop.xlane.xlu0 %3174
        %3176 = vadd.xlane.f32.xlu0 %v3065
        %v3177 = vpop.xlane.xlu0 %3176
        %3178 = vadd.xlane.f32.xlu0 %v3066
        %v3179 = vpop.xlane.xlu0 %3178
        %3180 = vadd.xlane.f32.xlu0 %v3067
        %v3181 = vpop.xlane.xlu0 %3180
        %3182 = vadd.xlane.f32.xlu0 %v3068
        %v3183 = vpop.xlane.xlu0 %3182
        %3184 = vadd.xlane.f32.xlu0 %v3069
        %v3185 = vpop.xlane.xlu0 %3184
        %3186 = vadd.xlane.f32.xlu0 %v3070
        %v3187 = vpop.xlane.xlu0 %3186
        %3188 = vadd.xlane.f32.xlu0 %v3071
        %v3189 = vpop.xlane.xlu0 %3188
        %3190 = vadd.xlane.f32.xlu0 %v3072
        %v3191 = vpop.xlane.xlu0 %3190
        %3192 = vadd.xlane.f32.xlu0 %v3073
        %v3193 = vpop.xlane.xlu0 %3192
        %3194 = vadd.xlane.f32.xlu0 %v3074
        %v3195 = vpop.xlane.xlu0 %3194
        %3196 = vadd.xlane.f32.xlu0 %v3075
        %v3197 = vpop.xlane.xlu0 %3196
        %3198 = vadd.xlane.f32.xlu0 %v3076
        %v3199 = vpop.xlane.xlu0 %3198
        %3200 = vadd.xlane.f32.xlu0 %v3077
        %v3201 = vpop.xlane.xlu0 %3200
        %3202 = vadd.xlane.f32.xlu0 %v3078
        %v3203 = vpop.xlane.xlu0 %3202
        %3204 = vadd.xlane.f32.xlu0 %v3079
        %v3205 = vpop.xlane.xlu0 %3204
        %3206 = vadd.xlane.f32.xlu0 %v3080
        %v3207 = vpop.xlane.xlu0 %3206
        %3208 = vadd.xlane.f32.xlu0 %v3081
        %v3209 = vpop.xlane.xlu0 %3208
        %v3210 = vadd.f32 %v3083, 14.703016
        %v3211 = vadd.f32 %v3085, 14.703016
        %v3212 = vadd.f32 %v3087, 14.703016
        %v3213 = vadd.f32 %v3089, 14.703016
        %v3214 = vadd.f32 %v3091, 14.703016
        %v3215 = vadd.f32 %v3093, 14.703016
        %v3216 = vadd.f32 %v3095, 14.703016
        %v3217 = vadd.f32 %v3097, 14.703016
        %v3218 = vadd.f32 %v3099, 14.703016
        %v3219 = vadd.f32 %v3101, 14.703016
        %v3220 = vadd.f32 %v3103, 14.703016
        %v3221 = vadd.f32 %v3105, 14.703016
        %v3222 = vadd.f32 %v3107, 14.703016
        %v3223 = vadd.f32 %v3109, 14.703016
        %v3224 = vadd.f32 %v3111, 14.703016
        %v3225 = vadd.f32 %v3113, 14.703016
        %v3226 = vadd.f32 %v3115, 14.703016
        %v3227 = vadd.f32 %v3117, 14.703016
        %v3228 = vadd.f32 %v3119, 14.703016
        %v3229 = vadd.f32 %v3121, 14.703016
        %v3230 = vadd.f32 %v3123, 14.703016
        %v3231 = vadd.f32 %v3125, 14.703016
        %v3232 = vadd.f32 %v3127, 14.703016
        %v3233 = vadd.f32 %v3129, 14.703016
        %v3234 = vadd.f32 %v3131, 14.703016
        %v3235 = vadd.f32 %v3133, 14.703016
        %v3236 = vadd.f32 %v3135, 14.703016
        %v3237 = vadd.f32 %v3137, 14.703016
        %v3238 = vadd.f32 %v3139, 14.703016
        %v3239 = vadd.f32 %v3141, 14.703016
        %v3240 = vadd.f32 %v3143, 14.703016
        %v3241 = vadd.f32 %v3145, 14.703016
        %v3242 = vadd.f32 %v3147, 14.703016
        %v3243 = vadd.f32 %v3149, 14.703016
        %v3244 = vadd.f32 %v3151, 14.703016
        %v3245 = vadd.f32 %v3153, 14.703016
        %v3246 = vadd.f32 %v3155, 14.703016
        %v3247 = vadd.f32 %v3157, 14.703016
        %v3248 = vadd.f32 %v3159, 14.703016
        %v3249 = vadd.f32 %v3161, 14.703016
        %v3250 = vadd.f32 %v3163, 14.703016
        %v3251 = vadd.f32 %v3165, 14.703016
        %v3252 = vadd.f32 %v3167, 14.703016
        %v3253 = vadd.f32 %v3169, 14.703016
        %v3254 = vadd.f32 %v3171, 14.703016
        %v3255 = vadd.f32 %v3173, 14.703016
        %v3256 = vadd.f32 %v3175, 14.703016
        %v3257 = vadd.f32 %v3177, 14.703016
        %v3258 = vadd.f32 %v3179, 14.703016
        %v3259 = vadd.f32 %v3181, 14.703016
        %v3260 = vadd.f32 %v3183, 14.703016
        %v3261 = vadd.f32 %v3185, 14.703016
        %v3262 = vadd.f32 %v3187, 14.703016
        %v3263 = vadd.f32 %v3189, 14.703016
        %v3264 = vadd.f32 %v3191, 14.703016
        %v3265 = vadd.f32 %v3193, 14.703016
        %v3266 = vadd.f32 %v3195, 14.703016
        %v3267 = vadd.f32 %v3197, 14.703016
        %v3268 = vadd.f32 %v3199, 14.703016
        %v3269 = vadd.f32 %v3201, 14.703016
        %v3270 = vadd.f32 %v3203, 14.703016
        %v3271 = vadd.f32 %v3205, 14.703016
        %v3272 = vadd.f32 %v3207, 14.703016
        %v3273 = vadd.f32 %v3209, 14.703016
        %v3274 = vsub.f32 0.0, %v3210
        %v3275 = vsub.f32 0.0, %v3211
        %v3276 = vsub.f32 0.0, %v3212
        %v3277 = vsub.f32 0.0, %v3213
        %v3278 = vsub.f32 0.0, %v3214
        %v3279 = vsub.f32 0.0, %v3215
        %v3280 = vsub.f32 0.0, %v3216
        %v3281 = vsub.f32 0.0, %v3217
        %v3282 = vsub.f32 0.0, %v3218
        %v3283 = vsub.f32 0.0, %v3219
        %v3284 = vsub.f32 0.0, %v3220
        %v3285 = vsub.f32 0.0, %v3221
        %v3286 = vsub.f32 0.0, %v3222
        %v3287 = vsub.f32 0.0, %v3223
        %v3288 = vsub.f32 0.0, %v3224
        %v3289 = vsub.f32 0.0, %v3225
        %v3290 = vsub.f32 0.0, %v3226
        %v3291 = vsub.f32 0.0, %v3227
        %v3292 = vsub.f32 0.0, %v3228
        %v3293 = vsub.f32 0.0, %v3229
        %v3294 = vsub.f32 0.0, %v3230
        %v3295 = vsub.f32 0.0, %v3231
        %v3296 = vsub.f32 0.0, %v3232
        %v3297 = vsub.f32 0.0, %v3233
        %v3298 = vsub.f32 0.0, %v3234
        %v3299 = vsub.f32 0.0, %v3235
        %v3300 = vsub.f32 0.0, %v3236
        %v3301 = vsub.f32 0.0, %v3237
        %v3302 = vsub.f32 0.0, %v3238
        %v3303 = vsub.f32 0.0, %v3239
        %v3304 = vsub.f32 0.0, %v3240
        %v3305 = vsub.f32 0.0, %v3241
        %v3306 = vsub.f32 0.0, %v3242
        %v3307 = vsub.f32 0.0, %v3243
        %v3308 = vsub.f32 0.0, %v3244
        %v3309 = vsub.f32 0.0, %v3245
        %v3310 = vsub.f32 0.0, %v3246
        %v3311 = vsub.f32 0.0, %v3247
        %v3312 = vsub.f32 0.0, %v3248
        %v3313 = vsub.f32 0.0, %v3249
        %v3314 = vsub.f32 0.0, %v3250
        %v3315 = vsub.f32 0.0, %v3251
        %v3316 = vsub.f32 0.0, %v3252
        %v3317 = vsub.f32 0.0, %v3253
        %v3318 = vsub.f32 0.0, %v3254
        %v3319 = vsub.f32 0.0, %v3255
        %v3320 = vsub.f32 0.0, %v3256
        %v3321 = vsub.f32 0.0, %v3257
        %v3322 = vsub.f32 0.0, %v3258
        %v3323 = vsub.f32 0.0, %v3259
        %v3324 = vsub.f32 0.0, %v3260
        %v3325 = vsub.f32 0.0, %v3261
        %v3326 = vsub.f32 0.0, %v3262
        %v3327 = vsub.f32 0.0, %v3263
        %v3328 = vsub.f32 0.0, %v3264
        %v3329 = vsub.f32 0.0, %v3265
        %v3330 = vsub.f32 0.0, %v3266
        %v3331 = vsub.f32 0.0, %v3267
        %v3332 = vsub.f32 0.0, %v3268
        %v3333 = vsub.f32 0.0, %v3269
        %v3334 = vsub.f32 0.0, %v3270
        %v3335 = vsub.f32 0.0, %v3271
        %v3336 = vsub.f32 0.0, %v3272
        %v3337 = vsub.f32 0.0, %v3273
        %v3338 = vlaneseq
        %v3339 = vand.u32 %v3338, 127
        %vm3340 = vcmp.lt.s32.totalorder %v3339, 16
        %v3341 = vsel %vm3340, 1, 0
        %v3342 = vcvt.s32.f32 %v3341
        %v3343 = vadd.f32 %v2826, %v2316
        %v3344 = vadd.f32 %v2827, %v2319
        %v3345 = vadd.f32 %v2828, %v2324
        %v3346 = vadd.f32 %v2829, %v2327
        %v3347 = vadd.f32 %v2830, %v2332
        %v3348 = vadd.f32 %v2831, %v2335
        %v3349 = vadd.f32 %v2832, %v2340
        %v3350 = vadd.f32 %v2833, %v2343
        %v3351 = vadd.f32 %v2834, %v2348
        %v3352 = vadd.f32 %v2835, %v2351
        %v3353 = vadd.f32 %v2836, %v2356
        %v3354 = vadd.f32 %v2837, %v2359
        %v3355 = vadd.f32 %v2838, %v2364
        %v3356 = vadd.f32 %v2839, %v2367
        %v3357 = vadd.f32 %v2840, %v2372
        %v3358 = vadd.f32 %v2841, %v2375
        %v3359 = vadd.f32 %v2842, %v2380
        %v3360 = vadd.f32 %v2843, %v2383
        %v3361 = vadd.f32 %v2844, %v2388
        %v3362 = vadd.f32 %v2845, %v2391
        %v3363 = vadd.f32 %v2846, %v2396
        %v3364 = vadd.f32 %v2847, %v2399
        %v3365 = vadd.f32 %v2848, %v2404
        %v3366 = vadd.f32 %v2849, %v2407
        %v3367 = vadd.f32 %v2850, %v2412
        %v3368 = vadd.f32 %v2851, %v2415
        %v3369 = vadd.f32 %v2852, %v2420
        %v3370 = vadd.f32 %v2853, %v2423
        %v3371 = vadd.f32 %v2854, %v2428
        %v3372 = vadd.f32 %v2855, %v2431
        %v3373 = vadd.f32 %v2856, %v2436
        %v3374 = vadd.f32 %v2857, %v2439
        %v3375 = vadd.f32 %v2858, %v2444
        %v3376 = vadd.f32 %v2859, %v2447
        %v3377 = vadd.f32 %v2860, %v2452
        %v3378 = vadd.f32 %v2861, %v2455
        %v3379 = vadd.f32 %v2862, %v2460
        %v3380 = vadd.f32 %v2863, %v2463
        %v3381 = vadd.f32 %v2864, %v2468
        %v3382 = vadd.f32 %v2865, %v2471
        %v3383 = vadd.f32 %v2866, %v2476
        %v3384 = vadd.f32 %v2867, %v2479
        %v3385 = vadd.f32 %v2868, %v2484
        %v3386 = vadd.f32 %v2869, %v2487
        %v3387 = vadd.f32 %v2870, %v2492
        %v3388 = vadd.f32 %v2871, %v2495
        %v3389 = vadd.f32 %v2872, %v2500
        %v3390 = vadd.f32 %v2873, %v2503
        %v3391 = vadd.f32 %v2874, %v2508
        %v3392 = vadd.f32 %v2875, %v2511
        %v3393 = vadd.f32 %v2876, %v2516
        %v3394 = vadd.f32 %v2877, %v2519
        %v3395 = vadd.f32 %v2878, %v2524
        %v3396 = vadd.f32 %v2879, %v2527
        %v3397 = vadd.f32 %v2880, %v2532
        %v3398 = vadd.f32 %v2881, %v2535
        %v3399 = vadd.f32 %v2882, %v2540
        %v3400 = vadd.f32 %v2883, %v2543
        %v3401 = vadd.f32 %v2884, %v2548
        %v3402 = vadd.f32 %v2885, %v2551
        %v3403 = vadd.f32 %v2886, %v2556
        %v3404 = vadd.f32 %v2887, %v2559
        %v3405 = vadd.f32 %v2888, %v2564
        %v3406 = vadd.f32 %v2889, %v2567
        %v3407 = vld [vmem:[%s6] sm:$0xf]
        %v3408 = vld [vmem:[%s6 + $0x4] sm:$0xf]
        %v3409 = vld [vmem:[%s6 + $0x8] sm:$0xf]
        %v3410 = vld [vmem:[%s6 + $0xc] sm:$0xf]
        %v3411 = vld [vmem:[%s6 + $0x10] sm:$0xf]
        %v3412 = vld [vmem:[%s6 + $0x14] sm:$0xf]
        %v3413 = vld [vmem:[%s6 + $0x18] sm:$0xf]
        %v3414 = vld [vmem:[%s6 + $0x1c] sm:$0xf]
        %v3415 = vld [vmem:[%s6 + $0x20] sm:$0xf]
        %v3416 = vld [vmem:[%s6 + $0x24] sm:$0xf]
        %v3417 = vld [vmem:[%s6 + $0x28] sm:$0xf]
        %v3418 = vld [vmem:[%s6 + $0x2c] sm:$0xf]
        %v3419 = vld [vmem:[%s6 + $0x30] sm:$0xf]
        %v3420 = vld [vmem:[%s6 + $0x34] sm:$0xf]
        %v3421 = vld [vmem:[%s6 + $0x38] sm:$0xf]
        %v3422 = vld [vmem:[%s6 + $0x3c] sm:$0xf]
        %v3423 = vpack.c.bf16 %v3344, %v3343
        %v3424 = vpack.c.bf16 %v3346, %v3345
        %v3425 = vpack.c.bf16 %v3348, %v3347
        %v3426 = vpack.c.bf16 %v3350, %v3349
        %v3427 = vpack.c.bf16 %v3352, %v3351
        %v3428 = vpack.c.bf16 %v3354, %v3353
        %v3429 = vpack.c.bf16 %v3356, %v3355
        %v3430 = vpack.c.bf16 %v3358, %v3357
        %v3431 = vpack.c.bf16 %v3360, %v3359
        %v3432 = vpack.c.bf16 %v3362, %v3361
        %v3433 = vpack.c.bf16 %v3364, %v3363
        %v3434 = vpack.c.bf16 %v3366, %v3365
        %v3435 = vpack.c.bf16 %v3368, %v3367
        %v3436 = vpack.c.bf16 %v3370, %v3369
        %v3437 = vpack.c.bf16 %v3372, %v3371
        %v3438 = vpack.c.bf16 %v3374, %v3373
        %v3439 = vpack.c.bf16 %v3376, %v3375
        %v3440 = vpack.c.bf16 %v3378, %v3377
        %v3441 = vpack.c.bf16 %v3380, %v3379
        %v3442 = vpack.c.bf16 %v3382, %v3381
        %v3443 = vpack.c.bf16 %v3384, %v3383
        %v3444 = vpack.c.bf16 %v3386, %v3385
        %v3445 = vpack.c.bf16 %v3388, %v3387
        %v3446 = vpack.c.bf16 %v3390, %v3389
        %v3447 = vpack.c.bf16 %v3392, %v3391
        %v3448 = vpack.c.bf16 %v3394, %v3393
        %v3449 = vpack.c.bf16 %v3396, %v3395
        %v3450 = vpack.c.bf16 %v3398, %v3397
        %v3451 = vpack.c.bf16 %v3400, %v3399
        %v3452 = vpack.c.bf16 %v3402, %v3401
        %v3453 = vpack.c.bf16 %v3404, %v3403
        %v3454 = vpack.c.bf16 %v3406, %v3405
        %v3455 = vld [vmem:[%s7] sm:$0x1]
        %v3457 = vlaneseq
        %v3458 = vshrl.u32 %v3457, 7
        %v3459 = vsub.s32 0, %v3458
        %v3460 = vrot.slane %v3455, %v3459
        %v3478 = vunpack.c.l.b16 %v3407
        %v3479 = vunpack.c.l.b16 %v3408
        %v3480 = vunpack.c.l.b16 %v3409
        %v3481 = vunpack.c.l.b16 %v3410
        %v3482 = vunpack.c.l.b16 %v3411
        %v3483 = vunpack.c.l.b16 %v3412
        %v3484 = vunpack.c.l.b16 %v3413
        %v3485 = vunpack.c.l.b16 %v3414
        %v3486 = vunpack.c.l.b16 %v3415
        %v3487 = vunpack.c.l.b16 %v3416
        %v3488 = vunpack.c.l.b16 %v3417
        %v3489 = vunpack.c.l.b16 %v3418
        %v3490 = vunpack.c.l.b16 %v3419
        %v3491 = vunpack.c.l.b16 %v3420
        %v3492 = vunpack.c.l.b16 %v3421
        %v3493 = vunpack.c.l.b16 %v3422
        %v3494 = vpack.c.b16 %v3479, %v3478
        %v3495 = vpack.c.b16 %v3481, %v3480
        %v3496 = vpack.c.b16 %v3483, %v3482
        %v3497 = vpack.c.b16 %v3485, %v3484
        %v3498 = vpack.c.b16 %v3487, %v3486
        %v3499 = vpack.c.b16 %v3489, %v3488
        %v3500 = vpack.c.b16 %v3491, %v3490
        %v3501 = vpack.c.b16 %v3493, %v3492
        %3510 = vmatprep.subr.bf16.mxu0 0
        %3511 = vmatpush1.bf16.msra.mxu0 %v3501
        %3512 = vmatprep.subr.bf16.mxu0 0
        %3513 = vmatpush1.bf16.msra.mxu0 %v3500
        %3514 = vmatprep.subr.bf16.mxu0 0
        %3515 = vmatpush1.bf16.msra.mxu0 %v3499
        %3516 = vmatprep.subr.bf16.mxu0 0
        %3517 = vmatpush1.bf16.msra.mxu0 %v3498
        %3518 = vmatprep.subr.bf16.mxu0 0
        %3519 = vmatpush1.bf16.msra.mxu0 %v3497
        %3520 = vmatprep.subr.bf16.mxu0 0
        %3521 = vmatpush1.bf16.msra.mxu0 %v3496
        %3522 = vmatprep.subr.bf16.mxu0 0
        %3523 = vmatpush1.bf16.msra.mxu0 %v3495
        %3524 = vmatprep.subr.bf16.mxu0 0
        %3525 = vmatpush1.bf16.msra.mxu0 %v3494
        %3526 = vmatprep.subr.bf16.mxu0 0
        %3527 = vmatpush2.bf16.msra.mxu0 0
        %3528 = vmatprep.subr.bf16.mxu0 0
        %3529 = vmatpush2.bf16.msra.mxu0 0
        %3530 = vmatprep.subr.bf16.mxu0 0
        %3531 = vmatpush2.bf16.msra.mxu0 0
        %3532 = vmatprep.subr.bf16.mxu0 0
        %3533 = vmatpush2.bf16.msra.mxu0 0
        %3534 = vmatprep.subr.bf16.mxu0 0
        %3535 = vmatpush2.bf16.msra.mxu0 0
        %3536 = vmatprep.subr.bf16.mxu0 0
        %3537 = vmatpush2.bf16.msra.mxu0 0
        %3538 = vmatprep.subr.bf16.mxu0 0
        %3539 = vmatpush2.bf16.msra.mxu0 0
        %3540 = vmatprep.subr.bf16.mxu0 0
        %3541 = vmatpush2.bf16.msra.mxu0 0
        %3542 = vmatprep.mubr.bf16.mxu0 0
        %3543 = vmatmul.mubr.bf16.gmra.mxu0 %v3423
        %v3544 = vpop.f32.mrf.mxu0
        %v3545 = vadd.f32 %v3460, %v3544
        %v3546 = vpop.f32.mrf.mxu0
        %v3547 = vpop.f32.mrf.mxu0
        %v3548 = vadd.f32 %v3460, %v3547
        %v3549 = vpop.f32.mrf.mxu0
        %3550 = vmatprep.mubr.bf16.mxu0 0
        %3551 = vmatmul.mubr.bf16.gmra.mxu0 %v3424
        %v3552 = vpop.f32.mrf.mxu0
        %v3553 = vadd.f32 %v3460, %v3552
        %v3554 = vpop.f32.mrf.mxu0
        %v3555 = vpop.f32.mrf.mxu0
        %v3556 = vadd.f32 %v3460, %v3555
        %v3557 = vpop.f32.mrf.mxu0
        %3558 = vmatprep.mubr.bf16.mxu0 0
        %3559 = vmatmul.mubr.bf16.gmra.mxu0 %v3425
        %v3560 = vpop.f32.mrf.mxu0
        %v3561 = vadd.f32 %v3460, %v3560
        %v3562 = vpop.f32.mrf.mxu0
        %v3563 = vpop.f32.mrf.mxu0
        %v3564 = vadd.f32 %v3460, %v3563
        %v3565 = vpop.f32.mrf.mxu0
        %3566 = vmatprep.mubr.bf16.mxu0 0
        %3567 = vmatmul.mubr.bf16.gmra.mxu0 %v3426
        %v3568 = vpop.f32.mrf.mxu0
        %v3569 = vadd.f32 %v3460, %v3568
        %v3570 = vpop.f32.mrf.mxu0
        %v3571 = vpop.f32.mrf.mxu0
        %v3572 = vadd.f32 %v3460, %v3571
        %v3573 = vpop.f32.mrf.mxu0
        %3574 = vmatprep.mubr.bf16.mxu0 0
        %3575 = vmatmul.mubr.bf16.gmra.mxu0 %v3427
        %v3576 = vpop.f32.mrf.mxu0
        %v3577 = vadd.f32 %v3460, %v3576
        %v3578 = vpop.f32.mrf.mxu0
        %v3579 = vpop.f32.mrf.mxu0
        %v3580 = vadd.f32 %v3460, %v3579
        %v3581 = vpop.f32.mrf.mxu0
        %3582 = vmatprep.mubr.bf16.mxu0 0
        %3583 = vmatmul.mubr.bf16.gmra.mxu0 %v3428
        %v3584 = vpop.f32.mrf.mxu0
        %v3585 = vadd.f32 %v3460, %v3584
        %v3586 = vpop.f32.mrf.mxu0
        %v3587 = vpop.f32.mrf.mxu0
        %v3588 = vadd.f32 %v3460, %v3587
        %v3589 = vpop.f32.mrf.mxu0
        %3590 = vmatprep.mubr.bf16.mxu0 0
        %3591 = vmatmul.mubr.bf16.gmra.mxu0 %v3429
        %v3592 = vpop.f32.mrf.mxu0
        %v3593 = vadd.f32 %v3460, %v3592
        %v3594 = vpop.f32.mrf.mxu0
        %v3595 = vpop.f32.mrf.mxu0
        %v3596 = vadd.f32 %v3460, %v3595
        %v3597 = vpop.f32.mrf.mxu0
        %3598 = vmatprep.mubr.bf16.mxu0 0
        %3599 = vmatmul.mubr.bf16.gmra.mxu0 %v3430
        %v3600 = vpop.f32.mrf.mxu0
        %v3601 = vadd.f32 %v3460, %v3600
        %v3602 = vpop.f32.mrf.mxu0
        %v3603 = vpop.f32.mrf.mxu0
        %v3604 = vadd.f32 %v3460, %v3603
        %v3605 = vpop.f32.mrf.mxu0
        %3606 = vmatprep.mubr.bf16.mxu0 0
        %3607 = vmatmul.mubr.bf16.gmra.mxu0 %v3431
        %v3608 = vpop.f32.mrf.mxu0
        %v3609 = vadd.f32 %v3460, %v3608
        %v3610 = vpop.f32.mrf.mxu0
        %v3611 = vpop.f32.mrf.mxu0
        %v3612 = vadd.f32 %v3460, %v3611
        %v3613 = vpop.f32.mrf.mxu0
        %3614 = vmatprep.mubr.bf16.mxu0 0
        %3615 = vmatmul.mubr.bf16.gmra.mxu0 %v3432
        %v3616 = vpop.f32.mrf.mxu0
        %v3617 = vadd.f32 %v3460, %v3616
        %v3618 = vpop.f32.mrf.mxu0
        %v3619 = vpop.f32.mrf.mxu0
        %v3620 = vadd.f32 %v3460, %v3619
        %v3621 = vpop.f32.mrf.mxu0
        %3622 = vmatprep.mubr.bf16.mxu0 0
        %3623 = vmatmul.mubr.bf16.gmra.mxu0 %v3433
        %v3624 = vpop.f32.mrf.mxu0
        %v3625 = vadd.f32 %v3460, %v3624
        %v3626 = vpop.f32.mrf.mxu0
        %v3627 = vpop.f32.mrf.mxu0
        %v3628 = vadd.f32 %v3460, %v3627
        %v3629 = vpop.f32.mrf.mxu0
        %3630 = vmatprep.mubr.bf16.mxu0 0
        %3631 = vmatmul.mubr.bf16.gmra.mxu0 %v3434
        %v3632 = vpop.f32.mrf.mxu0
        %v3633 = vadd.f32 %v3460, %v3632
        %v3634 = vpop.f32.mrf.mxu0
        %v3635 = vpop.f32.mrf.mxu0
        %v3636 = vadd.f32 %v3460, %v3635
        %v3637 = vpop.f32.mrf.mxu0
        %3638 = vmatprep.mubr.bf16.mxu0 0
        %3639 = vmatmul.mubr.bf16.gmra.mxu0 %v3435
        %v3640 = vpop.f32.mrf.mxu0
        %v3641 = vadd.f32 %v3460, %v3640
        %v3642 = vpop.f32.mrf.mxu0
        %v3643 = vpop.f32.mrf.mxu0
        %v3644 = vadd.f32 %v3460, %v3643
        %v3645 = vpop.f32.mrf.mxu0
        %3646 = vmatprep.mubr.bf16.mxu0 0
        %3647 = vmatmul.mubr.bf16.gmra.mxu0 %v3436
        %v3648 = vpop.f32.mrf.mxu0
        %v3649 = vadd.f32 %v3460, %v3648
        %v3650 = vpop.f32.mrf.mxu0
        %v3651 = vpop.f32.mrf.mxu0
        %v3652 = vadd.f32 %v3460, %v3651
        %v3653 = vpop.f32.mrf.mxu0
        %3654 = vmatprep.mubr.bf16.mxu0 0
        %3655 = vmatmul.mubr.bf16.gmra.mxu0 %v3437
        %v3656 = vpop.f32.mrf.mxu0
        %v3657 = vadd.f32 %v3460, %v3656
        %v3658 = vpop.f32.mrf.mxu0
        %v3659 = vpop.f32.mrf.mxu0
        %v3660 = vadd.f32 %v3460, %v3659
        %v3661 = vpop.f32.mrf.mxu0
        %3662 = vmatprep.mubr.bf16.mxu0 0
        %3663 = vmatmul.mubr.bf16.gmra.mxu0 %v3438
        %v3664 = vpop.f32.mrf.mxu0
        %v3665 = vadd.f32 %v3460, %v3664
        %v3666 = vpop.f32.mrf.mxu0
        %v3667 = vpop.f32.mrf.mxu0
        %v3668 = vadd.f32 %v3460, %v3667
        %v3669 = vpop.f32.mrf.mxu0
        %3670 = vmatprep.mubr.bf16.mxu0 0
        %3671 = vmatmul.mubr.bf16.gmra.mxu0 %v3439
        %v3672 = vpop.f32.mrf.mxu0
        %v3673 = vadd.f32 %v3460, %v3672
        %v3674 = vpop.f32.mrf.mxu0
        %v3675 = vpop.f32.mrf.mxu0
        %v3676 = vadd.f32 %v3460, %v3675
        %v3677 = vpop.f32.mrf.mxu0
        %3678 = vmatprep.mubr.bf16.mxu0 0
        %3679 = vmatmul.mubr.bf16.gmra.mxu0 %v3440
        %v3680 = vpop.f32.mrf.mxu0
        %v3681 = vadd.f32 %v3460, %v3680
        %v3682 = vpop.f32.mrf.mxu0
        %v3683 = vpop.f32.mrf.mxu0
        %v3684 = vadd.f32 %v3460, %v3683
        %v3685 = vpop.f32.mrf.mxu0
        %3686 = vmatprep.mubr.bf16.mxu0 0
        %3687 = vmatmul.mubr.bf16.gmra.mxu0 %v3441
        %v3688 = vpop.f32.mrf.mxu0
        %v3689 = vadd.f32 %v3460, %v3688
        %v3690 = vpop.f32.mrf.mxu0
        %v3691 = vpop.f32.mrf.mxu0
        %v3692 = vadd.f32 %v3460, %v3691
        %v3693 = vpop.f32.mrf.mxu0
        %3694 = vmatprep.mubr.bf16.mxu0 0
        %3695 = vmatmul.mubr.bf16.gmra.mxu0 %v3442
        %v3696 = vpop.f32.mrf.mxu0
        %v3697 = vadd.f32 %v3460, %v3696
        %v3698 = vpop.f32.mrf.mxu0
        %v3699 = vpop.f32.mrf.mxu0
        %v3700 = vadd.f32 %v3460, %v3699
        %v3701 = vpop.f32.mrf.mxu0
        %3702 = vmatprep.mubr.bf16.mxu0 0
        %3703 = vmatmul.mubr.bf16.gmra.mxu0 %v3443
        %v3704 = vpop.f32.mrf.mxu0
        %v3705 = vadd.f32 %v3460, %v3704
        %v3706 = vpop.f32.mrf.mxu0
        %v3707 = vpop.f32.mrf.mxu0
        %v3708 = vadd.f32 %v3460, %v3707
        %v3709 = vpop.f32.mrf.mxu0
        %3710 = vmatprep.mubr.bf16.mxu0 0
        %3711 = vmatmul.mubr.bf16.gmra.mxu0 %v3444
        %v3712 = vpop.f32.mrf.mxu0
        %v3713 = vadd.f32 %v3460, %v3712
        %v3714 = vpop.f32.mrf.mxu0
        %v3715 = vpop.f32.mrf.mxu0
        %v3716 = vadd.f32 %v3460, %v3715
        %v3717 = vpop.f32.mrf.mxu0
        %3718 = vmatprep.mubr.bf16.mxu0 0
        %3719 = vmatmul.mubr.bf16.gmra.mxu0 %v3445
        %v3720 = vpop.f32.mrf.mxu0
        %v3721 = vadd.f32 %v3460, %v3720
        %v3722 = vpop.f32.mrf.mxu0
        %v3723 = vpop.f32.mrf.mxu0
        %v3724 = vadd.f32 %v3460, %v3723
        %v3725 = vpop.f32.mrf.mxu0
        %3726 = vmatprep.mubr.bf16.mxu0 0
        %3727 = vmatmul.mubr.bf16.gmra.mxu0 %v3446
        %v3728 = vpop.f32.mrf.mxu0
        %v3729 = vadd.f32 %v3460, %v3728
        %v3730 = vpop.f32.mrf.mxu0
        %v3731 = vpop.f32.mrf.mxu0
        %v3732 = vadd.f32 %v3460, %v3731
        %v3733 = vpop.f32.mrf.mxu0
        %3734 = vmatprep.mubr.bf16.mxu0 0
        %3735 = vmatmul.mubr.bf16.gmra.mxu0 %v3447
        %v3736 = vpop.f32.mrf.mxu0
        %v3737 = vadd.f32 %v3460, %v3736
        %v3738 = vpop.f32.mrf.mxu0
        %v3739 = vpop.f32.mrf.mxu0
        %v3740 = vadd.f32 %v3460, %v3739
        %v3741 = vpop.f32.mrf.mxu0
        %3742 = vmatprep.mubr.bf16.mxu0 0
        %3743 = vmatmul.mubr.bf16.gmra.mxu0 %v3448
        %v3744 = vpop.f32.mrf.mxu0
        %v3745 = vadd.f32 %v3460, %v3744
        %v3746 = vpop.f32.mrf.mxu0
        %v3747 = vpop.f32.mrf.mxu0
        %v3748 = vadd.f32 %v3460, %v3747
        %v3749 = vpop.f32.mrf.mxu0
        %3750 = vmatprep.mubr.bf16.mxu0 0
        %3751 = vmatmul.mubr.bf16.gmra.mxu0 %v3449
        %v3752 = vpop.f32.mrf.mxu0
        %v3753 = vadd.f32 %v3460, %v3752
        %v3754 = vpop.f32.mrf.mxu0
        %v3755 = vpop.f32.mrf.mxu0
        %v3756 = vadd.f32 %v3460, %v3755
        %v3757 = vpop.f32.mrf.mxu0
        %3758 = vmatprep.mubr.bf16.mxu0 0
        %3759 = vmatmul.mubr.bf16.gmra.mxu0 %v3450
        %v3760 = vpop.f32.mrf.mxu0
        %v3761 = vadd.f32 %v3460, %v3760
        %v3762 = vpop.f32.mrf.mxu0
        %v3763 = vpop.f32.mrf.mxu0
        %v3764 = vadd.f32 %v3460, %v3763
        %v3765 = vpop.f32.mrf.mxu0
        %3766 = vmatprep.mubr.bf16.mxu0 0
        %3767 = vmatmul.mubr.bf16.gmra.mxu0 %v3451
        %v3768 = vpop.f32.mrf.mxu0
        %v3769 = vadd.f32 %v3460, %v3768
        %v3770 = vpop.f32.mrf.mxu0
        %v3771 = vpop.f32.mrf.mxu0
        %v3772 = vadd.f32 %v3460, %v3771
        %v3773 = vpop.f32.mrf.mxu0
        %3774 = vmatprep.mubr.bf16.mxu0 0
        %3775 = vmatmul.mubr.bf16.gmra.mxu0 %v3452
        %v3776 = vpop.f32.mrf.mxu0
        %v3777 = vadd.f32 %v3460, %v3776
        %v3778 = vpop.f32.mrf.mxu0
        %v3779 = vpop.f32.mrf.mxu0
        %v3780 = vadd.f32 %v3460, %v3779
        %v3781 = vpop.f32.mrf.mxu0
        %3782 = vmatprep.mubr.bf16.mxu0 0
        %3783 = vmatmul.mubr.bf16.gmra.mxu0 %v3453
        %v3784 = vpop.f32.mrf.mxu0
        %v3785 = vadd.f32 %v3460, %v3784
        %v3786 = vpop.f32.mrf.mxu0
        %v3787 = vpop.f32.mrf.mxu0
        %v3788 = vadd.f32 %v3460, %v3787
        %v3789 = vpop.f32.mrf.mxu0
        %3790 = vmatprep.mubr.bf16.mxu0 0
        %3791 = vmatmul.mubr.bf16.gmra.mxu0 %v3454
        %v3792 = vpop.f32.mrf.mxu0
        %v3793 = vadd.f32 %v3460, %v3792
        %v3794 = vpop.f32.mrf.mxu0
        %v3795 = vpop.f32.mrf.mxu0
        %v3796 = vadd.f32 %v3460, %v3795
        %v3797 = vpop.f32.mrf.mxu0
        %3798 = vdwg.mxu0
        %vm3799 = vcmp.gt.f32.partialorder %v3545, 0.0
        %vm3800 = vcmp.gt.f32.partialorder %v3548, 0.0
        %vm3801 = vcmp.gt.f32.partialorder %v3553, 0.0
        %vm3802 = vcmp.gt.f32.partialorder %v3556, 0.0
        %vm3803 = vcmp.gt.f32.partialorder %v3561, 0.0
        %vm3804 = vcmp.gt.f32.partialorder %v3564, 0.0
        %vm3805 = vcmp.gt.f32.partialorder %v3569, 0.0
        %vm3806 = vcmp.gt.f32.partialorder %v3572, 0.0
        %vm3807 = vcmp.gt.f32.partialorder %v3577, 0.0
        %vm3808 = vcmp.gt.f32.partialorder %v3580, 0.0
        %vm3809 = vcmp.gt.f32.partialorder %v3585, 0.0
        %vm3810 = vcmp.gt.f32.partialorder %v3588, 0.0
        %vm3811 = vcmp.gt.f32.partialorder %v3593, 0.0
        %vm3812 = vcmp.gt.f32.partialorder %v3596, 0.0
        %vm3813 = vcmp.gt.f32.partialorder %v3601, 0.0
        %vm3814 = vcmp.gt.f32.partialorder %v3604, 0.0
        %vm3815 = vcmp.gt.f32.partialorder %v3609, 0.0
        %vm3816 = vcmp.gt.f32.partialorder %v3612, 0.0
        %vm3817 = vcmp.gt.f32.partialorder %v3617, 0.0
        %vm3818 = vcmp.gt.f32.partialorder %v3620, 0.0
        %vm3819 = vcmp.gt.f32.partialorder %v3625, 0.0
        %vm3820 = vcmp.gt.f32.partialorder %v3628, 0.0
        %vm3821 = vcmp.gt.f32.partialorder %v3633, 0.0
        %vm3822 = vcmp.gt.f32.partialorder %v3636, 0.0
        %vm3823 = vcmp.gt.f32.partialorder %v3641, 0.0
        %vm3824 = vcmp.gt.f32.partialorder %v3644, 0.0
        %vm3825 = vcmp.gt.f32.partialorder %v3649, 0.0
        %vm3826 = vcmp.gt.f32.partialorder %v3652, 0.0
        %vm3827 = vcmp.gt.f32.partialorder %v3657, 0.0
        %vm3828 = vcmp.gt.f32.partialorder %v3660, 0.0
        %vm3829 = vcmp.gt.f32.partialorder %v3665, 0.0
        %vm3830 = vcmp.gt.f32.partialorder %v3668, 0.0
        %vm3831 = vcmp.gt.f32.partialorder %v3673, 0.0
        %vm3832 = vcmp.gt.f32.partialorder %v3676, 0.0
        %vm3833 = vcmp.gt.f32.partialorder %v3681, 0.0
        %vm3834 = vcmp.gt.f32.partialorder %v3684, 0.0
        %vm3835 = vcmp.gt.f32.partialorder %v3689, 0.0
        %vm3836 = vcmp.gt.f32.partialorder %v3692, 0.0
        %vm3837 = vcmp.gt.f32.partialorder %v3697, 0.0
        %vm3838 = vcmp.gt.f32.partialorder %v3700, 0.0
        %vm3839 = vcmp.gt.f32.partialorder %v3705, 0.0
        %vm3840 = vcmp.gt.f32.partialorder %v3708, 0.0
        %vm3841 = vcmp.gt.f32.partialorder %v3713, 0.0
        %vm3842 = vcmp.gt.f32.partialorder %v3716, 0.0
        %vm3843 = vcmp.gt.f32.partialorder %v3721, 0.0
        %vm3844 = vcmp.gt.f32.partialorder %v3724, 0.0
        %vm3845 = vcmp.gt.f32.partialorder %v3729, 0.0
        %vm3846 = vcmp.gt.f32.partialorder %v3732, 0.0
        %vm3847 = vcmp.gt.f32.partialorder %v3737, 0.0
        %vm3848 = vcmp.gt.f32.partialorder %v3740, 0.0
        %vm3849 = vcmp.gt.f32.partialorder %v3745, 0.0
        %vm3850 = vcmp.gt.f32.partialorder %v3748, 0.0
        %vm3851 = vcmp.gt.f32.partialorder %v3753, 0.0
        %vm3852 = vcmp.gt.f32.partialorder %v3756, 0.0
        %vm3853 = vcmp.gt.f32.partialorder %v3761, 0.0
        %vm3854 = vcmp.gt.f32.partialorder %v3764, 0.0
        %vm3855 = vcmp.gt.f32.partialorder %v3769, 0.0
        %vm3856 = vcmp.gt.f32.partialorder %v3772, 0.0
        %vm3857 = vcmp.gt.f32.partialorder %v3777, 0.0
        %vm3858 = vcmp.gt.f32.partialorder %v3780, 0.0
        %vm3859 = vcmp.gt.f32.partialorder %v3785, 0.0
        %vm3860 = vcmp.gt.f32.partialorder %v3788, 0.0
        %vm3861 = vcmp.gt.f32.partialorder %v3793, 0.0
        %vm3862 = vcmp.gt.f32.partialorder %v3796, 0.0
        %v3863 = vmin.f32 %v3545, 0.0
        %v3864 = vmin.f32 %v3548, 0.0
        %v3865 = vmin.f32 %v3553, 0.0
        %v3866 = vmin.f32 %v3556, 0.0
        %v3867 = vmin.f32 %v3561, 0.0
        %v3868 = vmin.f32 %v3564, 0.0
        %v3869 = vmin.f32 %v3569, 0.0
        %v3870 = vmin.f32 %v3572, 0.0
        %v3871 = vmin.f32 %v3577, 0.0
        %v3872 = vmin.f32 %v3580, 0.0
        %v3873 = vmin.f32 %v3585, 0.0
        %v3874 = vmin.f32 %v3588, 0.0
        %v3875 = vmin.f32 %v3593, 0.0
        %v3876 = vmin.f32 %v3596, 0.0
        %v3877 = vmin.f32 %v3601, 0.0
        %v3878 = vmin.f32 %v3604, 0.0
        %v3879 = vmin.f32 %v3609, 0.0
        %v3880 = vmin.f32 %v3612, 0.0
        %v3881 = vmin.f32 %v3617, 0.0
        %v3882 = vmin.f32 %v3620, 0.0
        %v3883 = vmin.f32 %v3625, 0.0
        %v3884 = vmin.f32 %v3628, 0.0
        %v3885 = vmin.f32 %v3633, 0.0
        %v3886 = vmin.f32 %v3636, 0.0
        %v3887 = vmin.f32 %v3641, 0.0
        %v3888 = vmin.f32 %v3644, 0.0
        %v3889 = vmin.f32 %v3649, 0.0
        %v3890 = vmin.f32 %v3652, 0.0
        %v3891 = vmin.f32 %v3657, 0.0
        %v3892 = vmin.f32 %v3660, 0.0
        %v3893 = vmin.f32 %v3665, 0.0
        %v3894 = vmin.f32 %v3668, 0.0
        %v3895 = vmin.f32 %v3673, 0.0
        %v3896 = vmin.f32 %v3676, 0.0
        %v3897 = vmin.f32 %v3681, 0.0
        %v3898 = vmin.f32 %v3684, 0.0
        %v3899 = vmin.f32 %v3689, 0.0
        %v3900 = vmin.f32 %v3692, 0.0
        %v3901 = vmin.f32 %v3697, 0.0
        %v3902 = vmin.f32 %v3700, 0.0
        %v3903 = vmin.f32 %v3705, 0.0
        %v3904 = vmin.f32 %v3708, 0.0
        %v3905 = vmin.f32 %v3713, 0.0
        %v3906 = vmin.f32 %v3716, 0.0
        %v3907 = vmin.f32 %v3721, 0.0
        %v3908 = vmin.f32 %v3724, 0.0
        %v3909 = vmin.f32 %v3729, 0.0
        %v3910 = vmin.f32 %v3732, 0.0
        %v3911 = vmin.f32 %v3737, 0.0
        %v3912 = vmin.f32 %v3740, 0.0
        %v3913 = vmin.f32 %v3745, 0.0
        %v3914 = vmin.f32 %v3748, 0.0
        %v3915 = vmin.f32 %v3753, 0.0
        %v3916 = vmin.f32 %v3756, 0.0
        %v3917 = vmin.f32 %v3761, 0.0
        %v3918 = vmin.f32 %v3764, 0.0
        %v3919 = vmin.f32 %v3769, 0.0
        %v3920 = vmin.f32 %v3772, 0.0
        %v3921 = vmin.f32 %v3777, 0.0
        %v3922 = vmin.f32 %v3780, 0.0
        %v3923 = vmin.f32 %v3785, 0.0
        %v3924 = vmin.f32 %v3788, 0.0
        %v3925 = vmin.f32 %v3793, 0.0
        %v3926 = vmin.f32 %v3796, 0.0
        %v3927 = vmul.f32 %v3863, 1.442695
        %v3928 = vpow.pop %v3927
        %v3929 = vmul.f32 %v3864, 1.442695
        %v3930 = vpow.pop %v3929
        %v3931 = vmul.f32 %v3865, 1.442695
        %v3932 = vpow.pop %v3931
        %v3933 = vmul.f32 %v3866, 1.442695
        %v3934 = vpow.pop %v3933
        %v3935 = vmul.f32 %v3867, 1.442695
        %v3936 = vpow.pop %v3935
        %v3937 = vmul.f32 %v3868, 1.442695
        %v3938 = vpow.pop %v3937
        %v3939 = vmul.f32 %v3869, 1.442695
        %v3940 = vpow.pop %v3939
        %v3941 = vmul.f32 %v3870, 1.442695
        %v3942 = vpow.pop %v3941
        %v3943 = vmul.f32 %v3871, 1.442695
        %v3944 = vpow.pop %v3943
        %v3945 = vmul.f32 %v3872, 1.442695
        %v3946 = vpow.pop %v3945
        %v3947 = vmul.f32 %v3873, 1.442695
        %v3948 = vpow.pop %v3947
        %v3949 = vmul.f32 %v3874, 1.442695
        %v3950 = vpow.pop %v3949
        %v3951 = vmul.f32 %v3875, 1.442695
        %v3952 = vpow.pop %v3951
        %v3953 = vmul.f32 %v3876, 1.442695
        %v3954 = vpow.pop %v3953
        %v3955 = vmul.f32 %v3877, 1.442695
        %v3956 = vpow.pop %v3955
        %v3957 = vmul.f32 %v3878, 1.442695
        %v3958 = vpow.pop %v3957
        %v3959 = vmul.f32 %v3879, 1.442695
        %v3960 = vpow.pop %v3959
        %v3961 = vmul.f32 %v3880, 1.442695
        %v3962 = vpow.pop %v3961
        %v3963 = vmul.f32 %v3881, 1.442695
        %v3964 = vpow.pop %v3963
        %v3965 = vmul.f32 %v3882, 1.442695
        %v3966 = vpow.pop %v3965
        %v3967 = vmul.f32 %v3883, 1.442695
        %v3968 = vpow.pop %v3967
        %v3969 = vmul.f32 %v3884, 1.442695
        %v3970 = vpow.pop %v3969
        %v3971 = vmul.f32 %v3885, 1.442695
        %v3972 = vpow.pop %v3971
        %v3973 = vmul.f32 %v3886, 1.442695
        %v3974 = vpow.pop %v3973
        %v3975 = vmul.f32 %v3887, 1.442695
        %v3976 = vpow.pop %v3975
        %v3977 = vmul.f32 %v3888, 1.442695
        %v3978 = vpow.pop %v3977
        %v3979 = vmul.f32 %v3889, 1.442695
        %v3980 = vpow.pop %v3979
        %v3981 = vmul.f32 %v3890, 1.442695
        %v3982 = vpow.pop %v3981
        %v3983 = vmul.f32 %v3891, 1.442695
        %v3984 = vpow.pop %v3983
        %v3985 = vmul.f32 %v3892, 1.442695
        %v3986 = vpow.pop %v3985
        %v3987 = vmul.f32 %v3893, 1.442695
        %v3988 = vpow.pop %v3987
        %v3989 = vmul.f32 %v3894, 1.442695
        %v3990 = vpow.pop %v3989
        %v3991 = vmul.f32 %v3895, 1.442695
        %v3992 = vpow.pop %v3991
        %v3993 = vmul.f32 %v3896, 1.442695
        %v3994 = vpow.pop %v3993
        %v3995 = vmul.f32 %v3897, 1.442695
        %v3996 = vpow.pop %v3995
        %v3997 = vmul.f32 %v3898, 1.442695
        %v3998 = vpow.pop %v3997
        %v3999 = vmul.f32 %v3899, 1.442695
        %v4000 = vpow.pop %v3999
        %v4001 = vmul.f32 %v3900, 1.442695
        %v4002 = vpow.pop %v4001
        %v4003 = vmul.f32 %v3901, 1.442695
        %v4004 = vpow.pop %v4003
        %v4005 = vmul.f32 %v3902, 1.442695
        %v4006 = vpow.pop %v4005
        %v4007 = vmul.f32 %v3903, 1.442695
        %v4008 = vpow.pop %v4007
        %v4009 = vmul.f32 %v3904, 1.442695
        %v4010 = vpow.pop %v4009
        %v4011 = vmul.f32 %v3905, 1.442695
        %v4012 = vpow.pop %v4011
        %v4013 = vmul.f32 %v3906, 1.442695
        %v4014 = vpow.pop %v4013
        %v4015 = vmul.f32 %v3907, 1.442695
        %v4016 = vpow.pop %v4015
        %v4017 = vmul.f32 %v3908, 1.442695
        %v4018 = vpow.pop %v4017
        %v4019 = vmul.f32 %v3909, 1.442695
        %v4020 = vpow.pop %v4019
        %v4021 = vmul.f32 %v3910, 1.442695
        %v4022 = vpow.pop %v4021
        %v4023 = vmul.f32 %v3911, 1.442695
        %v4024 = vpow.pop %v4023
        %v4025 = vmul.f32 %v3912, 1.442695
        %v4026 = vpow.pop %v4025
        %v4027 = vmul.f32 %v3913, 1.442695
        %v4028 = vpow.pop %v4027
        %v4029 = vmul.f32 %v3914, 1.442695
        %v4030 = vpow.pop %v4029
        %v4031 = vmul.f32 %v3915, 1.442695
        %v4032 = vpow.pop %v4031
        %v4033 = vmul.f32 %v3916, 1.442695
        %v4034 = vpow.pop %v4033
        %v4035 = vmul.f32 %v3917, 1.442695
        %v4036 = vpow.pop %v4035
        %v4037 = vmul.f32 %v3918, 1.442695
        %v4038 = vpow.pop %v4037
        %v4039 = vmul.f32 %v3919, 1.442695
        %v4040 = vpow.pop %v4039
        %v4041 = vmul.f32 %v3920, 1.442695
        %v4042 = vpow.pop %v4041
        %v4043 = vmul.f32 %v3921, 1.442695
        %v4044 = vpow.pop %v4043
        %v4045 = vmul.f32 %v3922, 1.442695
        %v4046 = vpow.pop %v4045
        %v4047 = vmul.f32 %v3923, 1.442695
        %v4048 = vpow.pop %v4047
        %v4049 = vmul.f32 %v3924, 1.442695
        %v4050 = vpow.pop %v4049
        %v4051 = vmul.f32 %v3925, 1.442695
        %v4052 = vpow.pop %v4051
        %v4053 = vmul.f32 %v3926, 1.442695
        %v4054 = vpow.pop %v4053
        %v4055 = vsub.f32 %v3928, 1.0
        %v4056 = vsub.f32 %v3930, 1.0
        %v4057 = vsub.f32 %v3932, 1.0
        %v4058 = vsub.f32 %v3934, 1.0
        %v4059 = vsub.f32 %v3936, 1.0
        %v4060 = vsub.f32 %v3938, 1.0
        %v4061 = vsub.f32 %v3940, 1.0
        %v4062 = vsub.f32 %v3942, 1.0
        %v4063 = vsub.f32 %v3944, 1.0
        %v4064 = vsub.f32 %v3946, 1.0
        %v4065 = vsub.f32 %v3948, 1.0
        %v4066 = vsub.f32 %v3950, 1.0
        %v4067 = vsub.f32 %v3952, 1.0
        %v4068 = vsub.f32 %v3954, 1.0
        %v4069 = vsub.f32 %v3956, 1.0
        %v4070 = vsub.f32 %v3958, 1.0
        %v4071 = vsub.f32 %v3960, 1.0
        %v4072 = vsub.f32 %v3962, 1.0
        %v4073 = vsub.f32 %v3964, 1.0
        %v4074 = vsub.f32 %v3966, 1.0
        %v4075 = vsub.f32 %v3968, 1.0
        %v4076 = vsub.f32 %v3970, 1.0
        %v4077 = vsub.f32 %v3972, 1.0
        %v4078 = vsub.f32 %v3974, 1.0
        %v4079 = vsub.f32 %v3976, 1.0
        %v4080 = vsub.f32 %v3978, 1.0
        %v4081 = vsub.f32 %v3980, 1.0
        %v4082 = vsub.f32 %v3982, 1.0
        %v4083 = vsub.f32 %v3984, 1.0
        %v4084 = vsub.f32 %v3986, 1.0
        %v4085 = vsub.f32 %v3988, 1.0
        %v4086 = vsub.f32 %v3990, 1.0
        %v4087 = vsub.f32 %v3992, 1.0
        %v4088 = vsub.f32 %v3994, 1.0
        %v4089 = vsub.f32 %v3996, 1.0
        %v4090 = vsub.f32 %v3998, 1.0
        %v4091 = vsub.f32 %v4000, 1.0
        %v4092 = vsub.f32 %v4002, 1.0
        %v4093 = vsub.f32 %v4004, 1.0
        %v4094 = vsub.f32 %v4006, 1.0
        %v4095 = vsub.f32 %v4008, 1.0
        %v4096 = vsub.f32 %v4010, 1.0
        %v4097 = vsub.f32 %v4012, 1.0
        %v4098 = vsub.f32 %v4014, 1.0
        %v4099 = vsub.f32 %v4016, 1.0
        %v4100 = vsub.f32 %v4018, 1.0
        %v4101 = vsub.f32 %v4020, 1.0
        %v4102 = vsub.f32 %v4022, 1.0
        %v4103 = vsub.f32 %v4024, 1.0
        %v4104 = vsub.f32 %v4026, 1.0
        %v4105 = vsub.f32 %v4028, 1.0
        %v4106 = vsub.f32 %v4030, 1.0
        %v4107 = vsub.f32 %v4032, 1.0
        %v4108 = vsub.f32 %v4034, 1.0
        %v4109 = vsub.f32 %v4036, 1.0
        %v4110 = vsub.f32 %v4038, 1.0
        %v4111 = vsub.f32 %v4040, 1.0
        %v4112 = vsub.f32 %v4042, 1.0
        %v4113 = vsub.f32 %v4044, 1.0
        %v4114 = vsub.f32 %v4046, 1.0
        %v4115 = vsub.f32 %v4048, 1.0
        %v4116 = vsub.f32 %v4050, 1.0
        %v4117 = vsub.f32 %v4052, 1.0
        %v4118 = vsub.f32 %v4054, 1.0
        %v4119 = vmul.f32 %v4055, 1.6732632
        %v4120 = vmul.f32 %v4056, 1.6732632
        %v4121 = vmul.f32 %v4057, 1.6732632
        %v4122 = vmul.f32 %v4058, 1.6732632
        %v4123 = vmul.f32 %v4059, 1.6732632
        %v4124 = vmul.f32 %v4060, 1.6732632
        %v4125 = vmul.f32 %v4061, 1.6732632
        %v4126 = vmul.f32 %v4062, 1.6732632
        %v4127 = vmul.f32 %v4063, 1.6732632
        %v4128 = vmul.f32 %v4064, 1.6732632
        %v4129 = vmul.f32 %v4065, 1.6732632
        %v4130 = vmul.f32 %v4066, 1.6732632
        %v4131 = vmul.f32 %v4067, 1.6732632
        %v4132 = vmul.f32 %v4068, 1.6732632
        %v4133 = vmul.f32 %v4069, 1.6732632
        %v4134 = vmul.f32 %v4070, 1.6732632
        %v4135 = vmul.f32 %v4071, 1.6732632
        %v4136 = vmul.f32 %v4072, 1.6732632
        %v4137 = vmul.f32 %v4073, 1.6732632
        %v4138 = vmul.f32 %v4074, 1.6732632
        %v4139 = vmul.f32 %v4075, 1.6732632
        %v4140 = vmul.f32 %v4076, 1.6732632
        %v4141 = vmul.f32 %v4077, 1.6732632
        %v4142 = vmul.f32 %v4078, 1.6732632
        %v4143 = vmul.f32 %v4079, 1.6732632
        %v4144 = vmul.f32 %v4080, 1.6732632
        %v4145 = vmul.f32 %v4081, 1.6732632
        %v4146 = vmul.f32 %v4082, 1.6732632
        %v4147 = vmul.f32 %v4083, 1.6732632
        %v4148 = vmul.f32 %v4084, 1.6732632
        %v4149 = vmul.f32 %v4085, 1.6732632
        %v4150 = vmul.f32 %v4086, 1.6732632
        %v4151 = vmul.f32 %v4087, 1.6732632
        %v4152 = vmul.f32 %v4088, 1.6732632
        %v4153 = vmul.f32 %v4089, 1.6732632
        %v4154 = vmul.f32 %v4090, 1.6732632
        %v4155 = vmul.f32 %v4091, 1.6732632
        %v4156 = vmul.f32 %v4092, 1.6732632
        %v4157 = vmul.f32 %v4093, 1.6732632
        %v4158 = vmul.f32 %v4094, 1.6732632
        %v4159 = vmul.f32 %v4095, 1.6732632
        %v4160 = vmul.f32 %v4096, 1.6732632
        %v4161 = vmul.f32 %v4097, 1.6732632
        %v4162 = vmul.f32 %v4098, 1.6732632
        %v4163 = vmul.f32 %v4099, 1.6732632
        %v4164 = vmul.f32 %v4100, 1.6732632
        %v4165 = vmul.f32 %v4101, 1.6732632
        %v4166 = vmul.f32 %v4102, 1.6732632
        %v4167 = vmul.f32 %v4103, 1.6732632
        %v4168 = vmul.f32 %v4104, 1.6732632
        %v4169 = vmul.f32 %v4105, 1.6732632
        %v4170 = vmul.f32 %v4106, 1.6732632
        %v4171 = vmul.f32 %v4107, 1.6732632
        %v4172 = vmul.f32 %v4108, 1.6732632
        %v4173 = vmul.f32 %v4109, 1.6732632
        %v4174 = vmul.f32 %v4110, 1.6732632
        %v4175 = vmul.f32 %v4111, 1.6732632
        %v4176 = vmul.f32 %v4112, 1.6732632
        %v4177 = vmul.f32 %v4113, 1.6732632
        %v4178 = vmul.f32 %v4114, 1.6732632
        %v4179 = vmul.f32 %v4115, 1.6732632
        %v4180 = vmul.f32 %v4116, 1.6732632
        %v4181 = vmul.f32 %v4117, 1.6732632
        %v4182 = vmul.f32 %v4118, 1.6732632
        %v4183 = vsel %vm3799, %v3545, %v4119
        %v4184 = vsel %vm3800, %v3548, %v4120
        %v4185 = vsel %vm3801, %v3553, %v4121
        %v4186 = vsel %vm3802, %v3556, %v4122
        %v4187 = vsel %vm3803, %v3561, %v4123
        %v4188 = vsel %vm3804, %v3564, %v4124
        %v4189 = vsel %vm3805, %v3569, %v4125
        %v4190 = vsel %vm3806, %v3572, %v4126
        %v4191 = vsel %vm3807, %v3577, %v4127
        %v4192 = vsel %vm3808, %v3580, %v4128
        %v4193 = vsel %vm3809, %v3585, %v4129
        %v4194 = vsel %vm3810, %v3588, %v4130
        %v4195 = vsel %vm3811, %v3593, %v4131
        %v4196 = vsel %vm3812, %v3596, %v4132
        %v4197 = vsel %vm3813, %v3601, %v4133
        %v4198 = vsel %vm3814, %v3604, %v4134
        %v4199 = vsel %vm3815, %v3609, %v4135
        %v4200 = vsel %vm3816, %v3612, %v4136
        %v4201 = vsel %vm3817, %v3617, %v4137
        %v4202 = vsel %vm3818, %v3620, %v4138
        %v4203 = vsel %vm3819, %v3625, %v4139
        %v4204 = vsel %vm3820, %v3628, %v4140
        %v4205 = vsel %vm3821, %v3633, %v4141
        %v4206 = vsel %vm3822, %v3636, %v4142
        %v4207 = vsel %vm3823, %v3641, %v4143
        %v4208 = vsel %vm3824, %v3644, %v4144
        %v4209 = vsel %vm3825, %v3649, %v4145
        %v4210 = vsel %vm3826, %v3652, %v4146
        %v4211 = vsel %vm3827, %v3657, %v4147
        %v4212 = vsel %vm3828, %v3660, %v4148
        %v4213 = vsel %vm3829, %v3665, %v4149
        %v4214 = vsel %vm3830, %v3668, %v4150
        %v4215 = vsel %vm3831, %v3673, %v4151
        %v4216 = vsel %vm3832, %v3676, %v4152
        %v4217 = vsel %vm3833, %v3681, %v4153
        %v4218 = vsel %vm3834, %v3684, %v4154
        %v4219 = vsel %vm3835, %v3689, %v4155
        %v4220 = vsel %vm3836, %v3692, %v4156
        %v4221 = vsel %vm3837, %v3697, %v4157
        %v4222 = vsel %vm3838, %v3700, %v4158
        %v4223 = vsel %vm3839, %v3705, %v4159
        %v4224 = vsel %vm3840, %v3708, %v4160
        %v4225 = vsel %vm3841, %v3713, %v4161
        %v4226 = vsel %vm3842, %v3716, %v4162
        %v4227 = vsel %vm3843, %v3721, %v4163
        %v4228 = vsel %vm3844, %v3724, %v4164
        %v4229 = vsel %vm3845, %v3729, %v4165
        %v4230 = vsel %vm3846, %v3732, %v4166
        %v4231 = vsel %vm3847, %v3737, %v4167
        %v4232 = vsel %vm3848, %v3740, %v4168
        %v4233 = vsel %vm3849, %v3745, %v4169
        %v4234 = vsel %vm3850, %v3748, %v4170
        %v4235 = vsel %vm3851, %v3753, %v4171
        %v4236 = vsel %vm3852, %v3756, %v4172
        %v4237 = vsel %vm3853, %v3761, %v4173
        %v4238 = vsel %vm3854, %v3764, %v4174
        %v4239 = vsel %vm3855, %v3769, %v4175
        %v4240 = vsel %vm3856, %v3772, %v4176
        %v4241 = vsel %vm3857, %v3777, %v4177
        %v4242 = vsel %vm3858, %v3780, %v4178
        %v4243 = vsel %vm3859, %v3785, %v4179
        %v4244 = vsel %vm3860, %v3788, %v4180
        %v4245 = vsel %vm3861, %v3793, %v4181
        %v4246 = vsel %vm3862, %v3796, %v4182
        %v4247 = vmul.f32 %v4183, 1.050701
        %v4248 = vmul.f32 %v4184, 1.050701
        %v4249 = vmul.f32 %v4185, 1.050701
        %v4250 = vmul.f32 %v4186, 1.050701
        %v4251 = vmul.f32 %v4187, 1.050701
        %v4252 = vmul.f32 %v4188, 1.050701
        %v4253 = vmul.f32 %v4189, 1.050701
        %v4254 = vmul.f32 %v4190, 1.050701
        %v4255 = vmul.f32 %v4191, 1.050701
        %v4256 = vmul.f32 %v4192, 1.050701
        %v4257 = vmul.f32 %v4193, 1.050701
        %v4258 = vmul.f32 %v4194, 1.050701
        %v4259 = vmul.f32 %v4195, 1.050701
        %v4260 = vmul.f32 %v4196, 1.050701
        %v4261 = vmul.f32 %v4197, 1.050701
        %v4262 = vmul.f32 %v4198, 1.050701
        %v4263 = vmul.f32 %v4199, 1.050701
        %v4264 = vmul.f32 %v4200, 1.050701
        %v4265 = vmul.f32 %v4201, 1.050701
        %v4266 = vmul.f32 %v4202, 1.050701
        %v4267 = vmul.f32 %v4203, 1.050701
        %v4268 = vmul.f32 %v4204, 1.050701
        %v4269 = vmul.f32 %v4205, 1.050701
        %v4270 = vmul.f32 %v4206, 1.050701
        %v4271 = vmul.f32 %v4207, 1.050701
        %v4272 = vmul.f32 %v4208, 1.050701
        %v4273 = vmul.f32 %v4209, 1.050701
        %v4274 = vmul.f32 %v4210, 1.050701
        %v4275 = vmul.f32 %v4211, 1.050701
        %v4276 = vmul.f32 %v4212, 1.050701
        %v4277 = vmul.f32 %v4213, 1.050701
        %v4278 = vmul.f32 %v4214, 1.050701
        %v4279 = vmul.f32 %v4215, 1.050701
        %v4280 = vmul.f32 %v4216, 1.050701
        %v4281 = vmul.f32 %v4217, 1.050701
        %v4282 = vmul.f32 %v4218, 1.050701
        %v4283 = vmul.f32 %v4219, 1.050701
        %v4284 = vmul.f32 %v4220, 1.050701
        %v4285 = vmul.f32 %v4221, 1.050701
        %v4286 = vmul.f32 %v4222, 1.050701
        %v4287 = vmul.f32 %v4223, 1.050701
        %v4288 = vmul.f32 %v4224, 1.050701
        %v4289 = vmul.f32 %v4225, 1.050701
        %v4290 = vmul.f32 %v4226, 1.050701
        %v4291 = vmul.f32 %v4227, 1.050701
        %v4292 = vmul.f32 %v4228, 1.050701
        %v4293 = vmul.f32 %v4229, 1.050701
        %v4294 = vmul.f32 %v4230, 1.050701
        %v4295 = vmul.f32 %v4231, 1.050701
        %v4296 = vmul.f32 %v4232, 1.050701
        %v4297 = vmul.f32 %v4233, 1.050701
        %v4298 = vmul.f32 %v4234, 1.050701
        %v4299 = vmul.f32 %v4235, 1.050701
        %v4300 = vmul.f32 %v4236, 1.050701
        %v4301 = vmul.f32 %v4237, 1.050701
        %v4302 = vmul.f32 %v4238, 1.050701
        %v4303 = vmul.f32 %v4239, 1.050701
        %v4304 = vmul.f32 %v4240, 1.050701
        %v4305 = vmul.f32 %v4241, 1.050701
        %v4306 = vmul.f32 %v4242, 1.050701
        %v4307 = vmul.f32 %v4243, 1.050701
        %v4308 = vmul.f32 %v4244, 1.050701
        %v4309 = vmul.f32 %v4245, 1.050701
        %v4310 = vmul.f32 %v4246, 1.050701
        %v4311 = vld [vmem:[#allocation11] sm:$0xff]
        %v4312 = vld [vmem:[#allocation11 + $0x8] sm:$0xff]
        %v4313 = vld [vmem:[#allocation11 + $0x10] sm:$0xff]
        %v4314 = vld [vmem:[#allocation11 + $0x18] sm:$0xff]
        %v4315 = vld [vmem:[#allocation11 + $0x20] sm:$0xff]
        %v4316 = vld [vmem:[#allocation11 + $0x28] sm:$0xff]
        %v4317 = vld [vmem:[#allocation11 + $0x30] sm:$0xff]
        %v4318 = vld [vmem:[#allocation11 + $0x38] sm:$0xff]
        %v4319 = vld [vmem:[#allocation11 + $0x40] sm:$0xff]
        %v4320 = vld [vmem:[#allocation11 + $0x48] sm:$0xff]
        %v4321 = vld [vmem:[#allocation11 + $0x50] sm:$0xff]
        %v4322 = vld [vmem:[#allocation11 + $0x58] sm:$0xff]
        %v4323 = vld [vmem:[#allocation11 + $0x60] sm:$0xff]
        %v4324 = vld [vmem:[#allocation11 + $0x68] sm:$0xff]
        %v4325 = vld [vmem:[#allocation11 + $0x70] sm:$0xff]
        %v4326 = vld [vmem:[#allocation11 + $0x78] sm:$0xff]
        %v4327 = vpack.c.bf16 %v4248, %v4247
        %v4328 = vpack.c.bf16 %v4250, %v4249
        %v4329 = vpack.c.bf16 %v4252, %v4251
        %v4330 = vpack.c.bf16 %v4254, %v4253
        %v4331 = vpack.c.bf16 %v4256, %v4255
        %v4332 = vpack.c.bf16 %v4258, %v4257
        %v4333 = vpack.c.bf16 %v4260, %v4259
        %v4334 = vpack.c.bf16 %v4262, %v4261
        %v4335 = vpack.c.bf16 %v4264, %v4263
        %v4336 = vpack.c.bf16 %v4266, %v4265
        %v4337 = vpack.c.bf16 %v4268, %v4267
        %v4338 = vpack.c.bf16 %v4270, %v4269
        %v4339 = vpack.c.bf16 %v4272, %v4271
        %v4340 = vpack.c.bf16 %v4274, %v4273
        %v4341 = vpack.c.bf16 %v4276, %v4275
        %v4342 = vpack.c.bf16 %v4278, %v4277
        %v4343 = vpack.c.bf16 %v4280, %v4279
        %v4344 = vpack.c.bf16 %v4282, %v4281
        %v4345 = vpack.c.bf16 %v4284, %v4283
        %v4346 = vpack.c.bf16 %v4286, %v4285
        %v4347 = vpack.c.bf16 %v4288, %v4287
        %v4348 = vpack.c.bf16 %v4290, %v4289
        %v4349 = vpack.c.bf16 %v4292, %v4291
        %v4350 = vpack.c.bf16 %v4294, %v4293
        %v4351 = vpack.c.bf16 %v4296, %v4295
        %v4352 = vpack.c.bf16 %v4298, %v4297
        %v4353 = vpack.c.bf16 %v4300, %v4299
        %v4354 = vpack.c.bf16 %v4302, %v4301
        %v4355 = vpack.c.bf16 %v4304, %v4303
        %v4356 = vpack.c.bf16 %v4306, %v4305
        %v4357 = vpack.c.bf16 %v4308, %v4307
        %v4358 = vpack.c.bf16 %v4310, %v4309
        %v4359 = vld [vmem:[%s9] sm:$0x3]
        %v4361 = vlaneseq
        %v4362 = vshrl.u32 %v4361, 7
        %v4363 = vsub.s32 0, %v4362
        %v4364 = vrot.slane %v4359, %v4363
        %v4365 = vlaneseq
        %v4366 = vshrl.u32 %v4365, 7
        %v4367 = vsub.s32 1, %v4366
        %v4368 = vrot.slane %v4359, %v4367
        %v4387 = vunpack.c.l.b16 %v4311
        %v4388 = vunpack.c.h.b16 %v4311
        %v4389 = vunpack.c.l.b16 %v4312
        %v4390 = vunpack.c.h.b16 %v4312
        %v4391 = vunpack.c.l.b16 %v4313
        %v4392 = vunpack.c.h.b16 %v4313
        %v4393 = vunpack.c.l.b16 %v4314
        %v4394 = vunpack.c.h.b16 %v4314
        %v4395 = vunpack.c.l.b16 %v4315
        %v4396 = vunpack.c.h.b16 %v4315
        %v4397 = vunpack.c.l.b16 %v4316
        %v4398 = vunpack.c.h.b16 %v4316
        %v4399 = vunpack.c.l.b16 %v4317
        %v4400 = vunpack.c.h.b16 %v4317
        %v4401 = vunpack.c.l.b16 %v4318
        %v4402 = vunpack.c.h.b16 %v4318
        %v4403 = vunpack.c.l.b16 %v4319
        %v4404 = vunpack.c.h.b16 %v4319
        %v4405 = vunpack.c.l.b16 %v4320
        %v4406 = vunpack.c.h.b16 %v4320
        %v4407 = vunpack.c.l.b16 %v4321
        %v4408 = vunpack.c.h.b16 %v4321
        %v4409 = vunpack.c.l.b16 %v4322
        %v4410 = vunpack.c.h.b16 %v4322
        %v4411 = vunpack.c.l.b16 %v4323
        %v4412 = vunpack.c.h.b16 %v4323
        %v4413 = vunpack.c.l.b16 %v4324
        %v4414 = vunpack.c.h.b16 %v4324
        %v4415 = vunpack.c.l.b16 %v4325
        %v4416 = vunpack.c.h.b16 %v4325
        %v4417 = vunpack.c.l.b16 %v4326
        %v4418 = vunpack.c.h.b16 %v4326
        %v4419 = vpack.c.b16 %v4389, %v4387
        %v4420 = vpack.c.b16 %v4390, %v4388
        %v4421 = vpack.c.b16 %v4393, %v4391
        %v4422 = vpack.c.b16 %v4394, %v4392
        %v4423 = vpack.c.b16 %v4397, %v4395
        %v4424 = vpack.c.b16 %v4398, %v4396
        %v4425 = vpack.c.b16 %v4401, %v4399
        %v4426 = vpack.c.b16 %v4402, %v4400
        %v4427 = vpack.c.b16 %v4405, %v4403
        %v4428 = vpack.c.b16 %v4406, %v4404
        %v4429 = vpack.c.b16 %v4409, %v4407
        %v4430 = vpack.c.b16 %v4410, %v4408
        %v4431 = vpack.c.b16 %v4413, %v4411
        %v4432 = vpack.c.b16 %v4414, %v4412
        %v4433 = vpack.c.b16 %v4417, %v4415
        %v4434 = vpack.c.b16 %v4418, %v4416
        %4451 = vmatprep.subr.bf16.mxu0 %v4434
        %4452 = vmatpush1.bf16.msra.mxu0 %v4433
        %4453 = vmatprep.subr.bf16.mxu0 %v4432
        %4454 = vmatpush1.bf16.msra.mxu0 %v4431
        %4455 = vmatprep.subr.bf16.mxu0 %v4430
        %4456 = vmatpush1.bf16.msra.mxu0 %v4429
        %4457 = vmatprep.subr.bf16.mxu0 %v4428
        %4458 = vmatpush1.bf16.msra.mxu0 %v4427
        %4459 = vmatprep.subr.bf16.mxu0 %v4426
        %4460 = vmatpush1.bf16.msra.mxu0 %v4425
        %4461 = vmatprep.subr.bf16.mxu0 %v4424
        %4462 = vmatpush1.bf16.msra.mxu0 %v4423
        %4463 = vmatprep.subr.bf16.mxu0 %v4422
        %4464 = vmatpush1.bf16.msra.mxu0 %v4421
        %4465 = vmatprep.subr.bf16.mxu0 %v4420
        %4466 = vmatpush1.bf16.msra.mxu0 %v4419
        %4467 = vmatprep.subr.bf16.mxu0 0
        %4468 = vmatpush2.bf16.msra.mxu0 0
        %4469 = vmatprep.subr.bf16.mxu0 0
        %4470 = vmatpush2.bf16.msra.mxu0 0
        %4471 = vmatprep.subr.bf16.mxu0 0
        %4472 = vmatpush2.bf16.msra.mxu0 0
        %4473 = vmatprep.subr.bf16.mxu0 0
        %4474 = vmatpush2.bf16.msra.mxu0 0
        %4475 = vmatprep.subr.bf16.mxu0 0
        %4476 = vmatpush2.bf16.msra.mxu0 0
        %4477 = vmatprep.subr.bf16.mxu0 0
        %4478 = vmatpush2.bf16.msra.mxu0 0
        %4479 = vmatprep.subr.bf16.mxu0 0
        %4480 = vmatpush2.bf16.msra.mxu0 0
        %4481 = vmatprep.subr.bf16.mxu0 0
        %4482 = vmatpush2.bf16.msra.mxu0 0
        %4483 = vmatprep.mubr.bf16.mxu0 0
        %4484 = vmatmul.mubr.bf16.gmra.mxu0 %v4327
        %v4485 = vpop.f32.mrf.mxu0
        %v4486 = vadd.f32 %v4364, %v4485
        %v4487 = vpop.f32.mrf.mxu0
        %v4488 = vadd.f32 %v4368, %v4487
        %v4489 = vpop.f32.mrf.mxu0
        %v4490 = vadd.f32 %v4364, %v4489
        %v4491 = vpop.f32.mrf.mxu0
        %v4492 = vadd.f32 %v4368, %v4491
        %4493 = vmatprep.mubr.bf16.mxu0 0
        %4494 = vmatmul.mubr.bf16.gmra.mxu0 %v4328
        %v4495 = vpop.f32.mrf.mxu0
        %v4496 = vadd.f32 %v4364, %v4495
        %v4497 = vpop.f32.mrf.mxu0
        %v4498 = vadd.f32 %v4368, %v4497
        %v4499 = vpop.f32.mrf.mxu0
        %v4500 = vadd.f32 %v4364, %v4499
        %v4501 = vpop.f32.mrf.mxu0
        %v4502 = vadd.f32 %v4368, %v4501
        %4503 = vmatprep.mubr.bf16.mxu0 0
        %4504 = vmatmul.mubr.bf16.gmra.mxu0 %v4329
        %v4505 = vpop.f32.mrf.mxu0
        %v4506 = vadd.f32 %v4364, %v4505
        %v4507 = vpop.f32.mrf.mxu0
        %v4508 = vadd.f32 %v4368, %v4507
        %v4509 = vpop.f32.mrf.mxu0
        %v4510 = vadd.f32 %v4364, %v4509
        %v4511 = vpop.f32.mrf.mxu0
        %v4512 = vadd.f32 %v4368, %v4511
        %4513 = vmatprep.mubr.bf16.mxu0 0
        %4514 = vmatmul.mubr.bf16.gmra.mxu0 %v4330
        %v4515 = vpop.f32.mrf.mxu0
        %v4516 = vadd.f32 %v4364, %v4515
        %v4517 = vpop.f32.mrf.mxu0
        %v4518 = vadd.f32 %v4368, %v4517
        %v4519 = vpop.f32.mrf.mxu0
        %v4520 = vadd.f32 %v4364, %v4519
        %v4521 = vpop.f32.mrf.mxu0
        %v4522 = vadd.f32 %v4368, %v4521
        %4523 = vmatprep.mubr.bf16.mxu0 0
        %4524 = vmatmul.mubr.bf16.gmra.mxu0 %v4331
        %v4525 = vpop.f32.mrf.mxu0
        %v4526 = vadd.f32 %v4364, %v4525
        %v4527 = vpop.f32.mrf.mxu0
        %v4528 = vadd.f32 %v4368, %v4527
        %v4529 = vpop.f32.mrf.mxu0
        %v4530 = vadd.f32 %v4364, %v4529
        %v4531 = vpop.f32.mrf.mxu0
        %v4532 = vadd.f32 %v4368, %v4531
        %4533 = vmatprep.mubr.bf16.mxu0 0
        %4534 = vmatmul.mubr.bf16.gmra.mxu0 %v4332
        %v4535 = vpop.f32.mrf.mxu0
        %v4536 = vadd.f32 %v4364, %v4535
        %v4537 = vpop.f32.mrf.mxu0
        %v4538 = vadd.f32 %v4368, %v4537
        %v4539 = vpop.f32.mrf.mxu0
        %v4540 = vadd.f32 %v4364, %v4539
        %v4541 = vpop.f32.mrf.mxu0
        %v4542 = vadd.f32 %v4368, %v4541
        %4543 = vmatprep.mubr.bf16.mxu0 0
        %4544 = vmatmul.mubr.bf16.gmra.mxu0 %v4333
        %v4545 = vpop.f32.mrf.mxu0
        %v4546 = vadd.f32 %v4364, %v4545
        %v4547 = vpop.f32.mrf.mxu0
        %v4548 = vadd.f32 %v4368, %v4547
        %v4549 = vpop.f32.mrf.mxu0
        %v4550 = vadd.f32 %v4364, %v4549
        %v4551 = vpop.f32.mrf.mxu0
        %v4552 = vadd.f32 %v4368, %v4551
        %4553 = vmatprep.mubr.bf16.mxu0 0
        %4554 = vmatmul.mubr.bf16.gmra.mxu0 %v4334
        %v4555 = vpop.f32.mrf.mxu0
        %v4556 = vadd.f32 %v4364, %v4555
        %v4557 = vpop.f32.mrf.mxu0
        %v4558 = vadd.f32 %v4368, %v4557
        %v4559 = vpop.f32.mrf.mxu0
        %v4560 = vadd.f32 %v4364, %v4559
        %v4561 = vpop.f32.mrf.mxu0
        %v4562 = vadd.f32 %v4368, %v4561
        %4563 = vmatprep.mubr.bf16.mxu0 0
        %4564 = vmatmul.mubr.bf16.gmra.mxu0 %v4335
        %v4565 = vpop.f32.mrf.mxu0
        %v4566 = vadd.f32 %v4364, %v4565
        %v4567 = vpop.f32.mrf.mxu0
        %v4568 = vadd.f32 %v4368, %v4567
        %v4569 = vpop.f32.mrf.mxu0
        %v4570 = vadd.f32 %v4364, %v4569
        %v4571 = vpop.f32.mrf.mxu0
        %v4572 = vadd.f32 %v4368, %v4571
        %4573 = vmatprep.mubr.bf16.mxu0 0
        %4574 = vmatmul.mubr.bf16.gmra.mxu0 %v4336
        %v4575 = vpop.f32.mrf.mxu0
        %v4576 = vadd.f32 %v4364, %v4575
        %v4577 = vpop.f32.mrf.mxu0
        %v4578 = vadd.f32 %v4368, %v4577
        %v4579 = vpop.f32.mrf.mxu0
        %v4580 = vadd.f32 %v4364, %v4579
        %v4581 = vpop.f32.mrf.mxu0
        %v4582 = vadd.f32 %v4368, %v4581
        %4583 = vmatprep.mubr.bf16.mxu0 0
        %4584 = vmatmul.mubr.bf16.gmra.mxu0 %v4337
        %v4585 = vpop.f32.mrf.mxu0
        %v4586 = vadd.f32 %v4364, %v4585
        %v4587 = vpop.f32.mrf.mxu0
        %v4588 = vadd.f32 %v4368, %v4587
        %v4589 = vpop.f32.mrf.mxu0
        %v4590 = vadd.f32 %v4364, %v4589
        %v4591 = vpop.f32.mrf.mxu0
        %v4592 = vadd.f32 %v4368, %v4591
        %4593 = vmatprep.mubr.bf16.mxu0 0
        %4594 = vmatmul.mubr.bf16.gmra.mxu0 %v4338
        %v4595 = vpop.f32.mrf.mxu0
        %v4596 = vadd.f32 %v4364, %v4595
        %v4597 = vpop.f32.mrf.mxu0
        %v4598 = vadd.f32 %v4368, %v4597
        %v4599 = vpop.f32.mrf.mxu0
        %v4600 = vadd.f32 %v4364, %v4599
        %v4601 = vpop.f32.mrf.mxu0
        %v4602 = vadd.f32 %v4368, %v4601
        %4603 = vmatprep.mubr.bf16.mxu0 0
        %4604 = vmatmul.mubr.bf16.gmra.mxu0 %v4339
        %v4605 = vpop.f32.mrf.mxu0
        %v4606 = vadd.f32 %v4364, %v4605
        %v4607 = vpop.f32.mrf.mxu0
        %v4608 = vadd.f32 %v4368, %v4607
        %v4609 = vpop.f32.mrf.mxu0
        %v4610 = vadd.f32 %v4364, %v4609
        %v4611 = vpop.f32.mrf.mxu0
        %v4612 = vadd.f32 %v4368, %v4611
        %4613 = vmatprep.mubr.bf16.mxu0 0
        %4614 = vmatmul.mubr.bf16.gmra.mxu0 %v4340
        %v4615 = vpop.f32.mrf.mxu0
        %v4616 = vadd.f32 %v4364, %v4615
        %v4617 = vpop.f32.mrf.mxu0
        %v4618 = vadd.f32 %v4368, %v4617
        %v4619 = vpop.f32.mrf.mxu0
        %v4620 = vadd.f32 %v4364, %v4619
        %v4621 = vpop.f32.mrf.mxu0
        %v4622 = vadd.f32 %v4368, %v4621
        %4623 = vmatprep.mubr.bf16.mxu0 0
        %4624 = vmatmul.mubr.bf16.gmra.mxu0 %v4341
        %v4625 = vpop.f32.mrf.mxu0
        %v4626 = vadd.f32 %v4364, %v4625
        %v4627 = vpop.f32.mrf.mxu0
        %v4628 = vadd.f32 %v4368, %v4627
        %v4629 = vpop.f32.mrf.mxu0
        %v4630 = vadd.f32 %v4364, %v4629
        %v4631 = vpop.f32.mrf.mxu0
        %v4632 = vadd.f32 %v4368, %v4631
        %4633 = vmatprep.mubr.bf16.mxu0 0
        %4634 = vmatmul.mubr.bf16.gmra.mxu0 %v4342
        %v4635 = vpop.f32.mrf.mxu0
        %v4636 = vadd.f32 %v4364, %v4635
        %v4637 = vpop.f32.mrf.mxu0
        %v4638 = vadd.f32 %v4368, %v4637
        %v4639 = vpop.f32.mrf.mxu0
        %v4640 = vadd.f32 %v4364, %v4639
        %v4641 = vpop.f32.mrf.mxu0
        %v4642 = vadd.f32 %v4368, %v4641
        %4643 = vmatprep.mubr.bf16.mxu0 0
        %4644 = vmatmul.mubr.bf16.gmra.mxu0 %v4343
        %v4645 = vpop.f32.mrf.mxu0
        %v4646 = vadd.f32 %v4364, %v4645
        %v4647 = vpop.f32.mrf.mxu0
        %v4648 = vadd.f32 %v4368, %v4647
        %v4649 = vpop.f32.mrf.mxu0
        %v4650 = vadd.f32 %v4364, %v4649
        %v4651 = vpop.f32.mrf.mxu0
        %v4652 = vadd.f32 %v4368, %v4651
        %4653 = vmatprep.mubr.bf16.mxu0 0
        %4654 = vmatmul.mubr.bf16.gmra.mxu0 %v4344
        %v4655 = vpop.f32.mrf.mxu0
        %v4656 = vadd.f32 %v4364, %v4655
        %v4657 = vpop.f32.mrf.mxu0
        %v4658 = vadd.f32 %v4368, %v4657
        %v4659 = vpop.f32.mrf.mxu0
        %v4660 = vadd.f32 %v4364, %v4659
        %v4661 = vpop.f32.mrf.mxu0
        %v4662 = vadd.f32 %v4368, %v4661
        %4663 = vmatprep.mubr.bf16.mxu0 0
        %4664 = vmatmul.mubr.bf16.gmra.mxu0 %v4345
        %v4665 = vpop.f32.mrf.mxu0
        %v4666 = vadd.f32 %v4364, %v4665
        %v4667 = vpop.f32.mrf.mxu0
        %v4668 = vadd.f32 %v4368, %v4667
        %v4669 = vpop.f32.mrf.mxu0
        %v4670 = vadd.f32 %v4364, %v4669
        %v4671 = vpop.f32.mrf.mxu0
        %v4672 = vadd.f32 %v4368, %v4671
        %4673 = vmatprep.mubr.bf16.mxu0 0
        %4674 = vmatmul.mubr.bf16.gmra.mxu0 %v4346
        %v4675 = vpop.f32.mrf.mxu0
        %v4676 = vadd.f32 %v4364, %v4675
        %v4677 = vpop.f32.mrf.mxu0
        %v4678 = vadd.f32 %v4368, %v4677
        %v4679 = vpop.f32.mrf.mxu0
        %v4680 = vadd.f32 %v4364, %v4679
        %v4681 = vpop.f32.mrf.mxu0
        %v4682 = vadd.f32 %v4368, %v4681
        %4683 = vmatprep.mubr.bf16.mxu0 0
        %4684 = vmatmul.mubr.bf16.gmra.mxu0 %v4347
        %v4685 = vpop.f32.mrf.mxu0
        %v4686 = vadd.f32 %v4364, %v4685
        %v4687 = vpop.f32.mrf.mxu0
        %v4688 = vadd.f32 %v4368, %v4687
        %v4689 = vpop.f32.mrf.mxu0
        %v4690 = vadd.f32 %v4364, %v4689
        %v4691 = vpop.f32.mrf.mxu0
        %v4692 = vadd.f32 %v4368, %v4691
        %4693 = vmatprep.mubr.bf16.mxu0 0
        %4694 = vmatmul.mubr.bf16.gmra.mxu0 %v4348
        %v4695 = vpop.f32.mrf.mxu0
        %v4696 = vadd.f32 %v4364, %v4695
        %v4697 = vpop.f32.mrf.mxu0
        %v4698 = vadd.f32 %v4368, %v4697
        %v4699 = vpop.f32.mrf.mxu0
        %v4700 = vadd.f32 %v4364, %v4699
        %v4701 = vpop.f32.mrf.mxu0
        %v4702 = vadd.f32 %v4368, %v4701
        %4703 = vmatprep.mubr.bf16.mxu0 0
        %4704 = vmatmul.mubr.bf16.gmra.mxu0 %v4349
        %v4705 = vpop.f32.mrf.mxu0
        %v4706 = vadd.f32 %v4364, %v4705
        %v4707 = vpop.f32.mrf.mxu0
        %v4708 = vadd.f32 %v4368, %v4707
        %v4709 = vpop.f32.mrf.mxu0
        %v4710 = vadd.f32 %v4364, %v4709
        %v4711 = vpop.f32.mrf.mxu0
        %v4712 = vadd.f32 %v4368, %v4711
        %4713 = vmatprep.mubr.bf16.mxu0 0
        %4714 = vmatmul.mubr.bf16.gmra.mxu0 %v4350
        %v4715 = vpop.f32.mrf.mxu0
        %v4716 = vadd.f32 %v4364, %v4715
        %v4717 = vpop.f32.mrf.mxu0
        %v4718 = vadd.f32 %v4368, %v4717
        %v4719 = vpop.f32.mrf.mxu0
        %v4720 = vadd.f32 %v4364, %v4719
        %v4721 = vpop.f32.mrf.mxu0
        %v4722 = vadd.f32 %v4368, %v4721
        %4723 = vmatprep.mubr.bf16.mxu0 0
        %4724 = vmatmul.mubr.bf16.gmra.mxu0 %v4351
        %v4725 = vpop.f32.mrf.mxu0
        %v4726 = vadd.f32 %v4364, %v4725
        %v4727 = vpop.f32.mrf.mxu0
        %v4728 = vadd.f32 %v4368, %v4727
        %v4729 = vpop.f32.mrf.mxu0
        %v4730 = vadd.f32 %v4364, %v4729
        %v4731 = vpop.f32.mrf.mxu0
        %v4732 = vadd.f32 %v4368, %v4731
        %4733 = vmatprep.mubr.bf16.mxu0 0
        %4734 = vmatmul.mubr.bf16.gmra.mxu0 %v4352
        %v4735 = vpop.f32.mrf.mxu0
        %v4736 = vadd.f32 %v4364, %v4735
        %v4737 = vpop.f32.mrf.mxu0
        %v4738 = vadd.f32 %v4368, %v4737
        %v4739 = vpop.f32.mrf.mxu0
        %v4740 = vadd.f32 %v4364, %v4739
        %v4741 = vpop.f32.mrf.mxu0
        %v4742 = vadd.f32 %v4368, %v4741
        %4743 = vmatprep.mubr.bf16.mxu0 0
        %4744 = vmatmul.mubr.bf16.gmra.mxu0 %v4353
        %v4745 = vpop.f32.mrf.mxu0
        %v4746 = vadd.f32 %v4364, %v4745
        %v4747 = vpop.f32.mrf.mxu0
        %v4748 = vadd.f32 %v4368, %v4747
        %v4749 = vpop.f32.mrf.mxu0
        %v4750 = vadd.f32 %v4364, %v4749
        %v4751 = vpop.f32.mrf.mxu0
        %v4752 = vadd.f32 %v4368, %v4751
        %4753 = vmatprep.mubr.bf16.mxu0 0
        %4754 = vmatmul.mubr.bf16.gmra.mxu0 %v4354
        %v4755 = vpop.f32.mrf.mxu0
        %v4756 = vadd.f32 %v4364, %v4755
        %v4757 = vpop.f32.mrf.mxu0
        %v4758 = vadd.f32 %v4368, %v4757
        %v4759 = vpop.f32.mrf.mxu0
        %v4760 = vadd.f32 %v4364, %v4759
        %v4761 = vpop.f32.mrf.mxu0
        %v4762 = vadd.f32 %v4368, %v4761
        %4763 = vmatprep.mubr.bf16.mxu0 0
        %4764 = vmatmul.mubr.bf16.gmra.mxu0 %v4355
        %v4765 = vpop.f32.mrf.mxu0
        %v4766 = vadd.f32 %v4364, %v4765
        %v4767 = vpop.f32.mrf.mxu0
        %v4768 = vadd.f32 %v4368, %v4767
        %v4769 = vpop.f32.mrf.mxu0
        %v4770 = vadd.f32 %v4364, %v4769
        %v4771 = vpop.f32.mrf.mxu0
        %v4772 = vadd.f32 %v4368, %v4771
        %4773 = vmatprep.mubr.bf16.mxu0 0
        %4774 = vmatmul.mubr.bf16.gmra.mxu0 %v4356
        %v4775 = vpop.f32.mrf.mxu0
        %v4776 = vadd.f32 %v4364, %v4775
        %v4777 = vpop.f32.mrf.mxu0
        %v4778 = vadd.f32 %v4368, %v4777
        %v4779 = vpop.f32.mrf.mxu0
        %v4780 = vadd.f32 %v4364, %v4779
        %v4781 = vpop.f32.mrf.mxu0
        %v4782 = vadd.f32 %v4368, %v4781
        %4783 = vmatprep.mubr.bf16.mxu0 0
        %4784 = vmatmul.mubr.bf16.gmra.mxu0 %v4357
        %v4785 = vpop.f32.mrf.mxu0
        %v4786 = vadd.f32 %v4364, %v4785
        %v4787 = vpop.f32.mrf.mxu0
        %v4788 = vadd.f32 %v4368, %v4787
        %v4789 = vpop.f32.mrf.mxu0
        %v4790 = vadd.f32 %v4364, %v4789
        %v4791 = vpop.f32.mrf.mxu0
        %v4792 = vadd.f32 %v4368, %v4791
        %4793 = vmatprep.mubr.bf16.mxu0 0
        %4794 = vmatmul.mubr.bf16.gmra.mxu0 %v4358
        %v4795 = vpop.f32.mrf.mxu0
        %v4796 = vadd.f32 %v4364, %v4795
        %v4797 = vpop.f32.mrf.mxu0
        %v4798 = vadd.f32 %v4368, %v4797
        %v4799 = vpop.f32.mrf.mxu0
        %v4800 = vadd.f32 %v4364, %v4799
        %v4801 = vpop.f32.mrf.mxu0
        %v4802 = vadd.f32 %v4368, %v4801
        %4803 = vdwg.mxu0
        %v4804 = vmax.f32 %v4488, -50.0
        %v4805 = vmax.f32 %v4492, -50.0
        %v4806 = vmax.f32 %v4498, -50.0
        %v4807 = vmax.f32 %v4502, -50.0
        %v4808 = vmax.f32 %v4508, -50.0
        %v4809 = vmax.f32 %v4512, -50.0
        %v4810 = vmax.f32 %v4518, -50.0
        %v4811 = vmax.f32 %v4522, -50.0
        %v4812 = vmax.f32 %v4528, -50.0
        %v4813 = vmax.f32 %v4532, -50.0
        %v4814 = vmax.f32 %v4538, -50.0
        %v4815 = vmax.f32 %v4542, -50.0
        %v4816 = vmax.f32 %v4548, -50.0
        %v4817 = vmax.f32 %v4552, -50.0
        %v4818 = vmax.f32 %v4558, -50.0
        %v4819 = vmax.f32 %v4562, -50.0
        %v4820 = vmax.f32 %v4568, -50.0
        %v4821 = vmax.f32 %v4572, -50.0
        %v4822 = vmax.f32 %v4578, -50.0
        %v4823 = vmax.f32 %v4582, -50.0
        %v4824 = vmax.f32 %v4588, -50.0
        %v4825 = vmax.f32 %v4592, -50.0
        %v4826 = vmax.f32 %v4598, -50.0
        %v4827 = vmax.f32 %v4602, -50.0
        %v4828 = vmax.f32 %v4608, -50.0
        %v4829 = vmax.f32 %v4612, -50.0
        %v4830 = vmax.f32 %v4618, -50.0
        %v4831 = vmax.f32 %v4622, -50.0
        %v4832 = vmax.f32 %v4628, -50.0
        %v4833 = vmax.f32 %v4632, -50.0
        %v4834 = vmax.f32 %v4638, -50.0
        %v4835 = vmax.f32 %v4642, -50.0
        %v4836 = vmax.f32 %v4648, -50.0
        %v4837 = vmax.f32 %v4652, -50.0
        %v4838 = vmax.f32 %v4658, -50.0
        %v4839 = vmax.f32 %v4662, -50.0
        %v4840 = vmax.f32 %v4668, -50.0
        %v4841 = vmax.f32 %v4672, -50.0
        %v4842 = vmax.f32 %v4678, -50.0
        %v4843 = vmax.f32 %v4682, -50.0
        %v4844 = vmax.f32 %v4688, -50.0
        %v4845 = vmax.f32 %v4692, -50.0
        %v4846 = vmax.f32 %v4698, -50.0
        %v4847 = vmax.f32 %v4702, -50.0
        %v4848 = vmax.f32 %v4708, -50.0
        %v4849 = vmax.f32 %v4712, -50.0
        %v4850 = vmax.f32 %v4718, -50.0
        %v4851 = vmax.f32 %v4722, -50.0
        %v4852 = vmax.f32 %v4728, -50.0
        %v4853 = vmax.f32 %v4732, -50.0
        %v4854 = vmax.f32 %v4738, -50.0
        %v4855 = vmax.f32 %v4742, -50.0
        %v4856 = vmax.f32 %v4748, -50.0
        %v4857 = vmax.f32 %v4752, -50.0
        %v4858 = vmax.f32 %v4758, -50.0
        %v4859 = vmax.f32 %v4762, -50.0
        %v4860 = vmax.f32 %v4768, -50.0
        %v4861 = vmax.f32 %v4772, -50.0
        %v4862 = vmax.f32 %v4778, -50.0
        %v4863 = vmax.f32 %v4782, -50.0
        %v4864 = vmax.f32 %v4788, -50.0
        %v4865 = vmax.f32 %v4792, -50.0
        %v4866 = vmax.f32 %v4798, -50.0
        %v4867 = vmax.f32 %v4802, -50.0
        %v4868 = vsub.f32 0.0, %v4804
        %v4869 = vsub.f32 0.0, %v4805
        %v4870 = vsub.f32 0.0, %v4806
        %v4871 = vsub.f32 0.0, %v4807
        %v4872 = vsub.f32 0.0, %v4808
        %v4873 = vsub.f32 0.0, %v4809
        %v4874 = vsub.f32 0.0, %v4810
        %v4875 = vsub.f32 0.0, %v4811
        %v4876 = vsub.f32 0.0, %v4812
        %v4877 = vsub.f32 0.0, %v4813
        %v4878 = vsub.f32 0.0, %v4814
        %v4879 = vsub.f32 0.0, %v4815
        %v4880 = vsub.f32 0.0, %v4816
        %v4881 = vsub.f32 0.0, %v4817
        %v4882 = vsub.f32 0.0, %v4818
        %v4883 = vsub.f32 0.0, %v4819
        %v4884 = vsub.f32 0.0, %v4820
        %v4885 = vsub.f32 0.0, %v4821
        %v4886 = vsub.f32 0.0, %v4822
        %v4887 = vsub.f32 0.0, %v4823
        %v4888 = vsub.f32 0.0, %v4824
        %v4889 = vsub.f32 0.0, %v4825
        %v4890 = vsub.f32 0.0, %v4826
        %v4891 = vsub.f32 0.0, %v4827
        %v4892 = vsub.f32 0.0, %v4828
        %v4893 = vsub.f32 0.0, %v4829
        %v4894 = vsub.f32 0.0, %v4830
        %v4895 = vsub.f32 0.0, %v4831
        %v4896 = vsub.f32 0.0, %v4832
        %v4897 = vsub.f32 0.0, %v4833
        %v4898 = vsub.f32 0.0, %v4834
        %v4899 = vsub.f32 0.0, %v4835
        %v4900 = vsub.f32 0.0, %v4836
        %v4901 = vsub.f32 0.0, %v4837
        %v4902 = vsub.f32 0.0, %v4838
        %v4903 = vsub.f32 0.0, %v4839
        %v4904 = vsub.f32 0.0, %v4840
        %v4905 = vsub.f32 0.0, %v4841
        %v4906 = vsub.f32 0.0, %v4842
        %v4907 = vsub.f32 0.0, %v4843
        %v4908 = vsub.f32 0.0, %v4844
        %v4909 = vsub.f32 0.0, %v4845
        %v4910 = vsub.f32 0.0, %v4846
        %v4911 = vsub.f32 0.0, %v4847
        %v4912 = vsub.f32 0.0, %v4848
        %v4913 = vsub.f32 0.0, %v4849
        %v4914 = vsub.f32 0.0, %v4850
        %v4915 = vsub.f32 0.0, %v4851
        %v4916 = vsub.f32 0.0, %v4852
        %v4917 = vsub.f32 0.0, %v4853
        %v4918 = vsub.f32 0.0, %v4854
        %v4919 = vsub.f32 0.0, %v4855
        %v4920 = vsub.f32 0.0, %v4856
        %v4921 = vsub.f32 0.0, %v4857
        %v4922 = vsub.f32 0.0, %v4858
        %v4923 = vsub.f32 0.0, %v4859
        %v4924 = vsub.f32 0.0, %v4860
        %v4925 = vsub.f32 0.0, %v4861
        %v4926 = vsub.f32 0.0, %v4862
        %v4927 = vsub.f32 0.0, %v4863
        %v4928 = vsub.f32 0.0, %v4864
        %v4929 = vsub.f32 0.0, %v4865
        %v4930 = vsub.f32 0.0, %v4866
        %v4931 = vsub.f32 0.0, %v4867
        %v4932 = vmul.f32 %v4868, 1.442695
        %v4933 = vpow.pop %v4932
        %v4934 = vmul.f32 %v4869, 1.442695
        %v4935 = vpow.pop %v4934
        %v4936 = vmul.f32 %v4870, 1.442695
        %v4937 = vpow.pop %v4936
        %v4938 = vmul.f32 %v4871, 1.442695
        %v4939 = vpow.pop %v4938
        %v4940 = vmul.f32 %v4872, 1.442695
        %v4941 = vpow.pop %v4940
        %v4942 = vmul.f32 %v4873, 1.442695
        %v4943 = vpow.pop %v4942
        %v4944 = vmul.f32 %v4874, 1.442695
        %v4945 = vpow.pop %v4944
        %v4946 = vmul.f32 %v4875, 1.442695
        %v4947 = vpow.pop %v4946
        %v4948 = vmul.f32 %v4876, 1.442695
        %v4949 = vpow.pop %v4948
        %v4950 = vmul.f32 %v4877, 1.442695
        %v4951 = vpow.pop %v4950
        %v4952 = vmul.f32 %v4878, 1.442695
        %v4953 = vpow.pop %v4952
        %v4954 = vmul.f32 %v4879, 1.442695
        %v4955 = vpow.pop %v4954
        %v4956 = vmul.f32 %v4880, 1.442695
        %v4957 = vpow.pop %v4956
        %v4958 = vmul.f32 %v4881, 1.442695
        %v4959 = vpow.pop %v4958
        %v4960 = vmul.f32 %v4882, 1.442695
        %v4961 = vpow.pop %v4960
        %v4962 = vmul.f32 %v4883, 1.442695
        %v4963 = vpow.pop %v4962
        %v4964 = vmul.f32 %v4884, 1.442695
        %v4965 = vpow.pop %v4964
        %v4966 = vmul.f32 %v4885, 1.442695
        %v4967 = vpow.pop %v4966
        %v4968 = vmul.f32 %v4886, 1.442695
        %v4969 = vpow.pop %v4968
        %v4970 = vmul.f32 %v4887, 1.442695
        %v4971 = vpow.pop %v4970
        %v4972 = vmul.f32 %v4888, 1.442695
        %v4973 = vpow.pop %v4972
        %v4974 = vmul.f32 %v4889, 1.442695
        %v4975 = vpow.pop %v4974
        %v4976 = vmul.f32 %v4890, 1.442695
        %v4977 = vpow.pop %v4976
        %v4978 = vmul.f32 %v4891, 1.442695
        %v4979 = vpow.pop %v4978
        %v4980 = vmul.f32 %v4892, 1.442695
        %v4981 = vpow.pop %v4980
        %v4982 = vmul.f32 %v4893, 1.442695
        %v4983 = vpow.pop %v4982
        %v4984 = vmul.f32 %v4894, 1.442695
        %v4985 = vpow.pop %v4984
        %v4986 = vmul.f32 %v4895, 1.442695
        %v4987 = vpow.pop %v4986
        %v4988 = vmul.f32 %v4896, 1.442695
        %v4989 = vpow.pop %v4988
        %v4990 = vmul.f32 %v4897, 1.442695
        %v4991 = vpow.pop %v4990
        %v4992 = vmul.f32 %v4898, 1.442695
        %v4993 = vpow.pop %v4992
        %v4994 = vmul.f32 %v4899, 1.442695
        %v4995 = vpow.pop %v4994
        %v4996 = vmul.f32 %v4900, 1.442695
        %v4997 = vpow.pop %v4996
        %v4998 = vmul.f32 %v4901, 1.442695
        %v4999 = vpow.pop %v4998
        %v5000 = vmul.f32 %v4902, 1.442695
        %v5001 = vpow.pop %v5000
        %v5002 = vmul.f32 %v4903, 1.442695
        %v5003 = vpow.pop %v5002
        %v5004 = vmul.f32 %v4904, 1.442695
        %v5005 = vpow.pop %v5004
        %v5006 = vmul.f32 %v4905, 1.442695
        %v5007 = vpow.pop %v5006
        %v5008 = vmul.f32 %v4906, 1.442695
        %v5009 = vpow.pop %v5008
        %v5010 = vmul.f32 %v4907, 1.442695
        %v5011 = vpow.pop %v5010
        %v5012 = vmul.f32 %v4908, 1.442695
        %v5013 = vpow.pop %v5012
        %v5014 = vmul.f32 %v4909, 1.442695
        %v5015 = vpow.pop %v5014
        %v5016 = vmul.f32 %v4910, 1.442695
        %v5017 = vpow.pop %v5016
        %v5018 = vmul.f32 %v4911, 1.442695
        %v5019 = vpow.pop %v5018
        %v5020 = vmul.f32 %v4912, 1.442695
        %v5021 = vpow.pop %v5020
        %v5022 = vmul.f32 %v4913, 1.442695
        %v5023 = vpow.pop %v5022
        %v5024 = vmul.f32 %v4914, 1.442695
        %v5025 = vpow.pop %v5024
        %v5026 = vmul.f32 %v4915, 1.442695
        %v5027 = vpow.pop %v5026
        %v5028 = vmul.f32 %v4916, 1.442695
        %v5029 = vpow.pop %v5028
        %v5030 = vmul.f32 %v4917, 1.442695
        %v5031 = vpow.pop %v5030
        %v5032 = vmul.f32 %v4918, 1.442695
        %v5033 = vpow.pop %v5032
        %v5034 = vmul.f32 %v4919, 1.442695
        %v5035 = vpow.pop %v5034
        %v5036 = vmul.f32 %v4920, 1.442695
        %v5037 = vpow.pop %v5036
        %v5038 = vmul.f32 %v4921, 1.442695
        %v5039 = vpow.pop %v5038
        %v5040 = vmul.f32 %v4922, 1.442695
        %v5041 = vpow.pop %v5040
        %v5042 = vmul.f32 %v4923, 1.442695
        %v5043 = vpow.pop %v5042
        %v5044 = vmul.f32 %v4924, 1.442695
        %v5045 = vpow.pop %v5044
        %v5046 = vmul.f32 %v4925, 1.442695
        %v5047 = vpow.pop %v5046
        %v5048 = vmul.f32 %v4926, 1.442695
        %v5049 = vpow.pop %v5048
        %v5050 = vmul.f32 %v4927, 1.442695
        %v5051 = vpow.pop %v5050
        %v5052 = vmul.f32 %v4928, 1.442695
        %v5053 = vpow.pop %v5052
        %v5054 = vmul.f32 %v4929, 1.442695
        %v5055 = vpow.pop %v5054
        %v5056 = vmul.f32 %v4930, 1.442695
        %v5057 = vpow.pop %v5056
        %v5058 = vmul.f32 %v4931, 1.442695
        %v5059 = vpow.pop %v5058
        %v5060 = vadd.f32 %v4933, 1.0
        %v5061 = vadd.f32 %v4935, 1.0
        %v5062 = vadd.f32 %v4937, 1.0
        %v5063 = vadd.f32 %v4939, 1.0
        %v5064 = vadd.f32 %v4941, 1.0
        %v5065 = vadd.f32 %v4943, 1.0
        %v5066 = vadd.f32 %v4945, 1.0
        %v5067 = vadd.f32 %v4947, 1.0
        %v5068 = vadd.f32 %v4949, 1.0
        %v5069 = vadd.f32 %v4951, 1.0
        %v5070 = vadd.f32 %v4953, 1.0
        %v5071 = vadd.f32 %v4955, 1.0
        %v5072 = vadd.f32 %v4957, 1.0
        %v5073 = vadd.f32 %v4959, 1.0
        %v5074 = vadd.f32 %v4961, 1.0
        %v5075 = vadd.f32 %v4963, 1.0
        %v5076 = vadd.f32 %v4965, 1.0
        %v5077 = vadd.f32 %v4967, 1.0
        %v5078 = vadd.f32 %v4969, 1.0
        %v5079 = vadd.f32 %v4971, 1.0
        %v5080 = vadd.f32 %v4973, 1.0
        %v5081 = vadd.f32 %v4975, 1.0
        %v5082 = vadd.f32 %v4977, 1.0
        %v5083 = vadd.f32 %v4979, 1.0
        %v5084 = vadd.f32 %v4981, 1.0
        %v5085 = vadd.f32 %v4983, 1.0
        %v5086 = vadd.f32 %v4985, 1.0
        %v5087 = vadd.f32 %v4987, 1.0
        %v5088 = vadd.f32 %v4989, 1.0
        %v5089 = vadd.f32 %v4991, 1.0
        %v5090 = vadd.f32 %v4993, 1.0
        %v5091 = vadd.f32 %v4995, 1.0
        %v5092 = vadd.f32 %v4997, 1.0
        %v5093 = vadd.f32 %v4999, 1.0
        %v5094 = vadd.f32 %v5001, 1.0
        %v5095 = vadd.f32 %v5003, 1.0
        %v5096 = vadd.f32 %v5005, 1.0
        %v5097 = vadd.f32 %v5007, 1.0
        %v5098 = vadd.f32 %v5009, 1.0
        %v5099 = vadd.f32 %v5011, 1.0
        %v5100 = vadd.f32 %v5013, 1.0
        %v5101 = vadd.f32 %v5015, 1.0
        %v5102 = vadd.f32 %v5017, 1.0
        %v5103 = vadd.f32 %v5019, 1.0
        %v5104 = vadd.f32 %v5021, 1.0
        %v5105 = vadd.f32 %v5023, 1.0
        %v5106 = vadd.f32 %v5025, 1.0
        %v5107 = vadd.f32 %v5027, 1.0
        %v5108 = vadd.f32 %v5029, 1.0
        %v5109 = vadd.f32 %v5031, 1.0
        %v5110 = vadd.f32 %v5033, 1.0
        %v5111 = vadd.f32 %v5035, 1.0
        %v5112 = vadd.f32 %v5037, 1.0
        %v5113 = vadd.f32 %v5039, 1.0
        %v5114 = vadd.f32 %v5041, 1.0
        %v5115 = vadd.f32 %v5043, 1.0
        %v5116 = vadd.f32 %v5045, 1.0
        %v5117 = vadd.f32 %v5047, 1.0
        %v5118 = vadd.f32 %v5049, 1.0
        %v5119 = vadd.f32 %v5051, 1.0
        %v5120 = vadd.f32 %v5053, 1.0
        %v5121 = vadd.f32 %v5055, 1.0
        %v5122 = vadd.f32 %v5057, 1.0
        %v5123 = vadd.f32 %v5059, 1.0
        %v5124 = vrcp.pop %v5060
        %v5125 = vrcp.pop %v5061
        %v5126 = vrcp.pop %v5062
        %v5127 = vrcp.pop %v5063
        %v5128 = vrcp.pop %v5064
        %v5129 = vrcp.pop %v5065
        %v5130 = vrcp.pop %v5066
        %v5131 = vrcp.pop %v5067
        %v5132 = vrcp.pop %v5068
        %v5133 = vrcp.pop %v5069
        %v5134 = vrcp.pop %v5070
        %v5135 = vrcp.pop %v5071
        %v5136 = vrcp.pop %v5072
        %v5137 = vrcp.pop %v5073
        %v5138 = vrcp.pop %v5074
        %v5139 = vrcp.pop %v5075
        %v5140 = vrcp.pop %v5076
        %v5141 = vrcp.pop %v5077
        %v5142 = vrcp.pop %v5078
        %v5143 = vrcp.pop %v5079
        %v5144 = vrcp.pop %v5080
        %v5145 = vrcp.pop %v5081
        %v5146 = vrcp.pop %v5082
        %v5147 = vrcp.pop %v5083
        %v5148 = vrcp.pop %v5084
        %v5149 = vrcp.pop %v5085
        %v5150 = vrcp.pop %v5086
        %v5151 = vrcp.pop %v5087
        %v5152 = vrcp.pop %v5088
        %v5153 = vrcp.pop %v5089
        %v5154 = vrcp.pop %v5090
        %v5155 = vrcp.pop %v5091
        %v5156 = vrcp.pop %v5092
        %v5157 = vrcp.pop %v5093
        %v5158 = vrcp.pop %v5094
        %v5159 = vrcp.pop %v5095
        %v5160 = vrcp.pop %v5096
        %v5161 = vrcp.pop %v5097
        %v5162 = vrcp.pop %v5098
        %v5163 = vrcp.pop %v5099
        %v5164 = vrcp.pop %v5100
        %v5165 = vrcp.pop %v5101
        %v5166 = vrcp.pop %v5102
        %v5167 = vrcp.pop %v5103
        %v5168 = vrcp.pop %v5104
        %v5169 = vrcp.pop %v5105
        %v5170 = vrcp.pop %v5106
        %v5171 = vrcp.pop %v5107
        %v5172 = vrcp.pop %v5108
        %v5173 = vrcp.pop %v5109
        %v5174 = vrcp.pop %v5110
        %v5175 = vrcp.pop %v5111
        %v5176 = vrcp.pop %v5112
        %v5177 = vrcp.pop %v5113
        %v5178 = vrcp.pop %v5114
        %v5179 = vrcp.pop %v5115
        %v5180 = vrcp.pop %v5116
        %v5181 = vrcp.pop %v5117
        %v5182 = vrcp.pop %v5118
        %v5183 = vrcp.pop %v5119
        %v5184 = vrcp.pop %v5120
        %v5185 = vrcp.pop %v5121
        %v5186 = vrcp.pop %v5122
        %v5187 = vrcp.pop %v5123
        %v5188 = vlog2.pop %v5060
        %v5189 = vmul.f32 %v5188, 0.6931472
        %v5190 = vlog2.pop %v5061
        %v5191 = vmul.f32 %v5190, 0.6931472
        %v5192 = vlog2.pop %v5062
        %v5193 = vmul.f32 %v5192, 0.6931472
        %v5194 = vlog2.pop %v5063
        %v5195 = vmul.f32 %v5194, 0.6931472
        %v5196 = vlog2.pop %v5064
        %v5197 = vmul.f32 %v5196, 0.6931472
        %v5198 = vlog2.pop %v5065
        %v5199 = vmul.f32 %v5198, 0.6931472
        %v5200 = vlog2.pop %v5066
        %v5201 = vmul.f32 %v5200, 0.6931472
        %v5202 = vlog2.pop %v5067
        %v5203 = vmul.f32 %v5202, 0.6931472
        %v5204 = vlog2.pop %v5068
        %v5205 = vmul.f32 %v5204, 0.6931472
        %v5206 = vlog2.pop %v5069
        %v5207 = vmul.f32 %v5206, 0.6931472
        %v5208 = vlog2.pop %v5070
        %v5209 = vmul.f32 %v5208, 0.6931472
        %v5210 = vlog2.pop %v5071
        %v5211 = vmul.f32 %v5210, 0.6931472
        %v5212 = vlog2.pop %v5072
        %v5213 = vmul.f32 %v5212, 0.6931472
        %v5214 = vlog2.pop %v5073
        %v5215 = vmul.f32 %v5214, 0.6931472
        %v5216 = vlog2.pop %v5074
        %v5217 = vmul.f32 %v5216, 0.6931472
        %v5218 = vlog2.pop %v5075
        %v5219 = vmul.f32 %v5218, 0.6931472
        %v5220 = vlog2.pop %v5076
        %v5221 = vmul.f32 %v5220, 0.6931472
        %v5222 = vlog2.pop %v5077
        %v5223 = vmul.f32 %v5222, 0.6931472
        %v5224 = vlog2.pop %v5078
        %v5225 = vmul.f32 %v5224, 0.6931472
        %v5226 = vlog2.pop %v5079
        %v5227 = vmul.f32 %v5226, 0.6931472
        %v5228 = vlog2.pop %v5080
        %v5229 = vmul.f32 %v5228, 0.6931472
        %v5230 = vlog2.pop %v5081
        %v5231 = vmul.f32 %v5230, 0.6931472
        %v5232 = vlog2.pop %v5082
        %v5233 = vmul.f32 %v5232, 0.6931472
        %v5234 = vlog2.pop %v5083
        %v5235 = vmul.f32 %v5234, 0.6931472
        %v5236 = vlog2.pop %v5084
        %v5237 = vmul.f32 %v5236, 0.6931472
        %v5238 = vlog2.pop %v5085
        %v5239 = vmul.f32 %v5238, 0.6931472
        %v5240 = vlog2.pop %v5086
        %v5241 = vmul.f32 %v5240, 0.6931472
        %v5242 = vlog2.pop %v5087
        %v5243 = vmul.f32 %v5242, 0.6931472
        %v5244 = vlog2.pop %v5088
        %v5245 = vmul.f32 %v5244, 0.6931472
        %v5246 = vlog2.pop %v5089
        %v5247 = vmul.f32 %v5246, 0.6931472
        %v5248 = vlog2.pop %v5090
        %v5249 = vmul.f32 %v5248, 0.6931472
        %v5250 = vlog2.pop %v5091
        %v5251 = vmul.f32 %v5250, 0.6931472
        %v5252 = vlog2.pop %v5092
        %v5253 = vmul.f32 %v5252, 0.6931472
        %v5254 = vlog2.pop %v5093
        %v5255 = vmul.f32 %v5254, 0.6931472
        %v5256 = vlog2.pop %v5094
        %v5257 = vmul.f32 %v5256, 0.6931472
        %v5258 = vlog2.pop %v5095
        %v5259 = vmul.f32 %v5258, 0.6931472
        %v5260 = vlog2.pop %v5096
        %v5261 = vmul.f32 %v5260, 0.6931472
        %v5262 = vlog2.pop %v5097
        %v5263 = vmul.f32 %v5262, 0.6931472
        %v5264 = vlog2.pop %v5098
        %v5265 = vmul.f32 %v5264, 0.6931472
        %v5266 = vlog2.pop %v5099
        %v5267 = vmul.f32 %v5266, 0.6931472
        %v5268 = vlog2.pop %v5100
        %v5269 = vmul.f32 %v5268, 0.6931472
        %v5270 = vlog2.pop %v5101
        %v5271 = vmul.f32 %v5270, 0.6931472
        %v5272 = vlog2.pop %v5102
        %v5273 = vmul.f32 %v5272, 0.6931472
        %v5274 = vlog2.pop %v5103
        %v5275 = vmul.f32 %v5274, 0.6931472
        %v5276 = vlog2.pop %v5104
        %v5277 = vmul.f32 %v5276, 0.6931472
        %v5278 = vlog2.pop %v5105
        %v5279 = vmul.f32 %v5278, 0.6931472
        %v5280 = vlog2.pop %v5106
        %v5281 = vmul.f32 %v5280, 0.6931472
        %v5282 = vlog2.pop %v5107
        %v5283 = vmul.f32 %v5282, 0.6931472
        %v5284 = vlog2.pop %v5108
        %v5285 = vmul.f32 %v5284, 0.6931472
        %v5286 = vlog2.pop %v5109
        %v5287 = vmul.f32 %v5286, 0.6931472
        %v5288 = vlog2.pop %v5110
        %v5289 = vmul.f32 %v5288, 0.6931472
        %v5290 = vlog2.pop %v5111
        %v5291 = vmul.f32 %v5290, 0.6931472
        %v5292 = vlog2.pop %v5112
        %v5293 = vmul.f32 %v5292, 0.6931472
        %v5294 = vlog2.pop %v5113
        %v5295 = vmul.f32 %v5294, 0.6931472
        %v5296 = vlog2.pop %v5114
        %v5297 = vmul.f32 %v5296, 0.6931472
        %v5298 = vlog2.pop %v5115
        %v5299 = vmul.f32 %v5298, 0.6931472
        %v5300 = vlog2.pop %v5116
        %v5301 = vmul.f32 %v5300, 0.6931472
        %v5302 = vlog2.pop %v5117
        %v5303 = vmul.f32 %v5302, 0.6931472
        %v5304 = vlog2.pop %v5118
        %v5305 = vmul.f32 %v5304, 0.6931472
        %v5306 = vlog2.pop %v5119
        %v5307 = vmul.f32 %v5306, 0.6931472
        %v5308 = vlog2.pop %v5120
        %v5309 = vmul.f32 %v5308, 0.6931472
        %v5310 = vlog2.pop %v5121
        %v5311 = vmul.f32 %v5310, 0.6931472
        %v5312 = vlog2.pop %v5122
        %v5313 = vmul.f32 %v5312, 0.6931472
        %v5314 = vlog2.pop %v5123
        %v5315 = vmul.f32 %v5314, 0.6931472
        %v5316 = vsub.f32 0.0, %v5189
        %v5317 = vsub.f32 0.0, %v5191
        %v5318 = vsub.f32 0.0, %v5193
        %v5319 = vsub.f32 0.0, %v5195
        %v5320 = vsub.f32 0.0, %v5197
        %v5321 = vsub.f32 0.0, %v5199
        %v5322 = vsub.f32 0.0, %v5201
        %v5323 = vsub.f32 0.0, %v5203
        %v5324 = vsub.f32 0.0, %v5205
        %v5325 = vsub.f32 0.0, %v5207
        %v5326 = vsub.f32 0.0, %v5209
        %v5327 = vsub.f32 0.0, %v5211
        %v5328 = vsub.f32 0.0, %v5213
        %v5329 = vsub.f32 0.0, %v5215
        %v5330 = vsub.f32 0.0, %v5217
        %v5331 = vsub.f32 0.0, %v5219
        %v5332 = vsub.f32 0.0, %v5221
        %v5333 = vsub.f32 0.0, %v5223
        %v5334 = vsub.f32 0.0, %v5225
        %v5335 = vsub.f32 0.0, %v5227
        %v5336 = vsub.f32 0.0, %v5229
        %v5337 = vsub.f32 0.0, %v5231
        %v5338 = vsub.f32 0.0, %v5233
        %v5339 = vsub.f32 0.0, %v5235
        %v5340 = vsub.f32 0.0, %v5237
        %v5341 = vsub.f32 0.0, %v5239
        %v5342 = vsub.f32 0.0, %v5241
        %v5343 = vsub.f32 0.0, %v5243
        %v5344 = vsub.f32 0.0, %v5245
        %v5345 = vsub.f32 0.0, %v5247
        %v5346 = vsub.f32 0.0, %v5249
        %v5347 = vsub.f32 0.0, %v5251
        %v5348 = vsub.f32 0.0, %v5253
        %v5349 = vsub.f32 0.0, %v5255
        %v5350 = vsub.f32 0.0, %v5257
        %v5351 = vsub.f32 0.0, %v5259
        %v5352 = vsub.f32 0.0, %v5261
        %v5353 = vsub.f32 0.0, %v5263
        %v5354 = vsub.f32 0.0, %v5265
        %v5355 = vsub.f32 0.0, %v5267
        %v5356 = vsub.f32 0.0, %v5269
        %v5357 = vsub.f32 0.0, %v5271
        %v5358 = vsub.f32 0.0, %v5273
        %v5359 = vsub.f32 0.0, %v5275
        %v5360 = vsub.f32 0.0, %v5277
        %v5361 = vsub.f32 0.0, %v5279
        %v5362 = vsub.f32 0.0, %v5281
        %v5363 = vsub.f32 0.0, %v5283
        %v5364 = vsub.f32 0.0, %v5285
        %v5365 = vsub.f32 0.0, %v5287
        %v5366 = vsub.f32 0.0, %v5289
        %v5367 = vsub.f32 0.0, %v5291
        %v5368 = vsub.f32 0.0, %v5293
        %v5369 = vsub.f32 0.0, %v5295
        %v5370 = vsub.f32 0.0, %v5297
        %v5371 = vsub.f32 0.0, %v5299
        %v5372 = vsub.f32 0.0, %v5301
        %v5373 = vsub.f32 0.0, %v5303
        %v5374 = vsub.f32 0.0, %v5305
        %v5375 = vsub.f32 0.0, %v5307
        %v5376 = vsub.f32 0.0, %v5309
        %v5377 = vsub.f32 0.0, %v5311
        %v5378 = vsub.f32 0.0, %v5313
        %v5379 = vsub.f32 0.0, %v5315
        %v5380 = vmul.f32 %v5124, %v2826
        %v5381 = vmul.f32 %v5125, %v2827
        %v5382 = vmul.f32 %v5126, %v2828
        %v5383 = vmul.f32 %v5127, %v2829
        %v5384 = vmul.f32 %v5128, %v2830
        %v5385 = vmul.f32 %v5129, %v2831
        %v5386 = vmul.f32 %v5130, %v2832
        %v5387 = vmul.f32 %v5131, %v2833
        %v5388 = vmul.f32 %v5132, %v2834
        %v5389 = vmul.f32 %v5133, %v2835
        %v5390 = vmul.f32 %v5134, %v2836
        %v5391 = vmul.f32 %v5135, %v2837
        %v5392 = vmul.f32 %v5136, %v2838
        %v5393 = vmul.f32 %v5137, %v2839
        %v5394 = vmul.f32 %v5138, %v2840
        %v5395 = vmul.f32 %v5139, %v2841
        %v5396 = vmul.f32 %v5140, %v2842
        %v5397 = vmul.f32 %v5141, %v2843
        %v5398 = vmul.f32 %v5142, %v2844
        %v5399 = vmul.f32 %v5143, %v2845
        %v5400 = vmul.f32 %v5144, %v2846
        %v5401 = vmul.f32 %v5145, %v2847
        %v5402 = vmul.f32 %v5146, %v2848
        %v5403 = vmul.f32 %v5147, %v2849
        %v5404 = vmul.f32 %v5148, %v2850
        %v5405 = vmul.f32 %v5149, %v2851
        %v5406 = vmul.f32 %v5150, %v2852
        %v5407 = vmul.f32 %v5151, %v2853
        %v5408 = vmul.f32 %v5152, %v2854
        %v5409 = vmul.f32 %v5153, %v2855
        %v5410 = vmul.f32 %v5154, %v2856
        %v5411 = vmul.f32 %v5155, %v2857
        %v5412 = vmul.f32 %v5156, %v2858
        %v5413 = vmul.f32 %v5157, %v2859
        %v5414 = vmul.f32 %v5158, %v2860
        %v5415 = vmul.f32 %v5159, %v2861
        %v5416 = vmul.f32 %v5160, %v2862
        %v5417 = vmul.f32 %v5161, %v2863
        %v5418 = vmul.f32 %v5162, %v2864
        %v5419 = vmul.f32 %v5163, %v2865
        %v5420 = vmul.f32 %v5164, %v2866
        %v5421 = vmul.f32 %v5165, %v2867
        %v5422 = vmul.f32 %v5166, %v2868
        %v5423 = vmul.f32 %v5167, %v2869
        %v5424 = vmul.f32 %v5168, %v2870
        %v5425 = vmul.f32 %v5169, %v2871
        %v5426 = vmul.f32 %v5170, %v2872
        %v5427 = vmul.f32 %v5171, %v2873
        %v5428 = vmul.f32 %v5172, %v2874
        %v5429 = vmul.f32 %v5173, %v2875
        %v5430 = vmul.f32 %v5174, %v2876
        %v5431 = vmul.f32 %v5175, %v2877
        %v5432 = vmul.f32 %v5176, %v2878
        %v5433 = vmul.f32 %v5177, %v2879
        %v5434 = vmul.f32 %v5178, %v2880
        %v5435 = vmul.f32 %v5179, %v2881
        %v5436 = vmul.f32 %v5180, %v2882
        %v5437 = vmul.f32 %v5181, %v2883
        %v5438 = vmul.f32 %v5182, %v2884
        %v5439 = vmul.f32 %v5183, %v2885
        %v5440 = vmul.f32 %v5184, %v2886
        %v5441 = vmul.f32 %v5185, %v2887
        %v5442 = vmul.f32 %v5186, %v2888
        %v5443 = vmul.f32 %v5187, %v2889
        %v5444 = vsub.f32 1.0, %v5124
        %v5445 = vsub.f32 1.0, %v5125
        %v5446 = vsub.f32 1.0, %v5126
        %v5447 = vsub.f32 1.0, %v5127
        %v5448 = vsub.f32 1.0, %v5128
        %v5449 = vsub.f32 1.0, %v5129
        %v5450 = vsub.f32 1.0, %v5130
        %v5451 = vsub.f32 1.0, %v5131
        %v5452 = vsub.f32 1.0, %v5132
        %v5453 = vsub.f32 1.0, %v5133
        %v5454 = vsub.f32 1.0, %v5134
        %v5455 = vsub.f32 1.0, %v5135
        %v5456 = vsub.f32 1.0, %v5136
        %v5457 = vsub.f32 1.0, %v5137
        %v5458 = vsub.f32 1.0, %v5138
        %v5459 = vsub.f32 1.0, %v5139
        %v5460 = vsub.f32 1.0, %v5140
        %v5461 = vsub.f32 1.0, %v5141
        %v5462 = vsub.f32 1.0, %v5142
        %v5463 = vsub.f32 1.0, %v5143
        %v5464 = vsub.f32 1.0, %v5144
        %v5465 = vsub.f32 1.0, %v5145
        %v5466 = vsub.f32 1.0, %v5146
        %v5467 = vsub.f32 1.0, %v5147
        %v5468 = vsub.f32 1.0, %v5148
        %v5469 = vsub.f32 1.0, %v5149
        %v5470 = vsub.f32 1.0, %v5150
        %v5471 = vsub.f32 1.0, %v5151
        %v5472 = vsub.f32 1.0, %v5152
        %v5473 = vsub.f32 1.0, %v5153
        %v5474 = vsub.f32 1.0, %v5154
        %v5475 = vsub.f32 1.0, %v5155
        %v5476 = vsub.f32 1.0, %v5156
        %v5477 = vsub.f32 1.0, %v5157
        %v5478 = vsub.f32 1.0, %v5158
        %v5479 = vsub.f32 1.0, %v5159
        %v5480 = vsub.f32 1.0, %v5160
        %v5481 = vsub.f32 1.0, %v5161
        %v5482 = vsub.f32 1.0, %v5162
        %v5483 = vsub.f32 1.0, %v5163
        %v5484 = vsub.f32 1.0, %v5164
        %v5485 = vsub.f32 1.0, %v5165
        %v5486 = vsub.f32 1.0, %v5166
        %v5487 = vsub.f32 1.0, %v5167
        %v5488 = vsub.f32 1.0, %v5168
        %v5489 = vsub.f32 1.0, %v5169
        %v5490 = vsub.f32 1.0, %v5170
        %v5491 = vsub.f32 1.0, %v5171
        %v5492 = vsub.f32 1.0, %v5172
        %v5493 = vsub.f32 1.0, %v5173
        %v5494 = vsub.f32 1.0, %v5174
        %v5495 = vsub.f32 1.0, %v5175
        %v5496 = vsub.f32 1.0, %v5176
        %v5497 = vsub.f32 1.0, %v5177
        %v5498 = vsub.f32 1.0, %v5178
        %v5499 = vsub.f32 1.0, %v5179
        %v5500 = vsub.f32 1.0, %v5180
        %v5501 = vsub.f32 1.0, %v5181
        %v5502 = vsub.f32 1.0, %v5182
        %v5503 = vsub.f32 1.0, %v5183
        %v5504 = vsub.f32 1.0, %v5184
        %v5505 = vsub.f32 1.0, %v5185
        %v5506 = vsub.f32 1.0, %v5186
        %v5507 = vsub.f32 1.0, %v5187
        %v5508 = vmul.f32 %v5444, %v4486
        %v5509 = vmul.f32 %v5445, %v4490
        %v5510 = vmul.f32 %v5446, %v4496
        %v5511 = vmul.f32 %v5447, %v4500
        %v5512 = vmul.f32 %v5448, %v4506
        %v5513 = vmul.f32 %v5449, %v4510
        %v5514 = vmul.f32 %v5450, %v4516
        %v5515 = vmul.f32 %v5451, %v4520
        %v5516 = vmul.f32 %v5452, %v4526
        %v5517 = vmul.f32 %v5453, %v4530
        %v5518 = vmul.f32 %v5454, %v4536
        %v5519 = vmul.f32 %v5455, %v4540
        %v5520 = vmul.f32 %v5456, %v4546
        %v5521 = vmul.f32 %v5457, %v4550
        %v5522 = vmul.f32 %v5458, %v4556
        %v5523 = vmul.f32 %v5459, %v4560
        %v5524 = vmul.f32 %v5460, %v4566
        %v5525 = vmul.f32 %v5461, %v4570
        %v5526 = vmul.f32 %v5462, %v4576
        %v5527 = vmul.f32 %v5463, %v4580
        %v5528 = vmul.f32 %v5464, %v4586
        %v5529 = vmul.f32 %v5465, %v4590
        %v5530 = vmul.f32 %v5466, %v4596
        %v5531 = vmul.f32 %v5467, %v4600
        %v5532 = vmul.f32 %v5468, %v4606
        %v5533 = vmul.f32 %v5469, %v4610
        %v5534 = vmul.f32 %v5470, %v4616
        %v5535 = vmul.f32 %v5471, %v4620
        %v5536 = vmul.f32 %v5472, %v4626
        %v5537 = vmul.f32 %v5473, %v4630
        %v5538 = vmul.f32 %v5474, %v4636
        %v5539 = vmul.f32 %v5475, %v4640
        %v5540 = vmul.f32 %v5476, %v4646
        %v5541 = vmul.f32 %v5477, %v4650
        %v5542 = vmul.f32 %v5478, %v4656
        %v5543 = vmul.f32 %v5479, %v4660
        %v5544 = vmul.f32 %v5480, %v4666
        %v5545 = vmul.f32 %v5481, %v4670
        %v5546 = vmul.f32 %v5482, %v4676
        %v5547 = vmul.f32 %v5483, %v4680
        %v5548 = vmul.f32 %v5484, %v4686
        %v5549 = vmul.f32 %v5485, %v4690
        %v5550 = vmul.f32 %v5486, %v4696
        %v5551 = vmul.f32 %v5487, %v4700
        %v5552 = vmul.f32 %v5488, %v4706
        %v5553 = vmul.f32 %v5489, %v4710
        %v5554 = vmul.f32 %v5490, %v4716
        %v5555 = vmul.f32 %v5491, %v4720
        %v5556 = vmul.f32 %v5492, %v4726
        %v5557 = vmul.f32 %v5493, %v4730
        %v5558 = vmul.f32 %v5494, %v4736
        %v5559 = vmul.f32 %v5495, %v4740
        %v5560 = vmul.f32 %v5496, %v4746
        %v5561 = vmul.f32 %v5497, %v4750
        %v5562 = vmul.f32 %v5498, %v4756
        %v5563 = vmul.f32 %v5499, %v4760
        %v5564 = vmul.f32 %v5500, %v4766
        %v5565 = vmul.f32 %v5501, %v4770
        %v5566 = vmul.f32 %v5502, %v4776
        %v5567 = vmul.f32 %v5503, %v4780
        %v5568 = vmul.f32 %v5504, %v4786
        %v5569 = vmul.f32 %v5505, %v4790
        %v5570 = vmul.f32 %v5506, %v4796
        %v5571 = vmul.f32 %v5507, %v4800
        %v5572 = vadd.f32 %v5380, %v5508
        %v5573 = vadd.f32 %v5381, %v5509
        %v5574 = vadd.f32 %v5382, %v5510
        %v5575 = vadd.f32 %v5383, %v5511
        %v5576 = vadd.f32 %v5384, %v5512
        %v5577 = vadd.f32 %v5385, %v5513
        %v5578 = vadd.f32 %v5386, %v5514
        %v5579 = vadd.f32 %v5387, %v5515
        %v5580 = vadd.f32 %v5388, %v5516
        %v5581 = vadd.f32 %v5389, %v5517
        %v5582 = vadd.f32 %v5390, %v5518
        %v5583 = vadd.f32 %v5391, %v5519
        %v5584 = vadd.f32 %v5392, %v5520
        %v5585 = vadd.f32 %v5393, %v5521
        %v5586 = vadd.f32 %v5394, %v5522
        %v5587 = vadd.f32 %v5395, %v5523
        %v5588 = vadd.f32 %v5396, %v5524
        %v5589 = vadd.f32 %v5397, %v5525
        %v5590 = vadd.f32 %v5398, %v5526
        %v5591 = vadd.f32 %v5399, %v5527
        %v5592 = vadd.f32 %v5400, %v5528
        %v5593 = vadd.f32 %v5401, %v5529
        %v5594 = vadd.f32 %v5402, %v5530
        %v5595 = vadd.f32 %v5403, %v5531
        %v5596 = vadd.f32 %v5404, %v5532
        %v5597 = vadd.f32 %v5405, %v5533
        %v5598 = vadd.f32 %v5406, %v5534
        %v5599 = vadd.f32 %v5407, %v5535
        %v5600 = vadd.f32 %v5408, %v5536
        %v5601 = vadd.f32 %v5409, %v5537
        %v5602 = vadd.f32 %v5410, %v5538
        %v5603 = vadd.f32 %v5411, %v5539
        %v5604 = vadd.f32 %v5412, %v5540
        %v5605 = vadd.f32 %v5413, %v5541
        %v5606 = vadd.f32 %v5414, %v5542
        %v5607 = vadd.f32 %v5415, %v5543
        %v5608 = vadd.f32 %v5416, %v5544
        %v5609 = vadd.f32 %v5417, %v5545
        %v5610 = vadd.f32 %v5418, %v5546
        %v5611 = vadd.f32 %v5419, %v5547
        %v5612 = vadd.f32 %v5420, %v5548
        %v5613 = vadd.f32 %v5421, %v5549
        %v5614 = vadd.f32 %v5422, %v5550
        %v5615 = vadd.f32 %v5423, %v5551
        %v5616 = vadd.f32 %v5424, %v5552
        %v5617 = vadd.f32 %v5425, %v5553
        %v5618 = vadd.f32 %v5426, %v5554
        %v5619 = vadd.f32 %v5427, %v5555
        %v5620 = vadd.f32 %v5428, %v5556
        %v5621 = vadd.f32 %v5429, %v5557
        %v5622 = vadd.f32 %v5430, %v5558
        %v5623 = vadd.f32 %v5431, %v5559
        %v5624 = vadd.f32 %v5432, %v5560
        %v5625 = vadd.f32 %v5433, %v5561
        %v5626 = vadd.f32 %v5434, %v5562
        %v5627 = vadd.f32 %v5435, %v5563
        %v5628 = vadd.f32 %v5436, %v5564
        %v5629 = vadd.f32 %v5437, %v5565
        %v5630 = vadd.f32 %v5438, %v5566
        %v5631 = vadd.f32 %v5439, %v5567
        %v5632 = vadd.f32 %v5440, %v5568
        %v5633 = vadd.f32 %v5441, %v5569
        %v5634 = vadd.f32 %v5442, %v5570
        %v5635 = vadd.f32 %v5443, %v5571
        %v5636 = vmul.f32 %v3342, %v5316
        %v5637 = vmul.f32 %v3342, %v5317
        %v5638 = vmul.f32 %v3342, %v5318
        %v5639 = vmul.f32 %v3342, %v5319
        %v5640 = vmul.f32 %v3342, %v5320
        %v5641 = vmul.f32 %v3342, %v5321
        %v5642 = vmul.f32 %v3342, %v5322
        %v5643 = vmul.f32 %v3342, %v5323
        %v5644 = vmul.f32 %v3342, %v5324
        %v5645 = vmul.f32 %v3342, %v5325
        %v5646 = vmul.f32 %v3342, %v5326
        %v5647 = vmul.f32 %v3342, %v5327
        %v5648 = vmul.f32 %v3342, %v5328
        %v5649 = vmul.f32 %v3342, %v5329
        %v5650 = vmul.f32 %v3342, %v5330
        %v5651 = vmul.f32 %v3342, %v5331
        %v5652 = vmul.f32 %v3342, %v5332
        %v5653 = vmul.f32 %v3342, %v5333
        %v5654 = vmul.f32 %v3342, %v5334
        %v5655 = vmul.f32 %v3342, %v5335
        %v5656 = vmul.f32 %v3342, %v5336
        %v5657 = vmul.f32 %v3342, %v5337
        %v5658 = vmul.f32 %v3342, %v5338
        %v5659 = vmul.f32 %v3342, %v5339
        %v5660 = vmul.f32 %v3342, %v5340
        %v5661 = vmul.f32 %v3342, %v5341
        %v5662 = vmul.f32 %v3342, %v5342
        %v5663 = vmul.f32 %v3342, %v5343
        %v5664 = vmul.f32 %v3342, %v5344
        %v5665 = vmul.f32 %v3342, %v5345
        %v5666 = vmul.f32 %v3342, %v5346
        %v5667 = vmul.f32 %v3342, %v5347
        %v5668 = vmul.f32 %v3342, %v5348
        %v5669 = vmul.f32 %v3342, %v5349
        %v5670 = vmul.f32 %v3342, %v5350
        %v5671 = vmul.f32 %v3342, %v5351
        %v5672 = vmul.f32 %v3342, %v5352
        %v5673 = vmul.f32 %v3342, %v5353
        %v5674 = vmul.f32 %v3342, %v5354
        %v5675 = vmul.f32 %v3342, %v5355
        %v5676 = vmul.f32 %v3342, %v5356
        %v5677 = vmul.f32 %v3342, %v5357
        %v5678 = vmul.f32 %v3342, %v5358
        %v5679 = vmul.f32 %v3342, %v5359
        %v5680 = vmul.f32 %v3342, %v5360
        %v5681 = vmul.f32 %v3342, %v5361
        %v5682 = vmul.f32 %v3342, %v5362
        %v5683 = vmul.f32 %v3342, %v5363
        %v5684 = vmul.f32 %v3342, %v5364
        %v5685 = vmul.f32 %v3342, %v5365
        %v5686 = vmul.f32 %v3342, %v5366
        %v5687 = vmul.f32 %v3342, %v5367
        %v5688 = vmul.f32 %v3342, %v5368
        %v5689 = vmul.f32 %v3342, %v5369
        %v5690 = vmul.f32 %v3342, %v5370
        %v5691 = vmul.f32 %v3342, %v5371
        %v5692 = vmul.f32 %v3342, %v5372
        %v5693 = vmul.f32 %v3342, %v5373
        %v5694 = vmul.f32 %v3342, %v5374
        %v5695 = vmul.f32 %v3342, %v5375
        %v5696 = vmul.f32 %v3342, %v5376
        %v5697 = vmul.f32 %v3342, %v5377
        %v5698 = vmul.f32 %v3342, %v5378
        %v5699 = vmul.f32 %v3342, %v5379
        %5700 = vadd.xlane.f32.xlu0 %v5636
        %v5701 = vpop.xlane.xlu0 %5700
        %5702 = vadd.xlane.f32.xlu0 %v5637
        %v5703 = vpop.xlane.xlu0 %5702
        %5704 = vadd.xlane.f32.xlu0 %v5638
        %v5705 = vpop.xlane.xlu0 %5704
        %5706 = vadd.xlane.f32.xlu0 %v5639
        %v5707 = vpop.xlane.xlu0 %5706
        %5708 = vadd.xlane.f32.xlu0 %v5640
        %v5709 = vpop.xlane.xlu0 %5708
        %5710 = vadd.xlane.f32.xlu0 %v5641
        %v5711 = vpop.xlane.xlu0 %5710
        %5712 = vadd.xlane.f32.xlu0 %v5642
        %v5713 = vpop.xlane.xlu0 %5712
        %5714 = vadd.xlane.f32.xlu0 %v5643
        %v5715 = vpop.xlane.xlu0 %5714
        %5716 = vadd.xlane.f32.xlu0 %v5644
        %v5717 = vpop.xlane.xlu0 %5716
        %5718 = vadd.xlane.f32.xlu0 %v5645
        %v5719 = vpop.xlane.xlu0 %5718
        %5720 = vadd.xlane.f32.xlu0 %v5646
        %v5721 = vpop.xlane.xlu0 %5720
        %5722 = vadd.xlane.f32.xlu0 %v5647
        %v5723 = vpop.xlane.xlu0 %5722
        %5724 = vadd.xlane.f32.xlu0 %v5648
        %v5725 = vpop.xlane.xlu0 %5724
        %5726 = vadd.xlane.f32.xlu0 %v5649
        %v5727 = vpop.xlane.xlu0 %5726
        %5728 = vadd.xlane.f32.xlu0 %v5650
        %v5729 = vpop.xlane.xlu0 %5728
        %5730 = vadd.xlane.f32.xlu0 %v5651
        %v5731 = vpop.xlane.xlu0 %5730
        %5732 = vadd.xlane.f32.xlu0 %v5652
        %v5733 = vpop.xlane.xlu0 %5732
        %5734 = vadd.xlane.f32.xlu0 %v5653
        %v5735 = vpop.xlane.xlu0 %5734
        %5736 = vadd.xlane.f32.xlu0 %v5654
        %v5737 = vpop.xlane.xlu0 %5736
        %5738 = vadd.xlane.f32.xlu0 %v5655
        %v5739 = vpop.xlane.xlu0 %5738
        %5740 = vadd.xlane.f32.xlu0 %v5656
        %v5741 = vpop.xlane.xlu0 %5740
        %5742 = vadd.xlane.f32.xlu0 %v5657
        %v5743 = vpop.xlane.xlu0 %5742
        %5744 = vadd.xlane.f32.xlu0 %v5658
        %v5745 = vpop.xlane.xlu0 %5744
        %5746 = vadd.xlane.f32.xlu0 %v5659
        %v5747 = vpop.xlane.xlu0 %5746
        %5748 = vadd.xlane.f32.xlu0 %v5660
        %v5749 = vpop.xlane.xlu0 %5748
        %5750 = vadd.xlane.f32.xlu0 %v5661
        %v5751 = vpop.xlane.xlu0 %5750
        %5752 = vadd.xlane.f32.xlu0 %v5662
        %v5753 = vpop.xlane.xlu0 %5752
        %5754 = vadd.xlane.f32.xlu0 %v5663
        %v5755 = vpop.xlane.xlu0 %5754
        %5756 = vadd.xlane.f32.xlu0 %v5664
        %v5757 = vpop.xlane.xlu0 %5756
        %5758 = vadd.xlane.f32.xlu0 %v5665
        %v5759 = vpop.xlane.xlu0 %5758
        %5760 = vadd.xlane.f32.xlu0 %v5666
        %v5761 = vpop.xlane.xlu0 %5760
        %5762 = vadd.xlane.f32.xlu0 %v5667
        %v5763 = vpop.xlane.xlu0 %5762
        %5764 = vadd.xlane.f32.xlu0 %v5668
        %v5765 = vpop.xlane.xlu0 %5764
        %5766 = vadd.xlane.f32.xlu0 %v5669
        %v5767 = vpop.xlane.xlu0 %5766
        %5768 = vadd.xlane.f32.xlu0 %v5670
        %v5769 = vpop.xlane.xlu0 %5768
        %5770 = vadd.xlane.f32.xlu0 %v5671
        %v5771 = vpop.xlane.xlu0 %5770
        %5772 = vadd.xlane.f32.xlu0 %v5672
        %v5773 = vpop.xlane.xlu0 %5772
        %5774 = vadd.xlane.f32.xlu0 %v5673
        %v5775 = vpop.xlane.xlu0 %5774
        %5776 = vadd.xlane.f32.xlu0 %v5674
        %v5777 = vpop.xlane.xlu0 %5776
        %5778 = vadd.xlane.f32.xlu0 %v5675
        %v5779 = vpop.xlane.xlu0 %5778
        %5780 = vadd.xlane.f32.xlu0 %v5676
        %v5781 = vpop.xlane.xlu0 %5780
        %5782 = vadd.xlane.f32.xlu0 %v5677
        %v5783 = vpop.xlane.xlu0 %5782
        %5784 = vadd.xlane.f32.xlu0 %v5678
        %v5785 = vpop.xlane.xlu0 %5784
        %5786 = vadd.xlane.f32.xlu0 %v5679
        %v5787 = vpop.xlane.xlu0 %5786
        %5788 = vadd.xlane.f32.xlu0 %v5680
        %v5789 = vpop.xlane.xlu0 %5788
        %5790 = vadd.xlane.f32.xlu0 %v5681
        %v5791 = vpop.xlane.xlu0 %5790
        %5792 = vadd.xlane.f32.xlu0 %v5682
        %v5793 = vpop.xlane.xlu0 %5792
        %5794 = vadd.xlane.f32.xlu0 %v5683
        %v5795 = vpop.xlane.xlu0 %5794
        %5796 = vadd.xlane.f32.xlu0 %v5684
        %v5797 = vpop.xlane.xlu0 %5796
        %5798 = vadd.xlane.f32.xlu0 %v5685
        %v5799 = vpop.xlane.xlu0 %5798
        %5800 = vadd.xlane.f32.xlu0 %v5686
        %v5801 = vpop.xlane.xlu0 %5800
        %5802 = vadd.xlane.f32.xlu0 %v5687
        %v5803 = vpop.xlane.xlu0 %5802
        %5804 = vadd.xlane.f32.xlu0 %v5688
        %v5805 = vpop.xlane.xlu0 %5804
        %5806 = vadd.xlane.f32.xlu0 %v5689
        %v5807 = vpop.xlane.xlu0 %5806
        %5808 = vadd.xlane.f32.xlu0 %v5690
        %v5809 = vpop.xlane.xlu0 %5808
        %5810 = vadd.xlane.f32.xlu0 %v5691
        %v5811 = vpop.xlane.xlu0 %5810
        %5812 = vadd.xlane.f32.xlu0 %v5692
        %v5813 = vpop.xlane.xlu0 %5812
        %5814 = vadd.xlane.f32.xlu0 %v5693
        %v5815 = vpop.xlane.xlu0 %5814
        %5816 = vadd.xlane.f32.xlu0 %v5694
        %v5817 = vpop.xlane.xlu0 %5816
        %5818 = vadd.xlane.f32.xlu0 %v5695
        %v5819 = vpop.xlane.xlu0 %5818
        %5820 = vadd.xlane.f32.xlu0 %v5696
        %v5821 = vpop.xlane.xlu0 %5820
        %5822 = vadd.xlane.f32.xlu0 %v5697
        %v5823 = vpop.xlane.xlu0 %5822
        %5824 = vadd.xlane.f32.xlu0 %v5698
        %v5825 = vpop.xlane.xlu0 %5824
        %5826 = vadd.xlane.f32.xlu0 %v5699
        %v5827 = vpop.xlane.xlu0 %5826
        %v5828 = vsub.f32 %v3274, %v5701
        %v5829 = vsub.f32 %v3275, %v5703
        %v5830 = vsub.f32 %v3276, %v5705
        %v5831 = vsub.f32 %v3277, %v5707
        %v5832 = vsub.f32 %v3278, %v5709
        %v5833 = vsub.f32 %v3279, %v5711
        %v5834 = vsub.f32 %v3280, %v5713
        %v5835 = vsub.f32 %v3281, %v5715
        %v5836 = vsub.f32 %v3282, %v5717
        %v5837 = vsub.f32 %v3283, %v5719
        %v5838 = vsub.f32 %v3284, %v5721
        %v5839 = vsub.f32 %v3285, %v5723
        %v5840 = vsub.f32 %v3286, %v5725
        %v5841 = vsub.f32 %v3287, %v5727
        %v5842 = vsub.f32 %v3288, %v5729
        %v5843 = vsub.f32 %v3289, %v5731
        %v5844 = vsub.f32 %v3290, %v5733
        %v5845 = vsub.f32 %v3291, %v5735
        %v5846 = vsub.f32 %v3292, %v5737
        %v5847 = vsub.f32 %v3293, %v5739
        %v5848 = vsub.f32 %v3294, %v5741
        %v5849 = vsub.f32 %v3295, %v5743
        %v5850 = vsub.f32 %v3296, %v5745
        %v5851 = vsub.f32 %v3297, %v5747
        %v5852 = vsub.f32 %v3298, %v5749
        %v5853 = vsub.f32 %v3299, %v5751
        %v5854 = vsub.f32 %v3300, %v5753
        %v5855 = vsub.f32 %v3301, %v5755
        %v5856 = vsub.f32 %v3302, %v5757
        %v5857 = vsub.f32 %v3303, %v5759
        %v5858 = vsub.f32 %v3304, %v5761
        %v5859 = vsub.f32 %v3305, %v5763
        %v5860 = vsub.f32 %v3306, %v5765
        %v5861 = vsub.f32 %v3307, %v5767
        %v5862 = vsub.f32 %v3308, %v5769
        %v5863 = vsub.f32 %v3309, %v5771
        %v5864 = vsub.f32 %v3310, %v5773
        %v5865 = vsub.f32 %v3311, %v5775
        %v5866 = vsub.f32 %v3312, %v5777
        %v5867 = vsub.f32 %v3313, %v5779
        %v5868 = vsub.f32 %v3314, %v5781
        %v5869 = vsub.f32 %v3315, %v5783
        %v5870 = vsub.f32 %v3316, %v5785
        %v5871 = vsub.f32 %v3317, %v5787
        %v5872 = vsub.f32 %v3318, %v5789
        %v5873 = vsub.f32 %v3319, %v5791
        %v5874 = vsub.f32 %v3320, %v5793
        %v5875 = vsub.f32 %v3321, %v5795
        %v5876 = vsub.f32 %v3322, %v5797
        %v5877 = vsub.f32 %v3323, %v5799
        %v5878 = vsub.f32 %v3324, %v5801
        %v5879 = vsub.f32 %v3325, %v5803
        %v5880 = vsub.f32 %v3326, %v5805
        %v5881 = vsub.f32 %v3327, %v5807
        %v5882 = vsub.f32 %v3328, %v5809
        %v5883 = vsub.f32 %v3329, %v5811
        %v5884 = vsub.f32 %v3330, %v5813
        %v5885 = vsub.f32 %v3331, %v5815
        %v5886 = vsub.f32 %v3332, %v5817
        %v5887 = vsub.f32 %v3333, %v5819
        %v5888 = vsub.f32 %v3334, %v5821
        %v5889 = vsub.f32 %v3335, %v5823
        %v5890 = vsub.f32 %v3336, %v5825
        %v5891 = vsub.f32 %v3337, %v5827
        %v5892 = vadd.f32 %v5572, %v2316
        %v5893 = vadd.f32 %v5573, %v2319
        %v5894 = vadd.f32 %v5574, %v2324
        %v5895 = vadd.f32 %v5575, %v2327
        %v5896 = vadd.f32 %v5576, %v2332
        %v5897 = vadd.f32 %v5577, %v2335
        %v5898 = vadd.f32 %v5578, %v2340
        %v5899 = vadd.f32 %v5579, %v2343
        %v5900 = vadd.f32 %v5580, %v2348
        %v5901 = vadd.f32 %v5581, %v2351
        %v5902 = vadd.f32 %v5582, %v2356
        %v5903 = vadd.f32 %v5583, %v2359
        %v5904 = vadd.f32 %v5584, %v2364
        %v5905 = vadd.f32 %v5585, %v2367
        %v5906 = vadd.f32 %v5586, %v2372
        %v5907 = vadd.f32 %v5587, %v2375
        %v5908 = vadd.f32 %v5588, %v2380
        %v5909 = vadd.f32 %v5589, %v2383
        %v5910 = vadd.f32 %v5590, %v2388
        %v5911 = vadd.f32 %v5591, %v2391
        %v5912 = vadd.f32 %v5592, %v2396
        %v5913 = vadd.f32 %v5593, %v2399
        %v5914 = vadd.f32 %v5594, %v2404
        %v5915 = vadd.f32 %v5595, %v2407
        %v5916 = vadd.f32 %v5596, %v2412
        %v5917 = vadd.f32 %v5597, %v2415
        %v5918 = vadd.f32 %v5598, %v2420
        %v5919 = vadd.f32 %v5599, %v2423
        %v5920 = vadd.f32 %v5600, %v2428
        %v5921 = vadd.f32 %v5601, %v2431
        %v5922 = vadd.f32 %v5602, %v2436
        %v5923 = vadd.f32 %v5603, %v2439
        %v5924 = vadd.f32 %v5604, %v2444
        %v5925 = vadd.f32 %v5605, %v2447
        %v5926 = vadd.f32 %v5606, %v2452
        %v5927 = vadd.f32 %v5607, %v2455
        %v5928 = vadd.f32 %v5608, %v2460
        %v5929 = vadd.f32 %v5609, %v2463
        %v5930 = vadd.f32 %v5610, %v2468
        %v5931 = vadd.f32 %v5611, %v2471
        %v5932 = vadd.f32 %v5612, %v2476
        %v5933 = vadd.f32 %v5613, %v2479
        %v5934 = vadd.f32 %v5614, %v2484
        %v5935 = vadd.f32 %v5615, %v2487
        %v5936 = vadd.f32 %v5616, %v2492
        %v5937 = vadd.f32 %v5617, %v2495
        %v5938 = vadd.f32 %v5618, %v2500
        %v5939 = vadd.f32 %v5619, %v2503
        %v5940 = vadd.f32 %v5620, %v2508
        %v5941 = vadd.f32 %v5621, %v2511
        %v5942 = vadd.f32 %v5622, %v2516
        %v5943 = vadd.f32 %v5623, %v2519
        %v5944 = vadd.f32 %v5624, %v2524
        %v5945 = vadd.f32 %v5625, %v2527
        %v5946 = vadd.f32 %v5626, %v2532
        %v5947 = vadd.f32 %v5627, %v2535
        %v5948 = vadd.f32 %v5628, %v2540
        %v5949 = vadd.f32 %v5629, %v2543
        %v5950 = vadd.f32 %v5630, %v2548
        %v5951 = vadd.f32 %v5631, %v2551
        %v5952 = vadd.f32 %v5632, %v2556
        %v5953 = vadd.f32 %v5633, %v2559
        %v5954 = vadd.f32 %v5634, %v2564
        %v5955 = vadd.f32 %v5635, %v2567
        %s5956 = scalar_lea.vmem %s6, 64
        %v5957 = vld [vmem:[%s5956] sm:$0xf]
        %v5958 = vld [vmem:[%s5956 + $0x4] sm:$0xf]
        %v5959 = vld [vmem:[%s5956 + $0x8] sm:$0xf]
        %v5960 = vld [vmem:[%s5956 + $0xc] sm:$0xf]
        %v5961 = vld [vmem:[%s5956 + $0x10] sm:$0xf]
        %v5962 = vld [vmem:[%s5956 + $0x14] sm:$0xf]
        %v5963 = vld [vmem:[%s5956 + $0x18] sm:$0xf]
        %v5964 = vld [vmem:[%s5956 + $0x1c] sm:$0xf]
        %v5965 = vld [vmem:[%s5956 + $0x20] sm:$0xf]
        %v5966 = vld [vmem:[%s5956 + $0x24] sm:$0xf]
        %v5967 = vld [vmem:[%s5956 + $0x28] sm:$0xf]
        %v5968 = vld [vmem:[%s5956 + $0x2c] sm:$0xf]
        %v5969 = vld [vmem:[%s5956 + $0x30] sm:$0xf]
        %v5970 = vld [vmem:[%s5956 + $0x34] sm:$0xf]
        %v5971 = vld [vmem:[%s5956 + $0x38] sm:$0xf]
        %v5972 = vld [vmem:[%s5956 + $0x3c] sm:$0xf]
        %v5973 = vpack.c.bf16 %v5893, %v5892
        %v5974 = vpack.c.bf16 %v5895, %v5894
        %v5975 = vpack.c.bf16 %v5897, %v5896
        %v5976 = vpack.c.bf16 %v5899, %v5898
        %v5977 = vpack.c.bf16 %v5901, %v5900
        %v5978 = vpack.c.bf16 %v5903, %v5902
        %v5979 = vpack.c.bf16 %v5905, %v5904
        %v5980 = vpack.c.bf16 %v5907, %v5906
        %v5981 = vpack.c.bf16 %v5909, %v5908
        %v5982 = vpack.c.bf16 %v5911, %v5910
        %v5983 = vpack.c.bf16 %v5913, %v5912
        %v5984 = vpack.c.bf16 %v5915, %v5914
        %v5985 = vpack.c.bf16 %v5917, %v5916
        %v5986 = vpack.c.bf16 %v5919, %v5918
        %v5987 = vpack.c.bf16 %v5921, %v5920
        %v5988 = vpack.c.bf16 %v5923, %v5922
        %v5989 = vpack.c.bf16 %v5925, %v5924
        %v5990 = vpack.c.bf16 %v5927, %v5926
        %v5991 = vpack.c.bf16 %v5929, %v5928
        %v5992 = vpack.c.bf16 %v5931, %v5930
        %v5993 = vpack.c.bf16 %v5933, %v5932
        %v5994 = vpack.c.bf16 %v5935, %v5934
        %v5995 = vpack.c.bf16 %v5937, %v5936
        %v5996 = vpack.c.bf16 %v5939, %v5938
        %v5997 = vpack.c.bf16 %v5941, %v5940
        %v5998 = vpack.c.bf16 %v5943, %v5942
        %v5999 = vpack.c.bf16 %v5945, %v5944
        %v6000 = vpack.c.bf16 %v5947, %v5946
        %v6001 = vpack.c.bf16 %v5949, %v5948
        %v6002 = vpack.c.bf16 %v5951, %v5950
        %v6003 = vpack.c.bf16 %v5953, %v5952
        %v6004 = vpack.c.bf16 %v5955, %v5954
        %s6005 = scalar_lea.vmem %s7, 1
        %v6006 = vld [vmem:[%s6005] sm:$0x1]
        %v6008 = vlaneseq
        %v6009 = vshrl.u32 %v6008, 7
        %v6010 = vsub.s32 0, %v6009
        %v6011 = vrot.slane %v6006, %v6010
        %v6029 = vunpack.c.l.b16 %v5957
        %v6030 = vunpack.c.l.b16 %v5958
        %v6031 = vunpack.c.l.b16 %v5959
        %v6032 = vunpack.c.l.b16 %v5960
        %v6033 = vunpack.c.l.b16 %v5961
        %v6034 = vunpack.c.l.b16 %v5962
        %v6035 = vunpack.c.l.b16 %v5963
        %v6036 = vunpack.c.l.b16 %v5964
        %v6037 = vunpack.c.l.b16 %v5965
        %v6038 = vunpack.c.l.b16 %v5966
        %v6039 = vunpack.c.l.b16 %v5967
        %v6040 = vunpack.c.l.b16 %v5968
        %v6041 = vunpack.c.l.b16 %v5969
        %v6042 = vunpack.c.l.b16 %v5970
        %v6043 = vunpack.c.l.b16 %v5971
        %v6044 = vunpack.c.l.b16 %v5972
        %v6045 = vpack.c.b16 %v6030, %v6029
        %v6046 = vpack.c.b16 %v6032, %v6031
        %v6047 = vpack.c.b16 %v6034, %v6033
        %v6048 = vpack.c.b16 %v6036, %v6035
        %v6049 = vpack.c.b16 %v6038, %v6037
        %v6050 = vpack.c.b16 %v6040, %v6039
        %v6051 = vpack.c.b16 %v6042, %v6041
        %v6052 = vpack.c.b16 %v6044, %v6043
        %6061 = vmatprep.subr.bf16.mxu0 0
        %6062 = vmatpush1.bf16.msra.mxu0 %v6052
        %6063 = vmatprep.subr.bf16.mxu0 0
        %6064 = vmatpush1.bf16.msra.mxu0 %v6051
        %6065 = vmatprep.subr.bf16.mxu0 0
        %6066 = vmatpush1.bf16.msra.mxu0 %v6050
        %6067 = vmatprep.subr.bf16.mxu0 0
        %6068 = vmatpush1.bf16.msra.mxu0 %v6049
        %6069 = vmatprep.subr.bf16.mxu0 0
        %6070 = vmatpush1.bf16.msra.mxu0 %v6048
        %6071 = vmatprep.subr.bf16.mxu0 0
        %6072 = vmatpush1.bf16.msra.mxu0 %v6047
        %6073 = vmatprep.subr.bf16.mxu0 0
        %6074 = vmatpush1.bf16.msra.mxu0 %v6046
        %6075 = vmatprep.subr.bf16.mxu0 0
        %6076 = vmatpush1.bf16.msra.mxu0 %v6045
        %6077 = vmatprep.subr.bf16.mxu0 0
        %6078 = vmatpush2.bf16.msra.mxu0 0
        %6079 = vmatprep.subr.bf16.mxu0 0
        %6080 = vmatpush2.bf16.msra.mxu0 0
        %6081 = vmatprep.subr.bf16.mxu0 0
        %6082 = vmatpush2.bf16.msra.mxu0 0
        %6083 = vmatprep.subr.bf16.mxu0 0
        %6084 = vmatpush2.bf16.msra.mxu0 0
        %6085 = vmatprep.subr.bf16.mxu0 0
        %6086 = vmatpush2.bf16.msra.mxu0 0
        %6087 = vmatprep.subr.bf16.mxu0 0
        %6088 = vmatpush2.bf16.msra.mxu0 0
        %6089 = vmatprep.subr.bf16.mxu0 0
        %6090 = vmatpush2.bf16.msra.mxu0 0
        %6091 = vmatprep.subr.bf16.mxu0 0
        %6092 = vmatpush2.bf16.msra.mxu0 0
        %6093 = vmatprep.mubr.bf16.mxu0 0
        %6094 = vmatmul.mubr.bf16.gmra.mxu0 %v5973
        %v6095 = vpop.f32.mrf.mxu0
        %v6096 = vadd.f32 %v6011, %v6095
        %v6097 = vpop.f32.mrf.mxu0
        %v6098 = vpop.f32.mrf.mxu0
        %v6099 = vadd.f32 %v6011, %v6098
        %v6100 = vpop.f32.mrf.mxu0
        %6101 = vmatprep.mubr.bf16.mxu0 0
        %6102 = vmatmul.mubr.bf16.gmra.mxu0 %v5974
        %v6103 = vpop.f32.mrf.mxu0
        %v6104 = vadd.f32 %v6011, %v6103
        %v6105 = vpop.f32.mrf.mxu0
        %v6106 = vpop.f32.mrf.mxu0
        %v6107 = vadd.f32 %v6011, %v6106
        %v6108 = vpop.f32.mrf.mxu0
        %6109 = vmatprep.mubr.bf16.mxu0 0
        %6110 = vmatmul.mubr.bf16.gmra.mxu0 %v5975
        %v6111 = vpop.f32.mrf.mxu0
        %v6112 = vadd.f32 %v6011, %v6111
        %v6113 = vpop.f32.mrf.mxu0
        %v6114 = vpop.f32.mrf.mxu0
        %v6115 = vadd.f32 %v6011, %v6114
        %v6116 = vpop.f32.mrf.mxu0
        %6117 = vmatprep.mubr.bf16.mxu0 0
        %6118 = vmatmul.mubr.bf16.gmra.mxu0 %v5976
        %v6119 = vpop.f32.mrf.mxu0
        %v6120 = vadd.f32 %v6011, %v6119
        %v6121 = vpop.f32.mrf.mxu0
        %v6122 = vpop.f32.mrf.mxu0
        %v6123 = vadd.f32 %v6011, %v6122
        %v6124 = vpop.f32.mrf.mxu0
        %6125 = vmatprep.mubr.bf16.mxu0 0
        %6126 = vmatmul.mubr.bf16.gmra.mxu0 %v5977
        %v6127 = vpop.f32.mrf.mxu0
        %v6128 = vadd.f32 %v6011, %v6127
        %v6129 = vpop.f32.mrf.mxu0
        %v6130 = vpop.f32.mrf.mxu0
        %v6131 = vadd.f32 %v6011, %v6130
        %v6132 = vpop.f32.mrf.mxu0
        %6133 = vmatprep.mubr.bf16.mxu0 0
        %6134 = vmatmul.mubr.bf16.gmra.mxu0 %v5978
        %v6135 = vpop.f32.mrf.mxu0
        %v6136 = vadd.f32 %v6011, %v6135
        %v6137 = vpop.f32.mrf.mxu0
        %v6138 = vpop.f32.mrf.mxu0
        %v6139 = vadd.f32 %v6011, %v6138
        %v6140 = vpop.f32.mrf.mxu0
        %6141 = vmatprep.mubr.bf16.mxu0 0
        %6142 = vmatmul.mubr.bf16.gmra.mxu0 %v5979
        %v6143 = vpop.f32.mrf.mxu0
        %v6144 = vadd.f32 %v6011, %v6143
        %v6145 = vpop.f32.mrf.mxu0
        %v6146 = vpop.f32.mrf.mxu0
        %v6147 = vadd.f32 %v6011, %v6146
        %v6148 = vpop.f32.mrf.mxu0
        %6149 = vmatprep.mubr.bf16.mxu0 0
        %6150 = vmatmul.mubr.bf16.gmra.mxu0 %v5980
        %v6151 = vpop.f32.mrf.mxu0
        %v6152 = vadd.f32 %v6011, %v6151
        %v6153 = vpop.f32.mrf.mxu0
        %v6154 = vpop.f32.mrf.mxu0
        %v6155 = vadd.f32 %v6011, %v6154
        %v6156 = vpop.f32.mrf.mxu0
        %6157 = vmatprep.mubr.bf16.mxu0 0
        %6158 = vmatmul.mubr.bf16.gmra.mxu0 %v5981
        %v6159 = vpop.f32.mrf.mxu0
        %v6160 = vadd.f32 %v6011, %v6159
        %v6161 = vpop.f32.mrf.mxu0
        %v6162 = vpop.f32.mrf.mxu0
        %v6163 = vadd.f32 %v6011, %v6162
        %v6164 = vpop.f32.mrf.mxu0
        %6165 = vmatprep.mubr.bf16.mxu0 0
        %6166 = vmatmul.mubr.bf16.gmra.mxu0 %v5982
        %v6167 = vpop.f32.mrf.mxu0
        %v6168 = vadd.f32 %v6011, %v6167
        %v6169 = vpop.f32.mrf.mxu0
        %v6170 = vpop.f32.mrf.mxu0
        %v6171 = vadd.f32 %v6011, %v6170
        %v6172 = vpop.f32.mrf.mxu0
        %6173 = vmatprep.mubr.bf16.mxu0 0
        %6174 = vmatmul.mubr.bf16.gmra.mxu0 %v5983
        %v6175 = vpop.f32.mrf.mxu0
        %v6176 = vadd.f32 %v6011, %v6175
        %v6177 = vpop.f32.mrf.mxu0
        %v6178 = vpop.f32.mrf.mxu0
        %v6179 = vadd.f32 %v6011, %v6178
        %v6180 = vpop.f32.mrf.mxu0
        %6181 = vmatprep.mubr.bf16.mxu0 0
        %6182 = vmatmul.mubr.bf16.gmra.mxu0 %v5984
        %v6183 = vpop.f32.mrf.mxu0
        %v6184 = vadd.f32 %v6011, %v6183
        %v6185 = vpop.f32.mrf.mxu0
        %v6186 = vpop.f32.mrf.mxu0
        %v6187 = vadd.f32 %v6011, %v6186
        %v6188 = vpop.f32.mrf.mxu0
        %6189 = vmatprep.mubr.bf16.mxu0 0
        %6190 = vmatmul.mubr.bf16.gmra.mxu0 %v5985
        %v6191 = vpop.f32.mrf.mxu0
        %v6192 = vadd.f32 %v6011, %v6191
        %v6193 = vpop.f32.mrf.mxu0
        %v6194 = vpop.f32.mrf.mxu0
        %v6195 = vadd.f32 %v6011, %v6194
        %v6196 = vpop.f32.mrf.mxu0
        %6197 = vmatprep.mubr.bf16.mxu0 0
        %6198 = vmatmul.mubr.bf16.gmra.mxu0 %v5986
        %v6199 = vpop.f32.mrf.mxu0
        %v6200 = vadd.f32 %v6011, %v6199
        %v6201 = vpop.f32.mrf.mxu0
        %v6202 = vpop.f32.mrf.mxu0
        %v6203 = vadd.f32 %v6011, %v6202
        %v6204 = vpop.f32.mrf.mxu0
        %6205 = vmatprep.mubr.bf16.mxu0 0
        %6206 = vmatmul.mubr.bf16.gmra.mxu0 %v5987
        %v6207 = vpop.f32.mrf.mxu0
        %v6208 = vadd.f32 %v6011, %v6207
        %v6209 = vpop.f32.mrf.mxu0
        %v6210 = vpop.f32.mrf.mxu0
        %v6211 = vadd.f32 %v6011, %v6210
        %v6212 = vpop.f32.mrf.mxu0
        %6213 = vmatprep.mubr.bf16.mxu0 0
        %6214 = vmatmul.mubr.bf16.gmra.mxu0 %v5988
        %v6215 = vpop.f32.mrf.mxu0
        %v6216 = vadd.f32 %v6011, %v6215
        %v6217 = vpop.f32.mrf.mxu0
        %v6218 = vpop.f32.mrf.mxu0
        %v6219 = vadd.f32 %v6011, %v6218
        %v6220 = vpop.f32.mrf.mxu0
        %6221 = vmatprep.mubr.bf16.mxu0 0
        %6222 = vmatmul.mubr.bf16.gmra.mxu0 %v5989
        %v6223 = vpop.f32.mrf.mxu0
        %v6224 = vadd.f32 %v6011, %v6223
        %v6225 = vpop.f32.mrf.mxu0
        %v6226 = vpop.f32.mrf.mxu0
        %v6227 = vadd.f32 %v6011, %v6226
        %v6228 = vpop.f32.mrf.mxu0
        %6229 = vmatprep.mubr.bf16.mxu0 0
        %6230 = vmatmul.mubr.bf16.gmra.mxu0 %v5990
        %v6231 = vpop.f32.mrf.mxu0
        %v6232 = vadd.f32 %v6011, %v6231
        %v6233 = vpop.f32.mrf.mxu0
        %v6234 = vpop.f32.mrf.mxu0
        %v6235 = vadd.f32 %v6011, %v6234
        %v6236 = vpop.f32.mrf.mxu0
        %6237 = vmatprep.mubr.bf16.mxu0 0
        %6238 = vmatmul.mubr.bf16.gmra.mxu0 %v5991
        %v6239 = vpop.f32.mrf.mxu0
        %v6240 = vadd.f32 %v6011, %v6239
        %v6241 = vpop.f32.mrf.mxu0
        %v6242 = vpop.f32.mrf.mxu0
        %v6243 = vadd.f32 %v6011, %v6242
        %v6244 = vpop.f32.mrf.mxu0
        %6245 = vmatprep.mubr.bf16.mxu0 0
        %6246 = vmatmul.mubr.bf16.gmra.mxu0 %v5992
        %v6247 = vpop.f32.mrf.mxu0
        %v6248 = vadd.f32 %v6011, %v6247
        %v6249 = vpop.f32.mrf.mxu0
        %v6250 = vpop.f32.mrf.mxu0
        %v6251 = vadd.f32 %v6011, %v6250
        %v6252 = vpop.f32.mrf.mxu0
        %6253 = vmatprep.mubr.bf16.mxu0 0
        %6254 = vmatmul.mubr.bf16.gmra.mxu0 %v5993
        %v6255 = vpop.f32.mrf.mxu0
        %v6256 = vadd.f32 %v6011, %v6255
        %v6257 = vpop.f32.mrf.mxu0
        %v6258 = vpop.f32.mrf.mxu0
        %v6259 = vadd.f32 %v6011, %v6258
        %v6260 = vpop.f32.mrf.mxu0
        %6261 = vmatprep.mubr.bf16.mxu0 0
        %6262 = vmatmul.mubr.bf16.gmra.mxu0 %v5994
        %v6263 = vpop.f32.mrf.mxu0
        %v6264 = vadd.f32 %v6011, %v6263
        %v6265 = vpop.f32.mrf.mxu0
        %v6266 = vpop.f32.mrf.mxu0
        %v6267 = vadd.f32 %v6011, %v6266
        %v6268 = vpop.f32.mrf.mxu0
        %6269 = vmatprep.mubr.bf16.mxu0 0
        %6270 = vmatmul.mubr.bf16.gmra.mxu0 %v5995
        %v6271 = vpop.f32.mrf.mxu0
        %v6272 = vadd.f32 %v6011, %v6271
        %v6273 = vpop.f32.mrf.mxu0
        %v6274 = vpop.f32.mrf.mxu0
        %v6275 = vadd.f32 %v6011, %v6274
        %v6276 = vpop.f32.mrf.mxu0
        %6277 = vmatprep.mubr.bf16.mxu0 0
        %6278 = vmatmul.mubr.bf16.gmra.mxu0 %v5996
        %v6279 = vpop.f32.mrf.mxu0
        %v6280 = vadd.f32 %v6011, %v6279
        %v6281 = vpop.f32.mrf.mxu0
        %v6282 = vpop.f32.mrf.mxu0
        %v6283 = vadd.f32 %v6011, %v6282
        %v6284 = vpop.f32.mrf.mxu0
        %6285 = vmatprep.mubr.bf16.mxu0 0
        %6286 = vmatmul.mubr.bf16.gmra.mxu0 %v5997
        %v6287 = vpop.f32.mrf.mxu0
        %v6288 = vadd.f32 %v6011, %v6287
        %v6289 = vpop.f32.mrf.mxu0
        %v6290 = vpop.f32.mrf.mxu0
        %v6291 = vadd.f32 %v6011, %v6290
        %v6292 = vpop.f32.mrf.mxu0
        %6293 = vmatprep.mubr.bf16.mxu0 0
        %6294 = vmatmul.mubr.bf16.gmra.mxu0 %v5998
        %v6295 = vpop.f32.mrf.mxu0
        %v6296 = vadd.f32 %v6011, %v6295
        %v6297 = vpop.f32.mrf.mxu0
        %v6298 = vpop.f32.mrf.mxu0
        %v6299 = vadd.f32 %v6011, %v6298
        %v6300 = vpop.f32.mrf.mxu0
        %6301 = vmatprep.mubr.bf16.mxu0 0
        %6302 = vmatmul.mubr.bf16.gmra.mxu0 %v5999
        %v6303 = vpop.f32.mrf.mxu0
        %v6304 = vadd.f32 %v6011, %v6303
        %v6305 = vpop.f32.mrf.mxu0
        %v6306 = vpop.f32.mrf.mxu0
        %v6307 = vadd.f32 %v6011, %v6306
        %v6308 = vpop.f32.mrf.mxu0
        %6309 = vmatprep.mubr.bf16.mxu0 0
        %6310 = vmatmul.mubr.bf16.gmra.mxu0 %v6000
        %v6311 = vpop.f32.mrf.mxu0
        %v6312 = vadd.f32 %v6011, %v6311
        %v6313 = vpop.f32.mrf.mxu0
        %v6314 = vpop.f32.mrf.mxu0
        %v6315 = vadd.f32 %v6011, %v6314
        %v6316 = vpop.f32.mrf.mxu0
        %6317 = vmatprep.mubr.bf16.mxu0 0
        %6318 = vmatmul.mubr.bf16.gmra.mxu0 %v6001
        %v6319 = vpop.f32.mrf.mxu0
        %v6320 = vadd.f32 %v6011, %v6319
        %v6321 = vpop.f32.mrf.mxu0
        %v6322 = vpop.f32.mrf.mxu0
        %v6323 = vadd.f32 %v6011, %v6322
        %v6324 = vpop.f32.mrf.mxu0
        %6325 = vmatprep.mubr.bf16.mxu0 0
        %6326 = vmatmul.mubr.bf16.gmra.mxu0 %v6002
        %v6327 = vpop.f32.mrf.mxu0
        %v6328 = vadd.f32 %v6011, %v6327
        %v6329 = vpop.f32.mrf.mxu0
        %v6330 = vpop.f32.mrf.mxu0
        %v6331 = vadd.f32 %v6011, %v6330
        %v6332 = vpop.f32.mrf.mxu0
        %6333 = vmatprep.mubr.bf16.mxu0 0
        %6334 = vmatmul.mubr.bf16.gmra.mxu0 %v6003
        %v6335 = vpop.f32.mrf.mxu0
        %v6336 = vadd.f32 %v6011, %v6335
        %v6337 = vpop.f32.mrf.mxu0
        %v6338 = vpop.f32.mrf.mxu0
        %v6339 = vadd.f32 %v6011, %v6338
        %v6340 = vpop.f32.mrf.mxu0
        %6341 = vmatprep.mubr.bf16.mxu0 0
        %6342 = vmatmul.mubr.bf16.gmra.mxu0 %v6004
        %v6343 = vpop.f32.mrf.mxu0
        %v6344 = vadd.f32 %v6011, %v6343
        %v6345 = vpop.f32.mrf.mxu0
        %v6346 = vpop.f32.mrf.mxu0
        %v6347 = vadd.f32 %v6011, %v6346
        %v6348 = vpop.f32.mrf.mxu0
        %6349 = vdwg.mxu0
        %vm6350 = vcmp.gt.f32.partialorder %v6096, 0.0
        %vm6351 = vcmp.gt.f32.partialorder %v6099, 0.0
        %vm6352 = vcmp.gt.f32.partialorder %v6104, 0.0
        %vm6353 = vcmp.gt.f32.partialorder %v6107, 0.0
        %vm6354 = vcmp.gt.f32.partialorder %v6112, 0.0
        %vm6355 = vcmp.gt.f32.partialorder %v6115, 0.0
        %vm6356 = vcmp.gt.f32.partialorder %v6120, 0.0
        %vm6357 = vcmp.gt.f32.partialorder %v6123, 0.0
        %vm6358 = vcmp.gt.f32.partialorder %v6128, 0.0
        %vm6359 = vcmp.gt.f32.partialorder %v6131, 0.0
        %vm6360 = vcmp.gt.f32.partialorder %v6136, 0.0
        %vm6361 = vcmp.gt.f32.partialorder %v6139, 0.0
        %vm6362 = vcmp.gt.f32.partialorder %v6144, 0.0
        %vm6363 = vcmp.gt.f32.partialorder %v6147, 0.0
        %vm6364 = vcmp.gt.f32.partialorder %v6152, 0.0
        %vm6365 = vcmp.gt.f32.partialorder %v6155, 0.0
        %vm6366 = vcmp.gt.f32.partialorder %v6160, 0.0
        %vm6367 = vcmp.gt.f32.partialorder %v6163, 0.0
        %vm6368 = vcmp.gt.f32.partialorder %v6168, 0.0
        %vm6369 = vcmp.gt.f32.partialorder %v6171, 0.0
        %vm6370 = vcmp.gt.f32.partialorder %v6176, 0.0
        %vm6371 = vcmp.gt.f32.partialorder %v6179, 0.0
        %vm6372 = vcmp.gt.f32.partialorder %v6184, 0.0
        %vm6373 = vcmp.gt.f32.partialorder %v6187, 0.0
        %vm6374 = vcmp.gt.f32.partialorder %v6192, 0.0
        %vm6375 = vcmp.gt.f32.partialorder %v6195, 0.0
        %vm6376 = vcmp.gt.f32.partialorder %v6200, 0.0
        %vm6377 = vcmp.gt.f32.partialorder %v6203, 0.0
        %vm6378 = vcmp.gt.f32.partialorder %v6208, 0.0
        %vm6379 = vcmp.gt.f32.partialorder %v6211, 0.0
        %vm6380 = vcmp.gt.f32.partialorder %v6216, 0.0
        %vm6381 = vcmp.gt.f32.partialorder %v6219, 0.0
        %vm6382 = vcmp.gt.f32.partialorder %v6224, 0.0
        %vm6383 = vcmp.gt.f32.partialorder %v6227, 0.0
        %vm6384 = vcmp.gt.f32.partialorder %v6232, 0.0
        %vm6385 = vcmp.gt.f32.partialorder %v6235, 0.0
        %vm6386 = vcmp.gt.f32.partialorder %v6240, 0.0
        %vm6387 = vcmp.gt.f32.partialorder %v6243, 0.0
        %vm6388 = vcmp.gt.f32.partialorder %v6248, 0.0
        %vm6389 = vcmp.gt.f32.partialorder %v6251, 0.0
        %vm6390 = vcmp.gt.f32.partialorder %v6256, 0.0
        %vm6391 = vcmp.gt.f32.partialorder %v6259, 0.0
        %vm6392 = vcmp.gt.f32.partialorder %v6264, 0.0
        %vm6393 = vcmp.gt.f32.partialorder %v6267, 0.0
        %vm6394 = vcmp.gt.f32.partialorder %v6272, 0.0
        %vm6395 = vcmp.gt.f32.partialorder %v6275, 0.0
        %vm6396 = vcmp.gt.f32.partialorder %v6280, 0.0
        %vm6397 = vcmp.gt.f32.partialorder %v6283, 0.0
        %vm6398 = vcmp.gt.f32.partialorder %v6288, 0.0
        %vm6399 = vcmp.gt.f32.partialorder %v6291, 0.0
        %vm6400 = vcmp.gt.f32.partialorder %v6296, 0.0
        %vm6401 = vcmp.gt.f32.partialorder %v6299, 0.0
        %vm6402 = vcmp.gt.f32.partialorder %v6304, 0.0
        %vm6403 = vcmp.gt.f32.partialorder %v6307, 0.0
        %vm6404 = vcmp.gt.f32.partialorder %v6312, 0.0
        %vm6405 = vcmp.gt.f32.partialorder %v6315, 0.0
        %vm6406 = vcmp.gt.f32.partialorder %v6320, 0.0
        %vm6407 = vcmp.gt.f32.partialorder %v6323, 0.0
        %vm6408 = vcmp.gt.f32.partialorder %v6328, 0.0
        %vm6409 = vcmp.gt.f32.partialorder %v6331, 0.0
        %vm6410 = vcmp.gt.f32.partialorder %v6336, 0.0
        %vm6411 = vcmp.gt.f32.partialorder %v6339, 0.0
        %vm6412 = vcmp.gt.f32.partialorder %v6344, 0.0
        %vm6413 = vcmp.gt.f32.partialorder %v6347, 0.0
        %v6414 = vmin.f32 %v6096, 0.0
        %v6415 = vmin.f32 %v6099, 0.0
        %v6416 = vmin.f32 %v6104, 0.0
        %v6417 = vmin.f32 %v6107, 0.0
        %v6418 = vmin.f32 %v6112, 0.0
        %v6419 = vmin.f32 %v6115, 0.0
        %v6420 = vmin.f32 %v6120, 0.0
        %v6421 = vmin.f32 %v6123, 0.0
        %v6422 = vmin.f32 %v6128, 0.0
        %v6423 = vmin.f32 %v6131, 0.0
        %v6424 = vmin.f32 %v6136, 0.0
        %v6425 = vmin.f32 %v6139, 0.0
        %v6426 = vmin.f32 %v6144, 0.0
        %v6427 = vmin.f32 %v6147, 0.0
        %v6428 = vmin.f32 %v6152, 0.0
        %v6429 = vmin.f32 %v6155, 0.0
        %v6430 = vmin.f32 %v6160, 0.0
        %v6431 = vmin.f32 %v6163, 0.0
        %v6432 = vmin.f32 %v6168, 0.0
        %v6433 = vmin.f32 %v6171, 0.0
        %v6434 = vmin.f32 %v6176, 0.0
        %v6435 = vmin.f32 %v6179, 0.0
        %v6436 = vmin.f32 %v6184, 0.0
        %v6437 = vmin.f32 %v6187, 0.0
        %v6438 = vmin.f32 %v6192, 0.0
        %v6439 = vmin.f32 %v6195, 0.0
        %v6440 = vmin.f32 %v6200, 0.0
        %v6441 = vmin.f32 %v6203, 0.0
        %v6442 = vmin.f32 %v6208, 0.0
        %v6443 = vmin.f32 %v6211, 0.0
        %v6444 = vmin.f32 %v6216, 0.0
        %v6445 = vmin.f32 %v6219, 0.0
        %v6446 = vmin.f32 %v6224, 0.0
        %v6447 = vmin.f32 %v6227, 0.0
        %v6448 = vmin.f32 %v6232, 0.0
        %v6449 = vmin.f32 %v6235, 0.0
        %v6450 = vmin.f32 %v6240, 0.0
        %v6451 = vmin.f32 %v6243, 0.0
        %v6452 = vmin.f32 %v6248, 0.0
        %v6453 = vmin.f32 %v6251, 0.0
        %v6454 = vmin.f32 %v6256, 0.0
        %v6455 = vmin.f32 %v6259, 0.0
        %v6456 = vmin.f32 %v6264, 0.0
        %v6457 = vmin.f32 %v6267, 0.0
        %v6458 = vmin.f32 %v6272, 0.0
        %v6459 = vmin.f32 %v6275, 0.0
        %v6460 = vmin.f32 %v6280, 0.0
        %v6461 = vmin.f32 %v6283, 0.0
        %v6462 = vmin.f32 %v6288, 0.0
        %v6463 = vmin.f32 %v6291, 0.0
        %v6464 = vmin.f32 %v6296, 0.0
        %v6465 = vmin.f32 %v6299, 0.0
        %v6466 = vmin.f32 %v6304, 0.0
        %v6467 = vmin.f32 %v6307, 0.0
        %v6468 = vmin.f32 %v6312, 0.0
        %v6469 = vmin.f32 %v6315, 0.0
        %v6470 = vmin.f32 %v6320, 0.0
        %v6471 = vmin.f32 %v6323, 0.0
        %v6472 = vmin.f32 %v6328, 0.0
        %v6473 = vmin.f32 %v6331, 0.0
        %v6474 = vmin.f32 %v6336, 0.0
        %v6475 = vmin.f32 %v6339, 0.0
        %v6476 = vmin.f32 %v6344, 0.0
        %v6477 = vmin.f32 %v6347, 0.0
        %v6478 = vmul.f32 %v6414, 1.442695
        %v6479 = vpow.pop %v6478
        %v6480 = vmul.f32 %v6415, 1.442695
        %v6481 = vpow.pop %v6480
        %v6482 = vmul.f32 %v6416, 1.442695
        %v6483 = vpow.pop %v6482
        %v6484 = vmul.f32 %v6417, 1.442695
        %v6485 = vpow.pop %v6484
        %v6486 = vmul.f32 %v6418, 1.442695
        %v6487 = vpow.pop %v6486
        %v6488 = vmul.f32 %v6419, 1.442695
        %v6489 = vpow.pop %v6488
        %v6490 = vmul.f32 %v6420, 1.442695
        %v6491 = vpow.pop %v6490
        %v6492 = vmul.f32 %v6421, 1.442695
        %v6493 = vpow.pop %v6492
        %v6494 = vmul.f32 %v6422, 1.442695
        %v6495 = vpow.pop %v6494
        %v6496 = vmul.f32 %v6423, 1.442695
        %v6497 = vpow.pop %v6496
        %v6498 = vmul.f32 %v6424, 1.442695
        %v6499 = vpow.pop %v6498
        %v6500 = vmul.f32 %v6425, 1.442695
        %v6501 = vpow.pop %v6500
        %v6502 = vmul.f32 %v6426, 1.442695
        %v6503 = vpow.pop %v6502
        %v6504 = vmul.f32 %v6427, 1.442695
        %v6505 = vpow.pop %v6504
        %v6506 = vmul.f32 %v6428, 1.442695
        %v6507 = vpow.pop %v6506
        %v6508 = vmul.f32 %v6429, 1.442695
        %v6509 = vpow.pop %v6508
        %v6510 = vmul.f32 %v6430, 1.442695
        %v6511 = vpow.pop %v6510
        %v6512 = vmul.f32 %v6431, 1.442695
        %v6513 = vpow.pop %v6512
        %v6514 = vmul.f32 %v6432, 1.442695
        %v6515 = vpow.pop %v6514
        %v6516 = vmul.f32 %v6433, 1.442695
        %v6517 = vpow.pop %v6516
        %v6518 = vmul.f32 %v6434, 1.442695
        %v6519 = vpow.pop %v6518
        %v6520 = vmul.f32 %v6435, 1.442695
        %v6521 = vpow.pop %v6520
        %v6522 = vmul.f32 %v6436, 1.442695
        %v6523 = vpow.pop %v6522
        %v6524 = vmul.f32 %v6437, 1.442695
        %v6525 = vpow.pop %v6524
        %v6526 = vmul.f32 %v6438, 1.442695
        %v6527 = vpow.pop %v6526
        %v6528 = vmul.f32 %v6439, 1.442695
        %v6529 = vpow.pop %v6528
        %v6530 = vmul.f32 %v6440, 1.442695
        %v6531 = vpow.pop %v6530
        %v6532 = vmul.f32 %v6441, 1.442695
        %v6533 = vpow.pop %v6532
        %v6534 = vmul.f32 %v6442, 1.442695
        %v6535 = vpow.pop %v6534
        %v6536 = vmul.f32 %v6443, 1.442695
        %v6537 = vpow.pop %v6536
        %v6538 = vmul.f32 %v6444, 1.442695
        %v6539 = vpow.pop %v6538
        %v6540 = vmul.f32 %v6445, 1.442695
        %v6541 = vpow.pop %v6540
        %v6542 = vmul.f32 %v6446, 1.442695
        %v6543 = vpow.pop %v6542
        %v6544 = vmul.f32 %v6447, 1.442695
        %v6545 = vpow.pop %v6544
        %v6546 = vmul.f32 %v6448, 1.442695
        %v6547 = vpow.pop %v6546
        %v6548 = vmul.f32 %v6449, 1.442695
        %v6549 = vpow.pop %v6548
        %v6550 = vmul.f32 %v6450, 1.442695
        %v6551 = vpow.pop %v6550
        %v6552 = vmul.f32 %v6451, 1.442695
        %v6553 = vpow.pop %v6552
        %v6554 = vmul.f32 %v6452, 1.442695
        %v6555 = vpow.pop %v6554
        %v6556 = vmul.f32 %v6453, 1.442695
        %v6557 = vpow.pop %v6556
        %v6558 = vmul.f32 %v6454, 1.442695
        %v6559 = vpow.pop %v6558
        %v6560 = vmul.f32 %v6455, 1.442695
        %v6561 = vpow.pop %v6560
        %v6562 = vmul.f32 %v6456, 1.442695
        %v6563 = vpow.pop %v6562
        %v6564 = vmul.f32 %v6457, 1.442695
        %v6565 = vpow.pop %v6564
        %v6566 = vmul.f32 %v6458, 1.442695
        %v6567 = vpow.pop %v6566
        %v6568 = vmul.f32 %v6459, 1.442695
        %v6569 = vpow.pop %v6568
        %v6570 = vmul.f32 %v6460, 1.442695
        %v6571 = vpow.pop %v6570
        %v6572 = vmul.f32 %v6461, 1.442695
        %v6573 = vpow.pop %v6572
        %v6574 = vmul.f32 %v6462, 1.442695
        %v6575 = vpow.pop %v6574
        %v6576 = vmul.f32 %v6463, 1.442695
        %v6577 = vpow.pop %v6576
        %v6578 = vmul.f32 %v6464, 1.442695
        %v6579 = vpow.pop %v6578
        %v6580 = vmul.f32 %v6465, 1.442695
        %v6581 = vpow.pop %v6580
        %v6582 = vmul.f32 %v6466, 1.442695
        %v6583 = vpow.pop %v6582
        %v6584 = vmul.f32 %v6467, 1.442695
        %v6585 = vpow.pop %v6584
        %v6586 = vmul.f32 %v6468, 1.442695
        %v6587 = vpow.pop %v6586
        %v6588 = vmul.f32 %v6469, 1.442695
        %v6589 = vpow.pop %v6588
        %v6590 = vmul.f32 %v6470, 1.442695
        %v6591 = vpow.pop %v6590
        %v6592 = vmul.f32 %v6471, 1.442695
        %v6593 = vpow.pop %v6592
        %v6594 = vmul.f32 %v6472, 1.442695
        %v6595 = vpow.pop %v6594
        %v6596 = vmul.f32 %v6473, 1.442695
        %v6597 = vpow.pop %v6596
        %v6598 = vmul.f32 %v6474, 1.442695
        %v6599 = vpow.pop %v6598
        %v6600 = vmul.f32 %v6475, 1.442695
        %v6601 = vpow.pop %v6600
        %v6602 = vmul.f32 %v6476, 1.442695
        %v6603 = vpow.pop %v6602
        %v6604 = vmul.f32 %v6477, 1.442695
        %v6605 = vpow.pop %v6604
        %v6606 = vsub.f32 %v6479, 1.0
        %v6607 = vsub.f32 %v6481, 1.0
        %v6608 = vsub.f32 %v6483, 1.0
        %v6609 = vsub.f32 %v6485, 1.0
        %v6610 = vsub.f32 %v6487, 1.0
        %v6611 = vsub.f32 %v6489, 1.0
        %v6612 = vsub.f32 %v6491, 1.0
        %v6613 = vsub.f32 %v6493, 1.0
        %v6614 = vsub.f32 %v6495, 1.0
        %v6615 = vsub.f32 %v6497, 1.0
        %v6616 = vsub.f32 %v6499, 1.0
        %v6617 = vsub.f32 %v6501, 1.0
        %v6618 = vsub.f32 %v6503, 1.0
        %v6619 = vsub.f32 %v6505, 1.0
        %v6620 = vsub.f32 %v6507, 1.0
        %v6621 = vsub.f32 %v6509, 1.0
        %v6622 = vsub.f32 %v6511, 1.0
        %v6623 = vsub.f32 %v6513, 1.0
        %v6624 = vsub.f32 %v6515, 1.0
        %v6625 = vsub.f32 %v6517, 1.0
        %v6626 = vsub.f32 %v6519, 1.0
        %v6627 = vsub.f32 %v6521, 1.0
        %v6628 = vsub.f32 %v6523, 1.0
        %v6629 = vsub.f32 %v6525, 1.0
        %v6630 = vsub.f32 %v6527, 1.0
        %v6631 = vsub.f32 %v6529, 1.0
        %v6632 = vsub.f32 %v6531, 1.0
        %v6633 = vsub.f32 %v6533, 1.0
        %v6634 = vsub.f32 %v6535, 1.0
        %v6635 = vsub.f32 %v6537, 1.0
        %v6636 = vsub.f32 %v6539, 1.0
        %v6637 = vsub.f32 %v6541, 1.0
        %v6638 = vsub.f32 %v6543, 1.0
        %v6639 = vsub.f32 %v6545, 1.0
        %v6640 = vsub.f32 %v6547, 1.0
        %v6641 = vsub.f32 %v6549, 1.0
        %v6642 = vsub.f32 %v6551, 1.0
        %v6643 = vsub.f32 %v6553, 1.0
        %v6644 = vsub.f32 %v6555, 1.0
        %v6645 = vsub.f32 %v6557, 1.0
        %v6646 = vsub.f32 %v6559, 1.0
        %v6647 = vsub.f32 %v6561, 1.0
        %v6648 = vsub.f32 %v6563, 1.0
        %v6649 = vsub.f32 %v6565, 1.0
        %v6650 = vsub.f32 %v6567, 1.0
        %v6651 = vsub.f32 %v6569, 1.0
        %v6652 = vsub.f32 %v6571, 1.0
        %v6653 = vsub.f32 %v6573, 1.0
        %v6654 = vsub.f32 %v6575, 1.0
        %v6655 = vsub.f32 %v6577, 1.0
        %v6656 = vsub.f32 %v6579, 1.0
        %v6657 = vsub.f32 %v6581, 1.0
        %v6658 = vsub.f32 %v6583, 1.0
        %v6659 = vsub.f32 %v6585, 1.0
        %v6660 = vsub.f32 %v6587, 1.0
        %v6661 = vsub.f32 %v6589, 1.0
        %v6662 = vsub.f32 %v6591, 1.0
        %v6663 = vsub.f32 %v6593, 1.0
        %v6664 = vsub.f32 %v6595, 1.0
        %v6665 = vsub.f32 %v6597, 1.0
        %v6666 = vsub.f32 %v6599, 1.0
        %v6667 = vsub.f32 %v6601, 1.0
        %v6668 = vsub.f32 %v6603, 1.0
        %v6669 = vsub.f32 %v6605, 1.0
        %v6670 = vmul.f32 %v6606, 1.6732632
        %v6671 = vmul.f32 %v6607, 1.6732632
        %v6672 = vmul.f32 %v6608, 1.6732632
        %v6673 = vmul.f32 %v6609, 1.6732632
        %v6674 = vmul.f32 %v6610, 1.6732632
        %v6675 = vmul.f32 %v6611, 1.6732632
        %v6676 = vmul.f32 %v6612, 1.6732632
        %v6677 = vmul.f32 %v6613, 1.6732632
        %v6678 = vmul.f32 %v6614, 1.6732632
        %v6679 = vmul.f32 %v6615, 1.6732632
        %v6680 = vmul.f32 %v6616, 1.6732632
        %v6681 = vmul.f32 %v6617, 1.6732632
        %v6682 = vmul.f32 %v6618, 1.6732632
        %v6683 = vmul.f32 %v6619, 1.6732632
        %v6684 = vmul.f32 %v6620, 1.6732632
        %v6685 = vmul.f32 %v6621, 1.6732632
        %v6686 = vmul.f32 %v6622, 1.6732632
        %v6687 = vmul.f32 %v6623, 1.6732632
        %v6688 = vmul.f32 %v6624, 1.6732632
        %v6689 = vmul.f32 %v6625, 1.6732632
        %v6690 = vmul.f32 %v6626, 1.6732632
        %v6691 = vmul.f32 %v6627, 1.6732632
        %v6692 = vmul.f32 %v6628, 1.6732632
        %v6693 = vmul.f32 %v6629, 1.6732632
        %v6694 = vmul.f32 %v6630, 1.6732632
        %v6695 = vmul.f32 %v6631, 1.6732632
        %v6696 = vmul.f32 %v6632, 1.6732632
        %v6697 = vmul.f32 %v6633, 1.6732632
        %v6698 = vmul.f32 %v6634, 1.6732632
        %v6699 = vmul.f32 %v6635, 1.6732632
        %v6700 = vmul.f32 %v6636, 1.6732632
        %v6701 = vmul.f32 %v6637, 1.6732632
        %v6702 = vmul.f32 %v6638, 1.6732632
        %v6703 = vmul.f32 %v6639, 1.6732632
        %v6704 = vmul.f32 %v6640, 1.6732632
        %v6705 = vmul.f32 %v6641, 1.6732632
        %v6706 = vmul.f32 %v6642, 1.6732632
        %v6707 = vmul.f32 %v6643, 1.6732632
        %v6708 = vmul.f32 %v6644, 1.6732632
        %v6709 = vmul.f32 %v6645, 1.6732632
        %v6710 = vmul.f32 %v6646, 1.6732632
        %v6711 = vmul.f32 %v6647, 1.6732632
        %v6712 = vmul.f32 %v6648, 1.6732632
        %v6713 = vmul.f32 %v6649, 1.6732632
        %v6714 = vmul.f32 %v6650, 1.6732632
        %v6715 = vmul.f32 %v6651, 1.6732632
        %v6716 = vmul.f32 %v6652, 1.6732632
        %v6717 = vmul.f32 %v6653, 1.6732632
        %v6718 = vmul.f32 %v6654, 1.6732632
        %v6719 = vmul.f32 %v6655, 1.6732632
        %v6720 = vmul.f32 %v6656, 1.6732632
        %v6721 = vmul.f32 %v6657, 1.6732632
        %v6722 = vmul.f32 %v6658, 1.6732632
        %v6723 = vmul.f32 %v6659, 1.6732632
        %v6724 = vmul.f32 %v6660, 1.6732632
        %v6725 = vmul.f32 %v6661, 1.6732632
        %v6726 = vmul.f32 %v6662, 1.6732632
        %v6727 = vmul.f32 %v6663, 1.6732632
        %v6728 = vmul.f32 %v6664, 1.6732632
        %v6729 = vmul.f32 %v6665, 1.6732632
        %v6730 = vmul.f32 %v6666, 1.6732632
        %v6731 = vmul.f32 %v6667, 1.6732632
        %v6732 = vmul.f32 %v6668, 1.6732632
        %v6733 = vmul.f32 %v6669, 1.6732632
        %v6734 = vsel %vm6350, %v6096, %v6670
        %v6735 = vsel %vm6351, %v6099, %v6671
        %v6736 = vsel %vm6352, %v6104, %v6672
        %v6737 = vsel %vm6353, %v6107, %v6673
        %v6738 = vsel %vm6354, %v6112, %v6674
        %v6739 = vsel %vm6355, %v6115, %v6675
        %v6740 = vsel %vm6356, %v6120, %v6676
        %v6741 = vsel %vm6357, %v6123, %v6677
        %v6742 = vsel %vm6358, %v6128, %v6678
        %v6743 = vsel %vm6359, %v6131, %v6679
        %v6744 = vsel %vm6360, %v6136, %v6680
        %v6745 = vsel %vm6361, %v6139, %v6681
        %v6746 = vsel %vm6362, %v6144, %v6682
        %v6747 = vsel %vm6363, %v6147, %v6683
        %v6748 = vsel %vm6364, %v6152, %v6684
        %v6749 = vsel %vm6365, %v6155, %v6685
        %v6750 = vsel %vm6366, %v6160, %v6686
        %v6751 = vsel %vm6367, %v6163, %v6687
        %v6752 = vsel %vm6368, %v6168, %v6688
        %v6753 = vsel %vm6369, %v6171, %v6689
        %v6754 = vsel %vm6370, %v6176, %v6690
        %v6755 = vsel %vm6371, %v6179, %v6691
        %v6756 = vsel %vm6372, %v6184, %v6692
        %v6757 = vsel %vm6373, %v6187, %v6693
        %v6758 = vsel %vm6374, %v6192, %v6694
        %v6759 = vsel %vm6375, %v6195, %v6695
        %v6760 = vsel %vm6376, %v6200, %v6696
        %v6761 = vsel %vm6377, %v6203, %v6697
        %v6762 = vsel %vm6378, %v6208, %v6698
        %v6763 = vsel %vm6379, %v6211, %v6699
        %v6764 = vsel %vm6380, %v6216, %v6700
        %v6765 = vsel %vm6381, %v6219, %v6701
        %v6766 = vsel %vm6382, %v6224, %v6702
        %v6767 = vsel %vm6383, %v6227, %v6703
        %v6768 = vsel %vm6384, %v6232, %v6704
        %v6769 = vsel %vm6385, %v6235, %v6705
        %v6770 = vsel %vm6386, %v6240, %v6706
        %v6771 = vsel %vm6387, %v6243, %v6707
        %v6772 = vsel %vm6388, %v6248, %v6708
        %v6773 = vsel %vm6389, %v6251, %v6709
        %v6774 = vsel %vm6390, %v6256, %v6710
        %v6775 = vsel %vm6391, %v6259, %v6711
        %v6776 = vsel %vm6392, %v6264, %v6712
        %v6777 = vsel %vm6393, %v6267, %v6713
        %v6778 = vsel %vm6394, %v6272, %v6714
        %v6779 = vsel %vm6395, %v6275, %v6715
        %v6780 = vsel %vm6396, %v6280, %v6716
        %v6781 = vsel %vm6397, %v6283, %v6717
        %v6782 = vsel %vm6398, %v6288, %v6718
        %v6783 = vsel %vm6399, %v6291, %v6719
        %v6784 = vsel %vm6400, %v6296, %v6720
        %v6785 = vsel %vm6401, %v6299, %v6721
        %v6786 = vsel %vm6402, %v6304, %v6722
        %v6787 = vsel %vm6403, %v6307, %v6723
        %v6788 = vsel %vm6404, %v6312, %v6724
        %v6789 = vsel %vm6405, %v6315, %v6725
        %v6790 = vsel %vm6406, %v6320, %v6726
        %v6791 = vsel %vm6407, %v6323, %v6727
        %v6792 = vsel %vm6408, %v6328, %v6728
        %v6793 = vsel %vm6409, %v6331, %v6729
        %v6794 = vsel %vm6410, %v6336, %v6730
        %v6795 = vsel %vm6411, %v6339, %v6731
        %v6796 = vsel %vm6412, %v6344, %v6732
        %v6797 = vsel %vm6413, %v6347, %v6733
        %v6798 = vmul.f32 %v6734, 1.050701
        %v6799 = vmul.f32 %v6735, 1.050701
        %v6800 = vmul.f32 %v6736, 1.050701
        %v6801 = vmul.f32 %v6737, 1.050701
        %v6802 = vmul.f32 %v6738, 1.050701
        %v6803 = vmul.f32 %v6739, 1.050701
        %v6804 = vmul.f32 %v6740, 1.050701
        %v6805 = vmul.f32 %v6741, 1.050701
        %v6806 = vmul.f32 %v6742, 1.050701
        %v6807 = vmul.f32 %v6743, 1.050701
        %v6808 = vmul.f32 %v6744, 1.050701
        %v6809 = vmul.f32 %v6745, 1.050701
        %v6810 = vmul.f32 %v6746, 1.050701
        %v6811 = vmul.f32 %v6747, 1.050701
        %v6812 = vmul.f32 %v6748, 1.050701
        %v6813 = vmul.f32 %v6749, 1.050701
        %v6814 = vmul.f32 %v6750, 1.050701
        %v6815 = vmul.f32 %v6751, 1.050701
        %v6816 = vmul.f32 %v6752, 1.050701
        %v6817 = vmul.f32 %v6753, 1.050701
        %v6818 = vmul.f32 %v6754, 1.050701
        %v6819 = vmul.f32 %v6755, 1.050701
        %v6820 = vmul.f32 %v6756, 1.050701
        %v6821 = vmul.f32 %v6757, 1.050701
        %v6822 = vmul.f32 %v6758, 1.050701
        %v6823 = vmul.f32 %v6759, 1.050701
        %v6824 = vmul.f32 %v6760, 1.050701
        %v6825 = vmul.f32 %v6761, 1.050701
        %v6826 = vmul.f32 %v6762, 1.050701
        %v6827 = vmul.f32 %v6763, 1.050701
        %v6828 = vmul.f32 %v6764, 1.050701
        %v6829 = vmul.f32 %v6765, 1.050701
        %v6830 = vmul.f32 %v6766, 1.050701
        %v6831 = vmul.f32 %v6767, 1.050701
        %v6832 = vmul.f32 %v6768, 1.050701
        %v6833 = vmul.f32 %v6769, 1.050701
        %v6834 = vmul.f32 %v6770, 1.050701
        %v6835 = vmul.f32 %v6771, 1.050701
        %v6836 = vmul.f32 %v6772, 1.050701
        %v6837 = vmul.f32 %v6773, 1.050701
        %v6838 = vmul.f32 %v6774, 1.050701
        %v6839 = vmul.f32 %v6775, 1.050701
        %v6840 = vmul.f32 %v6776, 1.050701
        %v6841 = vmul.f32 %v6777, 1.050701
        %v6842 = vmul.f32 %v6778, 1.050701
        %v6843 = vmul.f32 %v6779, 1.050701
        %v6844 = vmul.f32 %v6780, 1.050701
        %v6845 = vmul.f32 %v6781, 1.050701
        %v6846 = vmul.f32 %v6782, 1.050701
        %v6847 = vmul.f32 %v6783, 1.050701
        %v6848 = vmul.f32 %v6784, 1.050701
        %v6849 = vmul.f32 %v6785, 1.050701
        %v6850 = vmul.f32 %v6786, 1.050701
        %v6851 = vmul.f32 %v6787, 1.050701
        %v6852 = vmul.f32 %v6788, 1.050701
        %v6853 = vmul.f32 %v6789, 1.050701
        %v6854 = vmul.f32 %v6790, 1.050701
        %v6855 = vmul.f32 %v6791, 1.050701
        %v6856 = vmul.f32 %v6792, 1.050701
        %v6857 = vmul.f32 %v6793, 1.050701
        %v6858 = vmul.f32 %v6794, 1.050701
        %v6859 = vmul.f32 %v6795, 1.050701
        %v6860 = vmul.f32 %v6796, 1.050701
        %v6861 = vmul.f32 %v6797, 1.050701
        %s6862 = scalar_lea.vmem [#allocation11], 128
        %v6863 = vld [vmem:[%s6862] sm:$0xff]
        %v6864 = vld [vmem:[%s6862 + $0x8] sm:$0xff]
        %v6865 = vld [vmem:[%s6862 + $0x10] sm:$0xff]
        %v6866 = vld [vmem:[%s6862 + $0x18] sm:$0xff]
        %v6867 = vld [vmem:[%s6862 + $0x20] sm:$0xff]
        %v6868 = vld [vmem:[%s6862 + $0x28] sm:$0xff]
        %v6869 = vld [vmem:[%s6862 + $0x30] sm:$0xff]
        %v6870 = vld [vmem:[%s6862 + $0x38] sm:$0xff]
        %v6871 = vld [vmem:[%s6862 + $0x40] sm:$0xff]
        %v6872 = vld [vmem:[%s6862 + $0x48] sm:$0xff]
        %v6873 = vld [vmem:[%s6862 + $0x50] sm:$0xff]
        %v6874 = vld [vmem:[%s6862 + $0x58] sm:$0xff]
        %v6875 = vld [vmem:[%s6862 + $0x60] sm:$0xff]
        %v6876 = vld [vmem:[%s6862 + $0x68] sm:$0xff]
        %v6877 = vld [vmem:[%s6862 + $0x70] sm:$0xff]
        %v6878 = vld [vmem:[%s6862 + $0x78] sm:$0xff]
        %v6879 = vpack.c.bf16 %v6799, %v6798
        %v6880 = vpack.c.bf16 %v6801, %v6800
        %v6881 = vpack.c.bf16 %v6803, %v6802
        %v6882 = vpack.c.bf16 %v6805, %v6804
        %v6883 = vpack.c.bf16 %v6807, %v6806
        %v6884 = vpack.c.bf16 %v6809, %v6808
        %v6885 = vpack.c.bf16 %v6811, %v6810
        %v6886 = vpack.c.bf16 %v6813, %v6812
        %v6887 = vpack.c.bf16 %v6815, %v6814
        %v6888 = vpack.c.bf16 %v6817, %v6816
        %v6889 = vpack.c.bf16 %v6819, %v6818
        %v6890 = vpack.c.bf16 %v6821, %v6820
        %v6891 = vpack.c.bf16 %v6823, %v6822
        %v6892 = vpack.c.bf16 %v6825, %v6824
        %v6893 = vpack.c.bf16 %v6827, %v6826
        %v6894 = vpack.c.bf16 %v6829, %v6828
        %v6895 = vpack.c.bf16 %v6831, %v6830
        %v6896 = vpack.c.bf16 %v6833, %v6832
        %v6897 = vpack.c.bf16 %v6835, %v6834
        %v6898 = vpack.c.bf16 %v6837, %v6836
        %v6899 = vpack.c.bf16 %v6839, %v6838
        %v6900 = vpack.c.bf16 %v6841, %v6840
        %v6901 = vpack.c.bf16 %v6843, %v6842
        %v6902 = vpack.c.bf16 %v6845, %v6844
        %v6903 = vpack.c.bf16 %v6847, %v6846
        %v6904 = vpack.c.bf16 %v6849, %v6848
        %v6905 = vpack.c.bf16 %v6851, %v6850
        %v6906 = vpack.c.bf16 %v6853, %v6852
        %v6907 = vpack.c.bf16 %v6855, %v6854
        %v6908 = vpack.c.bf16 %v6857, %v6856
        %v6909 = vpack.c.bf16 %v6859, %v6858
        %v6910 = vpack.c.bf16 %v6861, %v6860
        %s6911 = scalar_lea.vmem %s9, 2
        %v6912 = vld [vmem:[%s6911] sm:$0x3]
        %v6914 = vlaneseq
        %v6915 = vshrl.u32 %v6914, 7
        %v6916 = vsub.s32 0, %v6915
        %v6917 = vrot.slane %v6912, %v6916
        %v6918 = vlaneseq
        %v6919 = vshrl.u32 %v6918, 7
        %v6920 = vsub.s32 1, %v6919
        %v6921 = vrot.slane %v6912, %v6920
        %v6940 = vunpack.c.l.b16 %v6863
        %v6941 = vunpack.c.h.b16 %v6863
        %v6942 = vunpack.c.l.b16 %v6864
        %v6943 = vunpack.c.h.b16 %v6864
        %v6944 = vunpack.c.l.b16 %v6865
        %v6945 = vunpack.c.h.b16 %v6865
        %v6946 = vunpack.c.l.b16 %v6866
        %v6947 = vunpack.c.h.b16 %v6866
        %v6948 = vunpack.c.l.b16 %v6867
        %v6949 = vunpack.c.h.b16 %v6867
        %v6950 = vunpack.c.l.b16 %v6868
        %v6951 = vunpack.c.h.b16 %v6868
        %v6952 = vunpack.c.l.b16 %v6869
        %v6953 = vunpack.c.h.b16 %v6869
        %v6954 = vunpack.c.l.b16 %v6870
        %v6955 = vunpack.c.h.b16 %v6870
        %v6956 = vunpack.c.l.b16 %v6871
        %v6957 = vunpack.c.h.b16 %v6871
        %v6958 = vunpack.c.l.b16 %v6872
        %v6959 = vunpack.c.h.b16 %v6872
        %v6960 = vunpack.c.l.b16 %v6873
        %v6961 = vunpack.c.h.b16 %v6873
        %v6962 = vunpack.c.l.b16 %v6874
        %v6963 = vunpack.c.h.b16 %v6874
        %v6964 = vunpack.c.l.b16 %v6875
        %v6965 = vunpack.c.h.b16 %v6875
        %v6966 = vunpack.c.l.b16 %v6876
        %v6967 = vunpack.c.h.b16 %v6876
        %v6968 = vunpack.c.l.b16 %v6877
        %v6969 = vunpack.c.h.b16 %v6877
        %v6970 = vunpack.c.l.b16 %v6878
        %v6971 = vunpack.c.h.b16 %v6878
        %v6972 = vpack.c.b16 %v6942, %v6940
        %v6973 = vpack.c.b16 %v6943, %v6941
        %v6974 = vpack.c.b16 %v6946, %v6944
        %v6975 = vpack.c.b16 %v6947, %v6945
        %v6976 = vpack.c.b16 %v6950, %v6948
        %v6977 = vpack.c.b16 %v6951, %v6949
        %v6978 = vpack.c.b16 %v6954, %v6952
        %v6979 = vpack.c.b16 %v6955, %v6953
        %v6980 = vpack.c.b16 %v6958, %v6956
        %v6981 = vpack.c.b16 %v6959, %v6957
        %v6982 = vpack.c.b16 %v6962, %v6960
        %v6983 = vpack.c.b16 %v6963, %v6961
        %v6984 = vpack.c.b16 %v6966, %v6964
        %v6985 = vpack.c.b16 %v6967, %v6965
        %v6986 = vpack.c.b16 %v6970, %v6968
        %v6987 = vpack.c.b16 %v6971, %v6969
        %7004 = vmatprep.subr.bf16.mxu0 %v6987
        %7005 = vmatpush1.bf16.msra.mxu0 %v6986
        %7006 = vmatprep.subr.bf16.mxu0 %v6985
        %7007 = vmatpush1.bf16.msra.mxu0 %v6984
        %7008 = vmatprep.subr.bf16.mxu0 %v6983
        %7009 = vmatpush1.bf16.msra.mxu0 %v6982
        %7010 = vmatprep.subr.bf16.mxu0 %v6981
        %7011 = vmatpush1.bf16.msra.mxu0 %v6980
        %7012 = vmatprep.subr.bf16.mxu0 %v6979
        %7013 = vmatpush1.bf16.msra.mxu0 %v6978
        %7014 = vmatprep.subr.bf16.mxu0 %v6977
        %7015 = vmatpush1.bf16.msra.mxu0 %v6976
        %7016 = vmatprep.subr.bf16.mxu0 %v6975
        %7017 = vmatpush1.bf16.msra.mxu0 %v6974
        %7018 = vmatprep.subr.bf16.mxu0 %v6973
        %7019 = vmatpush1.bf16.msra.mxu0 %v6972
        %7020 = vmatprep.subr.bf16.mxu0 0
        %7021 = vmatpush2.bf16.msra.mxu0 0
        %7022 = vmatprep.subr.bf16.mxu0 0
        %7023 = vmatpush2.bf16.msra.mxu0 0
        %7024 = vmatprep.subr.bf16.mxu0 0
        %7025 = vmatpush2.bf16.msra.mxu0 0
        %7026 = vmatprep.subr.bf16.mxu0 0
        %7027 = vmatpush2.bf16.msra.mxu0 0
        %7028 = vmatprep.subr.bf16.mxu0 0
        %7029 = vmatpush2.bf16.msra.mxu0 0
        %7030 = vmatprep.subr.bf16.mxu0 0
        %7031 = vmatpush2.bf16.msra.mxu0 0
        %7032 = vmatprep.subr.bf16.mxu0 0
        %7033 = vmatpush2.bf16.msra.mxu0 0
        %7034 = vmatprep.subr.bf16.mxu0 0
        %7035 = vmatpush2.bf16.msra.mxu0 0
        %7036 = vmatprep.mubr.bf16.mxu0 0
        %7037 = vmatmul.mubr.bf16.gmra.mxu0 %v6879
        %v7038 = vpop.f32.mrf.mxu0
        %v7039 = vadd.f32 %v6917, %v7038
        %v7040 = vpop.f32.mrf.mxu0
        %v7041 = vadd.f32 %v6921, %v7040
        %v7042 = vpop.f32.mrf.mxu0
        %v7043 = vadd.f32 %v6917, %v7042
        %v7044 = vpop.f32.mrf.mxu0
        %v7045 = vadd.f32 %v6921, %v7044
        %7046 = vmatprep.mubr.bf16.mxu0 0
        %7047 = vmatmul.mubr.bf16.gmra.mxu0 %v6880
        %v7048 = vpop.f32.mrf.mxu0
        %v7049 = vadd.f32 %v6917, %v7048
        %v7050 = vpop.f32.mrf.mxu0
        %v7051 = vadd.f32 %v6921, %v7050
        %v7052 = vpop.f32.mrf.mxu0
        %v7053 = vadd.f32 %v6917, %v7052
        %v7054 = vpop.f32.mrf.mxu0
        %v7055 = vadd.f32 %v6921, %v7054
        %7056 = vmatprep.mubr.bf16.mxu0 0
        %7057 = vmatmul.mubr.bf16.gmra.mxu0 %v6881
        %v7058 = vpop.f32.mrf.mxu0
        %v7059 = vadd.f32 %v6917, %v7058
        %v7060 = vpop.f32.mrf.mxu0
        %v7061 = vadd.f32 %v6921, %v7060
        %v7062 = vpop.f32.mrf.mxu0
        %v7063 = vadd.f32 %v6917, %v7062
        %v7064 = vpop.f32.mrf.mxu0
        %v7065 = vadd.f32 %v6921, %v7064
        %7066 = vmatprep.mubr.bf16.mxu0 0
        %7067 = vmatmul.mubr.bf16.gmra.mxu0 %v6882
        %v7068 = vpop.f32.mrf.mxu0
        %v7069 = vadd.f32 %v6917, %v7068
        %v7070 = vpop.f32.mrf.mxu0
        %v7071 = vadd.f32 %v6921, %v7070
        %v7072 = vpop.f32.mrf.mxu0
        %v7073 = vadd.f32 %v6917, %v7072
        %v7074 = vpop.f32.mrf.mxu0
        %v7075 = vadd.f32 %v6921, %v7074
        %7076 = vmatprep.mubr.bf16.mxu0 0
        %7077 = vmatmul.mubr.bf16.gmra.mxu0 %v6883
        %v7078 = vpop.f32.mrf.mxu0
        %v7079 = vadd.f32 %v6917, %v7078
        %v7080 = vpop.f32.mrf.mxu0
        %v7081 = vadd.f32 %v6921, %v7080
        %v7082 = vpop.f32.mrf.mxu0
        %v7083 = vadd.f32 %v6917, %v7082
        %v7084 = vpop.f32.mrf.mxu0
        %v7085 = vadd.f32 %v6921, %v7084
        %7086 = vmatprep.mubr.bf16.mxu0 0
        %7087 = vmatmul.mubr.bf16.gmra.mxu0 %v6884
        %v7088 = vpop.f32.mrf.mxu0
        %v7089 = vadd.f32 %v6917, %v7088
        %v7090 = vpop.f32.mrf.mxu0
        %v7091 = vadd.f32 %v6921, %v7090
        %v7092 = vpop.f32.mrf.mxu0
        %v7093 = vadd.f32 %v6917, %v7092
        %v7094 = vpop.f32.mrf.mxu0
        %v7095 = vadd.f32 %v6921, %v7094
        %7096 = vmatprep.mubr.bf16.mxu0 0
        %7097 = vmatmul.mubr.bf16.gmra.mxu0 %v6885
        %v7098 = vpop.f32.mrf.mxu0
        %v7099 = vadd.f32 %v6917, %v7098
        %v7100 = vpop.f32.mrf.mxu0
        %v7101 = vadd.f32 %v6921, %v7100
        %v7102 = vpop.f32.mrf.mxu0
        %v7103 = vadd.f32 %v6917, %v7102
        %v7104 = vpop.f32.mrf.mxu0
        %v7105 = vadd.f32 %v6921, %v7104
        %7106 = vmatprep.mubr.bf16.mxu0 0
        %7107 = vmatmul.mubr.bf16.gmra.mxu0 %v6886
        %v7108 = vpop.f32.mrf.mxu0
        %v7109 = vadd.f32 %v6917, %v7108
        %v7110 = vpop.f32.mrf.mxu0
        %v7111 = vadd.f32 %v6921, %v7110
        %v7112 = vpop.f32.mrf.mxu0
        %v7113 = vadd.f32 %v6917, %v7112
        %v7114 = vpop.f32.mrf.mxu0
        %v7115 = vadd.f32 %v6921, %v7114
        %7116 = vmatprep.mubr.bf16.mxu0 0
        %7117 = vmatmul.mubr.bf16.gmra.mxu0 %v6887
        %v7118 = vpop.f32.mrf.mxu0
        %v7119 = vadd.f32 %v6917, %v7118
        %v7120 = vpop.f32.mrf.mxu0
        %v7121 = vadd.f32 %v6921, %v7120
        %v7122 = vpop.f32.mrf.mxu0
        %v7123 = vadd.f32 %v6917, %v7122
        %v7124 = vpop.f32.mrf.mxu0
        %v7125 = vadd.f32 %v6921, %v7124
        %7126 = vmatprep.mubr.bf16.mxu0 0
        %7127 = vmatmul.mubr.bf16.gmra.mxu0 %v6888
        %v7128 = vpop.f32.mrf.mxu0
        %v7129 = vadd.f32 %v6917, %v7128
        %v7130 = vpop.f32.mrf.mxu0
        %v7131 = vadd.f32 %v6921, %v7130
        %v7132 = vpop.f32.mrf.mxu0
        %v7133 = vadd.f32 %v6917, %v7132
        %v7134 = vpop.f32.mrf.mxu0
        %v7135 = vadd.f32 %v6921, %v7134
        %7136 = vmatprep.mubr.bf16.mxu0 0
        %7137 = vmatmul.mubr.bf16.gmra.mxu0 %v6889
        %v7138 = vpop.f32.mrf.mxu0
        %v7139 = vadd.f32 %v6917, %v7138
        %v7140 = vpop.f32.mrf.mxu0
        %v7141 = vadd.f32 %v6921, %v7140
        %v7142 = vpop.f32.mrf.mxu0
        %v7143 = vadd.f32 %v6917, %v7142
        %v7144 = vpop.f32.mrf.mxu0
        %v7145 = vadd.f32 %v6921, %v7144
        %7146 = vmatprep.mubr.bf16.mxu0 0
        %7147 = vmatmul.mubr.bf16.gmra.mxu0 %v6890
        %v7148 = vpop.f32.mrf.mxu0
        %v7149 = vadd.f32 %v6917, %v7148
        %v7150 = vpop.f32.mrf.mxu0
        %v7151 = vadd.f32 %v6921, %v7150
        %v7152 = vpop.f32.mrf.mxu0
        %v7153 = vadd.f32 %v6917, %v7152
        %v7154 = vpop.f32.mrf.mxu0
        %v7155 = vadd.f32 %v6921, %v7154
        %7156 = vmatprep.mubr.bf16.mxu0 0
        %7157 = vmatmul.mubr.bf16.gmra.mxu0 %v6891
        %v7158 = vpop.f32.mrf.mxu0
        %v7159 = vadd.f32 %v6917, %v7158
        %v7160 = vpop.f32.mrf.mxu0
        %v7161 = vadd.f32 %v6921, %v7160
        %v7162 = vpop.f32.mrf.mxu0
        %v7163 = vadd.f32 %v6917, %v7162
        %v7164 = vpop.f32.mrf.mxu0
        %v7165 = vadd.f32 %v6921, %v7164
        %7166 = vmatprep.mubr.bf16.mxu0 0
        %7167 = vmatmul.mubr.bf16.gmra.mxu0 %v6892
        %v7168 = vpop.f32.mrf.mxu0
        %v7169 = vadd.f32 %v6917, %v7168
        %v7170 = vpop.f32.mrf.mxu0
        %v7171 = vadd.f32 %v6921, %v7170
        %v7172 = vpop.f32.mrf.mxu0
        %v7173 = vadd.f32 %v6917, %v7172
        %v7174 = vpop.f32.mrf.mxu0
        %v7175 = vadd.f32 %v6921, %v7174
        %7176 = vmatprep.mubr.bf16.mxu0 0
        %7177 = vmatmul.mubr.bf16.gmra.mxu0 %v6893
        %v7178 = vpop.f32.mrf.mxu0
        %v7179 = vadd.f32 %v6917, %v7178
        %v7180 = vpop.f32.mrf.mxu0
        %v7181 = vadd.f32 %v6921, %v7180
        %v7182 = vpop.f32.mrf.mxu0
        %v7183 = vadd.f32 %v6917, %v7182
        %v7184 = vpop.f32.mrf.mxu0
        %v7185 = vadd.f32 %v6921, %v7184
        %7186 = vmatprep.mubr.bf16.mxu0 0
        %7187 = vmatmul.mubr.bf16.gmra.mxu0 %v6894
        %v7188 = vpop.f32.mrf.mxu0
        %v7189 = vadd.f32 %v6917, %v7188
        %v7190 = vpop.f32.mrf.mxu0
        %v7191 = vadd.f32 %v6921, %v7190
        %v7192 = vpop.f32.mrf.mxu0
        %v7193 = vadd.f32 %v6917, %v7192
        %v7194 = vpop.f32.mrf.mxu0
        %v7195 = vadd.f32 %v6921, %v7194
        %7196 = vmatprep.mubr.bf16.mxu0 0
        %7197 = vmatmul.mubr.bf16.gmra.mxu0 %v6895
        %v7198 = vpop.f32.mrf.mxu0
        %v7199 = vadd.f32 %v6917, %v7198
        %v7200 = vpop.f32.mrf.mxu0
        %v7201 = vadd.f32 %v6921, %v7200
        %v7202 = vpop.f32.mrf.mxu0
        %v7203 = vadd.f32 %v6917, %v7202
        %v7204 = vpop.f32.mrf.mxu0
        %v7205 = vadd.f32 %v6921, %v7204
        %7206 = vmatprep.mubr.bf16.mxu0 0
        %7207 = vmatmul.mubr.bf16.gmra.mxu0 %v6896
        %v7208 = vpop.f32.mrf.mxu0
        %v7209 = vadd.f32 %v6917, %v7208
        %v7210 = vpop.f32.mrf.mxu0
        %v7211 = vadd.f32 %v6921, %v7210
        %v7212 = vpop.f32.mrf.mxu0
        %v7213 = vadd.f32 %v6917, %v7212
        %v7214 = vpop.f32.mrf.mxu0
        %v7215 = vadd.f32 %v6921, %v7214
        %7216 = vmatprep.mubr.bf16.mxu0 0
        %7217 = vmatmul.mubr.bf16.gmra.mxu0 %v6897
        %v7218 = vpop.f32.mrf.mxu0
        %v7219 = vadd.f32 %v6917, %v7218
        %v7220 = vpop.f32.mrf.mxu0
        %v7221 = vadd.f32 %v6921, %v7220
        %v7222 = vpop.f32.mrf.mxu0
        %v7223 = vadd.f32 %v6917, %v7222
        %v7224 = vpop.f32.mrf.mxu0
        %v7225 = vadd.f32 %v6921, %v7224
        %7226 = vmatprep.mubr.bf16.mxu0 0
        %7227 = vmatmul.mubr.bf16.gmra.mxu0 %v6898
        %v7228 = vpop.f32.mrf.mxu0
        %v7229 = vadd.f32 %v6917, %v7228
        %v7230 = vpop.f32.mrf.mxu0
        %v7231 = vadd.f32 %v6921, %v7230
        %v7232 = vpop.f32.mrf.mxu0
        %v7233 = vadd.f32 %v6917, %v7232
        %v7234 = vpop.f32.mrf.mxu0
        %v7235 = vadd.f32 %v6921, %v7234
        %7236 = vmatprep.mubr.bf16.mxu0 0
        %7237 = vmatmul.mubr.bf16.gmra.mxu0 %v6899
        %v7238 = vpop.f32.mrf.mxu0
        %v7239 = vadd.f32 %v6917, %v7238
        %v7240 = vpop.f32.mrf.mxu0
        %v7241 = vadd.f32 %v6921, %v7240
        %v7242 = vpop.f32.mrf.mxu0
        %v7243 = vadd.f32 %v6917, %v7242
        %v7244 = vpop.f32.mrf.mxu0
        %v7245 = vadd.f32 %v6921, %v7244
        %7246 = vmatprep.mubr.bf16.mxu0 0
        %7247 = vmatmul.mubr.bf16.gmra.mxu0 %v6900
        %v7248 = vpop.f32.mrf.mxu0
        %v7249 = vadd.f32 %v6917, %v7248
        %v7250 = vpop.f32.mrf.mxu0
        %v7251 = vadd.f32 %v6921, %v7250
        %v7252 = vpop.f32.mrf.mxu0
        %v7253 = vadd.f32 %v6917, %v7252
        %v7254 = vpop.f32.mrf.mxu0
        %v7255 = vadd.f32 %v6921, %v7254
        %7256 = vmatprep.mubr.bf16.mxu0 0
        %7257 = vmatmul.mubr.bf16.gmra.mxu0 %v6901
        %v7258 = vpop.f32.mrf.mxu0
        %v7259 = vadd.f32 %v6917, %v7258
        %v7260 = vpop.f32.mrf.mxu0
        %v7261 = vadd.f32 %v6921, %v7260
        %v7262 = vpop.f32.mrf.mxu0
        %v7263 = vadd.f32 %v6917, %v7262
        %v7264 = vpop.f32.mrf.mxu0
        %v7265 = vadd.f32 %v6921, %v7264
        %7266 = vmatprep.mubr.bf16.mxu0 0
        %7267 = vmatmul.mubr.bf16.gmra.mxu0 %v6902
        %v7268 = vpop.f32.mrf.mxu0
        %v7269 = vadd.f32 %v6917, %v7268
        %v7270 = vpop.f32.mrf.mxu0
        %v7271 = vadd.f32 %v6921, %v7270
        %v7272 = vpop.f32.mrf.mxu0
        %v7273 = vadd.f32 %v6917, %v7272
        %v7274 = vpop.f32.mrf.mxu0
        %v7275 = vadd.f32 %v6921, %v7274
        %7276 = vmatprep.mubr.bf16.mxu0 0
        %7277 = vmatmul.mubr.bf16.gmra.mxu0 %v6903
        %v7278 = vpop.f32.mrf.mxu0
        %v7279 = vadd.f32 %v6917, %v7278
        %v7280 = vpop.f32.mrf.mxu0
        %v7281 = vadd.f32 %v6921, %v7280
        %v7282 = vpop.f32.mrf.mxu0
        %v7283 = vadd.f32 %v6917, %v7282
        %v7284 = vpop.f32.mrf.mxu0
        %v7285 = vadd.f32 %v6921, %v7284
        %7286 = vmatprep.mubr.bf16.mxu0 0
        %7287 = vmatmul.mubr.bf16.gmra.mxu0 %v6904
        %v7288 = vpop.f32.mrf.mxu0
        %v7289 = vadd.f32 %v6917, %v7288
        %v7290 = vpop.f32.mrf.mxu0
        %v7291 = vadd.f32 %v6921, %v7290
        %v7292 = vpop.f32.mrf.mxu0
        %v7293 = vadd.f32 %v6917, %v7292
        %v7294 = vpop.f32.mrf.mxu0
        %v7295 = vadd.f32 %v6921, %v7294
        %7296 = vmatprep.mubr.bf16.mxu0 0
        %7297 = vmatmul.mubr.bf16.gmra.mxu0 %v6905
        %v7298 = vpop.f32.mrf.mxu0
        %v7299 = vadd.f32 %v6917, %v7298
        %v7300 = vpop.f32.mrf.mxu0
        %v7301 = vadd.f32 %v6921, %v7300
        %v7302 = vpop.f32.mrf.mxu0
        %v7303 = vadd.f32 %v6917, %v7302
        %v7304 = vpop.f32.mrf.mxu0
        %v7305 = vadd.f32 %v6921, %v7304
        %7306 = vmatprep.mubr.bf16.mxu0 0
        %7307 = vmatmul.mubr.bf16.gmra.mxu0 %v6906
        %v7308 = vpop.f32.mrf.mxu0
        %v7309 = vadd.f32 %v6917, %v7308
        %v7310 = vpop.f32.mrf.mxu0
        %v7311 = vadd.f32 %v6921, %v7310
        %v7312 = vpop.f32.mrf.mxu0
        %v7313 = vadd.f32 %v6917, %v7312
        %v7314 = vpop.f32.mrf.mxu0
        %v7315 = vadd.f32 %v6921, %v7314
        %7316 = vmatprep.mubr.bf16.mxu0 0
        %7317 = vmatmul.mubr.bf16.gmra.mxu0 %v6907
        %v7318 = vpop.f32.mrf.mxu0
        %v7319 = vadd.f32 %v6917, %v7318
        %v7320 = vpop.f32.mrf.mxu0
        %v7321 = vadd.f32 %v6921, %v7320
        %v7322 = vpop.f32.mrf.mxu0
        %v7323 = vadd.f32 %v6917, %v7322
        %v7324 = vpop.f32.mrf.mxu0
        %v7325 = vadd.f32 %v6921, %v7324
        %7326 = vmatprep.mubr.bf16.mxu0 0
        %7327 = vmatmul.mubr.bf16.gmra.mxu0 %v6908
        %v7328 = vpop.f32.mrf.mxu0
        %v7329 = vadd.f32 %v6917, %v7328
        %v7330 = vpop.f32.mrf.mxu0
        %v7331 = vadd.f32 %v6921, %v7330
        %v7332 = vpop.f32.mrf.mxu0
        %v7333 = vadd.f32 %v6917, %v7332
        %v7334 = vpop.f32.mrf.mxu0
        %v7335 = vadd.f32 %v6921, %v7334
        %7336 = vmatprep.mubr.bf16.mxu0 0
        %7337 = vmatmul.mubr.bf16.gmra.mxu0 %v6909
        %v7338 = vpop.f32.mrf.mxu0
        %v7339 = vadd.f32 %v6917, %v7338
        %v7340 = vpop.f32.mrf.mxu0
        %v7341 = vadd.f32 %v6921, %v7340
        %v7342 = vpop.f32.mrf.mxu0
        %v7343 = vadd.f32 %v6917, %v7342
        %v7344 = vpop.f32.mrf.mxu0
        %v7345 = vadd.f32 %v6921, %v7344
        %7346 = vmatprep.mubr.bf16.mxu0 0
        %7347 = vmatmul.mubr.bf16.gmra.mxu0 %v6910
        %v7348 = vpop.f32.mrf.mxu0
        %v7349 = vadd.f32 %v6917, %v7348
        %v7350 = vpop.f32.mrf.mxu0
        %v7351 = vadd.f32 %v6921, %v7350
        %v7352 = vpop.f32.mrf.mxu0
        %v7353 = vadd.f32 %v6917, %v7352
        %v7354 = vpop.f32.mrf.mxu0
        %v7355 = vadd.f32 %v6921, %v7354
        %7356 = vdwg.mxu0
        %v7357 = vmax.f32 %v7041, -50.0
        %v7358 = vmax.f32 %v7045, -50.0
        %v7359 = vmax.f32 %v7051, -50.0
        %v7360 = vmax.f32 %v7055, -50.0
        %v7361 = vmax.f32 %v7061, -50.0
        %v7362 = vmax.f32 %v7065, -50.0
        %v7363 = vmax.f32 %v7071, -50.0
        %v7364 = vmax.f32 %v7075, -50.0
        %v7365 = vmax.f32 %v7081, -50.0
        %v7366 = vmax.f32 %v7085, -50.0
        %v7367 = vmax.f32 %v7091, -50.0
        %v7368 = vmax.f32 %v7095, -50.0
        %v7369 = vmax.f32 %v7101, -50.0
        %v7370 = vmax.f32 %v7105, -50.0
        %v7371 = vmax.f32 %v7111, -50.0
        %v7372 = vmax.f32 %v7115, -50.0
        %v7373 = vmax.f32 %v7121, -50.0
        %v7374 = vmax.f32 %v7125, -50.0
        %v7375 = vmax.f32 %v7131, -50.0
        %v7376 = vmax.f32 %v7135, -50.0
        %v7377 = vmax.f32 %v7141, -50.0
        %v7378 = vmax.f32 %v7145, -50.0
        %v7379 = vmax.f32 %v7151, -50.0
        %v7380 = vmax.f32 %v7155, -50.0
        %v7381 = vmax.f32 %v7161, -50.0
        %v7382 = vmax.f32 %v7165, -50.0
        %v7383 = vmax.f32 %v7171, -50.0
        %v7384 = vmax.f32 %v7175, -50.0
        %v7385 = vmax.f32 %v7181, -50.0
        %v7386 = vmax.f32 %v7185, -50.0
        %v7387 = vmax.f32 %v7191, -50.0
        %v7388 = vmax.f32 %v7195, -50.0
        %v7389 = vmax.f32 %v7201, -50.0
        %v7390 = vmax.f32 %v7205, -50.0
        %v7391 = vmax.f32 %v7211, -50.0
        %v7392 = vmax.f32 %v7215, -50.0
        %v7393 = vmax.f32 %v7221, -50.0
        %v7394 = vmax.f32 %v7225, -50.0
        %v7395 = vmax.f32 %v7231, -50.0
        %v7396 = vmax.f32 %v7235, -50.0
        %v7397 = vmax.f32 %v7241, -50.0
        %v7398 = vmax.f32 %v7245, -50.0
        %v7399 = vmax.f32 %v7251, -50.0
        %v7400 = vmax.f32 %v7255, -50.0
        %v7401 = vmax.f32 %v7261, -50.0
        %v7402 = vmax.f32 %v7265, -50.0
        %v7403 = vmax.f32 %v7271, -50.0
        %v7404 = vmax.f32 %v7275, -50.0
        %v7405 = vmax.f32 %v7281, -50.0
        %v7406 = vmax.f32 %v7285, -50.0
        %v7407 = vmax.f32 %v7291, -50.0
        %v7408 = vmax.f32 %v7295, -50.0
        %v7409 = vmax.f32 %v7301, -50.0
        %v7410 = vmax.f32 %v7305, -50.0
        %v7411 = vmax.f32 %v7311, -50.0
        %v7412 = vmax.f32 %v7315, -50.0
        %v7413 = vmax.f32 %v7321, -50.0
        %v7414 = vmax.f32 %v7325, -50.0
        %v7415 = vmax.f32 %v7331, -50.0
        %v7416 = vmax.f32 %v7335, -50.0
        %v7417 = vmax.f32 %v7341, -50.0
        %v7418 = vmax.f32 %v7345, -50.0
        %v7419 = vmax.f32 %v7351, -50.0
        %v7420 = vmax.f32 %v7355, -50.0
        %v7421 = vsub.f32 0.0, %v7357
        %v7422 = vsub.f32 0.0, %v7358
        %v7423 = vsub.f32 0.0, %v7359
        %v7424 = vsub.f32 0.0, %v7360
        %v7425 = vsub.f32 0.0, %v7361
        %v7426 = vsub.f32 0.0, %v7362
        %v7427 = vsub.f32 0.0, %v7363
        %v7428 = vsub.f32 0.0, %v7364
        %v7429 = vsub.f32 0.0, %v7365
        %v7430 = vsub.f32 0.0, %v7366
        %v7431 = vsub.f32 0.0, %v7367
        %v7432 = vsub.f32 0.0, %v7368
        %v7433 = vsub.f32 0.0, %v7369
        %v7434 = vsub.f32 0.0, %v7370
        %v7435 = vsub.f32 0.0, %v7371
        %v7436 = vsub.f32 0.0, %v7372
        %v7437 = vsub.f32 0.0, %v7373
        %v7438 = vsub.f32 0.0, %v7374
        %v7439 = vsub.f32 0.0, %v7375
        %v7440 = vsub.f32 0.0, %v7376
        %v7441 = vsub.f32 0.0, %v7377
        %v7442 = vsub.f32 0.0, %v7378
        %v7443 = vsub.f32 0.0, %v7379
        %v7444 = vsub.f32 0.0, %v7380
        %v7445 = vsub.f32 0.0, %v7381
        %v7446 = vsub.f32 0.0, %v7382
        %v7447 = vsub.f32 0.0, %v7383
        %v7448 = vsub.f32 0.0, %v7384
        %v7449 = vsub.f32 0.0, %v7385
        %v7450 = vsub.f32 0.0, %v7386
        %v7451 = vsub.f32 0.0, %v7387
        %v7452 = vsub.f32 0.0, %v7388
        %v7453 = vsub.f32 0.0, %v7389
        %v7454 = vsub.f32 0.0, %v7390
        %v7455 = vsub.f32 0.0, %v7391
        %v7456 = vsub.f32 0.0, %v7392
        %v7457 = vsub.f32 0.0, %v7393
        %v7458 = vsub.f32 0.0, %v7394
        %v7459 = vsub.f32 0.0, %v7395
        %v7460 = vsub.f32 0.0, %v7396
        %v7461 = vsub.f32 0.0, %v7397
        %v7462 = vsub.f32 0.0, %v7398
        %v7463 = vsub.f32 0.0, %v7399
        %v7464 = vsub.f32 0.0, %v7400
        %v7465 = vsub.f32 0.0, %v7401
        %v7466 = vsub.f32 0.0, %v7402
        %v7467 = vsub.f32 0.0, %v7403
        %v7468 = vsub.f32 0.0, %v7404
        %v7469 = vsub.f32 0.0, %v7405
        %v7470 = vsub.f32 0.0, %v7406
        %v7471 = vsub.f32 0.0, %v7407
        %v7472 = vsub.f32 0.0, %v7408
        %v7473 = vsub.f32 0.0, %v7409
        %v7474 = vsub.f32 0.0, %v7410
        %v7475 = vsub.f32 0.0, %v7411
        %v7476 = vsub.f32 0.0, %v7412
        %v7477 = vsub.f32 0.0, %v7413
        %v7478 = vsub.f32 0.0, %v7414
        %v7479 = vsub.f32 0.0, %v7415
        %v7480 = vsub.f32 0.0, %v7416
        %v7481 = vsub.f32 0.0, %v7417
        %v7482 = vsub.f32 0.0, %v7418
        %v7483 = vsub.f32 0.0, %v7419
        %v7484 = vsub.f32 0.0, %v7420
        %v7485 = vmul.f32 %v7421, 1.442695
        %v7486 = vpow.pop %v7485
        %v7487 = vmul.f32 %v7422, 1.442695
        %v7488 = vpow.pop %v7487
        %v7489 = vmul.f32 %v7423, 1.442695
        %v7490 = vpow.pop %v7489
        %v7491 = vmul.f32 %v7424, 1.442695
        %v7492 = vpow.pop %v7491
        %v7493 = vmul.f32 %v7425, 1.442695
        %v7494 = vpow.pop %v7493
        %v7495 = vmul.f32 %v7426, 1.442695
        %v7496 = vpow.pop %v7495
        %v7497 = vmul.f32 %v7427, 1.442695
        %v7498 = vpow.pop %v7497
        %v7499 = vmul.f32 %v7428, 1.442695
        %v7500 = vpow.pop %v7499
        %v7501 = vmul.f32 %v7429, 1.442695
        %v7502 = vpow.pop %v7501
        %v7503 = vmul.f32 %v7430, 1.442695
        %v7504 = vpow.pop %v7503
        %v7505 = vmul.f32 %v7431, 1.442695
        %v7506 = vpow.pop %v7505
        %v7507 = vmul.f32 %v7432, 1.442695
        %v7508 = vpow.pop %v7507
        %v7509 = vmul.f32 %v7433, 1.442695
        %v7510 = vpow.pop %v7509
        %v7511 = vmul.f32 %v7434, 1.442695
        %v7512 = vpow.pop %v7511
        %v7513 = vmul.f32 %v7435, 1.442695
        %v7514 = vpow.pop %v7513
        %v7515 = vmul.f32 %v7436, 1.442695
        %v7516 = vpow.pop %v7515
        %v7517 = vmul.f32 %v7437, 1.442695
        %v7518 = vpow.pop %v7517
        %v7519 = vmul.f32 %v7438, 1.442695
        %v7520 = vpow.pop %v7519
        %v7521 = vmul.f32 %v7439, 1.442695
        %v7522 = vpow.pop %v7521
        %v7523 = vmul.f32 %v7440, 1.442695
        %v7524 = vpow.pop %v7523
        %v7525 = vmul.f32 %v7441, 1.442695
        %v7526 = vpow.pop %v7525
        %v7527 = vmul.f32 %v7442, 1.442695
        %v7528 = vpow.pop %v7527
        %v7529 = vmul.f32 %v7443, 1.442695
        %v7530 = vpow.pop %v7529
        %v7531 = vmul.f32 %v7444, 1.442695
        %v7532 = vpow.pop %v7531
        %v7533 = vmul.f32 %v7445, 1.442695
        %v7534 = vpow.pop %v7533
        %v7535 = vmul.f32 %v7446, 1.442695
        %v7536 = vpow.pop %v7535
        %v7537 = vmul.f32 %v7447, 1.442695
        %v7538 = vpow.pop %v7537
        %v7539 = vmul.f32 %v7448, 1.442695
        %v7540 = vpow.pop %v7539
        %v7541 = vmul.f32 %v7449, 1.442695
        %v7542 = vpow.pop %v7541
        %v7543 = vmul.f32 %v7450, 1.442695
        %v7544 = vpow.pop %v7543
        %v7545 = vmul.f32 %v7451, 1.442695
        %v7546 = vpow.pop %v7545
        %v7547 = vmul.f32 %v7452, 1.442695
        %v7548 = vpow.pop %v7547
        %v7549 = vmul.f32 %v7453, 1.442695
        %v7550 = vpow.pop %v7549
        %v7551 = vmul.f32 %v7454, 1.442695
        %v7552 = vpow.pop %v7551
        %v7553 = vmul.f32 %v7455, 1.442695
        %v7554 = vpow.pop %v7553
        %v7555 = vmul.f32 %v7456, 1.442695
        %v7556 = vpow.pop %v7555
        %v7557 = vmul.f32 %v7457, 1.442695
        %v7558 = vpow.pop %v7557
        %v7559 = vmul.f32 %v7458, 1.442695
        %v7560 = vpow.pop %v7559
        %v7561 = vmul.f32 %v7459, 1.442695
        %v7562 = vpow.pop %v7561
        %v7563 = vmul.f32 %v7460, 1.442695
        %v7564 = vpow.pop %v7563
        %v7565 = vmul.f32 %v7461, 1.442695
        %v7566 = vpow.pop %v7565
        %v7567 = vmul.f32 %v7462, 1.442695
        %v7568 = vpow.pop %v7567
        %v7569 = vmul.f32 %v7463, 1.442695
        %v7570 = vpow.pop %v7569
        %v7571 = vmul.f32 %v7464, 1.442695
        %v7572 = vpow.pop %v7571
        %v7573 = vmul.f32 %v7465, 1.442695
        %v7574 = vpow.pop %v7573
        %v7575 = vmul.f32 %v7466, 1.442695
        %v7576 = vpow.pop %v7575
        %v7577 = vmul.f32 %v7467, 1.442695
        %v7578 = vpow.pop %v7577
        %v7579 = vmul.f32 %v7468, 1.442695
        %v7580 = vpow.pop %v7579
        %v7581 = vmul.f32 %v7469, 1.442695
        %v7582 = vpow.pop %v7581
        %v7583 = vmul.f32 %v7470, 1.442695
        %v7584 = vpow.pop %v7583
        %v7585 = vmul.f32 %v7471, 1.442695
        %v7586 = vpow.pop %v7585
        %v7587 = vmul.f32 %v7472, 1.442695
        %v7588 = vpow.pop %v7587
        %v7589 = vmul.f32 %v7473, 1.442695
        %v7590 = vpow.pop %v7589
        %v7591 = vmul.f32 %v7474, 1.442695
        %v7592 = vpow.pop %v7591
        %v7593 = vmul.f32 %v7475, 1.442695
        %v7594 = vpow.pop %v7593
        %v7595 = vmul.f32 %v7476, 1.442695
        %v7596 = vpow.pop %v7595
        %v7597 = vmul.f32 %v7477, 1.442695
        %v7598 = vpow.pop %v7597
        %v7599 = vmul.f32 %v7478, 1.442695
        %v7600 = vpow.pop %v7599
        %v7601 = vmul.f32 %v7479, 1.442695
        %v7602 = vpow.pop %v7601
        %v7603 = vmul.f32 %v7480, 1.442695
        %v7604 = vpow.pop %v7603
        %v7605 = vmul.f32 %v7481, 1.442695
        %v7606 = vpow.pop %v7605
        %v7607 = vmul.f32 %v7482, 1.442695
        %v7608 = vpow.pop %v7607
        %v7609 = vmul.f32 %v7483, 1.442695
        %v7610 = vpow.pop %v7609
        %v7611 = vmul.f32 %v7484, 1.442695
        %v7612 = vpow.pop %v7611
        %v7613 = vadd.f32 %v7486, 1.0
        %v7614 = vadd.f32 %v7488, 1.0
        %v7615 = vadd.f32 %v7490, 1.0
        %v7616 = vadd.f32 %v7492, 1.0
        %v7617 = vadd.f32 %v7494, 1.0
        %v7618 = vadd.f32 %v7496, 1.0
        %v7619 = vadd.f32 %v7498, 1.0
        %v7620 = vadd.f32 %v7500, 1.0
        %v7621 = vadd.f32 %v7502, 1.0
        %v7622 = vadd.f32 %v7504, 1.0
        %v7623 = vadd.f32 %v7506, 1.0
        %v7624 = vadd.f32 %v7508, 1.0
        %v7625 = vadd.f32 %v7510, 1.0
        %v7626 = vadd.f32 %v7512, 1.0
        %v7627 = vadd.f32 %v7514, 1.0
        %v7628 = vadd.f32 %v7516, 1.0
        %v7629 = vadd.f32 %v7518, 1.0
        %v7630 = vadd.f32 %v7520, 1.0
        %v7631 = vadd.f32 %v7522, 1.0
        %v7632 = vadd.f32 %v7524, 1.0
        %v7633 = vadd.f32 %v7526, 1.0
        %v7634 = vadd.f32 %v7528, 1.0
        %v7635 = vadd.f32 %v7530, 1.0
        %v7636 = vadd.f32 %v7532, 1.0
        %v7637 = vadd.f32 %v7534, 1.0
        %v7638 = vadd.f32 %v7536, 1.0
        %v7639 = vadd.f32 %v7538, 1.0
        %v7640 = vadd.f32 %v7540, 1.0
        %v7641 = vadd.f32 %v7542, 1.0
        %v7642 = vadd.f32 %v7544, 1.0
        %v7643 = vadd.f32 %v7546, 1.0
        %v7644 = vadd.f32 %v7548, 1.0
        %v7645 = vadd.f32 %v7550, 1.0
        %v7646 = vadd.f32 %v7552, 1.0
        %v7647 = vadd.f32 %v7554, 1.0
        %v7648 = vadd.f32 %v7556, 1.0
        %v7649 = vadd.f32 %v7558, 1.0
        %v7650 = vadd.f32 %v7560, 1.0
        %v7651 = vadd.f32 %v7562, 1.0
        %v7652 = vadd.f32 %v7564, 1.0
        %v7653 = vadd.f32 %v7566, 1.0
        %v7654 = vadd.f32 %v7568, 1.0
        %v7655 = vadd.f32 %v7570, 1.0
        %v7656 = vadd.f32 %v7572, 1.0
        %v7657 = vadd.f32 %v7574, 1.0
        %v7658 = vadd.f32 %v7576, 1.0
        %v7659 = vadd.f32 %v7578, 1.0
        %v7660 = vadd.f32 %v7580, 1.0
        %v7661 = vadd.f32 %v7582, 1.0
        %v7662 = vadd.f32 %v7584, 1.0
        %v7663 = vadd.f32 %v7586, 1.0
        %v7664 = vadd.f32 %v7588, 1.0
        %v7665 = vadd.f32 %v7590, 1.0
        %v7666 = vadd.f32 %v7592, 1.0
        %v7667 = vadd.f32 %v7594, 1.0
        %v7668 = vadd.f32 %v7596, 1.0
        %v7669 = vadd.f32 %v7598, 1.0
        %v7670 = vadd.f32 %v7600, 1.0
        %v7671 = vadd.f32 %v7602, 1.0
        %v7672 = vadd.f32 %v7604, 1.0
        %v7673 = vadd.f32 %v7606, 1.0
        %v7674 = vadd.f32 %v7608, 1.0
        %v7675 = vadd.f32 %v7610, 1.0
        %v7676 = vadd.f32 %v7612, 1.0
        %v7677 = vrcp.pop %v7613
        %v7678 = vrcp.pop %v7614
        %v7679 = vrcp.pop %v7615
        %v7680 = vrcp.pop %v7616
        %v7681 = vrcp.pop %v7617
        %v7682 = vrcp.pop %v7618
        %v7683 = vrcp.pop %v7619
        %v7684 = vrcp.pop %v7620
        %v7685 = vrcp.pop %v7621
        %v7686 = vrcp.pop %v7622
        %v7687 = vrcp.pop %v7623
        %v7688 = vrcp.pop %v7624
        %v7689 = vrcp.pop %v7625
        %v7690 = vrcp.pop %v7626
        %v7691 = vrcp.pop %v7627
        %v7692 = vrcp.pop %v7628
        %v7693 = vrcp.pop %v7629
        %v7694 = vrcp.pop %v7630
        %v7695 = vrcp.pop %v7631
        %v7696 = vrcp.pop %v7632
        %v7697 = vrcp.pop %v7633
        %v7698 = vrcp.pop %v7634
        %v7699 = vrcp.pop %v7635
        %v7700 = vrcp.pop %v7636
        %v7701 = vrcp.pop %v7637
        %v7702 = vrcp.pop %v7638
        %v7703 = vrcp.pop %v7639
        %v7704 = vrcp.pop %v7640
        %v7705 = vrcp.pop %v7641
        %v7706 = vrcp.pop %v7642
        %v7707 = vrcp.pop %v7643
        %v7708 = vrcp.pop %v7644
        %v7709 = vrcp.pop %v7645
        %v7710 = vrcp.pop %v7646
        %v7711 = vrcp.pop %v7647
        %v7712 = vrcp.pop %v7648
        %v7713 = vrcp.pop %v7649
        %v7714 = vrcp.pop %v7650
        %v7715 = vrcp.pop %v7651
        %v7716 = vrcp.pop %v7652
        %v7717 = vrcp.pop %v7653
        %v7718 = vrcp.pop %v7654
        %v7719 = vrcp.pop %v7655
        %v7720 = vrcp.pop %v7656
        %v7721 = vrcp.pop %v7657
        %v7722 = vrcp.pop %v7658
        %v7723 = vrcp.pop %v7659
        %v7724 = vrcp.pop %v7660
        %v7725 = vrcp.pop %v7661
        %v7726 = vrcp.pop %v7662
        %v7727 = vrcp.pop %v7663
        %v7728 = vrcp.pop %v7664
        %v7729 = vrcp.pop %v7665
        %v7730 = vrcp.pop %v7666
        %v7731 = vrcp.pop %v7667
        %v7732 = vrcp.pop %v7668
        %v7733 = vrcp.pop %v7669
        %v7734 = vrcp.pop %v7670
        %v7735 = vrcp.pop %v7671
        %v7736 = vrcp.pop %v7672
        %v7737 = vrcp.pop %v7673
        %v7738 = vrcp.pop %v7674
        %v7739 = vrcp.pop %v7675
        %v7740 = vrcp.pop %v7676
        %v7741 = vlog2.pop %v7613
        %v7742 = vmul.f32 %v7741, 0.6931472
        %v7743 = vlog2.pop %v7614
        %v7744 = vmul.f32 %v7743, 0.6931472
        %v7745 = vlog2.pop %v7615
        %v7746 = vmul.f32 %v7745, 0.6931472
        %v7747 = vlog2.pop %v7616
        %v7748 = vmul.f32 %v7747, 0.6931472
        %v7749 = vlog2.pop %v7617
        %v7750 = vmul.f32 %v7749, 0.6931472
        %v7751 = vlog2.pop %v7618
        %v7752 = vmul.f32 %v7751, 0.6931472
        %v7753 = vlog2.pop %v7619
        %v7754 = vmul.f32 %v7753, 0.6931472
        %v7755 = vlog2.pop %v7620
        %v7756 = vmul.f32 %v7755, 0.6931472
        %v7757 = vlog2.pop %v7621
        %v7758 = vmul.f32 %v7757, 0.6931472
        %v7759 = vlog2.pop %v7622
        %v7760 = vmul.f32 %v7759, 0.6931472
        %v7761 = vlog2.pop %v7623
        %v7762 = vmul.f32 %v7761, 0.6931472
        %v7763 = vlog2.pop %v7624
        %v7764 = vmul.f32 %v7763, 0.6931472
        %v7765 = vlog2.pop %v7625
        %v7766 = vmul.f32 %v7765, 0.6931472
        %v7767 = vlog2.pop %v7626
        %v7768 = vmul.f32 %v7767, 0.6931472
        %v7769 = vlog2.pop %v7627
        %v7770 = vmul.f32 %v7769, 0.6931472
        %v7771 = vlog2.pop %v7628
        %v7772 = vmul.f32 %v7771, 0.6931472
        %v7773 = vlog2.pop %v7629
        %v7774 = vmul.f32 %v7773, 0.6931472
        %v7775 = vlog2.pop %v7630
        %v7776 = vmul.f32 %v7775, 0.6931472
        %v7777 = vlog2.pop %v7631
        %v7778 = vmul.f32 %v7777, 0.6931472
        %v7779 = vlog2.pop %v7632
        %v7780 = vmul.f32 %v7779, 0.6931472
        %v7781 = vlog2.pop %v7633
        %v7782 = vmul.f32 %v7781, 0.6931472
        %v7783 = vlog2.pop %v7634
        %v7784 = vmul.f32 %v7783, 0.6931472
        %v7785 = vlog2.pop %v7635
        %v7786 = vmul.f32 %v7785, 0.6931472
        %v7787 = vlog2.pop %v7636
        %v7788 = vmul.f32 %v7787, 0.6931472
        %v7789 = vlog2.pop %v7637
        %v7790 = vmul.f32 %v7789, 0.6931472
        %v7791 = vlog2.pop %v7638
        %v7792 = vmul.f32 %v7791, 0.6931472
        %v7793 = vlog2.pop %v7639
        %v7794 = vmul.f32 %v7793, 0.6931472
        %v7795 = vlog2.pop %v7640
        %v7796 = vmul.f32 %v7795, 0.6931472
        %v7797 = vlog2.pop %v7641
        %v7798 = vmul.f32 %v7797, 0.6931472
        %v7799 = vlog2.pop %v7642
        %v7800 = vmul.f32 %v7799, 0.6931472
        %v7801 = vlog2.pop %v7643
        %v7802 = vmul.f32 %v7801, 0.6931472
        %v7803 = vlog2.pop %v7644
        %v7804 = vmul.f32 %v7803, 0.6931472
        %v7805 = vlog2.pop %v7645
        %v7806 = vmul.f32 %v7805, 0.6931472
        %v7807 = vlog2.pop %v7646
        %v7808 = vmul.f32 %v7807, 0.6931472
        %v7809 = vlog2.pop %v7647
        %v7810 = vmul.f32 %v7809, 0.6931472
        %v7811 = vlog2.pop %v7648
        %v7812 = vmul.f32 %v7811, 0.6931472
        %v7813 = vlog2.pop %v7649
        %v7814 = vmul.f32 %v7813, 0.6931472
        %v7815 = vlog2.pop %v7650
        %v7816 = vmul.f32 %v7815, 0.6931472
        %v7817 = vlog2.pop %v7651
        %v7818 = vmul.f32 %v7817, 0.6931472
        %v7819 = vlog2.pop %v7652
        %v7820 = vmul.f32 %v7819, 0.6931472
        %v7821 = vlog2.pop %v7653
        %v7822 = vmul.f32 %v7821, 0.6931472
        %v7823 = vlog2.pop %v7654
        %v7824 = vmul.f32 %v7823, 0.6931472
        %v7825 = vlog2.pop %v7655
        %v7826 = vmul.f32 %v7825, 0.6931472
        %v7827 = vlog2.pop %v7656
        %v7828 = vmul.f32 %v7827, 0.6931472
        %v7829 = vlog2.pop %v7657
        %v7830 = vmul.f32 %v7829, 0.6931472
        %v7831 = vlog2.pop %v7658
        %v7832 = vmul.f32 %v7831, 0.6931472
        %v7833 = vlog2.pop %v7659
        %v7834 = vmul.f32 %v7833, 0.6931472
        %v7835 = vlog2.pop %v7660
        %v7836 = vmul.f32 %v7835, 0.6931472
        %v7837 = vlog2.pop %v7661
        %v7838 = vmul.f32 %v7837, 0.6931472
        %v7839 = vlog2.pop %v7662
        %v7840 = vmul.f32 %v7839, 0.6931472
        %v7841 = vlog2.pop %v7663
        %v7842 = vmul.f32 %v7841, 0.6931472
        %v7843 = vlog2.pop %v7664
        %v7844 = vmul.f32 %v7843, 0.6931472
        %v7845 = vlog2.pop %v7665
        %v7846 = vmul.f32 %v7845, 0.6931472
        %v7847 = vlog2.pop %v7666
        %v7848 = vmul.f32 %v7847, 0.6931472
        %v7849 = vlog2.pop %v7667
        %v7850 = vmul.f32 %v7849, 0.6931472
        %v7851 = vlog2.pop %v7668
        %v7852 = vmul.f32 %v7851, 0.6931472
        %v7853 = vlog2.pop %v7669
        %v7854 = vmul.f32 %v7853, 0.6931472
        %v7855 = vlog2.pop %v7670
        %v7856 = vmul.f32 %v7855, 0.6931472
        %v7857 = vlog2.pop %v7671
        %v7858 = vmul.f32 %v7857, 0.6931472
        %v7859 = vlog2.pop %v7672
        %v7860 = vmul.f32 %v7859, 0.6931472
        %v7861 = vlog2.pop %v7673
        %v7862 = vmul.f32 %v7861, 0.6931472
        %v7863 = vlog2.pop %v7674
        %v7864 = vmul.f32 %v7863, 0.6931472
        %v7865 = vlog2.pop %v7675
        %v7866 = vmul.f32 %v7865, 0.6931472
        %v7867 = vlog2.pop %v7676
        %v7868 = vmul.f32 %v7867, 0.6931472
        %v7869 = vsub.f32 0.0, %v7742
        %v7870 = vsub.f32 0.0, %v7744
        %v7871 = vsub.f32 0.0, %v7746
        %v7872 = vsub.f32 0.0, %v7748
        %v7873 = vsub.f32 0.0, %v7750
        %v7874 = vsub.f32 0.0, %v7752
        %v7875 = vsub.f32 0.0, %v7754
        %v7876 = vsub.f32 0.0, %v7756
        %v7877 = vsub.f32 0.0, %v7758
        %v7878 = vsub.f32 0.0, %v7760
        %v7879 = vsub.f32 0.0, %v7762
        %v7880 = vsub.f32 0.0, %v7764
        %v7881 = vsub.f32 0.0, %v7766
        %v7882 = vsub.f32 0.0, %v7768
        %v7883 = vsub.f32 0.0, %v7770
        %v7884 = vsub.f32 0.0, %v7772
        %v7885 = vsub.f32 0.0, %v7774
        %v7886 = vsub.f32 0.0, %v7776
        %v7887 = vsub.f32 0.0, %v7778
        %v7888 = vsub.f32 0.0, %v7780
        %v7889 = vsub.f32 0.0, %v7782
        %v7890 = vsub.f32 0.0, %v7784
        %v7891 = vsub.f32 0.0, %v7786
        %v7892 = vsub.f32 0.0, %v7788
        %v7893 = vsub.f32 0.0, %v7790
        %v7894 = vsub.f32 0.0, %v7792
        %v7895 = vsub.f32 0.0, %v7794
        %v7896 = vsub.f32 0.0, %v7796
        %v7897 = vsub.f32 0.0, %v7798
        %v7898 = vsub.f32 0.0, %v7800
        %v7899 = vsub.f32 0.0, %v7802
        %v7900 = vsub.f32 0.0, %v7804
        %v7901 = vsub.f32 0.0, %v7806
        %v7902 = vsub.f32 0.0, %v7808
        %v7903 = vsub.f32 0.0, %v7810
        %v7904 = vsub.f32 0.0, %v7812
        %v7905 = vsub.f32 0.0, %v7814
        %v7906 = vsub.f32 0.0, %v7816
        %v7907 = vsub.f32 0.0, %v7818
        %v7908 = vsub.f32 0.0, %v7820
        %v7909 = vsub.f32 0.0, %v7822
        %v7910 = vsub.f32 0.0, %v7824
        %v7911 = vsub.f32 0.0, %v7826
        %v7912 = vsub.f32 0.0, %v7828
        %v7913 = vsub.f32 0.0, %v7830
        %v7914 = vsub.f32 0.0, %v7832
        %v7915 = vsub.f32 0.0, %v7834
        %v7916 = vsub.f32 0.0, %v7836
        %v7917 = vsub.f32 0.0, %v7838
        %v7918 = vsub.f32 0.0, %v7840
        %v7919 = vsub.f32 0.0, %v7842
        %v7920 = vsub.f32 0.0, %v7844
        %v7921 = vsub.f32 0.0, %v7846
        %v7922 = vsub.f32 0.0, %v7848
        %v7923 = vsub.f32 0.0, %v7850
        %v7924 = vsub.f32 0.0, %v7852
        %v7925 = vsub.f32 0.0, %v7854
        %v7926 = vsub.f32 0.0, %v7856
        %v7927 = vsub.f32 0.0, %v7858
        %v7928 = vsub.f32 0.0, %v7860
        %v7929 = vsub.f32 0.0, %v7862
        %v7930 = vsub.f32 0.0, %v7864
        %v7931 = vsub.f32 0.0, %v7866
        %v7932 = vsub.f32 0.0, %v7868
        %v7933 = vmul.f32 %v7677, %v5572
        %v7934 = vmul.f32 %v7678, %v5573
        %v7935 = vmul.f32 %v7679, %v5574
        %v7936 = vmul.f32 %v7680, %v5575
        %v7937 = vmul.f32 %v7681, %v5576
        %v7938 = vmul.f32 %v7682, %v5577
        %v7939 = vmul.f32 %v7683, %v5578
        %v7940 = vmul.f32 %v7684, %v5579
        %v7941 = vmul.f32 %v7685, %v5580
        %v7942 = vmul.f32 %v7686, %v5581
        %v7943 = vmul.f32 %v7687, %v5582
        %v7944 = vmul.f32 %v7688, %v5583
        %v7945 = vmul.f32 %v7689, %v5584
        %v7946 = vmul.f32 %v7690, %v5585
        %v7947 = vmul.f32 %v7691, %v5586
        %v7948 = vmul.f32 %v7692, %v5587
        %v7949 = vmul.f32 %v7693, %v5588
        %v7950 = vmul.f32 %v7694, %v5589
        %v7951 = vmul.f32 %v7695, %v5590
        %v7952 = vmul.f32 %v7696, %v5591
        %v7953 = vmul.f32 %v7697, %v5592
        %v7954 = vmul.f32 %v7698, %v5593
        %v7955 = vmul.f32 %v7699, %v5594
        %v7956 = vmul.f32 %v7700, %v5595
        %v7957 = vmul.f32 %v7701, %v5596
        %v7958 = vmul.f32 %v7702, %v5597
        %v7959 = vmul.f32 %v7703, %v5598
        %v7960 = vmul.f32 %v7704, %v5599
        %v7961 = vmul.f32 %v7705, %v5600
        %v7962 = vmul.f32 %v7706, %v5601
        %v7963 = vmul.f32 %v7707, %v5602
        %v7964 = vmul.f32 %v7708, %v5603
        %v7965 = vmul.f32 %v7709, %v5604
        %v7966 = vmul.f32 %v7710, %v5605
        %v7967 = vmul.f32 %v7711, %v5606
        %v7968 = vmul.f32 %v7712, %v5607
        %v7969 = vmul.f32 %v7713, %v5608
        %v7970 = vmul.f32 %v7714, %v5609
        %v7971 = vmul.f32 %v7715, %v5610
        %v7972 = vmul.f32 %v7716, %v5611
        %v7973 = vmul.f32 %v7717, %v5612
        %v7974 = vmul.f32 %v7718, %v5613
        %v7975 = vmul.f32 %v7719, %v5614
        %v7976 = vmul.f32 %v7720, %v5615
        %v7977 = vmul.f32 %v7721, %v5616
        %v7978 = vmul.f32 %v7722, %v5617
        %v7979 = vmul.f32 %v7723, %v5618
        %v7980 = vmul.f32 %v7724, %v5619
        %v7981 = vmul.f32 %v7725, %v5620
        %v7982 = vmul.f32 %v7726, %v5621
        %v7983 = vmul.f32 %v7727, %v5622
        %v7984 = vmul.f32 %v7728, %v5623
        %v7985 = vmul.f32 %v7729, %v5624
        %v7986 = vmul.f32 %v7730, %v5625
        %v7987 = vmul.f32 %v7731, %v5626
        %v7988 = vmul.f32 %v7732, %v5627
        %v7989 = vmul.f32 %v7733, %v5628
        %v7990 = vmul.f32 %v7734, %v5629
        %v7991 = vmul.f32 %v7735, %v5630
        %v7992 = vmul.f32 %v7736, %v5631
        %v7993 = vmul.f32 %v7737, %v5632
        %v7994 = vmul.f32 %v7738, %v5633
        %v7995 = vmul.f32 %v7739, %v5634
        %v7996 = vmul.f32 %v7740, %v5635
        %v7997 = vsub.f32 1.0, %v7677
        %v7998 = vsub.f32 1.0, %v7678
        %v7999 = vsub.f32 1.0, %v7679
        %v8000 = vsub.f32 1.0, %v7680
        %v8001 = vsub.f32 1.0, %v7681
        %v8002 = vsub.f32 1.0, %v7682
        %v8003 = vsub.f32 1.0, %v7683
        %v8004 = vsub.f32 1.0, %v7684
        %v8005 = vsub.f32 1.0, %v7685
        %v8006 = vsub.f32 1.0, %v7686
        %v8007 = vsub.f32 1.0, %v7687
        %v8008 = vsub.f32 1.0, %v7688
        %v8009 = vsub.f32 1.0, %v7689
        %v8010 = vsub.f32 1.0, %v7690
        %v8011 = vsub.f32 1.0, %v7691
        %v8012 = vsub.f32 1.0, %v7692
        %v8013 = vsub.f32 1.0, %v7693
        %v8014 = vsub.f32 1.0, %v7694
        %v8015 = vsub.f32 1.0, %v7695
        %v8016 = vsub.f32 1.0, %v7696
        %v8017 = vsub.f32 1.0, %v7697
        %v8018 = vsub.f32 1.0, %v7698
        %v8019 = vsub.f32 1.0, %v7699
        %v8020 = vsub.f32 1.0, %v7700
        %v8021 = vsub.f32 1.0, %v7701
        %v8022 = vsub.f32 1.0, %v7702
        %v8023 = vsub.f32 1.0, %v7703
        %v8024 = vsub.f32 1.0, %v7704
        %v8025 = vsub.f32 1.0, %v7705
        %v8026 = vsub.f32 1.0, %v7706
        %v8027 = vsub.f32 1.0, %v7707
        %v8028 = vsub.f32 1.0, %v7708
        %v8029 = vsub.f32 1.0, %v7709
        %v8030 = vsub.f32 1.0, %v7710
        %v8031 = vsub.f32 1.0, %v7711
        %v8032 = vsub.f32 1.0, %v7712
        %v8033 = vsub.f32 1.0, %v7713
        %v8034 = vsub.f32 1.0, %v7714
        %v8035 = vsub.f32 1.0, %v7715
        %v8036 = vsub.f32 1.0, %v7716
        %v8037 = vsub.f32 1.0, %v7717
        %v8038 = vsub.f32 1.0, %v7718
        %v8039 = vsub.f32 1.0, %v7719
        %v8040 = vsub.f32 1.0, %v7720
        %v8041 = vsub.f32 1.0, %v7721
        %v8042 = vsub.f32 1.0, %v7722
        %v8043 = vsub.f32 1.0, %v7723
        %v8044 = vsub.f32 1.0, %v7724
        %v8045 = vsub.f32 1.0, %v7725
        %v8046 = vsub.f32 1.0, %v7726
        %v8047 = vsub.f32 1.0, %v7727
        %v8048 = vsub.f32 1.0, %v7728
        %v8049 = vsub.f32 1.0, %v7729
        %v8050 = vsub.f32 1.0, %v7730
        %v8051 = vsub.f32 1.0, %v7731
        %v8052 = vsub.f32 1.0, %v7732
        %v8053 = vsub.f32 1.0, %v7733
        %v8054 = vsub.f32 1.0, %v7734
        %v8055 = vsub.f32 1.0, %v7735
        %v8056 = vsub.f32 1.0, %v7736
        %v8057 = vsub.f32 1.0, %v7737
        %v8058 = vsub.f32 1.0, %v7738
        %v8059 = vsub.f32 1.0, %v7739
        %v8060 = vsub.f32 1.0, %v7740
        %v8061 = vmul.f32 %v7997, %v7039
        %v8062 = vmul.f32 %v7998, %v7043
        %v8063 = vmul.f32 %v7999, %v7049
        %v8064 = vmul.f32 %v8000, %v7053
        %v8065 = vmul.f32 %v8001, %v7059
        %v8066 = vmul.f32 %v8002, %v7063
        %v8067 = vmul.f32 %v8003, %v7069
        %v8068 = vmul.f32 %v8004, %v7073
        %v8069 = vmul.f32 %v8005, %v7079
        %v8070 = vmul.f32 %v8006, %v7083
        %v8071 = vmul.f32 %v8007, %v7089
        %v8072 = vmul.f32 %v8008, %v7093
        %v8073 = vmul.f32 %v8009, %v7099
        %v8074 = vmul.f32 %v8010, %v7103
        %v8075 = vmul.f32 %v8011, %v7109
        %v8076 = vmul.f32 %v8012, %v7113
        %v8077 = vmul.f32 %v8013, %v7119
        %v8078 = vmul.f32 %v8014, %v7123
        %v8079 = vmul.f32 %v8015, %v7129
        %v8080 = vmul.f32 %v8016, %v7133
        %v8081 = vmul.f32 %v8017, %v7139
        %v8082 = vmul.f32 %v8018, %v7143
        %v8083 = vmul.f32 %v8019, %v7149
        %v8084 = vmul.f32 %v8020, %v7153
        %v8085 = vmul.f32 %v8021, %v7159
        %v8086 = vmul.f32 %v8022, %v7163
        %v8087 = vmul.f32 %v8023, %v7169
        %v8088 = vmul.f32 %v8024, %v7173
        %v8089 = vmul.f32 %v8025, %v7179
        %v8090 = vmul.f32 %v8026, %v7183
        %v8091 = vmul.f32 %v8027, %v7189
        %v8092 = vmul.f32 %v8028, %v7193
        %v8093 = vmul.f32 %v8029, %v7199
        %v8094 = vmul.f32 %v8030, %v7203
        %v8095 = vmul.f32 %v8031, %v7209
        %v8096 = vmul.f32 %v8032, %v7213
        %v8097 = vmul.f32 %v8033, %v7219
        %v8098 = vmul.f32 %v8034, %v7223
        %v8099 = vmul.f32 %v8035, %v7229
        %v8100 = vmul.f32 %v8036, %v7233
        %v8101 = vmul.f32 %v8037, %v7239
        %v8102 = vmul.f32 %v8038, %v7243
        %v8103 = vmul.f32 %v8039, %v7249
        %v8104 = vmul.f32 %v8040, %v7253
        %v8105 = vmul.f32 %v8041, %v7259
        %v8106 = vmul.f32 %v8042, %v7263
        %v8107 = vmul.f32 %v8043, %v7269
        %v8108 = vmul.f32 %v8044, %v7273
        %v8109 = vmul.f32 %v8045, %v7279
        %v8110 = vmul.f32 %v8046, %v7283
        %v8111 = vmul.f32 %v8047, %v7289
        %v8112 = vmul.f32 %v8048, %v7293
        %v8113 = vmul.f32 %v8049, %v7299
        %v8114 = vmul.f32 %v8050, %v7303
        %v8115 = vmul.f32 %v8051, %v7309
        %v8116 = vmul.f32 %v8052, %v7313
        %v8117 = vmul.f32 %v8053, %v7319
        %v8118 = vmul.f32 %v8054, %v7323
        %v8119 = vmul.f32 %v8055, %v7329
        %v8120 = vmul.f32 %v8056, %v7333
        %v8121 = vmul.f32 %v8057, %v7339
        %v8122 = vmul.f32 %v8058, %v7343
        %v8123 = vmul.f32 %v8059, %v7349
        %v8124 = vmul.f32 %v8060, %v7353
        %v8125 = vadd.f32 %v7933, %v8061
        %v8126 = vadd.f32 %v7934, %v8062
        %v8127 = vadd.f32 %v7935, %v8063
        %v8128 = vadd.f32 %v7936, %v8064
        %v8129 = vadd.f32 %v7937, %v8065
        %v8130 = vadd.f32 %v7938, %v8066
        %v8131 = vadd.f32 %v7939, %v8067
        %v8132 = vadd.f32 %v7940, %v8068
        %v8133 = vadd.f32 %v7941, %v8069
        %v8134 = vadd.f32 %v7942, %v8070
        %v8135 = vadd.f32 %v7943, %v8071
        %v8136 = vadd.f32 %v7944, %v8072
        %v8137 = vadd.f32 %v7945, %v8073
        %v8138 = vadd.f32 %v7946, %v8074
        %v8139 = vadd.f32 %v7947, %v8075
        %v8140 = vadd.f32 %v7948, %v8076
        %v8141 = vadd.f32 %v7949, %v8077
        %v8142 = vadd.f32 %v7950, %v8078
        %v8143 = vadd.f32 %v7951, %v8079
        %v8144 = vadd.f32 %v7952, %v8080
        %v8145 = vadd.f32 %v7953, %v8081
        %v8146 = vadd.f32 %v7954, %v8082
        %v8147 = vadd.f32 %v7955, %v8083
        %v8148 = vadd.f32 %v7956, %v8084
        %v8149 = vadd.f32 %v7957, %v8085
        %v8150 = vadd.f32 %v7958, %v8086
        %v8151 = vadd.f32 %v7959, %v8087
        %v8152 = vadd.f32 %v7960, %v8088
        %v8153 = vadd.f32 %v7961, %v8089
        %v8154 = vadd.f32 %v7962, %v8090
        %v8155 = vadd.f32 %v7963, %v8091
        %v8156 = vadd.f32 %v7964, %v8092
        %v8157 = vadd.f32 %v7965, %v8093
        %v8158 = vadd.f32 %v7966, %v8094
        %v8159 = vadd.f32 %v7967, %v8095
        %v8160 = vadd.f32 %v7968, %v8096
        %v8161 = vadd.f32 %v7969, %v8097
        %v8162 = vadd.f32 %v7970, %v8098
        %v8163 = vadd.f32 %v7971, %v8099
        %v8164 = vadd.f32 %v7972, %v8100
        %v8165 = vadd.f32 %v7973, %v8101
        %v8166 = vadd.f32 %v7974, %v8102
        %v8167 = vadd.f32 %v7975, %v8103
        %v8168 = vadd.f32 %v7976, %v8104
        %v8169 = vadd.f32 %v7977, %v8105
        %v8170 = vadd.f32 %v7978, %v8106
        %v8171 = vadd.f32 %v7979, %v8107
        %v8172 = vadd.f32 %v7980, %v8108
        %v8173 = vadd.f32 %v7981, %v8109
        %v8174 = vadd.f32 %v7982, %v8110
        %v8175 = vadd.f32 %v7983, %v8111
        %v8176 = vadd.f32 %v7984, %v8112
        %v8177 = vadd.f32 %v7985, %v8113
        %v8178 = vadd.f32 %v7986, %v8114
        %v8179 = vadd.f32 %v7987, %v8115
        %v8180 = vadd.f32 %v7988, %v8116
        %v8181 = vadd.f32 %v7989, %v8117
        %v8182 = vadd.f32 %v7990, %v8118
        %v8183 = vadd.f32 %v7991, %v8119
        %v8184 = vadd.f32 %v7992, %v8120
        %v8185 = vadd.f32 %v7993, %v8121
        %v8186 = vadd.f32 %v7994, %v8122
        %v8187 = vadd.f32 %v7995, %v8123
        %v8188 = vadd.f32 %v7996, %v8124
        %v8189 = vmul.f32 %v3342, %v7869
        %v8190 = vmul.f32 %v3342, %v7870
        %v8191 = vmul.f32 %v3342, %v7871
        %v8192 = vmul.f32 %v3342, %v7872
        %v8193 = vmul.f32 %v3342, %v7873
        %v8194 = vmul.f32 %v3342, %v7874
        %v8195 = vmul.f32 %v3342, %v7875
        %v8196 = vmul.f32 %v3342, %v7876
        %v8197 = vmul.f32 %v3342, %v7877
        %v8198 = vmul.f32 %v3342, %v7878
        %v8199 = vmul.f32 %v3342, %v7879
        %v8200 = vmul.f32 %v3342, %v7880
        %v8201 = vmul.f32 %v3342, %v7881
        %v8202 = vmul.f32 %v3342, %v7882
        %v8203 = vmul.f32 %v3342, %v7883
        %v8204 = vmul.f32 %v3342, %v7884
        %v8205 = vmul.f32 %v3342, %v7885
        %v8206 = vmul.f32 %v3342, %v7886
        %v8207 = vmul.f32 %v3342, %v7887
        %v8208 = vmul.f32 %v3342, %v7888
        %v8209 = vmul.f32 %v3342, %v7889
        %v8210 = vmul.f32 %v3342, %v7890
        %v8211 = vmul.f32 %v3342, %v7891
        %v8212 = vmul.f32 %v3342, %v7892
        %v8213 = vmul.f32 %v3342, %v7893
        %v8214 = vmul.f32 %v3342, %v7894
        %v8215 = vmul.f32 %v3342, %v7895
        %v8216 = vmul.f32 %v3342, %v7896
        %v8217 = vmul.f32 %v3342, %v7897
        %v8218 = vmul.f32 %v3342, %v7898
        %v8219 = vmul.f32 %v3342, %v7899
        %v8220 = vmul.f32 %v3342, %v7900
        %v8221 = vmul.f32 %v3342, %v7901
        %v8222 = vmul.f32 %v3342, %v7902
        %v8223 = vmul.f32 %v3342, %v7903
        %v8224 = vmul.f32 %v3342, %v7904
        %v8225 = vmul.f32 %v3342, %v7905
        %v8226 = vmul.f32 %v3342, %v7906
        %v8227 = vmul.f32 %v3342, %v7907
        %v8228 = vmul.f32 %v3342, %v7908
        %v8229 = vmul.f32 %v3342, %v7909
        %v8230 = vmul.f32 %v3342, %v7910
        %v8231 = vmul.f32 %v3342, %v7911
        %v8232 = vmul.f32 %v3342, %v7912
        %v8233 = vmul.f32 %v3342, %v7913
        %v8234 = vmul.f32 %v3342, %v7914
        %v8235 = vmul.f32 %v3342, %v7915
        %v8236 = vmul.f32 %v3342, %v7916
        %v8237 = vmul.f32 %v3342, %v7917
        %v8238 = vmul.f32 %v3342, %v7918
        %v8239 = vmul.f32 %v3342, %v7919
        %v8240 = vmul.f32 %v3342, %v7920
        %v8241 = vmul.f32 %v3342, %v7921
        %v8242 = vmul.f32 %v3342, %v7922
        %v8243 = vmul.f32 %v3342, %v7923
        %v8244 = vmul.f32 %v3342, %v7924
        %v8245 = vmul.f32 %v3342, %v7925
        %v8246 = vmul.f32 %v3342, %v7926
        %v8247 = vmul.f32 %v3342, %v7927
        %v8248 = vmul.f32 %v3342, %v7928
        %v8249 = vmul.f32 %v3342, %v7929
        %v8250 = vmul.f32 %v3342, %v7930
        %v8251 = vmul.f32 %v3342, %v7931
        %v8252 = vmul.f32 %v3342, %v7932
        %8253 = vadd.xlane.f32.xlu0 %v8189
        %v8254 = vpop.xlane.xlu0 %8253
        %8255 = vadd.xlane.f32.xlu0 %v8190
        %v8256 = vpop.xlane.xlu0 %8255
        %8257 = vadd.xlane.f32.xlu0 %v8191
        %v8258 = vpop.xlane.xlu0 %8257
        %8259 = vadd.xlane.f32.xlu0 %v8192
        %v8260 = vpop.xlane.xlu0 %8259
        %8261 = vadd.xlane.f32.xlu0 %v8193
        %v8262 = vpop.xlane.xlu0 %8261
        %8263 = vadd.xlane.f32.xlu0 %v8194
        %v8264 = vpop.xlane.xlu0 %8263
        %8265 = vadd.xlane.f32.xlu0 %v8195
        %v8266 = vpop.xlane.xlu0 %8265
        %8267 = vadd.xlane.f32.xlu0 %v8196
        %v8268 = vpop.xlane.xlu0 %8267
        %8269 = vadd.xlane.f32.xlu0 %v8197
        %v8270 = vpop.xlane.xlu0 %8269
        %8271 = vadd.xlane.f32.xlu0 %v8198
        %v8272 = vpop.xlane.xlu0 %8271
        %8273 = vadd.xlane.f32.xlu0 %v8199
        %v8274 = vpop.xlane.xlu0 %8273
        %8275 = vadd.xlane.f32.xlu0 %v8200
        %v8276 = vpop.xlane.xlu0 %8275
        %8277 = vadd.xlane.f32.xlu0 %v8201
        %v8278 = vpop.xlane.xlu0 %8277
        %8279 = vadd.xlane.f32.xlu0 %v8202
        %v8280 = vpop.xlane.xlu0 %8279
        %8281 = vadd.xlane.f32.xlu0 %v8203
        %v8282 = vpop.xlane.xlu0 %8281
        %8283 = vadd.xlane.f32.xlu0 %v8204
        %v8284 = vpop.xlane.xlu0 %8283
        %8285 = vadd.xlane.f32.xlu0 %v8205
        %v8286 = vpop.xlane.xlu0 %8285
        %8287 = vadd.xlane.f32.xlu0 %v8206
        %v8288 = vpop.xlane.xlu0 %8287
        %8289 = vadd.xlane.f32.xlu0 %v8207
        %v8290 = vpop.xlane.xlu0 %8289
        %8291 = vadd.xlane.f32.xlu0 %v8208
        %v8292 = vpop.xlane.xlu0 %8291
        %8293 = vadd.xlane.f32.xlu0 %v8209
        %v8294 = vpop.xlane.xlu0 %8293
        %8295 = vadd.xlane.f32.xlu0 %v8210
        %v8296 = vpop.xlane.xlu0 %8295
        %8297 = vadd.xlane.f32.xlu0 %v8211
        %v8298 = vpop.xlane.xlu0 %8297
        %8299 = vadd.xlane.f32.xlu0 %v8212
        %v8300 = vpop.xlane.xlu0 %8299
        %8301 = vadd.xlane.f32.xlu0 %v8213
        %v8302 = vpop.xlane.xlu0 %8301
        %8303 = vadd.xlane.f32.xlu0 %v8214
        %v8304 = vpop.xlane.xlu0 %8303
        %8305 = vadd.xlane.f32.xlu0 %v8215
        %v8306 = vpop.xlane.xlu0 %8305
        %8307 = vadd.xlane.f32.xlu0 %v8216
        %v8308 = vpop.xlane.xlu0 %8307
        %8309 = vadd.xlane.f32.xlu0 %v8217
        %v8310 = vpop.xlane.xlu0 %8309
        %8311 = vadd.xlane.f32.xlu0 %v8218
        %v8312 = vpop.xlane.xlu0 %8311
        %8313 = vadd.xlane.f32.xlu0 %v8219
        %v8314 = vpop.xlane.xlu0 %8313
        %8315 = vadd.xlane.f32.xlu0 %v8220
        %v8316 = vpop.xlane.xlu0 %8315
        %8317 = vadd.xlane.f32.xlu0 %v8221
        %v8318 = vpop.xlane.xlu0 %8317
        %8319 = vadd.xlane.f32.xlu0 %v8222
        %v8320 = vpop.xlane.xlu0 %8319
        %8321 = vadd.xlane.f32.xlu0 %v8223
        %v8322 = vpop.xlane.xlu0 %8321
        %8323 = vadd.xlane.f32.xlu0 %v8224
        %v8324 = vpop.xlane.xlu0 %8323
        %8325 = vadd.xlane.f32.xlu0 %v8225
        %v8326 = vpop.xlane.xlu0 %8325
        %8327 = vadd.xlane.f32.xlu0 %v8226
        %v8328 = vpop.xlane.xlu0 %8327
        %8329 = vadd.xlane.f32.xlu0 %v8227
        %v8330 = vpop.xlane.xlu0 %8329
        %8331 = vadd.xlane.f32.xlu0 %v8228
        %v8332 = vpop.xlane.xlu0 %8331
        %8333 = vadd.xlane.f32.xlu0 %v8229
        %v8334 = vpop.xlane.xlu0 %8333
        %8335 = vadd.xlane.f32.xlu0 %v8230
        %v8336 = vpop.xlane.xlu0 %8335
        %8337 = vadd.xlane.f32.xlu0 %v8231
        %v8338 = vpop.xlane.xlu0 %8337
        %8339 = vadd.xlane.f32.xlu0 %v8232
        %v8340 = vpop.xlane.xlu0 %8339
        %8341 = vadd.xlane.f32.xlu0 %v8233
        %v8342 = vpop.xlane.xlu0 %8341
        %8343 = vadd.xlane.f32.xlu0 %v8234
        %v8344 = vpop.xlane.xlu0 %8343
        %8345 = vadd.xlane.f32.xlu0 %v8235
        %v8346 = vpop.xlane.xlu0 %8345
        %8347 = vadd.xlane.f32.xlu0 %v8236
        %v8348 = vpop.xlane.xlu0 %8347
        %8349 = vadd.xlane.f32.xlu0 %v8237
        %v8350 = vpop.xlane.xlu0 %8349
        %8351 = vadd.xlane.f32.xlu0 %v8238
        %v8352 = vpop.xlane.xlu0 %8351
        %8353 = vadd.xlane.f32.xlu0 %v8239
        %v8354 = vpop.xlane.xlu0 %8353
        %8355 = vadd.xlane.f32.xlu0 %v8240
        %v8356 = vpop.xlane.xlu0 %8355
        %8357 = vadd.xlane.f32.xlu0 %v8241
        %v8358 = vpop.xlane.xlu0 %8357
        %8359 = vadd.xlane.f32.xlu0 %v8242
        %v8360 = vpop.xlane.xlu0 %8359
        %8361 = vadd.xlane.f32.xlu0 %v8243
        %v8362 = vpop.xlane.xlu0 %8361
        %8363 = vadd.xlane.f32.xlu0 %v8244
        %v8364 = vpop.xlane.xlu0 %8363
        %8365 = vadd.xlane.f32.xlu0 %v8245
        %v8366 = vpop.xlane.xlu0 %8365
        %8367 = vadd.xlane.f32.xlu0 %v8246
        %v8368 = vpop.xlane.xlu0 %8367
        %8369 = vadd.xlane.f32.xlu0 %v8247
        %v8370 = vpop.xlane.xlu0 %8369
        %8371 = vadd.xlane.f32.xlu0 %v8248
        %v8372 = vpop.xlane.xlu0 %8371
        %8373 = vadd.xlane.f32.xlu0 %v8249
        %v8374 = vpop.xlane.xlu0 %8373
        %8375 = vadd.xlane.f32.xlu0 %v8250
        %v8376 = vpop.xlane.xlu0 %8375
        %8377 = vadd.xlane.f32.xlu0 %v8251
        %v8378 = vpop.xlane.xlu0 %8377
        %8379 = vadd.xlane.f32.xlu0 %v8252
        %v8380 = vpop.xlane.xlu0 %8379
        %v8381 = vsub.f32 %v5828, %v8254
        %v8382 = vsub.f32 %v5829, %v8256
        %v8383 = vsub.f32 %v5830, %v8258
        %v8384 = vsub.f32 %v5831, %v8260
        %v8385 = vsub.f32 %v5832, %v8262
        %v8386 = vsub.f32 %v5833, %v8264
        %v8387 = vsub.f32 %v5834, %v8266
        %v8388 = vsub.f32 %v5835, %v8268
        %v8389 = vsub.f32 %v5836, %v8270
        %v8390 = vsub.f32 %v5837, %v8272
        %v8391 = vsub.f32 %v5838, %v8274
        %v8392 = vsub.f32 %v5839, %v8276
        %v8393 = vsub.f32 %v5840, %v8278
        %v8394 = vsub.f32 %v5841, %v8280
        %v8395 = vsub.f32 %v5842, %v8282
        %v8396 = vsub.f32 %v5843, %v8284
        %v8397 = vsub.f32 %v5844, %v8286
        %v8398 = vsub.f32 %v5845, %v8288
        %v8399 = vsub.f32 %v5846, %v8290
        %v8400 = vsub.f32 %v5847, %v8292
        %v8401 = vsub.f32 %v5848, %v8294
        %v8402 = vsub.f32 %v5849, %v8296
        %v8403 = vsub.f32 %v5850, %v8298
        %v8404 = vsub.f32 %v5851, %v8300
        %v8405 = vsub.f32 %v5852, %v8302
        %v8406 = vsub.f32 %v5853, %v8304
        %v8407 = vsub.f32 %v5854, %v8306
        %v8408 = vsub.f32 %v5855, %v8308
        %v8409 = vsub.f32 %v5856, %v8310
        %v8410 = vsub.f32 %v5857, %v8312
        %v8411 = vsub.f32 %v5858, %v8314
        %v8412 = vsub.f32 %v5859, %v8316
        %v8413 = vsub.f32 %v5860, %v8318
        %v8414 = vsub.f32 %v5861, %v8320
        %v8415 = vsub.f32 %v5862, %v8322
        %v8416 = vsub.f32 %v5863, %v8324
        %v8417 = vsub.f32 %v5864, %v8326
        %v8418 = vsub.f32 %v5865, %v8328
        %v8419 = vsub.f32 %v5866, %v8330
        %v8420 = vsub.f32 %v5867, %v8332
        %v8421 = vsub.f32 %v5868, %v8334
        %v8422 = vsub.f32 %v5869, %v8336
        %v8423 = vsub.f32 %v5870, %v8338
        %v8424 = vsub.f32 %v5871, %v8340
        %v8425 = vsub.f32 %v5872, %v8342
        %v8426 = vsub.f32 %v5873, %v8344
        %v8427 = vsub.f32 %v5874, %v8346
        %v8428 = vsub.f32 %v5875, %v8348
        %v8429 = vsub.f32 %v5876, %v8350
        %v8430 = vsub.f32 %v5877, %v8352
        %v8431 = vsub.f32 %v5878, %v8354
        %v8432 = vsub.f32 %v5879, %v8356
        %v8433 = vsub.f32 %v5880, %v8358
        %v8434 = vsub.f32 %v5881, %v8360
        %v8435 = vsub.f32 %v5882, %v8362
        %v8436 = vsub.f32 %v5883, %v8364
        %v8437 = vsub.f32 %v5884, %v8366
        %v8438 = vsub.f32 %v5885, %v8368
        %v8439 = vsub.f32 %v5886, %v8370
        %v8440 = vsub.f32 %v5887, %v8372
        %v8441 = vsub.f32 %v5888, %v8374
        %v8442 = vsub.f32 %v5889, %v8376
        %v8443 = vsub.f32 %v5890, %v8378
        %v8444 = vsub.f32 %v5891, %v8380
        %vm8445 = vcmp.eq.s32.totalorder %v3339, 32
        %v8446 = vsel %vm8445, 1, 0
        %vm8447 = vcmp.eq.s32.totalorder %v8446, 1
        %v8448 = vsel %vm8447, %v8381, 0.0
        %v8449 = vsel %vm8447, %v8382, 0.0
        %v8450 = vsel %vm8447, %v8383, 0.0
        %v8451 = vsel %vm8447, %v8384, 0.0
        %v8452 = vsel %vm8447, %v8385, 0.0
        %v8453 = vsel %vm8447, %v8386, 0.0
        %v8454 = vsel %vm8447, %v8387, 0.0
        %v8455 = vsel %vm8447, %v8388, 0.0
        %v8456 = vsel %vm8447, %v8389, 0.0
        %v8457 = vsel %vm8447, %v8390, 0.0
        %v8458 = vsel %vm8447, %v8391, 0.0
        %v8459 = vsel %vm8447, %v8392, 0.0
        %v8460 = vsel %vm8447, %v8393, 0.0
        %v8461 = vsel %vm8447, %v8394, 0.0
        %v8462 = vsel %vm8447, %v8395, 0.0
        %v8463 = vsel %vm8447, %v8396, 0.0
        %v8464 = vsel %vm8447, %v8397, 0.0
        %v8465 = vsel %vm8447, %v8398, 0.0
        %v8466 = vsel %vm8447, %v8399, 0.0
        %v8467 = vsel %vm8447, %v8400, 0.0
        %v8468 = vsel %vm8447, %v8401, 0.0
        %v8469 = vsel %vm8447, %v8402, 0.0
        %v8470 = vsel %vm8447, %v8403, 0.0
        %v8471 = vsel %vm8447, %v8404, 0.0
        %v8472 = vsel %vm8447, %v8405, 0.0
        %v8473 = vsel %vm8447, %v8406, 0.0
        %v8474 = vsel %vm8447, %v8407, 0.0
        %v8475 = vsel %vm8447, %v8408, 0.0
        %v8476 = vsel %vm8447, %v8409, 0.0
        %v8477 = vsel %vm8447, %v8410, 0.0
        %v8478 = vsel %vm8447, %v8411, 0.0
        %v8479 = vsel %vm8447, %v8412, 0.0
        %v8480 = vsel %vm8447, %v8413, 0.0
        %v8481 = vsel %vm8447, %v8414, 0.0
        %v8482 = vsel %vm8447, %v8415, 0.0
        %v8483 = vsel %vm8447, %v8416, 0.0
        %v8484 = vsel %vm8447, %v8417, 0.0
        %v8485 = vsel %vm8447, %v8418, 0.0
        %v8486 = vsel %vm8447, %v8419, 0.0
        %v8487 = vsel %vm8447, %v8420, 0.0
        %v8488 = vsel %vm8447, %v8421, 0.0
        %v8489 = vsel %vm8447, %v8422, 0.0
        %v8490 = vsel %vm8447, %v8423, 0.0
        %v8491 = vsel %vm8447, %v8424, 0.0
        %v8492 = vsel %vm8447, %v8425, 0.0
        %v8493 = vsel %vm8447, %v8426, 0.0
        %v8494 = vsel %vm8447, %v8427, 0.0
        %v8495 = vsel %vm8447, %v8428, 0.0
        %v8496 = vsel %vm8447, %v8429, 0.0
        %v8497 = vsel %vm8447, %v8430, 0.0
        %v8498 = vsel %vm8447, %v8431, 0.0
        %v8499 = vsel %vm8447, %v8432, 0.0
        %v8500 = vsel %vm8447, %v8433, 0.0
        %v8501 = vsel %vm8447, %v8434, 0.0
        %v8502 = vsel %vm8447, %v8435, 0.0
        %v8503 = vsel %vm8447, %v8436, 0.0
        %v8504 = vsel %vm8447, %v8437, 0.0
        %v8505 = vsel %vm8447, %v8438, 0.0
        %v8506 = vsel %vm8447, %v8439, 0.0
        %v8507 = vsel %vm8447, %v8440, 0.0
        %v8508 = vsel %vm8447, %v8441, 0.0
        %v8509 = vsel %vm8447, %v8442, 0.0
        %v8510 = vsel %vm8447, %v8443, 0.0
        %v8511 = vsel %vm8447, %v8444, 0.0
        %v8512 = vadd.f32 %v5892, %v8448
        %v8513 = vadd.f32 %v5893, %v8449
        %v8514 = vadd.f32 %v5894, %v8450
        %v8515 = vadd.f32 %v5895, %v8451
        %v8516 = vadd.f32 %v5896, %v8452
        %v8517 = vadd.f32 %v5897, %v8453
        %v8518 = vadd.f32 %v5898, %v8454
        %v8519 = vadd.f32 %v5899, %v8455
        %v8520 = vadd.f32 %v5900, %v8456
        %v8521 = vadd.f32 %v5901, %v8457
        %v8522 = vadd.f32 %v5902, %v8458
        %v8523 = vadd.f32 %v5903, %v8459
        %v8524 = vadd.f32 %v5904, %v8460
        %v8525 = vadd.f32 %v5905, %v8461
        %v8526 = vadd.f32 %v5906, %v8462
        %v8527 = vadd.f32 %v5907, %v8463
        %v8528 = vadd.f32 %v5908, %v8464
        %v8529 = vadd.f32 %v5909, %v8465
        %v8530 = vadd.f32 %v5910, %v8466
        %v8531 = vadd.f32 %v5911, %v8467
        %v8532 = vadd.f32 %v5912, %v8468
        %v8533 = vadd.f32 %v5913, %v8469
        %v8534 = vadd.f32 %v5914, %v8470
        %v8535 = vadd.f32 %v5915, %v8471
        %v8536 = vadd.f32 %v5916, %v8472
        %v8537 = vadd.f32 %v5917, %v8473
        %v8538 = vadd.f32 %v5918, %v8474
        %v8539 = vadd.f32 %v5919, %v8475
        %v8540 = vadd.f32 %v5920, %v8476
        %v8541 = vadd.f32 %v5921, %v8477
        %v8542 = vadd.f32 %v5922, %v8478
        %v8543 = vadd.f32 %v5923, %v8479
        %v8544 = vadd.f32 %v5924, %v8480
        %v8545 = vadd.f32 %v5925, %v8481
        %v8546 = vadd.f32 %v5926, %v8482
        %v8547 = vadd.f32 %v5927, %v8483
        %v8548 = vadd.f32 %v5928, %v8484
        %v8549 = vadd.f32 %v5929, %v8485
        %v8550 = vadd.f32 %v5930, %v8486
        %v8551 = vadd.f32 %v5931, %v8487
        %v8552 = vadd.f32 %v5932, %v8488
        %v8553 = vadd.f32 %v5933, %v8489
        %v8554 = vadd.f32 %v5934, %v8490
        %v8555 = vadd.f32 %v5935, %v8491
        %v8556 = vadd.f32 %v5936, %v8492
        %v8557 = vadd.f32 %v5937, %v8493
        %v8558 = vadd.f32 %v5938, %v8494
        %v8559 = vadd.f32 %v5939, %v8495
        %v8560 = vadd.f32 %v5940, %v8496
        %v8561 = vadd.f32 %v5941, %v8497
        %v8562 = vadd.f32 %v5942, %v8498
        %v8563 = vadd.f32 %v5943, %v8499
        %v8564 = vadd.f32 %v5944, %v8500
        %v8565 = vadd.f32 %v5945, %v8501
        %v8566 = vadd.f32 %v5946, %v8502
        %v8567 = vadd.f32 %v5947, %v8503
        %v8568 = vadd.f32 %v5948, %v8504
        %v8569 = vadd.f32 %v5949, %v8505
        %v8570 = vadd.f32 %v5950, %v8506
        %v8571 = vadd.f32 %v5951, %v8507
        %v8572 = vadd.f32 %v5952, %v8508
        %v8573 = vadd.f32 %v5953, %v8509
        %v8574 = vadd.f32 %v5954, %v8510
        %v8575 = vadd.f32 %v5955, %v8511
        %8576 = vst [vmem:[%s466] sm:$0xff] %v8512
        %8577 = vst [vmem:[%s466 + $0x8] sm:$0xff] %v8513
        %8578 = vst [vmem:[%s466 + $0x10] sm:$0xff] %v8514
        %8579 = vst [vmem:[%s466 + $0x18] sm:$0xff] %v8515
        %8580 = vst [vmem:[%s466 + $0x20] sm:$0xff] %v8516
        %8581 = vst [vmem:[%s466 + $0x28] sm:$0xff] %v8517
        %8582 = vst [vmem:[%s466 + $0x30] sm:$0xff] %v8518
        %8583 = vst [vmem:[%s466 + $0x38] sm:$0xff] %v8519
        %8584 = vst [vmem:[%s466 + $0x40] sm:$0xff] %v8520
        %8585 = vst [vmem:[%s466 + $0x48] sm:$0xff] %v8521
        %8586 = vst [vmem:[%s466 + $0x50] sm:$0xff] %v8522
        %8587 = vst [vmem:[%s466 + $0x58] sm:$0xff] %v8523
        %8588 = vst [vmem:[%s466 + $0x60] sm:$0xff] %v8524
        %8589 = vst [vmem:[%s466 + $0x68] sm:$0xff] %v8525
        %8590 = vst [vmem:[%s466 + $0x70] sm:$0xff] %v8526
        %8591 = vst [vmem:[%s466 + $0x78] sm:$0xff] %v8527
        %8592 = vst [vmem:[%s466 + $0x80] sm:$0xff] %v8528
        %8593 = vst [vmem:[%s466 + $0x88] sm:$0xff] %v8529
        %8594 = vst [vmem:[%s466 + $0x90] sm:$0xff] %v8530
        %8595 = vst [vmem:[%s466 + $0x98] sm:$0xff] %v8531
        %8596 = vst [vmem:[%s466 + $0xa0] sm:$0xff] %v8532
        %8597 = vst [vmem:[%s466 + $0xa8] sm:$0xff] %v8533
        %8598 = vst [vmem:[%s466 + $0xb0] sm:$0xff] %v8534
        %8599 = vst [vmem:[%s466 + $0xb8] sm:$0xff] %v8535
        %8600 = vst [vmem:[%s466 + $0xc0] sm:$0xff] %v8536
        %8601 = vst [vmem:[%s466 + $0xc8] sm:$0xff] %v8537
        %8602 = vst [vmem:[%s466 + $0xd0] sm:$0xff] %v8538
        %8603 = vst [vmem:[%s466 + $0xd8] sm:$0xff] %v8539
        %8604 = vst [vmem:[%s466 + $0xe0] sm:$0xff] %v8540
        %8605 = vst [vmem:[%s466 + $0xe8] sm:$0xff] %v8541
        %8606 = vst [vmem:[%s466 + $0xf0] sm:$0xff] %v8542
        %8607 = vst [vmem:[%s466 + $0xf8] sm:$0xff] %v8543
        %8608 = vst [vmem:[%s466 + $0x100] sm:$0xff] %v8544
        %8609 = vst [vmem:[%s466 + $0x108] sm:$0xff] %v8545
        %8610 = vst [vmem:[%s466 + $0x110] sm:$0xff] %v8546
        %8611 = vst [vmem:[%s466 + $0x118] sm:$0xff] %v8547
        %8612 = vst [vmem:[%s466 + $0x120] sm:$0xff] %v8548
        %8613 = vst [vmem:[%s466 + $0x128] sm:$0xff] %v8549
        %8614 = vst [vmem:[%s466 + $0x130] sm:$0xff] %v8550
        %8615 = vst [vmem:[%s466 + $0x138] sm:$0xff] %v8551
        %8616 = vst [vmem:[%s466 + $0x140] sm:$0xff] %v8552
        %8617 = vst [vmem:[%s466 + $0x148] sm:$0xff] %v8553
        %8618 = vst [vmem:[%s466 + $0x150] sm:$0xff] %v8554
        %8619 = vst [vmem:[%s466 + $0x158] sm:$0xff] %v8555
        %8620 = vst [vmem:[%s466 + $0x160] sm:$0xff] %v8556
        %8621 = vst [vmem:[%s466 + $0x168] sm:$0xff] %v8557
        %8622 = vst [vmem:[%s466 + $0x170] sm:$0xff] %v8558
        %8623 = vst [vmem:[%s466 + $0x178] sm:$0xff] %v8559
        %8624 = vst [vmem:[%s466 + $0x180] sm:$0xff] %v8560
        %8625 = vst [vmem:[%s466 + $0x188] sm:$0xff] %v8561
        %8626 = vst [vmem:[%s466 + $0x190] sm:$0xff] %v8562
        %8627 = vst [vmem:[%s466 + $0x198] sm:$0xff] %v8563
        %8628 = vst [vmem:[%s466 + $0x1a0] sm:$0xff] %v8564
        %8629 = vst [vmem:[%s466 + $0x1a8] sm:$0xff] %v8565
        %8630 = vst [vmem:[%s466 + $0x1b0] sm:$0xff] %v8566
        %8631 = vst [vmem:[%s466 + $0x1b8] sm:$0xff] %v8567
        %8632 = vst [vmem:[%s466 + $0x1c0] sm:$0xff] %v8568
        %8633 = vst [vmem:[%s466 + $0x1c8] sm:$0xff] %v8569
        %8634 = vst [vmem:[%s466 + $0x1d0] sm:$0xff] %v8570
        %8635 = vst [vmem:[%s466 + $0x1d8] sm:$0xff] %v8571
        %8636 = vst [vmem:[%s466 + $0x1e0] sm:$0xff] %v8572
        %8637 = vst [vmem:[%s466 + $0x1e8] sm:$0xff] %v8573
        %8638 = vst [vmem:[%s466 + $0x1f0] sm:$0xff] %v8574
        %8639 = vst [vmem:[%s466 + $0x1f8] sm:$0xff] %v8575
        %8640 = vst.msk [vmem:[%s491] sm:$0xff] %vm622, %v8125
        %8641 = vst.msk [vmem:[%s491 + $0x8] sm:$0xff] %vm622, %v8126
        %8642 = vst.msk [vmem:[%s491 + $0x10] sm:$0xff] %vm622, %v8127
        %8643 = vst.msk [vmem:[%s491 + $0x18] sm:$0xff] %vm622, %v8128
        %8644 = vst.msk [vmem:[%s491 + $0x20] sm:$0xff] %vm622, %v8129
        %8645 = vst.msk [vmem:[%s491 + $0x28] sm:$0xff] %vm622, %v8130
        %8646 = vst.msk [vmem:[%s491 + $0x30] sm:$0xff] %vm622, %v8131
        %8647 = vst.msk [vmem:[%s491 + $0x38] sm:$0xff] %vm622, %v8132
        %8648 = vst.msk [vmem:[%s491 + $0x40] sm:$0xff] %vm622, %v8133
        %8649 = vst.msk [vmem:[%s491 + $0x48] sm:$0xff] %vm622, %v8134
        %8650 = vst.msk [vmem:[%s491 + $0x50] sm:$0xff] %vm622, %v8135
        %8651 = vst.msk [vmem:[%s491 + $0x58] sm:$0xff] %vm622, %v8136
        %8652 = vst.msk [vmem:[%s491 + $0x60] sm:$0xff] %vm622, %v8137
        %8653 = vst.msk [vmem:[%s491 + $0x68] sm:$0xff] %vm622, %v8138
        %8654 = vst.msk [vmem:[%s491 + $0x70] sm:$0xff] %vm622, %v8139
        %8655 = vst.msk [vmem:[%s491 + $0x78] sm:$0xff] %vm622, %v8140
        %8656 = vst.msk [vmem:[%s491 + $0x80] sm:$0xff] %vm622, %v8141
        %8657 = vst.msk [vmem:[%s491 + $0x88] sm:$0xff] %vm622, %v8142
        %8658 = vst.msk [vmem:[%s491 + $0x90] sm:$0xff] %vm622, %v8143
        %8659 = vst.msk [vmem:[%s491 + $0x98] sm:$0xff] %vm622, %v8144
        %8660 = vst.msk [vmem:[%s491 + $0xa0] sm:$0xff] %vm622, %v8145
        %8661 = vst.msk [vmem:[%s491 + $0xa8] sm:$0xff] %vm622, %v8146
        %8662 = vst.msk [vmem:[%s491 + $0xb0] sm:$0xff] %vm622, %v8147
        %8663 = vst.msk [vmem:[%s491 + $0xb8] sm:$0xff] %vm622, %v8148
        %8664 = vst.msk [vmem:[%s491 + $0xc0] sm:$0xff] %vm622, %v8149
        %8665 = vst.msk [vmem:[%s491 + $0xc8] sm:$0xff] %vm622, %v8150
        %8666 = vst.msk [vmem:[%s491 + $0xd0] sm:$0xff] %vm622, %v8151
        %8667 = vst.msk [vmem:[%s491 + $0xd8] sm:$0xff] %vm622, %v8152
        %8668 = vst.msk [vmem:[%s491 + $0xe0] sm:$0xff] %vm622, %v8153
        %8669 = vst.msk [vmem:[%s491 + $0xe8] sm:$0xff] %vm622, %v8154
        %8670 = vst.msk [vmem:[%s491 + $0xf0] sm:$0xff] %vm622, %v8155
        %8671 = vst.msk [vmem:[%s491 + $0xf8] sm:$0xff] %vm622, %v8156
        %8672 = vst.msk [vmem:[%s491 + $0x100] sm:$0xff] %vm622, %v8157
        %8673 = vst.msk [vmem:[%s491 + $0x108] sm:$0xff] %vm622, %v8158
        %8674 = vst.msk [vmem:[%s491 + $0x110] sm:$0xff] %vm622, %v8159
        %8675 = vst.msk [vmem:[%s491 + $0x118] sm:$0xff] %vm622, %v8160
        %8676 = vst.msk [vmem:[%s491 + $0x120] sm:$0xff] %vm622, %v8161
        %8677 = vst.msk [vmem:[%s491 + $0x128] sm:$0xff] %vm622, %v8162
        %8678 = vst.msk [vmem:[%s491 + $0x130] sm:$0xff] %vm622, %v8163
        %8679 = vst.msk [vmem:[%s491 + $0x138] sm:$0xff] %vm622, %v8164
        %8680 = vst.msk [vmem:[%s491 + $0x140] sm:$0xff] %vm622, %v8165
        %8681 = vst.msk [vmem:[%s491 + $0x148] sm:$0xff] %vm622, %v8166
        %8682 = vst.msk [vmem:[%s491 + $0x150] sm:$0xff] %vm622, %v8167
        %8683 = vst.msk [vmem:[%s491 + $0x158] sm:$0xff] %vm622, %v8168
        %8684 = vst.msk [vmem:[%s491 + $0x160] sm:$0xff] %vm622, %v8169
        %8685 = vst.msk [vmem:[%s491 + $0x168] sm:$0xff] %vm622, %v8170
        %8686 = vst.msk [vmem:[%s491 + $0x170] sm:$0xff] %vm622, %v8171
        %8687 = vst.msk [vmem:[%s491 + $0x178] sm:$0xff] %vm622, %v8172
        %8688 = vst.msk [vmem:[%s491 + $0x180] sm:$0xff] %vm622, %v8173
        %8689 = vst.msk [vmem:[%s491 + $0x188] sm:$0xff] %vm622, %v8174
        %8690 = vst.msk [vmem:[%s491 + $0x190] sm:$0xff] %vm622, %v8175
        %8691 = vst.msk [vmem:[%s491 + $0x198] sm:$0xff] %vm622, %v8176
        %8692 = vst.msk [vmem:[%s491 + $0x1a0] sm:$0xff] %vm622, %v8177
        %8693 = vst.msk [vmem:[%s491 + $0x1a8] sm:$0xff] %vm622, %v8178
        %8694 = vst.msk [vmem:[%s491 + $0x1b0] sm:$0xff] %vm622, %v8179
        %8695 = vst.msk [vmem:[%s491 + $0x1b8] sm:$0xff] %vm622, %v8180
        %8696 = vst.msk [vmem:[%s491 + $0x1c0] sm:$0xff] %vm622, %v8181
        %8697 = vst.msk [vmem:[%s491 + $0x1c8] sm:$0xff] %vm622, %v8182
        %8698 = vst.msk [vmem:[%s491 + $0x1d0] sm:$0xff] %vm622, %v8183
        %8699 = vst.msk [vmem:[%s491 + $0x1d8] sm:$0xff] %vm622, %v8184
        %8700 = vst.msk [vmem:[%s491 + $0x1e0] sm:$0xff] %vm622, %v8185
        %8701 = vst.msk [vmem:[%s491 + $0x1e8] sm:$0xff] %vm622, %v8186
        %8702 = vst.msk [vmem:[%s491 + $0x1f0] sm:$0xff] %vm622, %v8187
        %8703 = vst.msk [vmem:[%s491 + $0x1f8] sm:$0xff] %vm622, %v8188
        %s8704 = sand.u32 %s257, 1
        %s8705 = scalar_lea.sflag [#allocation5], %s8704
        %s8706 = sand.u32 %s257, 1
        %s8707 = smul.addr %s8706, 512
        %s8708 = scalar_lea.vmem [#allocation12], %s8707
        %s8709 = smul.u32 64, %s29
        %p8710 = scmp.lt.s32.totalorder %s8709, 127
        %s8711 = scalar_select %p8710, %s8709, 127
        %s8712 = smul.addr %s8711, 8
        %s8713 = scalar_lea.vmem %s11, %s8712
        // Predicated region
        $region81: #{tpu_custom_call.1} parent=59 // pred_check
          %p8714 = pneg %p267
        $region82: #{tpu_custom_call.1} parent=59 // pred_check_branch
          %8716 = sbr.rel (%p8714) target = $region84
        $region83: #{tpu_custom_call.1} parent=59 // pred_region
          %s8717 = smul.u32 64, %s29
          %s8719 = ssub.s32 8192, 8192
          %8720 = vsyncadd %s8705, %s8719
          %s8721 = smul.addr %s8717, 128
          %s8722 = scalar_lea.hbm %s10, %s8721
          %s8723 = sshll.u32 %s8708, 4
          %s8724 = int_to_ptr.vmem [resolvable:$true] %s8723
          %8729 = dma.vmem_to_hbm [thread:$0]  %s8724, 8192, %s8722, %s8705, 128, 128, 8
        $region84: #{tpu_custom_call.1} parent=59 // pred_fallthru
          _
        // Predicated region
        $region85: #{tpu_custom_call.1} parent=59 // pred_check
          %p8730 = pneg %p293
        $region86: #{tpu_custom_call.1} parent=59 // pred_check_branch
          %8732 = sbr.rel (%p8730) target = $region88
        $region87: #{tpu_custom_call.1} parent=59 // pred_region
          %s8733 = smul.u32 64, %s29
        $region88: #{tpu_custom_call.1} parent=59 // pred_fallthru
          _
      $region60: #{tpu_custom_call.1} parent=5 // pred_fallthru
        _
      %p8734 = scmp.le.s32.totalorder 2, %s24
      // Predicated region
      $region89: #{tpu_custom_call.1} parent=5 // pred_check
        %p8735 = pneg %p8734
      $region90: #{tpu_custom_call.1} parent=5 // pred_check_branch
        %8737 = sbr.rel (%p8735) target = $region92
      $region91: #{tpu_custom_call.1} parent=5 // pred_region
        %s8738 = ssub.s32 %s24, 2
        // Predicated region
        $region93: #{tpu_custom_call.1} parent=91 // pred_check
          %p8739 = pneg %p273
        $region94: #{tpu_custom_call.1} parent=91 // pred_check_branch
          %8741 = sbr.rel (%p8739) target = $region96
        $region95: #{tpu_custom_call.1} parent=91 // pred_region
          %s8742 = sand.u32 %s258, 1
          %s8743 = scalar_lea.sflag [#allocation5], %s8742
          %s8744 = sand.u32 %s258, 1
          %s8745 = smul.addr %s8744, 512
          %s8746 = scalar_lea.vmem [#allocation12], %s8745
          %8747 = dma.done %s8743, 8192
        $region96: #{tpu_custom_call.1} parent=91 // pred_fallthru
          _
        // Predicated region
        $region97: #{tpu_custom_call.1} parent=91 // pred_check
          %p8748 = pneg %p299
        $region98: #{tpu_custom_call.1} parent=91 // pred_check_branch
          %8750 = sbr.rel (%p8748) target = $region100
        $region99: #{tpu_custom_call.1} parent=91 // pred_region
          %s8751 = smul.u32 64, %s30
          %p8752 = scmp.lt.s32.totalorder %s8751, 127
          %s8753 = scalar_select %p8752, %s8751, 127
          %s8754 = smul.addr %s8753, 8
          %s8755 = scalar_lea.vmem %s11, %s8754
        $region100: #{tpu_custom_call.1} parent=91 // pred_fallthru
          _
      $region92: #{tpu_custom_call.1} parent=5 // pred_fallthru
        _
    $region6: #{tpu_custom_call.1} parent=1 // loop_footer
      %s28 = sadd.s32 1, %s24
    $region7: #{tpu_custom_call.1} parent=1 // loop_footer_branch
      %23 = sbr.rel target = $region3
    $region8: #{tpu_custom_call.1} parent=1 // loop_exit
      _
    %8756 = vsyncpa [#allocation4], 1
    %s8757 = scalar_lea.sflag [#allocation4], 1
    %8758 = vsyncpa %s8757, 1
    %8759 = vsyncpa [#allocation7], 1
    %8760 = vsyncpa [#allocation10], 1
    %8761 = vsyncpa [#allocation5], 1
    %s8762 = scalar_lea.sflag [#allocation5], 1
    %8763 = vsyncpa %s8762, 1

</llo_original>
